<compile_context>
chip_gen: v7x
topology: tpu7x:2x2x1
jax: 0.10.0
libtpu: 0.0.40
codegen_flags: <defaults>
</compile_context>

<pallas_src>
import functools

import numpy as np

import jax
import jax.numpy as jnp
from jax.experimental import pallas as pl
from jax.experimental.pallas import tpu as pltpu


def _resblock_kernel(x_ref, w1_ref, b1_ref, w2_ref, b2_ref, mask_ref,
                     o_ref, h_ref, *, H, W, padl):
    """Fused conv3x3 -> ReLU -> conv3x3 -> +x for one batch sample.

    x_ref   : (C, (H+2)*(W+2)) zero-padded input, flattened spatially (row stride W+2)
    w*_ref  : (9, C, C)        conv taps, index = ky*3 + kx, each (Cout, Cin)
    b*_ref  : (C, 1)
    mask_ref: (1, L)           1.0 on real pixels of the slab, 0.0 on inter-row junk cols
    o_ref   : (C, L)           output slab (padded-flat positions r0 .. r0+L)
    h_ref   : (C, padl+L+W+3)  scratch: zero-padded conv1 activation map
    """
    Wp = W + 2
    L = (H - 1) * Wp + W
    r0 = Wp + 1                     # padded-flat index of output pixel (0, 0)
    C = o_ref.shape[0]

    # ---- conv1 (3x3, pad=1) + bias + ReLU on the padded-flat slab ----
    acc1 = jnp.zeros((C, L), jnp.float32)
    for ky in range(3):
        for kx in range(3):
            a = ky * Wp + kx        # static contiguous slice == spatial shift for this tap
            acc1 = acc1 + jnp.dot(w1_ref[ky * 3 + kx], x_ref[:, a:a + L],
                                  preferred_element_type=jnp.float32)
    h = jnp.maximum(acc1 + b1_ref[...], 0.0)

    # Re-embed as a zero-padded flat activation map; junk columns are zeroed so they act as
    # the spatial padding for conv2.  Slab start `padl` is lane-aligned (multiple of 128).
    h_ref[...] = jnp.zeros_like(h_ref)
    h_ref[:, padl:padl + L] = h * mask_ref[...]

    # ---- conv2 (3x3, pad=1) + bias ----
    acc2 = jnp.zeros((C, L), jnp.float32)
    for ky in range(3):
        for kx in range(3):
            d = padl + (ky - 1) * Wp + (kx - 1)
            acc2 = acc2 + jnp.dot(w2_ref[ky * 3 + kx], h_ref[:, d:d + L],
                                  preferred_element_type=jnp.float32)
    res = acc2 + b2_ref[...]

    # ---- residual add: the interior of the padded input IS the original x ----
    o_ref[...] = (x_ref[:, r0:r0 + L] + res).astype(o_ref.dtype)


def res_block(x, w1, b1, w2, b2):
    """x: (N, C, H, W) NCHW; w1, w2: (C, C, 3, 3); b1, b2: (C,).  Returns (N, C, H, W)."""
    N, C, H, W = x.shape
    Hp, Wp = H + 2, W + 2
    P = Hp * Wp
    L = (H - 1) * Wp + W
    r0 = Wp + 1
    padl = pl.cdiv(r0, 128) * 128          # lane-aligned slab start inside the scratch
    SW = padl + L + r0                     # scratch width (needs a +/- r0 halo)

    # Zero-pad spatially and flatten: (N, C, Hp*Wp), row stride Wp.
    x_pad = jnp.pad(x, ((0, 0), (0, 0), (1, 1), (1, 1))).reshape(N, C, P)
    # Conv taps as 9 (Cout, Cin) matrices, tap index = ky*3 + kx.
    w1r = jnp.transpose(w1, (2, 3, 0, 1)).reshape(9, C, C)
    w2r = jnp.transpose(w2, (2, 3, 0, 1)).reshape(9, C, C)
    b1r = b1.reshape(C, 1).astype(jnp.float32)
    b2r = b2.reshape(C, 1).astype(jnp.float32)
    # 1.0 on real output pixels of the slab, 0.0 on the inter-row junk columns.
    cols = (np.arange(L) + r0) % Wp
    mask = jnp.asarray(((cols >= 1) & (cols <= W)).astype(np.float32)[None, :])

    itemsize = jnp.dtype(x.dtype).itemsize
    est = (2 * (C * P * itemsize + C * L * itemsize)       # double-buffered x / out blocks
           + 2 * (2 * 9 * C * C * 4 + 2 * C * 4 + L * 4)   # weights / biases / mask
           + C * SW * 4                                    # activation scratch
           + (2 << 20))                                    # headroom
    vmem_limit = int(min(max(est, 16 << 20), 64 << 20))    # stay v7x-safe (64 MiB / TC)

    kernel = functools.partial(_resblock_kernel, H=H, W=W, padl=padl)

    out_slab = pl.pallas_call(
        kernel,
        out_shape=jax.ShapeDtypeStruct((N, C, L), x.dtype),
        grid_spec=pltpu.PrefetchScalarGridSpec(
            num_scalar_prefetch=0,
            grid=(N,),   # one sample per step; grid length == N (>= 2 -> both v7x cores busy)
            in_specs=[
                pl.BlockSpec((None, C, P), lambda n: (n, 0, 0)),   # x (per-sample tile)
                pl.BlockSpec((9, C, C), lambda n: (0, 0, 0)),      # conv1 taps
                pl.BlockSpec((C, 1), lambda n: (0, 0)),            # conv1 bias
                pl.BlockSpec((9, C, C), lambda n: (0, 0, 0)),      # conv2 taps
                pl.BlockSpec((C, 1), lambda n: (0, 0)),            # conv2 bias
                pl.BlockSpec((1, L), lambda n: (0, 0)),            # interior-column mask
            ],
            out_specs=pl.BlockSpec((None, C, L), lambda n: (n, 0, 0)),
            scratch_shapes=[pltpu.VMEM((C, SW), jnp.float32)],
        ),
        compiler_params=pltpu.CompilerParams(
            dimension_semantics=("parallel",),
            vmem_limit_bytes=vmem_limit,
        ),
    )(x_pad, w1r, b1r, w2r, b2r, mask)

    # Drop the inter-row junk columns: pad the slab to full padded rows, reshape into
    # (H, Wp) rows and keep the first W columns of each row.
    out = jnp.pad(out_slab, ((0, 0), (0, 0), (0, Wp - W)))
    return out.reshape(N, C, H, Wp)[..., :W]


def _reference(x, w1, b1, w2, b2):
    # Pure-JAX reference mirroring the PyTorch ResBlock (mode='CRC').
    dn = ("NCHW", "OIHW", "NCHW")
    h = jax.lax.conv_general_dilated(x, w1, (1, 1), "SAME", dimension_numbers=dn,
                                     precision=jax.lax.Precision.HIGHEST)
    h = jnp.maximum(h + b1[None, :, None, None], 0.0)
    r = jax.lax.conv_general_dilated(h, w2, (1, 1), "SAME", dimension_numbers=dn,
                                     precision=jax.lax.Precision.HIGHEST)
    r = r + b2[None, :, None, None]
    return x + r


if __name__ == "__main__":
    # ResBlock defaults: in_channels == out_channels == 64, 3x3 conv, pad=1, bias=True.
    N, C, H, W = 2, 64, 16, 16

    key = jax.random.PRNGKey(0)
    kx, k1, kb1, k2, kb2 = jax.random.split(key, 5)
    x = jax.random.normal(kx, (N, C, H, W), dtype=jnp.float32)
    w1 = jax.random.normal(k1, (C, C, 3, 3), dtype=jnp.float32) * 0.05
    b1 = jax.random.normal(kb1, (C,), dtype=jnp.float32) * 0.1
    w2 = jax.random.normal(k2, (C, C, 3, 3), dtype=jnp.float32) * 0.05
    b2 = jax.random.normal(kb2, (C,), dtype=jnp.float32) * 0.1

    out = jax.block_until_ready(res_block(x, w1, b1, w2, b2))
    ref = _reference(x, w1, b1, w2, b2)

    assert out.shape == (N, C, H, W)
    max_err = float(jnp.max(jnp.abs(out - ref)))
    assert jnp.allclose(out, ref, atol=2e-3, rtol=2e-3), (
        f"mismatch vs reference (max abs err={max_err})")

    print("KERNEL_OK")
</pallas_src>

<mosaic_0001>
module attributes {stable_mosaic.version = 11 : i64} {
  func.func @_resblock_kernel(%arg0: i32, %arg1: memref<1x64x324xf32, #tpu.memory_space<vmem>>, %arg2: memref<9x64x64xf32, #tpu.memory_space<vmem>>, %arg3: memref<64x1xf32, #tpu.memory_space<vmem>>, %arg4: memref<9x64x64xf32, #tpu.memory_space<vmem>>, %arg5: memref<64x1xf32, #tpu.memory_space<vmem>>, %arg6: memref<1x286xf32, #tpu.memory_space<vmem>>, %arg7: memref<1x64x286xf32, #tpu.memory_space<vmem>>, %arg8: memref<64x433xf32, #tpu.memory_space<vmem>>) attributes {dimension_semantics = [#tpu.dimension_semantics<parallel>], iteration_bounds = array<i64: 2>, scalar_prefetch = 0 : i64, scratch_operands = 1 : i64, tpu.core_type = #tpu.core_type<tc>, window_params = [{transform_indices = @transform_0, window_bounds = array<i64: 1, 64, 324>}, {pipeline_mode = #tpu.pipeline_mode<synchronous>, transform_indices = @transform_1, window_bounds = array<i64: 9, 64, 64>}, {pipeline_mode = #tpu.pipeline_mode<synchronous>, transform_indices = @transform_2, window_bounds = array<i64: 64, 1>}, {pipeline_mode = #tpu.pipeline_mode<synchronous>, transform_indices = @transform_3, window_bounds = array<i64: 9, 64, 64>}, {pipeline_mode = #tpu.pipeline_mode<synchronous>, transform_indices = @transform_4, window_bounds = array<i64: 64, 1>}, {pipeline_mode = #tpu.pipeline_mode<synchronous>, transform_indices = @transform_5, window_bounds = array<i64: 1, 286>}, {transform_indices = @transform_6, window_bounds = array<i64: 1, 64, 286>}]} {
    %cst = arith.constant 0.000000e+00 : f32
    %0 = vector.broadcast %cst : f32 to vector<64x286xf32>
    %c0 = arith.constant 0 : index
    %c0_0 = arith.constant 0 : index
    %c0_1 = arith.constant 0 : index
    %1 = vector.load %arg2[%c0, %c0_0, %c0_1] : memref<9x64x64xf32, #tpu.memory_space<vmem>>, vector<1x64x64xf32>
    %2 = vector.shape_cast %1 : vector<1x64x64xf32> to vector<64x64xf32>
    %c0_2 = arith.constant 0 : index
    %c0_3 = arith.constant 0 : index
    %c0_4 = arith.constant 0 : index
    %3 = vector.load %arg1[%c0_2, %c0_3, %c0_4] : memref<1x64x324xf32, #tpu.memory_space<vmem>>, vector<1x64x286xf32>
    %4 = vector.shape_cast %3 : vector<1x64x286xf32> to vector<64x286xf32>
    %cst_5 = arith.constant dense<0.000000e+00> : vector<64x286xf32>
    %5 = tpu.matmul %2, %4, %cst_5 {dimension_numbers = #tpu.dot_dimension_numbers<[1], [0], [0], [1], [0, 0, 1, 1], [], []>} : vector<64x64xf32>, vector<64x286xf32>, vector<64x286xf32> -> vector<64x286xf32>
    %6 = arith.addf %0, %5 : vector<64x286xf32>
    %c1 = arith.constant 1 : index
    %c0_6 = arith.constant 0 : index
    %c0_7 = arith.constant 0 : index
    %7 = vector.load %arg2[%c1, %c0_6, %c0_7] : memref<9x64x64xf32, #tpu.memory_space<vmem>>, vector<1x64x64xf32>
    %8 = vector.shape_cast %7 : vector<1x64x64xf32> to vector<64x64xf32>
    %c0_8 = arith.constant 0 : index
    %c0_9 = arith.constant 0 : index
    %c1_10 = arith.constant 1 : index
    %9 = vector.load %arg1[%c0_8, %c0_9, %c1_10] : memref<1x64x324xf32, #tpu.memory_space<vmem>>, vector<1x64x286xf32>
    %10 = vector.shape_cast %9 : vector<1x64x286xf32> to vector<64x286xf32>
    %cst_11 = arith.constant dense<0.000000e+00> : vector<64x286xf32>
    %11 = tpu.matmul %8, %10, %cst_11 {dimension_numbers = #tpu.dot_dimension_numbers<[1], [0], [0], [1], [0, 0, 1, 1], [], []>} : vector<64x64xf32>, vector<64x286xf32>, vector<64x286xf32> -> vector<64x286xf32>
    %12 = arith.addf %6, %11 : vector<64x286xf32>
    %c2 = arith.constant 2 : index
    %c0_12 = arith.constant 0 : index
    %c0_13 = arith.constant 0 : index
    %13 = vector.load %arg2[%c2, %c0_12, %c0_13] : memref<9x64x64xf32, #tpu.memory_space<vmem>>, vector<1x64x64xf32>
    %14 = vector.shape_cast %13 : vector<1x64x64xf32> to vector<64x64xf32>
    %c0_14 = arith.constant 0 : index
    %c0_15 = arith.constant 0 : index
    %c2_16 = arith.constant 2 : index
    %15 = vector.load %arg1[%c0_14, %c0_15, %c2_16] : memref<1x64x324xf32, #tpu.memory_space<vmem>>, vector<1x64x286xf32>
    %16 = vector.shape_cast %15 : vector<1x64x286xf32> to vector<64x286xf32>
    %cst_17 = arith.constant dense<0.000000e+00> : vector<64x286xf32>
    %17 = tpu.matmul %14, %16, %cst_17 {dimension_numbers = #tpu.dot_dimension_numbers<[1], [0], [0], [1], [0, 0, 1, 1], [], []>} : vector<64x64xf32>, vector<64x286xf32>, vector<64x286xf32> -> vector<64x286xf32>
    %18 = arith.addf %12, %17 : vector<64x286xf32>
    %c3 = arith.constant 3 : index
    %c0_18 = arith.constant 0 : index
    %c0_19 = arith.constant 0 : index
    %19 = vector.load %arg2[%c3, %c0_18, %c0_19] : memref<9x64x64xf32, #tpu.memory_space<vmem>>, vector<1x64x64xf32>
    %20 = vector.shape_cast %19 : vector<1x64x64xf32> to vector<64x64xf32>
    %c0_20 = arith.constant 0 : index
    %c0_21 = arith.constant 0 : index
    %c18 = arith.constant 18 : index
    %21 = vector.load %arg1[%c0_20, %c0_21, %c18] : memref<1x64x324xf32, #tpu.memory_space<vmem>>, vector<1x64x286xf32>
    %22 = vector.shape_cast %21 : vector<1x64x286xf32> to vector<64x286xf32>
    %cst_22 = arith.constant dense<0.000000e+00> : vector<64x286xf32>
    %23 = tpu.matmul %20, %22, %cst_22 {dimension_numbers = #tpu.dot_dimension_numbers<[1], [0], [0], [1], [0, 0, 1, 1], [], []>} : vector<64x64xf32>, vector<64x286xf32>, vector<64x286xf32> -> vector<64x286xf32>
    %24 = arith.addf %18, %23 : vector<64x286xf32>
    %c4 = arith.constant 4 : index
    %c0_23 = arith.constant 0 : index
    %c0_24 = arith.constant 0 : index
    %25 = vector.load %arg2[%c4, %c0_23, %c0_24] : memref<9x64x64xf32, #tpu.memory_space<vmem>>, vector<1x64x64xf32>
    %26 = vector.shape_cast %25 : vector<1x64x64xf32> to vector<64x64xf32>
    %c0_25 = arith.constant 0 : index
    %c0_26 = arith.constant 0 : index
    %c19 = arith.constant 19 : index
    %27 = vector.load %arg1[%c0_25, %c0_26, %c19] : memref<1x64x324xf32, #tpu.memory_space<vmem>>, vector<1x64x286xf32>
    %28 = vector.shape_cast %27 : vector<1x64x286xf32> to vector<64x286xf32>
    %cst_27 = arith.constant dense<0.000000e+00> : vector<64x286xf32>
    %29 = tpu.matmul %26, %28, %cst_27 {dimension_numbers = #tpu.dot_dimension_numbers<[1], [0], [0], [1], [0, 0, 1, 1], [], []>} : vector<64x64xf32>, vector<64x286xf32>, vector<64x286xf32> -> vector<64x286xf32>
    %30 = arith.addf %24, %29 : vector<64x286xf32>
    %c5 = arith.constant 5 : index
    %c0_28 = arith.constant 0 : index
    %c0_29 = arith.constant 0 : index
    %31 = vector.load %arg2[%c5, %c0_28, %c0_29] : memref<9x64x64xf32, #tpu.memory_space<vmem>>, vector<1x64x64xf32>
    %32 = vector.shape_cast %31 : vector<1x64x64xf32> to vector<64x64xf32>
    %c0_30 = arith.constant 0 : index
    %c0_31 = arith.constant 0 : index
    %c20 = arith.constant 20 : index
    %33 = vector.load %arg1[%c0_30, %c0_31, %c20] : memref<1x64x324xf32, #tpu.memory_space<vmem>>, vector<1x64x286xf32>
    %34 = vector.shape_cast %33 : vector<1x64x286xf32> to vector<64x286xf32>
    %cst_32 = arith.constant dense<0.000000e+00> : vector<64x286xf32>
    %35 = tpu.matmul %32, %34, %cst_32 {dimension_numbers = #tpu.dot_dimension_numbers<[1], [0], [0], [1], [0, 0, 1, 1], [], []>} : vector<64x64xf32>, vector<64x286xf32>, vector<64x286xf32> -> vector<64x286xf32>
    %36 = arith.addf %30, %35 : vector<64x286xf32>
    %c6 = arith.constant 6 : index
    %c0_33 = arith.constant 0 : index
    %c0_34 = arith.constant 0 : index
    %37 = vector.load %arg2[%c6, %c0_33, %c0_34] : memref<9x64x64xf32, #tpu.memory_space<vmem>>, vector<1x64x64xf32>
    %38 = vector.shape_cast %37 : vector<1x64x64xf32> to vector<64x64xf32>
    %c0_35 = arith.constant 0 : index
    %c0_36 = arith.constant 0 : index
    %c36 = arith.constant 36 : index
    %39 = vector.load %arg1[%c0_35, %c0_36, %c36] : memref<1x64x324xf32, #tpu.memory_space<vmem>>, vector<1x64x286xf32>
    %40 = vector.shape_cast %39 : vector<1x64x286xf32> to vector<64x286xf32>
    %cst_37 = arith.constant dense<0.000000e+00> : vector<64x286xf32>
    %41 = tpu.matmul %38, %40, %cst_37 {dimension_numbers = #tpu.dot_dimension_numbers<[1], [0], [0], [1], [0, 0, 1, 1], [], []>} : vector<64x64xf32>, vector<64x286xf32>, vector<64x286xf32> -> vector<64x286xf32>
    %42 = arith.addf %36, %41 : vector<64x286xf32>
    %c7 = arith.constant 7 : index
    %c0_38 = arith.constant 0 : index
    %c0_39 = arith.constant 0 : index
    %43 = vector.load %arg2[%c7, %c0_38, %c0_39] : memref<9x64x64xf32, #tpu.memory_space<vmem>>, vector<1x64x64xf32>
    %44 = vector.shape_cast %43 : vector<1x64x64xf32> to vector<64x64xf32>
    %c0_40 = arith.constant 0 : index
    %c0_41 = arith.constant 0 : index
    %c37 = arith.constant 37 : index
    %45 = vector.load %arg1[%c0_40, %c0_41, %c37] : memref<1x64x324xf32, #tpu.memory_space<vmem>>, vector<1x64x286xf32>
    %46 = vector.shape_cast %45 : vector<1x64x286xf32> to vector<64x286xf32>
    %cst_42 = arith.constant dense<0.000000e+00> : vector<64x286xf32>
    %47 = tpu.matmul %44, %46, %cst_42 {dimension_numbers = #tpu.dot_dimension_numbers<[1], [0], [0], [1], [0, 0, 1, 1], [], []>} : vector<64x64xf32>, vector<64x286xf32>, vector<64x286xf32> -> vector<64x286xf32>
    %48 = arith.addf %42, %47 : vector<64x286xf32>
    %c8 = arith.constant 8 : index
    %c0_43 = arith.constant 0 : index
    %c0_44 = arith.constant 0 : index
    %49 = vector.load %arg2[%c8, %c0_43, %c0_44] : memref<9x64x64xf32, #tpu.memory_space<vmem>>, vector<1x64x64xf32>
    %50 = vector.shape_cast %49 : vector<1x64x64xf32> to vector<64x64xf32>
    %c0_45 = arith.constant 0 : index
    %c0_46 = arith.constant 0 : index
    %c38 = arith.constant 38 : index
    %51 = vector.load %arg1[%c0_45, %c0_46, %c38] : memref<1x64x324xf32, #tpu.memory_space<vmem>>, vector<1x64x286xf32>
    %52 = vector.shape_cast %51 : vector<1x64x286xf32> to vector<64x286xf32>
    %cst_47 = arith.constant dense<0.000000e+00> : vector<64x286xf32>
    %53 = tpu.matmul %50, %52, %cst_47 {dimension_numbers = #tpu.dot_dimension_numbers<[1], [0], [0], [1], [0, 0, 1, 1], [], []>} : vector<64x64xf32>, vector<64x286xf32>, vector<64x286xf32> -> vector<64x286xf32>
    %54 = arith.addf %48, %53 : vector<64x286xf32>
    %c0_48 = arith.constant 0 : index
    %c0_49 = arith.constant 0 : index
    %55 = vector.load %arg3[%c0_48, %c0_49] : memref<64x1xf32, #tpu.memory_space<vmem>>, vector<64x1xf32>
    %56 = vector.broadcast %55 : vector<64x1xf32> to vector<64x286xf32>
    %57 = arith.addf %54, %56 : vector<64x286xf32>
    %cst_50 = arith.constant 0.000000e+00 : f32
    %58 = vector.broadcast %cst_50 : f32 to vector<64x286xf32>
    %59 = arith.maximumf %57, %58 : vector<64x286xf32>
    %cst_51 = arith.constant 0.000000e+00 : f32
    %60 = vector.broadcast %cst_51 : f32 to vector<64x433xf32>
    %c0_52 = arith.constant 0 : index
    %c0_53 = arith.constant 0 : index
    %61 = vector.load %arg8[%c0_52, %c0_53] : memref<64x433xf32, #tpu.memory_space<vmem>>, vector<64x433xf32>
    tpu.vector_store %arg8[%c0_52, %c0_53], %60 {strides = array<i32>} : memref<64x433xf32, #tpu.memory_space<vmem>>, vector<64x433xf32>,
    %c0_54 = arith.constant 0 : index
    %c0_55 = arith.constant 0 : index
    %62 = vector.load %arg6[%c0_54, %c0_55] : memref<1x286xf32, #tpu.memory_space<vmem>>, vector<1x286xf32>
    %63 = vector.broadcast %62 : vector<1x286xf32> to vector<64x286xf32>
    %64 = arith.mulf %59, %63 : vector<64x286xf32>
    %c0_56 = arith.constant 0 : index
    %c128 = arith.constant 128 : index
    %65 = vector.load %arg8[%c0_56, %c128] : memref<64x433xf32, #tpu.memory_space<vmem>>, vector<64x286xf32>
    tpu.vector_store %arg8[%c0_56, %c128], %64 {strides = array<i32>} : memref<64x433xf32, #tpu.memory_space<vmem>>, vector<64x286xf32>,
    %cst_57 = arith.constant 0.000000e+00 : f32
    %66 = vector.broadcast %cst_57 : f32 to vector<64x286xf32>
    %c0_58 = arith.constant 0 : index
    %c0_59 = arith.constant 0 : index
    %c0_60 = arith.constant 0 : index
    %67 = vector.load %arg4[%c0_58, %c0_59, %c0_60] : memref<9x64x64xf32, #tpu.memory_space<vmem>>, vector<1x64x64xf32>
    %68 = vector.shape_cast %67 : vector<1x64x64xf32> to vector<64x64xf32>
    %c0_61 = arith.constant 0 : index
    %c109 = arith.constant 109 : index
    %69 = vector.load %arg8[%c0_61, %c109] : memref<64x433xf32, #tpu.memory_space<vmem>>, vector<64x286xf32>
    %cst_62 = arith.constant dense<0.000000e+00> : vector<64x286xf32>
    %70 = tpu.matmul %68, %69, %cst_62 {dimension_numbers = #tpu.dot_dimension_numbers<[1], [0], [0], [1], [0, 0, 1, 1], [], []>} : vector<64x64xf32>, vector<64x286xf32>, vector<64x286xf32> -> vector<64x286xf32>
    %71 = arith.addf %66, %70 : vector<64x286xf32>
    %c1_63 = arith.constant 1 : index
    %c0_64 = arith.constant 0 : index
    %c0_65 = arith.constant 0 : index
    %72 = vector.load %arg4[%c1_63, %c0_64, %c0_65] : memref<9x64x64xf32, #tpu.memory_space<vmem>>, vector<1x64x64xf32>
    %73 = vector.shape_cast %72 : vector<1x64x64xf32> to vector<64x64xf32>
    %c0_66 = arith.constant 0 : index
    %c110 = arith.constant 110 : index
    %74 = vector.load %arg8[%c0_66, %c110] : memref<64x433xf32, #tpu.memory_space<vmem>>, vector<64x286xf32>
    %cst_67 = arith.constant dense<0.000000e+00> : vector<64x286xf32>
    %75 = tpu.matmul %73, %74, %cst_67 {dimension_numbers = #tpu.dot_dimension_numbers<[1], [0], [0], [1], [0, 0, 1, 1], [], []>} : vector<64x64xf32>, vector<64x286xf32>, vector<64x286xf32> -> vector<64x286xf32>
    %76 = arith.addf %71, %75 : vector<64x286xf32>
    %c2_68 = arith.constant 2 : index
    %c0_69 = arith.constant 0 : index
    %c0_70 = arith.constant 0 : index
    %77 = vector.load %arg4[%c2_68, %c0_69, %c0_70] : memref<9x64x64xf32, #tpu.memory_space<vmem>>, vector<1x64x64xf32>
    %78 = vector.shape_cast %77 : vector<1x64x64xf32> to vector<64x64xf32>
    %c0_71 = arith.constant 0 : index
    %c111 = arith.constant 111 : index
    %79 = vector.load %arg8[%c0_71, %c111] : memref<64x433xf32, #tpu.memory_space<vmem>>, vector<64x286xf32>
    %cst_72 = arith.constant dense<0.000000e+00> : vector<64x286xf32>
    %80 = tpu.matmul %78, %79, %cst_72 {dimension_numbers = #tpu.dot_dimension_numbers<[1], [0], [0], [1], [0, 0, 1, 1], [], []>} : vector<64x64xf32>, vector<64x286xf32>, vector<64x286xf32> -> vector<64x286xf32>
    %81 = arith.addf %76, %80 : vector<64x286xf32>
    %c3_73 = arith.constant 3 : index
    %c0_74 = arith.constant 0 : index
    %c0_75 = arith.constant 0 : index
    %82 = vector.load %arg4[%c3_73, %c0_74, %c0_75] : memref<9x64x64xf32, #tpu.memory_space<vmem>>, vector<1x64x64xf32>
    %83 = vector.shape_cast %82 : vector<1x64x64xf32> to vector<64x64xf32>
    %c0_76 = arith.constant 0 : index
    %c127 = arith.constant 127 : index
    %84 = vector.load %arg8[%c0_76, %c127] : memref<64x433xf32, #tpu.memory_space<vmem>>, vector<64x286xf32>
    %cst_77 = arith.constant dense<0.000000e+00> : vector<64x286xf32>
    %85 = tpu.matmul %83, %84, %cst_77 {dimension_numbers = #tpu.dot_dimension_numbers<[1], [0], [0], [1], [0, 0, 1, 1], [], []>} : vector<64x64xf32>, vector<64x286xf32>, vector<64x286xf32> -> vector<64x286xf32>
    %86 = arith.addf %81, %85 : vector<64x286xf32>
    %c4_78 = arith.constant 4 : index
    %c0_79 = arith.constant 0 : index
    %c0_80 = arith.constant 0 : index
    %87 = vector.load %arg4[%c4_78, %c0_79, %c0_80] : memref<9x64x64xf32, #tpu.memory_space<vmem>>, vector<1x64x64xf32>
    %88 = vector.shape_cast %87 : vector<1x64x64xf32> to vector<64x64xf32>
    %c0_81 = arith.constant 0 : index
    %c128_82 = arith.constant 128 : index
    %89 = vector.load %arg8[%c0_81, %c128_82] : memref<64x433xf32, #tpu.memory_space<vmem>>, vector<64x286xf32>
    %cst_83 = arith.constant dense<0.000000e+00> : vector<64x286xf32>
    %90 = tpu.matmul %88, %89, %cst_83 {dimension_numbers = #tpu.dot_dimension_numbers<[1], [0], [0], [1], [0, 0, 1, 1], [], []>} : vector<64x64xf32>, vector<64x286xf32>, vector<64x286xf32> -> vector<64x286xf32>
    %91 = arith.addf %86, %90 : vector<64x286xf32>
    %c5_84 = arith.constant 5 : index
    %c0_85 = arith.constant 0 : index
    %c0_86 = arith.constant 0 : index
    %92 = vector.load %arg4[%c5_84, %c0_85, %c0_86] : memref<9x64x64xf32, #tpu.memory_space<vmem>>, vector<1x64x64xf32>
    %93 = vector.shape_cast %92 : vector<1x64x64xf32> to vector<64x64xf32>
    %c0_87 = arith.constant 0 : index
    %c129 = arith.constant 129 : index
    %94 = vector.load %arg8[%c0_87, %c129] : memref<64x433xf32, #tpu.memory_space<vmem>>, vector<64x286xf32>
    %cst_88 = arith.constant dense<0.000000e+00> : vector<64x286xf32>
    %95 = tpu.matmul %93, %94, %cst_88 {dimension_numbers = #tpu.dot_dimension_numbers<[1], [0], [0], [1], [0, 0, 1, 1], [], []>} : vector<64x64xf32>, vector<64x286xf32>, vector<64x286xf32> -> vector<64x286xf32>
    %96 = arith.addf %91, %95 : vector<64x286xf32>
    %c6_89 = arith.constant 6 : index
    %c0_90 = arith.constant 0 : index
    %c0_91 = arith.constant 0 : index
    %97 = vector.load %arg4[%c6_89, %c0_90, %c0_91] : memref<9x64x64xf32, #tpu.memory_space<vmem>>, vector<1x64x64xf32>
    %98 = vector.shape_cast %97 : vector<1x64x64xf32> to vector<64x64xf32>
    %c0_92 = arith.constant 0 : index
    %c145 = arith.constant 145 : index
    %99 = vector.load %arg8[%c0_92, %c145] : memref<64x433xf32, #tpu.memory_space<vmem>>, vector<64x286xf32>
    %cst_93 = arith.constant dense<0.000000e+00> : vector<64x286xf32>
    %100 = tpu.matmul %98, %99, %cst_93 {dimension_numbers = #tpu.dot_dimension_numbers<[1], [0], [0], [1], [0, 0, 1, 1], [], []>} : vector<64x64xf32>, vector<64x286xf32>, vector<64x286xf32> -> vector<64x286xf32>
    %101 = arith.addf %96, %100 : vector<64x286xf32>
    %c7_94 = arith.constant 7 : index
    %c0_95 = arith.constant 0 : index
    %c0_96 = arith.constant 0 : index
    %102 = vector.load %arg4[%c7_94, %c0_95, %c0_96] : memref<9x64x64xf32, #tpu.memory_space<vmem>>, vector<1x64x64xf32>
    %103 = vector.shape_cast %102 : vector<1x64x64xf32> to vector<64x64xf32>
    %c0_97 = arith.constant 0 : index
    %c146 = arith.constant 146 : index
    %104 = vector.load %arg8[%c0_97, %c146] : memref<64x433xf32, #tpu.memory_space<vmem>>, vector<64x286xf32>
    %cst_98 = arith.constant dense<0.000000e+00> : vector<64x286xf32>
    %105 = tpu.matmul %103, %104, %cst_98 {dimension_numbers = #tpu.dot_dimension_numbers<[1], [0], [0], [1], [0, 0, 1, 1], [], []>} : vector<64x64xf32>, vector<64x286xf32>, vector<64x286xf32> -> vector<64x286xf32>
    %106 = arith.addf %101, %105 : vector<64x286xf32>
    %c8_99 = arith.constant 8 : index
    %c0_100 = arith.constant 0 : index
    %c0_101 = arith.constant 0 : index
    %107 = vector.load %arg4[%c8_99, %c0_100, %c0_101] : memref<9x64x64xf32, #tpu.memory_space<vmem>>, vector<1x64x64xf32>
    %108 = vector.shape_cast %107 : vector<1x64x64xf32> to vector<64x64xf32>
    %c0_102 = arith.constant 0 : index
    %c147 = arith.constant 147 : index
    %109 = vector.load %arg8[%c0_102, %c147] : memref<64x433xf32, #tpu.memory_space<vmem>>, vector<64x286xf32>
    %cst_103 = arith.constant dense<0.000000e+00> : vector<64x286xf32>
    %110 = tpu.matmul %108, %109, %cst_103 {dimension_numbers = #tpu.dot_dimension_numbers<[1], [0], [0], [1], [0, 0, 1, 1], [], []>} : vector<64x64xf32>, vector<64x286xf32>, vector<64x286xf32> -> vector<64x286xf32>
    %111 = arith.addf %106, %110 : vector<64x286xf32>
    %c0_104 = arith.constant 0 : index
    %c0_105 = arith.constant 0 : index
    %112 = vector.load %arg5[%c0_104, %c0_105] : memref<64x1xf32, #tpu.memory_space<vmem>>, vector<64x1xf32>
    %113 = vector.broadcast %112 : vector<64x1xf32> to vector<64x286xf32>
    %114 = arith.addf %111, %113 : vector<64x286xf32>
    %c0_106 = arith.constant 0 : index
    %c0_107 = arith.constant 0 : index
    %c19_108 = arith.constant 19 : index
    %115 = vector.load %arg1[%c0_106, %c0_107, %c19_108] : memref<1x64x324xf32, #tpu.memory_space<vmem>>, vector<1x64x286xf32>
    %116 = vector.shape_cast %115 : vector<1x64x286xf32> to vector<64x286xf32>
    %117 = arith.addf %116, %114 : vector<64x286xf32>
    %c0_109 = arith.constant 0 : index
    %c0_110 = arith.constant 0 : index
    %c0_111 = arith.constant 0 : index
    %118 = vector.load %arg7[%c0_109, %c0_110, %c0_111] : memref<1x64x286xf32, #tpu.memory_space<vmem>>, vector<1x64x286xf32>
    %119 = vector.shape_cast %118 : vector<1x64x286xf32> to vector<64x286xf32>
    %120 = vector.shape_cast %117 : vector<64x286xf32> to vector<1x64x286xf32>
    tpu.vector_store %arg7[%c0_109, %c0_110, %c0_111], %120 {strides = array<i32>} : memref<1x64x286xf32, #tpu.memory_space<vmem>>, vector<1x64x286xf32>,
    return
  }
  func.func @transform_0(%arg0: i32) -> (i32, i32, i32) {
    %c0_i32 = arith.constant 0 : i32
    %c0_i32_0 = arith.constant 0 : i32
    %c0_i32_1 = arith.constant 0 : i32
    return %arg0, %c0_i32, %c0_i32_0 : i32, i32, i32
  }
  func.func @transform_1(%arg0: i32) -> (i32, i32, i32) {
    %c0_i32 = arith.constant 0 : i32
    %c0_i32_0 = arith.constant 0 : i32
    %c0_i32_1 = arith.constant 0 : i32
    %c0_i32_2 = arith.constant 0 : i32
    return %c0_i32, %c0_i32_0, %c0_i32_1 : i32, i32, i32
  }
  func.func @transform_2(%arg0: i32) -> (i32, i32) {
    %c0_i32 = arith.constant 0 : i32
    %c0_i32_0 = arith.constant 0 : i32
    %c0_i32_1 = arith.constant 0 : i32
    return %c0_i32, %c0_i32_0 : i32, i32
  }
  func.func @transform_3(%arg0: i32) -> (i32, i32, i32) {
    %c0_i32 = arith.constant 0 : i32
    %c0_i32_0 = arith.constant 0 : i32
    %c0_i32_1 = arith.constant 0 : i32
    %c0_i32_2 = arith.constant 0 : i32
    return %c0_i32, %c0_i32_0, %c0_i32_1 : i32, i32, i32
  }
  func.func @transform_4(%arg0: i32) -> (i32, i32) {
    %c0_i32 = arith.constant 0 : i32
    %c0_i32_0 = arith.constant 0 : i32
    %c0_i32_1 = arith.constant 0 : i32
    return %c0_i32, %c0_i32_0 : i32, i32
  }
  func.func @transform_5(%arg0: i32) -> (i32, i32) {
    %c0_i32 = arith.constant 0 : i32
    %c0_i32_0 = arith.constant 0 : i32
    %c0_i32_1 = arith.constant 0 : i32
    return %c0_i32, %c0_i32_0 : i32, i32
  }
  func.func @transform_6(%arg0: i32) -> (i32, i32, i32) {
    %c0_i32 = arith.constant 0 : i32
    %c0_i32_0 = arith.constant 0 : i32
    %c0_i32_1 = arith.constant 0 : i32
    return %arg0, %c0_i32, %c0_i32_0 : i32, i32, i32
  }
}

</mosaic_0001>

<llo_original>
// kernel: tpu_custom_call.1
$region0: #{tpu_custom_call.1}
  #allocation0 [shape = 'u32[]', space=smem, size = 0x4, offset = 0x4, fixed_abs, tag = 'smem constant byte address 0x4 - core index']
  #allocation1 [shape = 'u32[144,128]{1,0:T(1,128)}', space=vmem, size = 0x12000, scoped, tag = 'internal scratch']
  #allocation2 [shape = 'f32[64,433]{1,0:T(8,128)}', space=vmem, size = 0x20000, scoped, tag = 'scratch operand']
  %s0 = inlined_call_operand.hbm [shape: f32[2,64,324], index: 0, kind: input, shape index: {}]
  %s1 = inlined_call_operand.hbm [shape: f32[9,64,64], index: 1, kind: input, shape index: {}]
  %s2 = inlined_call_operand.vmem [shape: f32[64,1], index: 2, kind: input, shape index: {}]
  %s3 = inlined_call_operand.hbm [shape: f32[9,64,64], index: 3, kind: input, shape index: {}]
  %s4 = inlined_call_operand.vmem [shape: f32[64,1], index: 4, kind: input, shape index: {}]
  %s5 = inlined_call_operand.vmem [shape: f32[1,286], index: 5, kind: input, shape index: {}]
  %s6 = inlined_call_operand.hbm [shape: f32[2,64,286], index: 6, kind: output, shape index: {}]
  %s7 = sld [smem:[#allocation0]]
  $region69: #{tpu_custom_call.1} parent=0
    _
  %s9 = ssub.s32 1, %s7
  %s10 = scalar_select 0, %s9, %s7
  $region1: #{tpu_custom_call.1} parent=0
    #allocation3 [shape = 'u8[196608]{0}', space=vmem, size = 0x30000, scoped, tag = 'input window, operand 0']
    #allocation4 [shape = 's32[2]{0}', space=sflag, size = 0x8, scoped, tag = 'scoped memory for tpu_custom_call.1']
    #allocation5 [shape = 's32[2]{0}', space=sflag, size = 0x8, scoped, tag = 'scoped memory for tpu_custom_call.1']
    #allocation6 [shape = 'u8[294912]{0}', space=vmem, size = 0x48000, scoped, tag = 'input window, operand 1, single buffered']
    #allocation7 [shape = 's32[1]{0}', space=sflag, size = 0x4, scoped, tag = 'scoped memory for tpu_custom_call.1']
    #allocation8 [shape = 'u8[294912]{0}', space=vmem, size = 0x48000, scoped, tag = 'input window, operand 3, single buffered']
    #allocation9 [shape = 'u8[196608]{0}', space=vmem, size = 0x30000, scoped, tag = 'output window, operand 0']
    %11 = vsyncpa [#allocation4], 0
    %s12 = scalar_lea.sflag [#allocation4], 1
    %13 = vsyncpa %s12, 0
    %14 = vsyncpa [#allocation7], 0
    %15 = vsyncpa [#allocation5], 0
    %s16 = scalar_lea.sflag [#allocation5], 1
    %17 = vsyncpa %s16, 0
    loop: start=0, step=1, limit=4
    $region2: #{tpu_custom_call.1} parent=1 // loop_pre_header
      _
    $region3: #{tpu_custom_call.1} parent=1 // loop_header
      %s19 = sphi 0, %s23
      %p20 = scmp.ge.s32.totalorder %s19, 4
      %s29 = sphi 0, %s31
      %s32 = sphi 0, %s29
      %s33 = sphi 0, %s32
      %s49 = sphi 0, %s33
      %s53 = sphi 0, %s53
      %s55 = sphi 0, %s53
      %s56 = sphi 0, %s55
      %s70 = sphi 0, %s56
      %s74 = sphi 0, %s74
      %s76 = sphi 0, %s74
      %s77 = sphi 0, %s76
      %s91 = sphi 0, %s77
      %s95 = sphi 0, %s95
      %s97 = sphi 0, %s95
      %s98 = sphi 0, %s97
      %s112 = sphi 0, %s98
      %s116 = sphi 0, %s116
      %s118 = sphi 0, %s116
      %s119 = sphi 0, %s118
      %s133 = sphi 0, %s119
      %s137 = sphi 0, %s137
      %s139 = sphi 0, %s137
      %s140 = sphi 0, %s139
      %s154 = sphi 0, %s140
      %s160 = sphi 0, %s162
      %s163 = sphi 0, %s160
      %s164 = sphi 0, %s163
      %s180 = sphi 0, %s164
    $region4: #{tpu_custom_call.1} parent=1 // loop_header_branch
      %22 = sbr.rel (%p20) target = $region8
    $region5: #{tpu_custom_call.1} parent=1 // loop_body
      %s24 = ssub.s32 %s19, 1
      %s25 = ssub.s32 %s19, 2
      %s26 = sadd.s32 %s19, 1
      %s27 = ssub.s32 %s19, %s26
      %p28 = scmp.eq.s32.totalorder %s27, 0
      %s30 = sadd.s32 %s29, 1
      %s31 = scalar_select %p28, %s29, %s30
      %p34 = pneg %p28
      %p35 = scmp.eq.s32.totalorder %s19, 1
      %p36 = por %p34, %p35
      %p37 = scmp.ne.s32.totalorder %s29, %s32
      %p38 = scmp.eq.s32.totalorder %s19, 0
      %p39 = por %p37, %p38
      %p40 = scmp.ne.s32.totalorder %s29, %s32
      %p41 = scmp.eq.s32.totalorder %s24, 1
      %p42 = por %p40, %p41
      %p43 = scmp.ne.s32.totalorder %s32, %s33
      %p44 = scmp.eq.s32.totalorder %s24, 0
      %p45 = por %p43, %p44
      %p46 = scmp.ne.s32.totalorder %s32, %s33
      %p47 = scmp.eq.s32.totalorder %s25, 1
      %p48 = por %p46, %p47
      %p50 = scmp.ne.s32.totalorder %s33, %s49
      %p51 = scmp.eq.s32.totalorder %s25, 0
      %p52 = por %p50, %p51
      %s54 = sadd.s32 %s53, 1
      %p57 = scmp.eq.s32.totalorder %s19, 1
      %p58 = scmp.ne.s32.totalorder %s53, %s55
      %p59 = scmp.eq.s32.totalorder %s19, 0
      %p60 = por %p58, %p59
      %p61 = scmp.ne.s32.totalorder %s53, %s55
      %p62 = scmp.eq.s32.totalorder %s24, 1
      %p63 = por %p61, %p62
      %p64 = scmp.ne.s32.totalorder %s55, %s56
      %p65 = scmp.eq.s32.totalorder %s24, 0
      %p66 = por %p64, %p65
      %p67 = scmp.ne.s32.totalorder %s55, %s56
      %p68 = scmp.eq.s32.totalorder %s25, 1
      %p69 = por %p67, %p68
      %p71 = scmp.ne.s32.totalorder %s56, %s70
      %p72 = scmp.eq.s32.totalorder %s25, 0
      %p73 = por %p71, %p72
      %s75 = sadd.s32 %s74, 1
      %p78 = scmp.eq.s32.totalorder %s19, 1
      %p79 = scmp.ne.s32.totalorder %s74, %s76
      %p80 = scmp.eq.s32.totalorder %s19, 0
      %p81 = por %p79, %p80
      %p82 = scmp.ne.s32.totalorder %s74, %s76
      %p83 = scmp.eq.s32.totalorder %s24, 1
      %p84 = por %p82, %p83
      %p85 = scmp.ne.s32.totalorder %s76, %s77
      %p86 = scmp.eq.s32.totalorder %s24, 0
      %p87 = por %p85, %p86
      %p88 = scmp.ne.s32.totalorder %s76, %s77
      %p89 = scmp.eq.s32.totalorder %s25, 1
      %p90 = por %p88, %p89
      %p92 = scmp.ne.s32.totalorder %s77, %s91
      %p93 = scmp.eq.s32.totalorder %s25, 0
      %p94 = por %p92, %p93
      %s96 = sadd.s32 %s95, 1
      %p99 = scmp.eq.s32.totalorder %s19, 1
      %p100 = scmp.ne.s32.totalorder %s95, %s97
      %p101 = scmp.eq.s32.totalorder %s19, 0
      %p102 = por %p100, %p101
      %p103 = scmp.ne.s32.totalorder %s95, %s97
      %p104 = scmp.eq.s32.totalorder %s24, 1
      %p105 = por %p103, %p104
      %p106 = scmp.ne.s32.totalorder %s97, %s98
      %p107 = scmp.eq.s32.totalorder %s24, 0
      %p108 = por %p106, %p107
      %p109 = scmp.ne.s32.totalorder %s97, %s98
      %p110 = scmp.eq.s32.totalorder %s25, 1
      %p111 = por %p109, %p110
      %p113 = scmp.ne.s32.totalorder %s98, %s112
      %p114 = scmp.eq.s32.totalorder %s25, 0
      %p115 = por %p113, %p114
      %s117 = sadd.s32 %s116, 1
      %p120 = scmp.eq.s32.totalorder %s19, 1
      %p121 = scmp.ne.s32.totalorder %s116, %s118
      %p122 = scmp.eq.s32.totalorder %s19, 0
      %p123 = por %p121, %p122
      %p124 = scmp.ne.s32.totalorder %s116, %s118
      %p125 = scmp.eq.s32.totalorder %s24, 1
      %p126 = por %p124, %p125
      %p127 = scmp.ne.s32.totalorder %s118, %s119
      %p128 = scmp.eq.s32.totalorder %s24, 0
      %p129 = por %p127, %p128
      %p130 = scmp.ne.s32.totalorder %s118, %s119
      %p131 = scmp.eq.s32.totalorder %s25, 1
      %p132 = por %p130, %p131
      %p134 = scmp.ne.s32.totalorder %s119, %s133
      %p135 = scmp.eq.s32.totalorder %s25, 0
      %p136 = por %p134, %p135
      %s138 = sadd.s32 %s137, 1
      %p141 = scmp.eq.s32.totalorder %s19, 1
      %p142 = scmp.ne.s32.totalorder %s137, %s139
      %p143 = scmp.eq.s32.totalorder %s19, 0
      %p144 = por %p142, %p143
      %p145 = scmp.ne.s32.totalorder %s137, %s139
      %p146 = scmp.eq.s32.totalorder %s24, 1
      %p147 = por %p145, %p146
      %p148 = scmp.ne.s32.totalorder %s139, %s140
      %p149 = scmp.eq.s32.totalorder %s24, 0
      %p150 = por %p148, %p149
      %p151 = scmp.ne.s32.totalorder %s139, %s140
      %p152 = scmp.eq.s32.totalorder %s25, 1
      %p153 = por %p151, %p152
      %p155 = scmp.ne.s32.totalorder %s140, %s154
      %p156 = scmp.eq.s32.totalorder %s25, 0
      %p157 = por %p155, %p156
      %s158 = ssub.s32 %s19, %s26
      %p159 = scmp.eq.s32.totalorder %s158, 0
      %s161 = sadd.s32 %s160, 1
      %s162 = scalar_select %p159, %s160, %s161
      %p165 = pneg %p159
      %p166 = scmp.eq.s32.totalorder %s19, 1
      %p167 = por %p165, %p166
      %p168 = scmp.ne.s32.totalorder %s160, %s163
      %p169 = scmp.eq.s32.totalorder %s19, 0
      %p170 = por %p168, %p169
      %p171 = scmp.ne.s32.totalorder %s160, %s163
      %p172 = scmp.eq.s32.totalorder %s24, 1
      %p173 = por %p171, %p172
      %p174 = scmp.ne.s32.totalorder %s163, %s164
      %p175 = scmp.eq.s32.totalorder %s24, 0
      %p176 = por %p174, %p175
      %p177 = scmp.ne.s32.totalorder %s163, %s164
      %p178 = scmp.eq.s32.totalorder %s25, 1
      %p179 = por %p177, %p178
      %p181 = scmp.ne.s32.totalorder %s164, %s180
      %p182 = scmp.eq.s32.totalorder %s25, 0
      %p183 = por %p181, %p182
      %p184 = scmp.le.s32.totalorder 1, %s19
      %p185 = scmp.lt.s32.totalorder %s19, 3
      %p186 = pnand %p184, %p185
      %p187 = pneg %p186
      // Predicated region
      $region9: #{tpu_custom_call.1} parent=5 // pred_check
        _
      $region10: #{tpu_custom_call.1} parent=5 // pred_check_branch
        %189 = sbr.rel (%p186) target = $region12
      $region11: #{tpu_custom_call.1} parent=5 // pred_region
        %s190 = ssub.s32 %s19, 1
        // Predicated region
        $region13: #{tpu_custom_call.1} parent=11 // pred_check
          %p191 = pneg %p66
        $region14: #{tpu_custom_call.1} parent=11 // pred_check_branch
          %193 = sbr.rel (%p191) target = $region16
        $region15: #{tpu_custom_call.1} parent=11 // pred_region
          %s195 = ssub.s32 9216, 9216
          %196 = vsyncadd [#allocation7], %s195
          %s197 = sshll.u32 [#allocation6], 4
          %s198 = int_to_ptr.vmem [resolvable:$true] %s197
          %203 = dma.hbm_to_vmem [thread:$0]  %s1, 9216, %s198, [#allocation7], 128, 128, 8
        $region16: #{tpu_custom_call.1} parent=11 // pred_fallthru
          _
        // Predicated region
        $region17: #{tpu_custom_call.1} parent=11 // pred_check
          %p204 = pneg %p87
        $region18: #{tpu_custom_call.1} parent=11 // pred_check_branch
          %206 = sbr.rel (%p204) target = $region20
        $region19: #{tpu_custom_call.1} parent=11 // pred_region
          _
        $region20: #{tpu_custom_call.1} parent=11 // pred_fallthru
          _
        // Predicated region
        $region21: #{tpu_custom_call.1} parent=11 // pred_check
          %p207 = pneg %p108
        $region22: #{tpu_custom_call.1} parent=11 // pred_check_branch
          %209 = sbr.rel (%p207) target = $region24
        $region23: #{tpu_custom_call.1} parent=11 // pred_region
          %s211 = ssub.s32 9216, 9216
          %212 = vsyncadd [#allocation7], %s211
          %s213 = sshll.u32 [#allocation8], 4
          %s214 = int_to_ptr.vmem [resolvable:$true] %s213
          %219 = dma.hbm_to_vmem [thread:$0]  %s3, 9216, %s214, [#allocation7], 128, 128, 8
        $region24: #{tpu_custom_call.1} parent=11 // pred_fallthru
          _
        // Predicated region
        $region25: #{tpu_custom_call.1} parent=11 // pred_check
          %p220 = pneg %p129
        $region26: #{tpu_custom_call.1} parent=11 // pred_check_branch
          %222 = sbr.rel (%p220) target = $region28
        $region27: #{tpu_custom_call.1} parent=11 // pred_region
          _
        $region28: #{tpu_custom_call.1} parent=11 // pred_fallthru
          _
        // Predicated region
        $region29: #{tpu_custom_call.1} parent=11 // pred_check
          %p223 = pneg %p150
        $region30: #{tpu_custom_call.1} parent=11 // pred_check_branch
          %225 = sbr.rel (%p223) target = $region32
        $region31: #{tpu_custom_call.1} parent=11 // pred_region
          _
        $region32: #{tpu_custom_call.1} parent=11 // pred_fallthru
          _
      $region12: #{tpu_custom_call.1} parent=5 // pred_fallthru
        _
      %p226 = scmp.lt.s32.totalorder %s19, 2
      // Predicated region
      $region33: #{tpu_custom_call.1} parent=5 // pred_check
        %p227 = pneg %p226
      $region34: #{tpu_custom_call.1} parent=5 // pred_check_branch
        %229 = sbr.rel (%p227) target = $region36
      $region35: #{tpu_custom_call.1} parent=5 // pred_region
        // Predicated region
        $region37: #{tpu_custom_call.1} parent=35 // pred_check
          %p230 = pneg %p39
        $region38: #{tpu_custom_call.1} parent=35 // pred_check_branch
          %232 = sbr.rel (%p230) target = $region40
        $region39: #{tpu_custom_call.1} parent=35 // pred_region
          %s233 = sand.u32 %s29, 1
          %s234 = scalar_lea.sflag [#allocation4], %s233
          %s235 = sand.u32 %s29, 1
          %s236 = smul.addr %s235, 192
          %s237 = scalar_lea.vmem [#allocation3], %s236
          %s239 = ssub.s32 3072, 3072
          %240 = vsyncadd %s234, %s239
          %s241 = smul.addr %s19, 24
          %s242 = smul.addr %s241, 128
          %s243 = scalar_lea.hbm %s0, %s242
          %s244 = sshll.u32 %s237, 4
          %s245 = int_to_ptr.vmem [resolvable:$true] %s244
          %250 = dma.hbm_to_vmem [thread:$0]  %s243, 3072, %s245, %s234, 384, 384, 24
        $region40: #{tpu_custom_call.1} parent=35 // pred_fallthru
          _
      $region36: #{tpu_custom_call.1} parent=5 // pred_fallthru
        _
      %p251 = scmp.le.s32.totalorder 1, %s19
      %p252 = scmp.lt.s32.totalorder %s19, 3
      %p253 = pnand %p251, %p252
      %p254 = pneg %p253
      // Predicated region
      $region41: #{tpu_custom_call.1} parent=5 // pred_check
        _
      $region42: #{tpu_custom_call.1} parent=5 // pred_check_branch
        %256 = sbr.rel (%p253) target = $region44
      $region43: #{tpu_custom_call.1} parent=5 // pred_region
        %s257 = ssub.s32 %s19, 1
        %s258 = sand.u32 %s32, 1
        %s259 = scalar_lea.sflag [#allocation4], %s258
        %s260 = sand.u32 %s32, 1
        %s261 = smul.addr %s260, 192
        %s262 = scalar_lea.vmem [#allocation3], %s261
        // Predicated region
        $region45: #{tpu_custom_call.1} parent=43 // pred_check
          %p263 = pneg %p45
        $region46: #{tpu_custom_call.1} parent=43 // pred_check_branch
          %265 = sbr.rel (%p263) target = $region48
        $region47: #{tpu_custom_call.1} parent=43 // pred_region
          %266 = dma.done %s259, 3072
        $region48: #{tpu_custom_call.1} parent=43 // pred_fallthru
          _
        // Predicated region
        $region49: #{tpu_custom_call.1} parent=43 // pred_check
          %p267 = pneg %p66
        $region50: #{tpu_custom_call.1} parent=43 // pred_check_branch
          %269 = sbr.rel (%p267) target = $region52
        $region51: #{tpu_custom_call.1} parent=43 // pred_region
          %270 = dma.done [#allocation7], 9216
        $region52: #{tpu_custom_call.1} parent=43 // pred_fallthru
          _
        // Predicated region
        $region53: #{tpu_custom_call.1} parent=43 // pred_check
          %p271 = pneg %p108
        $region54: #{tpu_custom_call.1} parent=43 // pred_check_branch
          %273 = sbr.rel (%p271) target = $region56
        $region55: #{tpu_custom_call.1} parent=43 // pred_region
          %274 = dma.done [#allocation7], 9216
        $region56: #{tpu_custom_call.1} parent=43 // pred_fallthru
          _
        %s275 = sand.u32 %s32, 1
        %s276 = scalar_lea.sflag [#allocation4], %s275
        %s277 = sand.u32 %s32, 1
        %s278 = smul.addr %s277, 192
        %s279 = scalar_lea.vmem [#allocation3], %s278
        %p280 = pneg %p45
        %p281 = pneg %p42
        %p282 = pneg %p66
        %p283 = pneg %p63
        %p284 = pneg %p87
        %p285 = pneg %p84
        %p286 = pneg %p108
        %p287 = pneg %p105
        %p288 = pneg %p129
        %p289 = pneg %p126
        %p290 = pneg %p150
        %p291 = pneg %p147
        %p292 = pneg %p176
        %p293 = pneg %p173
        %s294 = sand.u32 %s163, 1
        %s295 = scalar_lea.sflag [#allocation5], %s294
        %s296 = sand.u32 %s163, 1
        %s297 = smul.addr %s296, 192
        %s298 = scalar_lea.vmem [#allocation9], %s297
        %v299 = vld [vmem:[#allocation6] sm:$0xff]
        %v300 = vld [vmem:[#allocation6 + $0x8] sm:$0xff]
        %v301 = vld [vmem:[#allocation6 + $0x10] sm:$0xff]
        %v302 = vld [vmem:[#allocation6 + $0x18] sm:$0xff]
        %v303 = vld [vmem:[#allocation6 + $0x20] sm:$0xff]
        %v304 = vld [vmem:[#allocation6 + $0x28] sm:$0xff]
        %v305 = vld [vmem:[#allocation6 + $0x30] sm:$0xff]
        %v306 = vld [vmem:[#allocation6 + $0x38] sm:$0xff]
        %v307 = vld [vmem:[%s262] sm:$0xff]
        %v308 = vld [vmem:[%s262 + $0x8] sm:$0xff]
        %v309 = vld [vmem:[%s262 + $0x10] sm:$0xff]
        %v310 = vld [vmem:[%s262 + $0x18] sm:$0xff]
        %v311 = vld [vmem:[%s262 + $0x20] sm:$0xff]
        %v312 = vld [vmem:[%s262 + $0x28] sm:$0xff]
        %v313 = vld [vmem:[%s262 + $0x30] sm:$0xff]
        %v314 = vld [vmem:[%s262 + $0x38] sm:$0xff]
        %v315 = vld [vmem:[%s262 + $0x40] sm:$0xff]
        %v316 = vld [vmem:[%s262 + $0x48] sm:$0xff]
        %v317 = vld [vmem:[%s262 + $0x50] sm:$0xff]
        %v318 = vld [vmem:[%s262 + $0x58] sm:$0xff]
        %v319 = vld [vmem:[%s262 + $0x60] sm:$0xff]
        %v320 = vld [vmem:[%s262 + $0x68] sm:$0xff]
        %v321 = vld [vmem:[%s262 + $0x70] sm:$0xff]
        %v322 = vld [vmem:[%s262 + $0x78] sm:$0xff]
        %v323 = vld [vmem:[%s262 + $0x80] sm:$0xff]
        %v324 = vld [vmem:[%s262 + $0x88] sm:$0xff]
        %v325 = vld [vmem:[%s262 + $0x90] sm:$0xff]
        %v326 = vld [vmem:[%s262 + $0x98] sm:$0xff]
        %v327 = vld [vmem:[%s262 + $0xa0] sm:$0xff]
        %v328 = vld [vmem:[%s262 + $0xa8] sm:$0xff]
        %v329 = vld [vmem:[%s262 + $0xb0] sm:$0xff]
        %v330 = vld [vmem:[%s262 + $0xb8] sm:$0xff]
        %s331 = scalar_lea.vmem [#allocation6], 64
        %v332 = vld [vmem:[%s331] sm:$0xff]
        %v333 = vld [vmem:[%s331 + $0x8] sm:$0xff]
        %v334 = vld [vmem:[%s331 + $0x10] sm:$0xff]
        %v335 = vld [vmem:[%s331 + $0x18] sm:$0xff]
        %v336 = vld [vmem:[%s331 + $0x20] sm:$0xff]
        %v337 = vld [vmem:[%s331 + $0x28] sm:$0xff]
        %v338 = vld [vmem:[%s331 + $0x30] sm:$0xff]
        %v339 = vld [vmem:[%s331 + $0x38] sm:$0xff]
        %364 = vrot.lane.b32.xlu0 %v307, 127
        %v365 = vpop.permute.xlu0 %364
        %366 = vrot.lane.b32.xlu0 %v308, 127
        %v367 = vpop.permute.xlu0 %366
        %368 = vrot.lane.b32.xlu0 %v309, 127
        %v369 = vpop.permute.xlu0 %368
        %370 = vrot.lane.b32.xlu0 %v310, 127
        %v371 = vpop.permute.xlu0 %370
        %372 = vrot.lane.b32.xlu0 %v311, 127
        %v373 = vpop.permute.xlu0 %372
        %374 = vrot.lane.b32.xlu0 %v312, 127
        %v375 = vpop.permute.xlu0 %374
        %376 = vrot.lane.b32.xlu0 %v313, 127
        %v377 = vpop.permute.xlu0 %376
        %378 = vrot.lane.b32.xlu0 %v314, 127
        %v379 = vpop.permute.xlu0 %378
        %380 = vrot.lane.b32.xlu0 %v315, 127
        %v381 = vpop.permute.xlu0 %380
        %382 = vrot.lane.b32.xlu0 %v316, 127
        %v383 = vpop.permute.xlu0 %382
        %384 = vrot.lane.b32.xlu0 %v317, 127
        %v385 = vpop.permute.xlu0 %384
        %386 = vrot.lane.b32.xlu0 %v318, 127
        %v387 = vpop.permute.xlu0 %386
        %388 = vrot.lane.b32.xlu0 %v319, 127
        %v389 = vpop.permute.xlu0 %388
        %390 = vrot.lane.b32.xlu0 %v320, 127
        %v391 = vpop.permute.xlu0 %390
        %392 = vrot.lane.b32.xlu0 %v321, 127
        %v393 = vpop.permute.xlu0 %392
        %394 = vrot.lane.b32.xlu0 %v322, 127
        %v395 = vpop.permute.xlu0 %394
        %396 = vrot.lane.b32.xlu0 %v323, 127
        %v397 = vpop.permute.xlu0 %396
        %398 = vrot.lane.b32.xlu0 %v324, 127
        %v399 = vpop.permute.xlu0 %398
        %400 = vrot.lane.b32.xlu0 %v325, 127
        %v401 = vpop.permute.xlu0 %400
        %402 = vrot.lane.b32.xlu0 %v326, 127
        %v403 = vpop.permute.xlu0 %402
        %404 = vrot.lane.b32.xlu0 %v327, 127
        %v405 = vpop.permute.xlu0 %404
        %406 = vrot.lane.b32.xlu0 %v328, 127
        %v407 = vpop.permute.xlu0 %406
        %408 = vrot.lane.b32.xlu0 %v329, 127
        %v409 = vpop.permute.xlu0 %408
        %410 = vrot.lane.b32.xlu0 %v330, 127
        %v411 = vpop.permute.xlu0 %410
        %vm412 = vcmask 1039360
        %v413 = vsel %vm412, %v365, %v367
        %v414 = vsel %vm412, %v367, %v369
        %v415 = vsel %vm412, %v371, %v373
        %v416 = vsel %vm412, %v373, %v375
        %v417 = vsel %vm412, %v377, %v379
        %v418 = vsel %vm412, %v379, %v381
        %v419 = vsel %vm412, %v383, %v385
        %v420 = vsel %vm412, %v385, %v387
        %v421 = vsel %vm412, %v389, %v391
        %v422 = vsel %vm412, %v391, %v393
        %v423 = vsel %vm412, %v395, %v397
        %v424 = vsel %vm412, %v397, %v399
        %v425 = vsel %vm412, %v401, %v403
        %v426 = vsel %vm412, %v403, %v405
        %v427 = vsel %vm412, %v407, %v409
        %v428 = vsel %vm412, %v409, %v411
        %vm453 = vcmask 523264
        %v455 = vsel %vm453, %v332, 0
        %v458 = vsel %vm453, %v333, 0
        %v461 = vsel %vm453, %v334, 0
        %v464 = vsel %vm453, %v335, 0
        %v467 = vsel %vm453, %v336, 0
        %v470 = vsel %vm453, %v337, 0
        %v473 = vsel %vm453, %v338, 0
        %v476 = vsel %vm453, %v339, 0
        %478 = vmatprep.subr.mxu0 %v414
        %479 = vmatpush1.msra.mxu0 %v413
        %480 = vmatprep.subr.mxu0 %v416
        %481 = vmatpush1.msra.mxu0 %v415
        %482 = vmatprep.subr.mxu0 %v418
        %483 = vmatpush1.msra.mxu0 %v417
        %484 = vmatprep.subr.mxu0 %v420
        %485 = vmatpush1.msra.mxu0 %v419
        %486 = vmatprep.subr.mxu0 %v422
        %487 = vmatpush1.msra.mxu0 %v421
        %488 = vmatprep.subr.mxu0 %v424
        %489 = vmatpush1.msra.mxu0 %v423
        %490 = vmatprep.subr.mxu0 %v426
        %491 = vmatpush1.msra.mxu0 %v425
        %492 = vmatprep.subr.mxu0 %v428
        %493 = vmatpush1.msra.mxu0 %v427
        %494 = vmatprep.subr.mxu0 0.0
        %495 = vmatpush1.msra.mxu0 0.0
        %496 = vmatprep.subr.mxu0 0.0
        %497 = vmatpush1.msra.mxu0 0.0
        %498 = vmatprep.subr.mxu0 0.0
        %499 = vmatpush1.msra.mxu0 0.0
        %500 = vmatprep.subr.mxu0 0.0
        %501 = vmatpush1.msra.mxu0 0.0
        %502 = vmatprep.subr.mxu0 0.0
        %503 = vmatpush1.msra.mxu0 0.0
        %504 = vmatprep.subr.mxu0 0.0
        %505 = vmatpush1.msra.mxu0 0.0
        %506 = vmatprep.subr.mxu0 0.0
        %507 = vmatpush1.msra.mxu0 0.0
        %508 = vmatprep.subr.mxu0 0.0
        %509 = vmatpush1.msra.mxu0 0.0
        %510 = vmatprep.subr.mxu0 0.0
        %511 = vmatpush1.msra.mxu0 0.0
        %512 = vmatprep.subr.mxu0 0.0
        %513 = vmatpush1.msra.mxu0 0.0
        %514 = vmatprep.subr.mxu0 0.0
        %515 = vmatpush1.msra.mxu0 0.0
        %516 = vmatprep.subr.mxu0 0.0
        %517 = vmatpush1.msra.mxu0 0.0
        %518 = vmatprep.subr.mxu0 0.0
        %519 = vmatpush1.msra.mxu0 0.0
        %520 = vmatprep.subr.mxu0 0.0
        %521 = vmatpush1.msra.mxu0 0.0
        %522 = vmatprep.subr.mxu0 0.0
        %523 = vmatpush1.msra.mxu0 0.0
        %524 = vmatprep.subr.mxu0 0.0
        %525 = vmatpush1.msra.mxu0 0.0
        %526 = vmatprep.subr.mxu0 0.0
        %527 = vmatpush1.msra.mxu0 0.0
        %528 = vmatprep.subr.mxu0 0.0
        %529 = vmatpush1.msra.mxu0 0.0
        %530 = vmatprep.subr.mxu0 0.0
        %531 = vmatpush1.msra.mxu0 0.0
        %532 = vmatprep.subr.mxu0 0.0
        %533 = vmatpush1.msra.mxu0 0.0
        %534 = vmatprep.subr.mxu0 0.0
        %535 = vmatpush1.msra.mxu0 0.0
        %536 = vmatprep.subr.mxu0 0.0
        %537 = vmatpush1.msra.mxu0 0.0
        %538 = vmatprep.subr.mxu0 0.0
        %539 = vmatpush1.msra.mxu0 0.0
        %540 = vmatprep.subr.mxu0 0.0
        %541 = vmatpush1.msra.mxu0 0.0
        %542 = vmatprep.mubr.f32.mxu0 0.0
        %543 = vmatmul.mubr.f32.gmra.mrb[0].mxu0 %v455
        %v544 = vpop.f32.mrb[0].mxu0
        %v545 = vadd.f32 0.0, %v544
        %v546 = vpop.f32.mrb[0].mxu0
        %v547 = vadd.f32 0.0, %v546
        %548 = vmatprep.mubr.f32.mxu0 0.0
        %549 = vmatmul.mubr.f32.gmra.mrb[0].mxu0 %v458
        %v550 = vpop.f32.mrb[0].mxu0
        %v551 = vadd.f32 0.0, %v550
        %v552 = vpop.f32.mrb[0].mxu0
        %v553 = vadd.f32 0.0, %v552
        %554 = vmatprep.mubr.f32.mxu0 0.0
        %555 = vmatmul.mubr.f32.gmra.mrb[0].mxu0 %v461
        %v556 = vpop.f32.mrb[0].mxu0
        %v557 = vadd.f32 0.0, %v556
        %v558 = vpop.f32.mrb[0].mxu0
        %v559 = vadd.f32 0.0, %v558
        %560 = vmatprep.mubr.f32.mxu0 0.0
        %561 = vmatmul.mubr.f32.gmra.mrb[0].mxu0 %v464
        %v562 = vpop.f32.mrb[0].mxu0
        %v563 = vadd.f32 0.0, %v562
        %v564 = vpop.f32.mrb[0].mxu0
        %v565 = vadd.f32 0.0, %v564
        %566 = vmatprep.mubr.f32.mxu0 0.0
        %567 = vmatmul.mubr.f32.gmra.mrb[0].mxu0 %v467
        %v568 = vpop.f32.mrb[0].mxu0
        %v569 = vadd.f32 0.0, %v568
        %v570 = vpop.f32.mrb[0].mxu0
        %v571 = vadd.f32 0.0, %v570
        %572 = vmatprep.mubr.f32.mxu0 0.0
        %573 = vmatmul.mubr.f32.gmra.mrb[0].mxu0 %v470
        %v574 = vpop.f32.mrb[0].mxu0
        %v575 = vadd.f32 0.0, %v574
        %v576 = vpop.f32.mrb[0].mxu0
        %v577 = vadd.f32 0.0, %v576
        %578 = vmatprep.mubr.f32.mxu0 0.0
        %579 = vmatmul.mubr.f32.gmra.mrb[0].mxu0 %v473
        %v580 = vpop.f32.mrb[0].mxu0
        %v581 = vadd.f32 0.0, %v580
        %v582 = vpop.f32.mrb[0].mxu0
        %v583 = vadd.f32 0.0, %v582
        %584 = vmatprep.mubr.f32.mxu0 0.0
        %585 = vmatmul.mubr.f32.gmra.mrb[0].mxu0 %v476
        %v586 = vpop.f32.mrb[0].mxu0
        %v587 = vadd.f32 0.0, %v586
        %v588 = vpop.f32.mrb[0].mxu0
        %v589 = vadd.f32 0.0, %v588
        %590 = vdwg.mxu0
        %591 = vmatprep.subr.mxu0 0.0
        %592 = vmatpush1.msra.mxu0 %v369
        %593 = vmatprep.subr.mxu0 0.0
        %594 = vmatpush1.msra.mxu0 %v375
        %595 = vmatprep.subr.mxu0 0.0
        %596 = vmatpush1.msra.mxu0 %v381
        %597 = vmatprep.subr.mxu0 0.0
        %598 = vmatpush1.msra.mxu0 %v387
        %599 = vmatprep.subr.mxu0 0.0
        %600 = vmatpush1.msra.mxu0 %v393
        %601 = vmatprep.subr.mxu0 0.0
        %602 = vmatpush1.msra.mxu0 %v399
        %603 = vmatprep.subr.mxu0 0.0
        %604 = vmatpush1.msra.mxu0 %v405
        %605 = vmatprep.subr.mxu0 0.0
        %606 = vmatpush1.msra.mxu0 %v411
        %607 = vmatprep.subr.mxu0 0.0
        %608 = vmatpush1.msra.mxu0 0.0
        %609 = vmatprep.subr.mxu0 0.0
        %610 = vmatpush1.msra.mxu0 0.0
        %611 = vmatprep.subr.mxu0 0.0
        %612 = vmatpush1.msra.mxu0 0.0
        %613 = vmatprep.subr.mxu0 0.0
        %614 = vmatpush1.msra.mxu0 0.0
        %615 = vmatprep.subr.mxu0 0.0
        %616 = vmatpush1.msra.mxu0 0.0
        %617 = vmatprep.subr.mxu0 0.0
        %618 = vmatpush1.msra.mxu0 0.0
        %619 = vmatprep.subr.mxu0 0.0
        %620 = vmatpush1.msra.mxu0 0.0
        %621 = vmatprep.subr.mxu0 0.0
        %622 = vmatpush1.msra.mxu0 0.0
        %623 = vmatprep.subr.mxu0 0.0
        %624 = vmatpush1.msra.mxu0 0.0
        %625 = vmatprep.subr.mxu0 0.0
        %626 = vmatpush1.msra.mxu0 0.0
        %627 = vmatprep.subr.mxu0 0.0
        %628 = vmatpush1.msra.mxu0 0.0
        %629 = vmatprep.subr.mxu0 0.0
        %630 = vmatpush1.msra.mxu0 0.0
        %631 = vmatprep.subr.mxu0 0.0
        %632 = vmatpush1.msra.mxu0 0.0
        %633 = vmatprep.subr.mxu0 0.0
        %634 = vmatpush1.msra.mxu0 0.0
        %635 = vmatprep.subr.mxu0 0.0
        %636 = vmatpush1.msra.mxu0 0.0
        %637 = vmatprep.subr.mxu0 0.0
        %638 = vmatpush1.msra.mxu0 0.0
        %639 = vmatprep.subr.mxu0 0.0
        %640 = vmatpush1.msra.mxu0 0.0
        %641 = vmatprep.subr.mxu0 0.0
        %642 = vmatpush1.msra.mxu0 0.0
        %643 = vmatprep.subr.mxu0 0.0
        %644 = vmatpush1.msra.mxu0 0.0
        %645 = vmatprep.subr.mxu0 0.0
        %646 = vmatpush1.msra.mxu0 0.0
        %647 = vmatprep.subr.mxu0 0.0
        %648 = vmatpush1.msra.mxu0 0.0
        %649 = vmatprep.subr.mxu0 0.0
        %650 = vmatpush1.msra.mxu0 0.0
        %651 = vmatprep.subr.mxu0 0.0
        %652 = vmatpush1.msra.mxu0 0.0
        %653 = vmatprep.subr.mxu0 0.0
        %654 = vmatpush1.msra.mxu0 0.0
        %655 = vmatprep.mubr.f32.mxu0 0.0
        %656 = vmatmul.mubr.f32.gmra.mrb[0].mxu0 %v455
        %v657 = vpop.f32.mrb[0].mxu0
        %v658 = vadd.f32 0.0, %v657
        %v659 = vpop.f32.mrb[0].mxu0
        %660 = vmatprep.mubr.f32.mxu0 0.0
        %661 = vmatmul.mubr.f32.gmra.mrb[0].mxu0 %v458
        %v662 = vpop.f32.mrb[0].mxu0
        %v663 = vadd.f32 0.0, %v662
        %v664 = vpop.f32.mrb[0].mxu0
        %665 = vmatprep.mubr.f32.mxu0 0.0
        %666 = vmatmul.mubr.f32.gmra.mrb[0].mxu0 %v461
        %v667 = vpop.f32.mrb[0].mxu0
        %v668 = vadd.f32 0.0, %v667
        %v669 = vpop.f32.mrb[0].mxu0
        %670 = vmatprep.mubr.f32.mxu0 0.0
        %671 = vmatmul.mubr.f32.gmra.mrb[0].mxu0 %v464
        %v672 = vpop.f32.mrb[0].mxu0
        %v673 = vadd.f32 0.0, %v672
        %v674 = vpop.f32.mrb[0].mxu0
        %675 = vmatprep.mubr.f32.mxu0 0.0
        %676 = vmatmul.mubr.f32.gmra.mrb[0].mxu0 %v467
        %v677 = vpop.f32.mrb[0].mxu0
        %v678 = vadd.f32 0.0, %v677
        %v679 = vpop.f32.mrb[0].mxu0
        %680 = vmatprep.mubr.f32.mxu0 0.0
        %681 = vmatmul.mubr.f32.gmra.mrb[0].mxu0 %v470
        %v682 = vpop.f32.mrb[0].mxu0
        %v683 = vadd.f32 0.0, %v682
        %v684 = vpop.f32.mrb[0].mxu0
        %685 = vmatprep.mubr.f32.mxu0 0.0
        %686 = vmatmul.mubr.f32.gmra.mrb[0].mxu0 %v473
        %v687 = vpop.f32.mrb[0].mxu0
        %v688 = vadd.f32 0.0, %v687
        %v689 = vpop.f32.mrb[0].mxu0
        %690 = vmatprep.mubr.f32.mxu0 0.0
        %691 = vmatmul.mubr.f32.gmra.mrb[0].mxu0 %v476
        %v692 = vpop.f32.mrb[0].mxu0
        %v693 = vadd.f32 0.0, %v692
        %v694 = vpop.f32.mrb[0].mxu0
        %695 = vdwg.mxu0
        %v697 = vsel %vm453, %v299, 0
        %v700 = vsel %vm453, %v300, 0
        %v703 = vsel %vm453, %v301, 0
        %v706 = vsel %vm453, %v302, 0
        %v709 = vsel %vm453, %v303, 0
        %v712 = vsel %vm453, %v304, 0
        %v715 = vsel %vm453, %v305, 0
        %v718 = vsel %vm453, %v306, 0
        %720 = vmatprep.subr.mxu0 %v308
        %721 = vmatpush1.msra.mxu0 %v307
        %722 = vmatprep.subr.mxu0 %v311
        %723 = vmatpush1.msra.mxu0 %v310
        %724 = vmatprep.subr.mxu0 %v314
        %725 = vmatpush1.msra.mxu0 %v313
        %726 = vmatprep.subr.mxu0 %v317
        %727 = vmatpush1.msra.mxu0 %v316
        %728 = vmatprep.subr.mxu0 %v320
        %729 = vmatpush1.msra.mxu0 %v319
        %730 = vmatprep.subr.mxu0 %v323
        %731 = vmatpush1.msra.mxu0 %v322
        %732 = vmatprep.subr.mxu0 %v326
        %733 = vmatpush1.msra.mxu0 %v325
        %734 = vmatprep.subr.mxu0 %v329
        %735 = vmatpush1.msra.mxu0 %v328
        %736 = vmatprep.subr.mxu0 0.0
        %737 = vmatpush1.msra.mxu0 0.0
        %738 = vmatprep.subr.mxu0 0.0
        %739 = vmatpush1.msra.mxu0 0.0
        %740 = vmatprep.subr.mxu0 0.0
        %741 = vmatpush1.msra.mxu0 0.0
        %742 = vmatprep.subr.mxu0 0.0
        %743 = vmatpush1.msra.mxu0 0.0
        %744 = vmatprep.subr.mxu0 0.0
        %745 = vmatpush1.msra.mxu0 0.0
        %746 = vmatprep.subr.mxu0 0.0
        %747 = vmatpush1.msra.mxu0 0.0
        %748 = vmatprep.subr.mxu0 0.0
        %749 = vmatpush1.msra.mxu0 0.0
        %750 = vmatprep.subr.mxu0 0.0
        %751 = vmatpush1.msra.mxu0 0.0
        %752 = vmatprep.subr.mxu0 0.0
        %753 = vmatpush1.msra.mxu0 0.0
        %754 = vmatprep.subr.mxu0 0.0
        %755 = vmatpush1.msra.mxu0 0.0
        %756 = vmatprep.subr.mxu0 0.0
        %757 = vmatpush1.msra.mxu0 0.0
        %758 = vmatprep.subr.mxu0 0.0
        %759 = vmatpush1.msra.mxu0 0.0
        %760 = vmatprep.subr.mxu0 0.0
        %761 = vmatpush1.msra.mxu0 0.0
        %762 = vmatprep.subr.mxu0 0.0
        %763 = vmatpush1.msra.mxu0 0.0
        %764 = vmatprep.subr.mxu0 0.0
        %765 = vmatpush1.msra.mxu0 0.0
        %766 = vmatprep.subr.mxu0 0.0
        %767 = vmatpush1.msra.mxu0 0.0
        %768 = vmatprep.subr.mxu0 0.0
        %769 = vmatpush1.msra.mxu0 0.0
        %770 = vmatprep.subr.mxu0 0.0
        %771 = vmatpush1.msra.mxu0 0.0
        %772 = vmatprep.subr.mxu0 0.0
        %773 = vmatpush1.msra.mxu0 0.0
        %774 = vmatprep.subr.mxu0 0.0
        %775 = vmatpush1.msra.mxu0 0.0
        %776 = vmatprep.subr.mxu0 0.0
        %777 = vmatpush1.msra.mxu0 0.0
        %778 = vmatprep.subr.mxu0 0.0
        %779 = vmatpush1.msra.mxu0 0.0
        %780 = vmatprep.subr.mxu0 0.0
        %781 = vmatpush1.msra.mxu0 0.0
        %782 = vmatprep.subr.mxu0 0.0
        %783 = vmatpush1.msra.mxu0 0.0
        %784 = vmatprep.mubr.f32.mxu0 0.0
        %785 = vmatmul.mubr.f32.gmra.mrb[0].mxu0 %v697
        %v786 = vpop.f32.mrb[0].mxu0
        %v787 = vadd.f32 %v545, %v786
        %v788 = vpop.f32.mrb[0].mxu0
        %v789 = vadd.f32 %v547, %v788
        %790 = vmatprep.mubr.f32.mxu0 0.0
        %791 = vmatmul.mubr.f32.gmra.mrb[0].mxu0 %v700
        %v792 = vpop.f32.mrb[0].mxu0
        %v793 = vadd.f32 %v551, %v792
        %v794 = vpop.f32.mrb[0].mxu0
        %v795 = vadd.f32 %v553, %v794
        %796 = vmatprep.mubr.f32.mxu0 0.0
        %797 = vmatmul.mubr.f32.gmra.mrb[0].mxu0 %v703
        %v798 = vpop.f32.mrb[0].mxu0
        %v799 = vadd.f32 %v557, %v798
        %v800 = vpop.f32.mrb[0].mxu0
        %v801 = vadd.f32 %v559, %v800
        %802 = vmatprep.mubr.f32.mxu0 0.0
        %803 = vmatmul.mubr.f32.gmra.mrb[0].mxu0 %v706
        %v804 = vpop.f32.mrb[0].mxu0
        %v805 = vadd.f32 %v563, %v804
        %v806 = vpop.f32.mrb[0].mxu0
        %v807 = vadd.f32 %v565, %v806
        %808 = vmatprep.mubr.f32.mxu0 0.0
        %809 = vmatmul.mubr.f32.gmra.mrb[0].mxu0 %v709
        %v810 = vpop.f32.mrb[0].mxu0
        %v811 = vadd.f32 %v569, %v810
        %v812 = vpop.f32.mrb[0].mxu0
        %v813 = vadd.f32 %v571, %v812
        %814 = vmatprep.mubr.f32.mxu0 0.0
        %815 = vmatmul.mubr.f32.gmra.mrb[0].mxu0 %v712
        %v816 = vpop.f32.mrb[0].mxu0
        %v817 = vadd.f32 %v575, %v816
        %v818 = vpop.f32.mrb[0].mxu0
        %v819 = vadd.f32 %v577, %v818
        %820 = vmatprep.mubr.f32.mxu0 0.0
        %821 = vmatmul.mubr.f32.gmra.mrb[0].mxu0 %v715
        %v822 = vpop.f32.mrb[0].mxu0
        %v823 = vadd.f32 %v581, %v822
        %v824 = vpop.f32.mrb[0].mxu0
        %v825 = vadd.f32 %v583, %v824
        %826 = vmatprep.mubr.f32.mxu0 0.0
        %827 = vmatmul.mubr.f32.gmra.mrb[0].mxu0 %v718
        %v828 = vpop.f32.mrb[0].mxu0
        %v829 = vadd.f32 %v587, %v828
        %v830 = vpop.f32.mrb[0].mxu0
        %v831 = vadd.f32 %v589, %v830
        %832 = vdwg.mxu0
        %833 = vmatprep.subr.mxu0 0.0
        %834 = vmatpush1.msra.mxu0 %v309
        %835 = vmatprep.subr.mxu0 0.0
        %836 = vmatpush1.msra.mxu0 %v312
        %837 = vmatprep.subr.mxu0 0.0
        %838 = vmatpush1.msra.mxu0 %v315
        %839 = vmatprep.subr.mxu0 0.0
        %840 = vmatpush1.msra.mxu0 %v318
        %841 = vmatprep.subr.mxu0 0.0
        %842 = vmatpush1.msra.mxu0 %v321
        %843 = vmatprep.subr.mxu0 0.0
        %844 = vmatpush1.msra.mxu0 %v324
        %845 = vmatprep.subr.mxu0 0.0
        %846 = vmatpush1.msra.mxu0 %v327
        %847 = vmatprep.subr.mxu0 0.0
        %848 = vmatpush1.msra.mxu0 %v330
        %849 = vmatprep.subr.mxu0 0.0
        %850 = vmatpush1.msra.mxu0 0.0
        %851 = vmatprep.subr.mxu0 0.0
        %852 = vmatpush1.msra.mxu0 0.0
        %853 = vmatprep.subr.mxu0 0.0
        %854 = vmatpush1.msra.mxu0 0.0
        %855 = vmatprep.subr.mxu0 0.0
        %856 = vmatpush1.msra.mxu0 0.0
        %857 = vmatprep.subr.mxu0 0.0
        %858 = vmatpush1.msra.mxu0 0.0
        %859 = vmatprep.subr.mxu0 0.0
        %860 = vmatpush1.msra.mxu0 0.0
        %861 = vmatprep.subr.mxu0 0.0
        %862 = vmatpush1.msra.mxu0 0.0
        %863 = vmatprep.subr.mxu0 0.0
        %864 = vmatpush1.msra.mxu0 0.0
        %865 = vmatprep.subr.mxu0 0.0
        %866 = vmatpush1.msra.mxu0 0.0
        %867 = vmatprep.subr.mxu0 0.0
        %868 = vmatpush1.msra.mxu0 0.0
        %869 = vmatprep.subr.mxu0 0.0
        %870 = vmatpush1.msra.mxu0 0.0
        %871 = vmatprep.subr.mxu0 0.0
        %872 = vmatpush1.msra.mxu0 0.0
        %873 = vmatprep.subr.mxu0 0.0
        %874 = vmatpush1.msra.mxu0 0.0
        %875 = vmatprep.subr.mxu0 0.0
        %876 = vmatpush1.msra.mxu0 0.0
        %877 = vmatprep.subr.mxu0 0.0
        %878 = vmatpush1.msra.mxu0 0.0
        %879 = vmatprep.subr.mxu0 0.0
        %880 = vmatpush1.msra.mxu0 0.0
        %881 = vmatprep.subr.mxu0 0.0
        %882 = vmatpush1.msra.mxu0 0.0
        %883 = vmatprep.subr.mxu0 0.0
        %884 = vmatpush1.msra.mxu0 0.0
        %885 = vmatprep.subr.mxu0 0.0
        %886 = vmatpush1.msra.mxu0 0.0
        %887 = vmatprep.subr.mxu0 0.0
        %888 = vmatpush1.msra.mxu0 0.0
        %889 = vmatprep.subr.mxu0 0.0
        %890 = vmatpush1.msra.mxu0 0.0
        %891 = vmatprep.subr.mxu0 0.0
        %892 = vmatpush1.msra.mxu0 0.0
        %893 = vmatprep.subr.mxu0 0.0
        %894 = vmatpush1.msra.mxu0 0.0
        %895 = vmatprep.subr.mxu0 0.0
        %896 = vmatpush1.msra.mxu0 0.0
        %897 = vmatprep.mubr.f32.mxu0 0.0
        %898 = vmatmul.mubr.f32.gmra.mrb[0].mxu0 %v697
        %v899 = vpop.f32.mrb[0].mxu0
        %v900 = vadd.f32 %v658, %v899
        %v901 = vpop.f32.mrb[0].mxu0
        %902 = vmatprep.mubr.f32.mxu0 0.0
        %903 = vmatmul.mubr.f32.gmra.mrb[0].mxu0 %v700
        %v904 = vpop.f32.mrb[0].mxu0
        %v905 = vadd.f32 %v663, %v904
        %v906 = vpop.f32.mrb[0].mxu0
        %907 = vmatprep.mubr.f32.mxu0 0.0
        %908 = vmatmul.mubr.f32.gmra.mrb[0].mxu0 %v703
        %v909 = vpop.f32.mrb[0].mxu0
        %v910 = vadd.f32 %v668, %v909
        %v911 = vpop.f32.mrb[0].mxu0
        %912 = vmatprep.mubr.f32.mxu0 0.0
        %913 = vmatmul.mubr.f32.gmra.mrb[0].mxu0 %v706
        %v914 = vpop.f32.mrb[0].mxu0
        %v915 = vadd.f32 %v673, %v914
        %v916 = vpop.f32.mrb[0].mxu0
        %917 = vmatprep.mubr.f32.mxu0 0.0
        %918 = vmatmul.mubr.f32.gmra.mrb[0].mxu0 %v709
        %v919 = vpop.f32.mrb[0].mxu0
        %v920 = vadd.f32 %v678, %v919
        %v921 = vpop.f32.mrb[0].mxu0
        %922 = vmatprep.mubr.f32.mxu0 0.0
        %923 = vmatmul.mubr.f32.gmra.mrb[0].mxu0 %v712
        %v924 = vpop.f32.mrb[0].mxu0
        %v925 = vadd.f32 %v683, %v924
        %v926 = vpop.f32.mrb[0].mxu0
        %927 = vmatprep.mubr.f32.mxu0 0.0
        %928 = vmatmul.mubr.f32.gmra.mrb[0].mxu0 %v715
        %v929 = vpop.f32.mrb[0].mxu0
        %v930 = vadd.f32 %v688, %v929
        %v931 = vpop.f32.mrb[0].mxu0
        %932 = vmatprep.mubr.f32.mxu0 0.0
        %933 = vmatmul.mubr.f32.gmra.mrb[0].mxu0 %v718
        %v934 = vpop.f32.mrb[0].mxu0
        %v935 = vadd.f32 %v693, %v934
        %v936 = vpop.f32.mrb[0].mxu0
        %937 = vdwg.mxu0
        %s938 = scalar_lea.vmem [#allocation6], 128
        %v939 = vld [vmem:[%s938] sm:$0xff]
        %v940 = vld [vmem:[%s938 + $0x8] sm:$0xff]
        %v941 = vld [vmem:[%s938 + $0x10] sm:$0xff]
        %v942 = vld [vmem:[%s938 + $0x18] sm:$0xff]
        %v943 = vld [vmem:[%s938 + $0x20] sm:$0xff]
        %v944 = vld [vmem:[%s938 + $0x28] sm:$0xff]
        %v945 = vld [vmem:[%s938 + $0x30] sm:$0xff]
        %v946 = vld [vmem:[%s938 + $0x38] sm:$0xff]
        %947 = vrot.lane.b32.xlu0 %v307, 126
        %v948 = vpop.permute.xlu0 %947
        %949 = vrot.lane.b32.xlu0 %v308, 126
        %v950 = vpop.permute.xlu0 %949
        %951 = vrot.lane.b32.xlu0 %v309, 126
        %v952 = vpop.permute.xlu0 %951
        %953 = vrot.lane.b32.xlu0 %v310, 126
        %v954 = vpop.permute.xlu0 %953
        %955 = vrot.lane.b32.xlu0 %v311, 126
        %v956 = vpop.permute.xlu0 %955
        %957 = vrot.lane.b32.xlu0 %v312, 126
        %v958 = vpop.permute.xlu0 %957
        %959 = vrot.lane.b32.xlu0 %v313, 126
        %v960 = vpop.permute.xlu0 %959
        %961 = vrot.lane.b32.xlu0 %v314, 126
        %v962 = vpop.permute.xlu0 %961
        %963 = vrot.lane.b32.xlu0 %v315, 126
        %v964 = vpop.permute.xlu0 %963
        %965 = vrot.lane.b32.xlu0 %v316, 126
        %v966 = vpop.permute.xlu0 %965
        %967 = vrot.lane.b32.xlu0 %v317, 126
        %v968 = vpop.permute.xlu0 %967
        %969 = vrot.lane.b32.xlu0 %v318, 126
        %v970 = vpop.permute.xlu0 %969
        %971 = vrot.lane.b32.xlu0 %v319, 126
        %v972 = vpop.permute.xlu0 %971
        %973 = vrot.lane.b32.xlu0 %v320, 126
        %v974 = vpop.permute.xlu0 %973
        %975 = vrot.lane.b32.xlu0 %v321, 126
        %v976 = vpop.permute.xlu0 %975
        %977 = vrot.lane.b32.xlu0 %v322, 126
        %v978 = vpop.permute.xlu0 %977
        %979 = vrot.lane.b32.xlu0 %v323, 126
        %v980 = vpop.permute.xlu0 %979
        %981 = vrot.lane.b32.xlu0 %v324, 126
        %v982 = vpop.permute.xlu0 %981
        %983 = vrot.lane.b32.xlu0 %v325, 126
        %v984 = vpop.permute.xlu0 %983
        %985 = vrot.lane.b32.xlu0 %v326, 126
        %v986 = vpop.permute.xlu0 %985
        %987 = vrot.lane.b32.xlu0 %v327, 126
        %v988 = vpop.permute.xlu0 %987
        %989 = vrot.lane.b32.xlu0 %v328, 126
        %v990 = vpop.permute.xlu0 %989
        %991 = vrot.lane.b32.xlu0 %v329, 126
        %v992 = vpop.permute.xlu0 %991
        %993 = vrot.lane.b32.xlu0 %v330, 126
        %v994 = vpop.permute.xlu0 %993
        %vm995 = vcmask 1031168
        %v996 = vsel %vm995, %v948, %v950
        %v997 = vsel %vm995, %v950, %v952
        %v998 = vsel %vm995, %v954, %v956
        %v999 = vsel %vm995, %v956, %v958
        %v1000 = vsel %vm995, %v960, %v962
        %v1001 = vsel %vm995, %v962, %v964
        %v1002 = vsel %vm995, %v966, %v968
        %v1003 = vsel %vm995, %v968, %v970
        %v1004 = vsel %vm995, %v972, %v974
        %v1005 = vsel %vm995, %v974, %v976
        %v1006 = vsel %vm995, %v978, %v980
        %v1007 = vsel %vm995, %v980, %v982
        %v1008 = vsel %vm995, %v984, %v986
        %v1009 = vsel %vm995, %v986, %v988
        %v1010 = vsel %vm995, %v990, %v992
        %v1011 = vsel %vm995, %v992, %v994
        %v1037 = vsel %vm453, %v939, 0
        %v1040 = vsel %vm453, %v940, 0
        %v1043 = vsel %vm453, %v941, 0
        %v1046 = vsel %vm453, %v942, 0
        %v1049 = vsel %vm453, %v943, 0
        %v1052 = vsel %vm453, %v944, 0
        %v1055 = vsel %vm453, %v945, 0
        %v1058 = vsel %vm453, %v946, 0
        %1060 = vmatprep.subr.mxu0 %v997
        %1061 = vmatpush1.msra.mxu0 %v996
        %1062 = vmatprep.subr.mxu0 %v999
        %1063 = vmatpush1.msra.mxu0 %v998
        %1064 = vmatprep.subr.mxu0 %v1001
        %1065 = vmatpush1.msra.mxu0 %v1000
        %1066 = vmatprep.subr.mxu0 %v1003
        %1067 = vmatpush1.msra.mxu0 %v1002
        %1068 = vmatprep.subr.mxu0 %v1005
        %1069 = vmatpush1.msra.mxu0 %v1004
        %1070 = vmatprep.subr.mxu0 %v1007
        %1071 = vmatpush1.msra.mxu0 %v1006
        %1072 = vmatprep.subr.mxu0 %v1009
        %1073 = vmatpush1.msra.mxu0 %v1008
        %1074 = vmatprep.subr.mxu0 %v1011
        %1075 = vmatpush1.msra.mxu0 %v1010
        %1076 = vmatprep.subr.mxu0 0.0
        %1077 = vmatpush1.msra.mxu0 0.0
        %1078 = vmatprep.subr.mxu0 0.0
        %1079 = vmatpush1.msra.mxu0 0.0
        %1080 = vmatprep.subr.mxu0 0.0
        %1081 = vmatpush1.msra.mxu0 0.0
        %1082 = vmatprep.subr.mxu0 0.0
        %1083 = vmatpush1.msra.mxu0 0.0
        %1084 = vmatprep.subr.mxu0 0.0
        %1085 = vmatpush1.msra.mxu0 0.0
        %1086 = vmatprep.subr.mxu0 0.0
        %1087 = vmatpush1.msra.mxu0 0.0
        %1088 = vmatprep.subr.mxu0 0.0
        %1089 = vmatpush1.msra.mxu0 0.0
        %1090 = vmatprep.subr.mxu0 0.0
        %1091 = vmatpush1.msra.mxu0 0.0
        %1092 = vmatprep.subr.mxu0 0.0
        %1093 = vmatpush1.msra.mxu0 0.0
        %1094 = vmatprep.subr.mxu0 0.0
        %1095 = vmatpush1.msra.mxu0 0.0
        %1096 = vmatprep.subr.mxu0 0.0
        %1097 = vmatpush1.msra.mxu0 0.0
        %1098 = vmatprep.subr.mxu0 0.0
        %1099 = vmatpush1.msra.mxu0 0.0
        %1100 = vmatprep.subr.mxu0 0.0
        %1101 = vmatpush1.msra.mxu0 0.0
        %1102 = vmatprep.subr.mxu0 0.0
        %1103 = vmatpush1.msra.mxu0 0.0
        %1104 = vmatprep.subr.mxu0 0.0
        %1105 = vmatpush1.msra.mxu0 0.0
        %1106 = vmatprep.subr.mxu0 0.0
        %1107 = vmatpush1.msra.mxu0 0.0
        %1108 = vmatprep.subr.mxu0 0.0
        %1109 = vmatpush1.msra.mxu0 0.0
        %1110 = vmatprep.subr.mxu0 0.0
        %1111 = vmatpush1.msra.mxu0 0.0
        %1112 = vmatprep.subr.mxu0 0.0
        %1113 = vmatpush1.msra.mxu0 0.0
        %1114 = vmatprep.subr.mxu0 0.0
        %1115 = vmatpush1.msra.mxu0 0.0
        %1116 = vmatprep.subr.mxu0 0.0
        %1117 = vmatpush1.msra.mxu0 0.0
        %1118 = vmatprep.subr.mxu0 0.0
        %1119 = vmatpush1.msra.mxu0 0.0
        %1120 = vmatprep.subr.mxu0 0.0
        %1121 = vmatpush1.msra.mxu0 0.0
        %1122 = vmatprep.subr.mxu0 0.0
        %1123 = vmatpush1.msra.mxu0 0.0
        %1124 = vmatprep.mubr.f32.mxu0 0.0
        %1125 = vmatmul.mubr.f32.gmra.mrb[0].mxu0 %v1037
        %v1126 = vpop.f32.mrb[0].mxu0
        %v1127 = vadd.f32 0.0, %v1126
        %v1128 = vpop.f32.mrb[0].mxu0
        %v1129 = vadd.f32 0.0, %v1128
        %1130 = vmatprep.mubr.f32.mxu0 0.0
        %1131 = vmatmul.mubr.f32.gmra.mrb[0].mxu0 %v1040
        %v1132 = vpop.f32.mrb[0].mxu0
        %v1133 = vadd.f32 0.0, %v1132
        %v1134 = vpop.f32.mrb[0].mxu0
        %v1135 = vadd.f32 0.0, %v1134
        %1136 = vmatprep.mubr.f32.mxu0 0.0
        %1137 = vmatmul.mubr.f32.gmra.mrb[0].mxu0 %v1043
        %v1138 = vpop.f32.mrb[0].mxu0
        %v1139 = vadd.f32 0.0, %v1138
        %v1140 = vpop.f32.mrb[0].mxu0
        %v1141 = vadd.f32 0.0, %v1140
        %1142 = vmatprep.mubr.f32.mxu0 0.0
        %1143 = vmatmul.mubr.f32.gmra.mrb[0].mxu0 %v1046
        %v1144 = vpop.f32.mrb[0].mxu0
        %v1145 = vadd.f32 0.0, %v1144
        %v1146 = vpop.f32.mrb[0].mxu0
        %v1147 = vadd.f32 0.0, %v1146
        %1148 = vmatprep.mubr.f32.mxu0 0.0
        %1149 = vmatmul.mubr.f32.gmra.mrb[0].mxu0 %v1049
        %v1150 = vpop.f32.mrb[0].mxu0
        %v1151 = vadd.f32 0.0, %v1150
        %v1152 = vpop.f32.mrb[0].mxu0
        %v1153 = vadd.f32 0.0, %v1152
        %1154 = vmatprep.mubr.f32.mxu0 0.0
        %1155 = vmatmul.mubr.f32.gmra.mrb[0].mxu0 %v1052
        %v1156 = vpop.f32.mrb[0].mxu0
        %v1157 = vadd.f32 0.0, %v1156
        %v1158 = vpop.f32.mrb[0].mxu0
        %v1159 = vadd.f32 0.0, %v1158
        %1160 = vmatprep.mubr.f32.mxu0 0.0
        %1161 = vmatmul.mubr.f32.gmra.mrb[0].mxu0 %v1055
        %v1162 = vpop.f32.mrb[0].mxu0
        %v1163 = vadd.f32 0.0, %v1162
        %v1164 = vpop.f32.mrb[0].mxu0
        %v1165 = vadd.f32 0.0, %v1164
        %1166 = vmatprep.mubr.f32.mxu0 0.0
        %1167 = vmatmul.mubr.f32.gmra.mrb[0].mxu0 %v1058
        %v1168 = vpop.f32.mrb[0].mxu0
        %v1169 = vadd.f32 0.0, %v1168
        %v1170 = vpop.f32.mrb[0].mxu0
        %v1171 = vadd.f32 0.0, %v1170
        %1172 = vdwg.mxu0
        %1173 = vmatprep.subr.mxu0 0.0
        %1174 = vmatpush1.msra.mxu0 %v952
        %1175 = vmatprep.subr.mxu0 0.0
        %1176 = vmatpush1.msra.mxu0 %v958
        %1177 = vmatprep.subr.mxu0 0.0
        %1178 = vmatpush1.msra.mxu0 %v964
        %1179 = vmatprep.subr.mxu0 0.0
        %1180 = vmatpush1.msra.mxu0 %v970
        %1181 = vmatprep.subr.mxu0 0.0
        %1182 = vmatpush1.msra.mxu0 %v976
        %1183 = vmatprep.subr.mxu0 0.0
        %1184 = vmatpush1.msra.mxu0 %v982
        %1185 = vmatprep.subr.mxu0 0.0
        %1186 = vmatpush1.msra.mxu0 %v988
        %1187 = vmatprep.subr.mxu0 0.0
        %1188 = vmatpush1.msra.mxu0 %v994
        %1189 = vmatprep.subr.mxu0 0.0
        %1190 = vmatpush1.msra.mxu0 0.0
        %1191 = vmatprep.subr.mxu0 0.0
        %1192 = vmatpush1.msra.mxu0 0.0
        %1193 = vmatprep.subr.mxu0 0.0
        %1194 = vmatpush1.msra.mxu0 0.0
        %1195 = vmatprep.subr.mxu0 0.0
        %1196 = vmatpush1.msra.mxu0 0.0
        %1197 = vmatprep.subr.mxu0 0.0
        %1198 = vmatpush1.msra.mxu0 0.0
        %1199 = vmatprep.subr.mxu0 0.0
        %1200 = vmatpush1.msra.mxu0 0.0
        %1201 = vmatprep.subr.mxu0 0.0
        %1202 = vmatpush1.msra.mxu0 0.0
        %1203 = vmatprep.subr.mxu0 0.0
        %1204 = vmatpush1.msra.mxu0 0.0
        %1205 = vmatprep.subr.mxu0 0.0
        %1206 = vmatpush1.msra.mxu0 0.0
        %1207 = vmatprep.subr.mxu0 0.0
        %1208 = vmatpush1.msra.mxu0 0.0
        %1209 = vmatprep.subr.mxu0 0.0
        %1210 = vmatpush1.msra.mxu0 0.0
        %1211 = vmatprep.subr.mxu0 0.0
        %1212 = vmatpush1.msra.mxu0 0.0
        %1213 = vmatprep.subr.mxu0 0.0
        %1214 = vmatpush1.msra.mxu0 0.0
        %1215 = vmatprep.subr.mxu0 0.0
        %1216 = vmatpush1.msra.mxu0 0.0
        %1217 = vmatprep.subr.mxu0 0.0
        %1218 = vmatpush1.msra.mxu0 0.0
        %1219 = vmatprep.subr.mxu0 0.0
        %1220 = vmatpush1.msra.mxu0 0.0
        %1221 = vmatprep.subr.mxu0 0.0
        %1222 = vmatpush1.msra.mxu0 0.0
        %1223 = vmatprep.subr.mxu0 0.0
        %1224 = vmatpush1.msra.mxu0 0.0
        %1225 = vmatprep.subr.mxu0 0.0
        %1226 = vmatpush1.msra.mxu0 0.0
        %1227 = vmatprep.subr.mxu0 0.0
        %1228 = vmatpush1.msra.mxu0 0.0
        %1229 = vmatprep.subr.mxu0 0.0
        %1230 = vmatpush1.msra.mxu0 0.0
        %1231 = vmatprep.subr.mxu0 0.0
        %1232 = vmatpush1.msra.mxu0 0.0
        %1233 = vmatprep.subr.mxu0 0.0
        %1234 = vmatpush1.msra.mxu0 0.0
        %1235 = vmatprep.subr.mxu0 0.0
        %1236 = vmatpush1.msra.mxu0 0.0
        %1237 = vmatprep.mubr.f32.mxu0 0.0
        %1238 = vmatmul.mubr.f32.gmra.mrb[0].mxu0 %v1037
        %v1239 = vpop.f32.mrb[0].mxu0
        %v1240 = vadd.f32 0.0, %v1239
        %v1241 = vpop.f32.mrb[0].mxu0
        %1242 = vmatprep.mubr.f32.mxu0 0.0
        %1243 = vmatmul.mubr.f32.gmra.mrb[0].mxu0 %v1040
        %v1244 = vpop.f32.mrb[0].mxu0
        %v1245 = vadd.f32 0.0, %v1244
        %v1246 = vpop.f32.mrb[0].mxu0
        %1247 = vmatprep.mubr.f32.mxu0 0.0
        %1248 = vmatmul.mubr.f32.gmra.mrb[0].mxu0 %v1043
        %v1249 = vpop.f32.mrb[0].mxu0
        %v1250 = vadd.f32 0.0, %v1249
        %v1251 = vpop.f32.mrb[0].mxu0
        %1252 = vmatprep.mubr.f32.mxu0 0.0
        %1253 = vmatmul.mubr.f32.gmra.mrb[0].mxu0 %v1046
        %v1254 = vpop.f32.mrb[0].mxu0
        %v1255 = vadd.f32 0.0, %v1254
        %v1256 = vpop.f32.mrb[0].mxu0
        %1257 = vmatprep.mubr.f32.mxu0 0.0
        %1258 = vmatmul.mubr.f32.gmra.mrb[0].mxu0 %v1049
        %v1259 = vpop.f32.mrb[0].mxu0
        %v1260 = vadd.f32 0.0, %v1259
        %v1261 = vpop.f32.mrb[0].mxu0
        %1262 = vmatprep.mubr.f32.mxu0 0.0
        %1263 = vmatmul.mubr.f32.gmra.mrb[0].mxu0 %v1052
        %v1264 = vpop.f32.mrb[0].mxu0
        %v1265 = vadd.f32 0.0, %v1264
        %v1266 = vpop.f32.mrb[0].mxu0
        %1267 = vmatprep.mubr.f32.mxu0 0.0
        %1268 = vmatmul.mubr.f32.gmra.mrb[0].mxu0 %v1055
        %v1269 = vpop.f32.mrb[0].mxu0
        %v1270 = vadd.f32 0.0, %v1269
        %v1271 = vpop.f32.mrb[0].mxu0
        %1272 = vmatprep.mubr.f32.mxu0 0.0
        %1273 = vmatmul.mubr.f32.gmra.mrb[0].mxu0 %v1058
        %v1274 = vpop.f32.mrb[0].mxu0
        %v1275 = vadd.f32 0.0, %v1274
        %v1276 = vpop.f32.mrb[0].mxu0
        %1277 = vdwg.mxu0
        %v1278 = vadd.f32 %v787, %v1127
        %v1279 = vadd.f32 %v789, %v1129
        %v1280 = vadd.f32 %v900, %v1240
        %v1281 = vadd.f32 %v793, %v1133
        %v1282 = vadd.f32 %v795, %v1135
        %v1283 = vadd.f32 %v905, %v1245
        %v1284 = vadd.f32 %v799, %v1139
        %v1285 = vadd.f32 %v801, %v1141
        %v1286 = vadd.f32 %v910, %v1250
        %v1287 = vadd.f32 %v805, %v1145
        %v1288 = vadd.f32 %v807, %v1147
        %v1289 = vadd.f32 %v915, %v1255
        %v1290 = vadd.f32 %v811, %v1151
        %v1291 = vadd.f32 %v813, %v1153
        %v1292 = vadd.f32 %v920, %v1260
        %v1293 = vadd.f32 %v817, %v1157
        %v1294 = vadd.f32 %v819, %v1159
        %v1295 = vadd.f32 %v925, %v1265
        %v1296 = vadd.f32 %v823, %v1163
        %v1297 = vadd.f32 %v825, %v1165
        %v1298 = vadd.f32 %v930, %v1270
        %v1299 = vadd.f32 %v829, %v1169
        %v1300 = vadd.f32 %v831, %v1171
        %v1301 = vadd.f32 %v935, %v1275
        %s1302 = scalar_lea.vmem [#allocation6], 192
        %v1303 = vld [vmem:[%s1302] sm:$0xff]
        %v1304 = vld [vmem:[%s1302 + $0x8] sm:$0xff]
        %v1305 = vld [vmem:[%s1302 + $0x10] sm:$0xff]
        %v1306 = vld [vmem:[%s1302 + $0x18] sm:$0xff]
        %v1307 = vld [vmem:[%s1302 + $0x20] sm:$0xff]
        %v1308 = vld [vmem:[%s1302 + $0x28] sm:$0xff]
        %v1309 = vld [vmem:[%s1302 + $0x30] sm:$0xff]
        %v1310 = vld [vmem:[%s1302 + $0x38] sm:$0xff]
        %1311 = vrot.lane.b32.xlu0 %v307, 110
        %v1312 = vpop.permute.xlu0 %1311
        %1313 = vrot.lane.b32.xlu0 %v308, 110
        %v1314 = vpop.permute.xlu0 %1313
        %1315 = vrot.lane.b32.xlu0 %v309, 110
        %v1316 = vpop.permute.xlu0 %1315
        %1317 = vrot.lane.b32.xlu0 %v310, 110
        %v1318 = vpop.permute.xlu0 %1317
        %1319 = vrot.lane.b32.xlu0 %v311, 110
        %v1320 = vpop.permute.xlu0 %1319
        %1321 = vrot.lane.b32.xlu0 %v312, 110
        %v1322 = vpop.permute.xlu0 %1321
        %1323 = vrot.lane.b32.xlu0 %v313, 110
        %v1324 = vpop.permute.xlu0 %1323
        %1325 = vrot.lane.b32.xlu0 %v314, 110
        %v1326 = vpop.permute.xlu0 %1325
        %1327 = vrot.lane.b32.xlu0 %v315, 110
        %v1328 = vpop.permute.xlu0 %1327
        %1329 = vrot.lane.b32.xlu0 %v316, 110
        %v1330 = vpop.permute.xlu0 %1329
        %1331 = vrot.lane.b32.xlu0 %v317, 110
        %v1332 = vpop.permute.xlu0 %1331
        %1333 = vrot.lane.b32.xlu0 %v318, 110
        %v1334 = vpop.permute.xlu0 %1333
        %1335 = vrot.lane.b32.xlu0 %v319, 110
        %v1336 = vpop.permute.xlu0 %1335
        %1337 = vrot.lane.b32.xlu0 %v320, 110
        %v1338 = vpop.permute.xlu0 %1337
        %1339 = vrot.lane.b32.xlu0 %v321, 110
        %v1340 = vpop.permute.xlu0 %1339
        %1341 = vrot.lane.b32.xlu0 %v322, 110
        %v1342 = vpop.permute.xlu0 %1341
        %1343 = vrot.lane.b32.xlu0 %v323, 110
        %v1344 = vpop.permute.xlu0 %1343
        %1345 = vrot.lane.b32.xlu0 %v324, 110
        %v1346 = vpop.permute.xlu0 %1345
        %1347 = vrot.lane.b32.xlu0 %v325, 110
        %v1348 = vpop.permute.xlu0 %1347
        %1349 = vrot.lane.b32.xlu0 %v326, 110
        %v1350 = vpop.permute.xlu0 %1349
        %1351 = vrot.lane.b32.xlu0 %v327, 110
        %v1352 = vpop.permute.xlu0 %1351
        %1353 = vrot.lane.b32.xlu0 %v328, 110
        %v1354 = vpop.permute.xlu0 %1353
        %1355 = vrot.lane.b32.xlu0 %v329, 110
        %v1356 = vpop.permute.xlu0 %1355
        %1357 = vrot.lane.b32.xlu0 %v330, 110
        %v1358 = vpop.permute.xlu0 %1357
        %vm1359 = vcmask 900096
        %v1360 = vsel %vm1359, %v1312, %v1314
        %v1361 = vsel %vm1359, %v1314, %v1316
        %v1362 = vsel %vm1359, %v1318, %v1320
        %v1363 = vsel %vm1359, %v1320, %v1322
        %v1364 = vsel %vm1359, %v1324, %v1326
        %v1365 = vsel %vm1359, %v1326, %v1328
        %v1366 = vsel %vm1359, %v1330, %v1332
        %v1367 = vsel %vm1359, %v1332, %v1334
        %v1368 = vsel %vm1359, %v1336, %v1338
        %v1369 = vsel %vm1359, %v1338, %v1340
        %v1370 = vsel %vm1359, %v1342, %v1344
        %v1371 = vsel %vm1359, %v1344, %v1346
        %v1372 = vsel %vm1359, %v1348, %v1350
        %v1373 = vsel %vm1359, %v1350, %v1352
        %v1374 = vsel %vm1359, %v1354, %v1356
        %v1375 = vsel %vm1359, %v1356, %v1358
        %v1401 = vsel %vm453, %v1303, 0
        %v1404 = vsel %vm453, %v1304, 0
        %v1407 = vsel %vm453, %v1305, 0
        %v1410 = vsel %vm453, %v1306, 0
        %v1413 = vsel %vm453, %v1307, 0
        %v1416 = vsel %vm453, %v1308, 0
        %v1419 = vsel %vm453, %v1309, 0
        %v1422 = vsel %vm453, %v1310, 0
        %1424 = vmatprep.subr.mxu0 %v1361
        %1425 = vmatpush1.msra.mxu0 %v1360
        %1426 = vmatprep.subr.mxu0 %v1363
        %1427 = vmatpush1.msra.mxu0 %v1362
        %1428 = vmatprep.subr.mxu0 %v1365
        %1429 = vmatpush1.msra.mxu0 %v1364
        %1430 = vmatprep.subr.mxu0 %v1367
        %1431 = vmatpush1.msra.mxu0 %v1366
        %1432 = vmatprep.subr.mxu0 %v1369
        %1433 = vmatpush1.msra.mxu0 %v1368
        %1434 = vmatprep.subr.mxu0 %v1371
        %1435 = vmatpush1.msra.mxu0 %v1370
        %1436 = vmatprep.subr.mxu0 %v1373
        %1437 = vmatpush1.msra.mxu0 %v1372
        %1438 = vmatprep.subr.mxu0 %v1375
        %1439 = vmatpush1.msra.mxu0 %v1374
        %1440 = vmatprep.subr.mxu0 0.0
        %1441 = vmatpush1.msra.mxu0 0.0
        %1442 = vmatprep.subr.mxu0 0.0
        %1443 = vmatpush1.msra.mxu0 0.0
        %1444 = vmatprep.subr.mxu0 0.0
        %1445 = vmatpush1.msra.mxu0 0.0
        %1446 = vmatprep.subr.mxu0 0.0
        %1447 = vmatpush1.msra.mxu0 0.0
        %1448 = vmatprep.subr.mxu0 0.0
        %1449 = vmatpush1.msra.mxu0 0.0
        %1450 = vmatprep.subr.mxu0 0.0
        %1451 = vmatpush1.msra.mxu0 0.0
        %1452 = vmatprep.subr.mxu0 0.0
        %1453 = vmatpush1.msra.mxu0 0.0
        %1454 = vmatprep.subr.mxu0 0.0
        %1455 = vmatpush1.msra.mxu0 0.0
        %1456 = vmatprep.subr.mxu0 0.0
        %1457 = vmatpush1.msra.mxu0 0.0
        %1458 = vmatprep.subr.mxu0 0.0
        %1459 = vmatpush1.msra.mxu0 0.0
        %1460 = vmatprep.subr.mxu0 0.0
        %1461 = vmatpush1.msra.mxu0 0.0
        %1462 = vmatprep.subr.mxu0 0.0
        %1463 = vmatpush1.msra.mxu0 0.0
        %1464 = vmatprep.subr.mxu0 0.0
        %1465 = vmatpush1.msra.mxu0 0.0
        %1466 = vmatprep.subr.mxu0 0.0
        %1467 = vmatpush1.msra.mxu0 0.0
        %1468 = vmatprep.subr.mxu0 0.0
        %1469 = vmatpush1.msra.mxu0 0.0
        %1470 = vmatprep.subr.mxu0 0.0
        %1471 = vmatpush1.msra.mxu0 0.0
        %1472 = vmatprep.subr.mxu0 0.0
        %1473 = vmatpush1.msra.mxu0 0.0
        %1474 = vmatprep.subr.mxu0 0.0
        %1475 = vmatpush1.msra.mxu0 0.0
        %1476 = vmatprep.subr.mxu0 0.0
        %1477 = vmatpush1.msra.mxu0 0.0
        %1478 = vmatprep.subr.mxu0 0.0
        %1479 = vmatpush1.msra.mxu0 0.0
        %1480 = vmatprep.subr.mxu0 0.0
        %1481 = vmatpush1.msra.mxu0 0.0
        %1482 = vmatprep.subr.mxu0 0.0
        %1483 = vmatpush1.msra.mxu0 0.0
        %1484 = vmatprep.subr.mxu0 0.0
        %1485 = vmatpush1.msra.mxu0 0.0
        %1486 = vmatprep.subr.mxu0 0.0
        %1487 = vmatpush1.msra.mxu0 0.0
        %1488 = vmatprep.mubr.f32.mxu0 0.0
        %1489 = vmatmul.mubr.f32.gmra.mrb[0].mxu0 %v1401
        %v1490 = vpop.f32.mrb[0].mxu0
        %v1491 = vadd.f32 0.0, %v1490
        %v1492 = vpop.f32.mrb[0].mxu0
        %v1493 = vadd.f32 0.0, %v1492
        %1494 = vmatprep.mubr.f32.mxu0 0.0
        %1495 = vmatmul.mubr.f32.gmra.mrb[0].mxu0 %v1404
        %v1496 = vpop.f32.mrb[0].mxu0
        %v1497 = vadd.f32 0.0, %v1496
        %v1498 = vpop.f32.mrb[0].mxu0
        %v1499 = vadd.f32 0.0, %v1498
        %1500 = vmatprep.mubr.f32.mxu0 0.0
        %1501 = vmatmul.mubr.f32.gmra.mrb[0].mxu0 %v1407
        %v1502 = vpop.f32.mrb[0].mxu0
        %v1503 = vadd.f32 0.0, %v1502
        %v1504 = vpop.f32.mrb[0].mxu0
        %v1505 = vadd.f32 0.0, %v1504
        %1506 = vmatprep.mubr.f32.mxu0 0.0
        %1507 = vmatmul.mubr.f32.gmra.mrb[0].mxu0 %v1410
        %v1508 = vpop.f32.mrb[0].mxu0
        %v1509 = vadd.f32 0.0, %v1508
        %v1510 = vpop.f32.mrb[0].mxu0
        %v1511 = vadd.f32 0.0, %v1510
        %1512 = vmatprep.mubr.f32.mxu0 0.0
        %1513 = vmatmul.mubr.f32.gmra.mrb[0].mxu0 %v1413
        %v1514 = vpop.f32.mrb[0].mxu0
        %v1515 = vadd.f32 0.0, %v1514
        %v1516 = vpop.f32.mrb[0].mxu0
        %v1517 = vadd.f32 0.0, %v1516
        %1518 = vmatprep.mubr.f32.mxu0 0.0
        %1519 = vmatmul.mubr.f32.gmra.mrb[0].mxu0 %v1416
        %v1520 = vpop.f32.mrb[0].mxu0
        %v1521 = vadd.f32 0.0, %v1520
        %v1522 = vpop.f32.mrb[0].mxu0
        %v1523 = vadd.f32 0.0, %v1522
        %1524 = vmatprep.mubr.f32.mxu0 0.0
        %1525 = vmatmul.mubr.f32.gmra.mrb[0].mxu0 %v1419
        %v1526 = vpop.f32.mrb[0].mxu0
        %v1527 = vadd.f32 0.0, %v1526
        %v1528 = vpop.f32.mrb[0].mxu0
        %v1529 = vadd.f32 0.0, %v1528
        %1530 = vmatprep.mubr.f32.mxu0 0.0
        %1531 = vmatmul.mubr.f32.gmra.mrb[0].mxu0 %v1422
        %v1532 = vpop.f32.mrb[0].mxu0
        %v1533 = vadd.f32 0.0, %v1532
        %v1534 = vpop.f32.mrb[0].mxu0
        %v1535 = vadd.f32 0.0, %v1534
        %1536 = vdwg.mxu0
        %1537 = vmatprep.subr.mxu0 0.0
        %1538 = vmatpush1.msra.mxu0 %v1316
        %1539 = vmatprep.subr.mxu0 0.0
        %1540 = vmatpush1.msra.mxu0 %v1322
        %1541 = vmatprep.subr.mxu0 0.0
        %1542 = vmatpush1.msra.mxu0 %v1328
        %1543 = vmatprep.subr.mxu0 0.0
        %1544 = vmatpush1.msra.mxu0 %v1334
        %1545 = vmatprep.subr.mxu0 0.0
        %1546 = vmatpush1.msra.mxu0 %v1340
        %1547 = vmatprep.subr.mxu0 0.0
        %1548 = vmatpush1.msra.mxu0 %v1346
        %1549 = vmatprep.subr.mxu0 0.0
        %1550 = vmatpush1.msra.mxu0 %v1352
        %1551 = vmatprep.subr.mxu0 0.0
        %1552 = vmatpush1.msra.mxu0 %v1358
        %1553 = vmatprep.subr.mxu0 0.0
        %1554 = vmatpush1.msra.mxu0 0.0
        %1555 = vmatprep.subr.mxu0 0.0
        %1556 = vmatpush1.msra.mxu0 0.0
        %1557 = vmatprep.subr.mxu0 0.0
        %1558 = vmatpush1.msra.mxu0 0.0
        %1559 = vmatprep.subr.mxu0 0.0
        %1560 = vmatpush1.msra.mxu0 0.0
        %1561 = vmatprep.subr.mxu0 0.0
        %1562 = vmatpush1.msra.mxu0 0.0
        %1563 = vmatprep.subr.mxu0 0.0
        %1564 = vmatpush1.msra.mxu0 0.0
        %1565 = vmatprep.subr.mxu0 0.0
        %1566 = vmatpush1.msra.mxu0 0.0
        %1567 = vmatprep.subr.mxu0 0.0
        %1568 = vmatpush1.msra.mxu0 0.0
        %1569 = vmatprep.subr.mxu0 0.0
        %1570 = vmatpush1.msra.mxu0 0.0
        %1571 = vmatprep.subr.mxu0 0.0
        %1572 = vmatpush1.msra.mxu0 0.0
        %1573 = vmatprep.subr.mxu0 0.0
        %1574 = vmatpush1.msra.mxu0 0.0
        %1575 = vmatprep.subr.mxu0 0.0
        %1576 = vmatpush1.msra.mxu0 0.0
        %1577 = vmatprep.subr.mxu0 0.0
        %1578 = vmatpush1.msra.mxu0 0.0
        %1579 = vmatprep.subr.mxu0 0.0
        %1580 = vmatpush1.msra.mxu0 0.0
        %1581 = vmatprep.subr.mxu0 0.0
        %1582 = vmatpush1.msra.mxu0 0.0
        %1583 = vmatprep.subr.mxu0 0.0
        %1584 = vmatpush1.msra.mxu0 0.0
        %1585 = vmatprep.subr.mxu0 0.0
        %1586 = vmatpush1.msra.mxu0 0.0
        %1587 = vmatprep.subr.mxu0 0.0
        %1588 = vmatpush1.msra.mxu0 0.0
        %1589 = vmatprep.subr.mxu0 0.0
        %1590 = vmatpush1.msra.mxu0 0.0
        %1591 = vmatprep.subr.mxu0 0.0
        %1592 = vmatpush1.msra.mxu0 0.0
        %1593 = vmatprep.subr.mxu0 0.0
        %1594 = vmatpush1.msra.mxu0 0.0
        %1595 = vmatprep.subr.mxu0 0.0
        %1596 = vmatpush1.msra.mxu0 0.0
        %1597 = vmatprep.subr.mxu0 0.0
        %1598 = vmatpush1.msra.mxu0 0.0
        %1599 = vmatprep.subr.mxu0 0.0
        %1600 = vmatpush1.msra.mxu0 0.0
        %1601 = vmatprep.mubr.f32.mxu0 0.0
        %1602 = vmatmul.mubr.f32.gmra.mrb[0].mxu0 %v1401
        %v1603 = vpop.f32.mrb[0].mxu0
        %v1604 = vadd.f32 0.0, %v1603
        %v1605 = vpop.f32.mrb[0].mxu0
        %1606 = vmatprep.mubr.f32.mxu0 0.0
        %1607 = vmatmul.mubr.f32.gmra.mrb[0].mxu0 %v1404
        %v1608 = vpop.f32.mrb[0].mxu0
        %v1609 = vadd.f32 0.0, %v1608
        %v1610 = vpop.f32.mrb[0].mxu0
        %1611 = vmatprep.mubr.f32.mxu0 0.0
        %1612 = vmatmul.mubr.f32.gmra.mrb[0].mxu0 %v1407
        %v1613 = vpop.f32.mrb[0].mxu0
        %v1614 = vadd.f32 0.0, %v1613
        %v1615 = vpop.f32.mrb[0].mxu0
        %1616 = vmatprep.mubr.f32.mxu0 0.0
        %1617 = vmatmul.mubr.f32.gmra.mrb[0].mxu0 %v1410
        %v1618 = vpop.f32.mrb[0].mxu0
        %v1619 = vadd.f32 0.0, %v1618
        %v1620 = vpop.f32.mrb[0].mxu0
        %1621 = vmatprep.mubr.f32.mxu0 0.0
        %1622 = vmatmul.mubr.f32.gmra.mrb[0].mxu0 %v1413
        %v1623 = vpop.f32.mrb[0].mxu0
        %v1624 = vadd.f32 0.0, %v1623
        %v1625 = vpop.f32.mrb[0].mxu0
        %1626 = vmatprep.mubr.f32.mxu0 0.0
        %1627 = vmatmul.mubr.f32.gmra.mrb[0].mxu0 %v1416
        %v1628 = vpop.f32.mrb[0].mxu0
        %v1629 = vadd.f32 0.0, %v1628
        %v1630 = vpop.f32.mrb[0].mxu0
        %1631 = vmatprep.mubr.f32.mxu0 0.0
        %1632 = vmatmul.mubr.f32.gmra.mrb[0].mxu0 %v1419
        %v1633 = vpop.f32.mrb[0].mxu0
        %v1634 = vadd.f32 0.0, %v1633
        %v1635 = vpop.f32.mrb[0].mxu0
        %1636 = vmatprep.mubr.f32.mxu0 0.0
        %1637 = vmatmul.mubr.f32.gmra.mrb[0].mxu0 %v1422
        %v1638 = vpop.f32.mrb[0].mxu0
        %v1639 = vadd.f32 0.0, %v1638
        %v1640 = vpop.f32.mrb[0].mxu0
        %1641 = vdwg.mxu0
        %v1642 = vadd.f32 %v1278, %v1491
        %v1643 = vadd.f32 %v1279, %v1493
        %v1644 = vadd.f32 %v1280, %v1604
        %v1645 = vadd.f32 %v1281, %v1497
        %v1646 = vadd.f32 %v1282, %v1499
        %v1647 = vadd.f32 %v1283, %v1609
        %v1648 = vadd.f32 %v1284, %v1503
        %v1649 = vadd.f32 %v1285, %v1505
        %v1650 = vadd.f32 %v1286, %v1614
        %v1651 = vadd.f32 %v1287, %v1509
        %v1652 = vadd.f32 %v1288, %v1511
        %v1653 = vadd.f32 %v1289, %v1619
        %v1654 = vadd.f32 %v1290, %v1515
        %v1655 = vadd.f32 %v1291, %v1517
        %v1656 = vadd.f32 %v1292, %v1624
        %v1657 = vadd.f32 %v1293, %v1521
        %v1658 = vadd.f32 %v1294, %v1523
        %v1659 = vadd.f32 %v1295, %v1629
        %v1660 = vadd.f32 %v1296, %v1527
        %v1661 = vadd.f32 %v1297, %v1529
        %v1662 = vadd.f32 %v1298, %v1634
        %v1663 = vadd.f32 %v1299, %v1533
        %v1664 = vadd.f32 %v1300, %v1535
        %v1665 = vadd.f32 %v1301, %v1639
        %s1666 = scalar_lea.vmem [#allocation6], 256
        %v1667 = vld [vmem:[%s1666] sm:$0xff]
        %v1668 = vld [vmem:[%s1666 + $0x8] sm:$0xff]
        %v1669 = vld [vmem:[%s1666 + $0x10] sm:$0xff]
        %v1670 = vld [vmem:[%s1666 + $0x18] sm:$0xff]
        %v1671 = vld [vmem:[%s1666 + $0x20] sm:$0xff]
        %v1672 = vld [vmem:[%s1666 + $0x28] sm:$0xff]
        %v1673 = vld [vmem:[%s1666 + $0x30] sm:$0xff]
        %v1674 = vld [vmem:[%s1666 + $0x38] sm:$0xff]
        %1675 = vrot.lane.b32.xlu0 %v307, 109
        %v1676 = vpop.permute.xlu0 %1675
        %1677 = vrot.lane.b32.xlu0 %v308, 109
        %v1678 = vpop.permute.xlu0 %1677
        %1679 = vrot.lane.b32.xlu0 %v309, 109
        %v1680 = vpop.permute.xlu0 %1679
        %1681 = vrot.lane.b32.xlu0 %v310, 109
        %v1682 = vpop.permute.xlu0 %1681
        %1683 = vrot.lane.b32.xlu0 %v311, 109
        %v1684 = vpop.permute.xlu0 %1683
        %1685 = vrot.lane.b32.xlu0 %v312, 109
        %v1686 = vpop.permute.xlu0 %1685
        %1687 = vrot.lane.b32.xlu0 %v313, 109
        %v1688 = vpop.permute.xlu0 %1687
        %1689 = vrot.lane.b32.xlu0 %v314, 109
        %v1690 = vpop.permute.xlu0 %1689
        %1691 = vrot.lane.b32.xlu0 %v315, 109
        %v1692 = vpop.permute.xlu0 %1691
        %1693 = vrot.lane.b32.xlu0 %v316, 109
        %v1694 = vpop.permute.xlu0 %1693
        %1695 = vrot.lane.b32.xlu0 %v317, 109
        %v1696 = vpop.permute.xlu0 %1695
        %1697 = vrot.lane.b32.xlu0 %v318, 109
        %v1698 = vpop.permute.xlu0 %1697
        %1699 = vrot.lane.b32.xlu0 %v319, 109
        %v1700 = vpop.permute.xlu0 %1699
        %1701 = vrot.lane.b32.xlu0 %v320, 109
        %v1702 = vpop.permute.xlu0 %1701
        %1703 = vrot.lane.b32.xlu0 %v321, 109
        %v1704 = vpop.permute.xlu0 %1703
        %1705 = vrot.lane.b32.xlu0 %v322, 109
        %v1706 = vpop.permute.xlu0 %1705
        %1707 = vrot.lane.b32.xlu0 %v323, 109
        %v1708 = vpop.permute.xlu0 %1707
        %1709 = vrot.lane.b32.xlu0 %v324, 109
        %v1710 = vpop.permute.xlu0 %1709
        %1711 = vrot.lane.b32.xlu0 %v325, 109
        %v1712 = vpop.permute.xlu0 %1711
        %1713 = vrot.lane.b32.xlu0 %v326, 109
        %v1714 = vpop.permute.xlu0 %1713
        %1715 = vrot.lane.b32.xlu0 %v327, 109
        %v1716 = vpop.permute.xlu0 %1715
        %1717 = vrot.lane.b32.xlu0 %v328, 109
        %v1718 = vpop.permute.xlu0 %1717
        %1719 = vrot.lane.b32.xlu0 %v329, 109
        %v1720 = vpop.permute.xlu0 %1719
        %1721 = vrot.lane.b32.xlu0 %v330, 109
        %v1722 = vpop.permute.xlu0 %1721
        %vm1723 = vcmask 891904
        %v1724 = vsel %vm1723, %v1676, %v1678
        %v1725 = vsel %vm1723, %v1678, %v1680
        %v1726 = vsel %vm1723, %v1682, %v1684
        %v1727 = vsel %vm1723, %v1684, %v1686
        %v1728 = vsel %vm1723, %v1688, %v1690
        %v1729 = vsel %vm1723, %v1690, %v1692
        %v1730 = vsel %vm1723, %v1694, %v1696
        %v1731 = vsel %vm1723, %v1696, %v1698
        %v1732 = vsel %vm1723, %v1700, %v1702
        %v1733 = vsel %vm1723, %v1702, %v1704
        %v1734 = vsel %vm1723, %v1706, %v1708
        %v1735 = vsel %vm1723, %v1708, %v1710
        %v1736 = vsel %vm1723, %v1712, %v1714
        %v1737 = vsel %vm1723, %v1714, %v1716
        %v1738 = vsel %vm1723, %v1718, %v1720
        %v1739 = vsel %vm1723, %v1720, %v1722
        %v1765 = vsel %vm453, %v1667, 0
        %v1768 = vsel %vm453, %v1668, 0
        %v1771 = vsel %vm453, %v1669, 0
        %v1774 = vsel %vm453, %v1670, 0
        %v1777 = vsel %vm453, %v1671, 0
        %v1780 = vsel %vm453, %v1672, 0
        %v1783 = vsel %vm453, %v1673, 0
        %v1786 = vsel %vm453, %v1674, 0
        %1788 = vmatprep.subr.mxu0 %v1725
        %1789 = vmatpush1.msra.mxu0 %v1724
        %1790 = vmatprep.subr.mxu0 %v1727
        %1791 = vmatpush1.msra.mxu0 %v1726
        %1792 = vmatprep.subr.mxu0 %v1729
        %1793 = vmatpush1.msra.mxu0 %v1728
        %1794 = vmatprep.subr.mxu0 %v1731
        %1795 = vmatpush1.msra.mxu0 %v1730
        %1796 = vmatprep.subr.mxu0 %v1733
        %1797 = vmatpush1.msra.mxu0 %v1732
        %1798 = vmatprep.subr.mxu0 %v1735
        %1799 = vmatpush1.msra.mxu0 %v1734
        %1800 = vmatprep.subr.mxu0 %v1737
        %1801 = vmatpush1.msra.mxu0 %v1736
        %1802 = vmatprep.subr.mxu0 %v1739
        %1803 = vmatpush1.msra.mxu0 %v1738
        %1804 = vmatprep.subr.mxu0 0.0
        %1805 = vmatpush1.msra.mxu0 0.0
        %1806 = vmatprep.subr.mxu0 0.0
        %1807 = vmatpush1.msra.mxu0 0.0
        %1808 = vmatprep.subr.mxu0 0.0
        %1809 = vmatpush1.msra.mxu0 0.0
        %1810 = vmatprep.subr.mxu0 0.0
        %1811 = vmatpush1.msra.mxu0 0.0
        %1812 = vmatprep.subr.mxu0 0.0
        %1813 = vmatpush1.msra.mxu0 0.0
        %1814 = vmatprep.subr.mxu0 0.0
        %1815 = vmatpush1.msra.mxu0 0.0
        %1816 = vmatprep.subr.mxu0 0.0
        %1817 = vmatpush1.msra.mxu0 0.0
        %1818 = vmatprep.subr.mxu0 0.0
        %1819 = vmatpush1.msra.mxu0 0.0
        %1820 = vmatprep.subr.mxu0 0.0
        %1821 = vmatpush1.msra.mxu0 0.0
        %1822 = vmatprep.subr.mxu0 0.0
        %1823 = vmatpush1.msra.mxu0 0.0
        %1824 = vmatprep.subr.mxu0 0.0
        %1825 = vmatpush1.msra.mxu0 0.0
        %1826 = vmatprep.subr.mxu0 0.0
        %1827 = vmatpush1.msra.mxu0 0.0
        %1828 = vmatprep.subr.mxu0 0.0
        %1829 = vmatpush1.msra.mxu0 0.0
        %1830 = vmatprep.subr.mxu0 0.0
        %1831 = vmatpush1.msra.mxu0 0.0
        %1832 = vmatprep.subr.mxu0 0.0
        %1833 = vmatpush1.msra.mxu0 0.0
        %1834 = vmatprep.subr.mxu0 0.0
        %1835 = vmatpush1.msra.mxu0 0.0
        %1836 = vmatprep.subr.mxu0 0.0
        %1837 = vmatpush1.msra.mxu0 0.0
        %1838 = vmatprep.subr.mxu0 0.0
        %1839 = vmatpush1.msra.mxu0 0.0
        %1840 = vmatprep.subr.mxu0 0.0
        %1841 = vmatpush1.msra.mxu0 0.0
        %1842 = vmatprep.subr.mxu0 0.0
        %1843 = vmatpush1.msra.mxu0 0.0
        %1844 = vmatprep.subr.mxu0 0.0
        %1845 = vmatpush1.msra.mxu0 0.0
        %1846 = vmatprep.subr.mxu0 0.0
        %1847 = vmatpush1.msra.mxu0 0.0
        %1848 = vmatprep.subr.mxu0 0.0
        %1849 = vmatpush1.msra.mxu0 0.0
        %1850 = vmatprep.subr.mxu0 0.0
        %1851 = vmatpush1.msra.mxu0 0.0
        %1852 = vmatprep.mubr.f32.mxu0 0.0
        %1853 = vmatmul.mubr.f32.gmra.mrb[0].mxu0 %v1765
        %v1854 = vpop.f32.mrb[0].mxu0
        %v1855 = vadd.f32 0.0, %v1854
        %v1856 = vpop.f32.mrb[0].mxu0
        %v1857 = vadd.f32 0.0, %v1856
        %1858 = vmatprep.mubr.f32.mxu0 0.0
        %1859 = vmatmul.mubr.f32.gmra.mrb[0].mxu0 %v1768
        %v1860 = vpop.f32.mrb[0].mxu0
        %v1861 = vadd.f32 0.0, %v1860
        %v1862 = vpop.f32.mrb[0].mxu0
        %v1863 = vadd.f32 0.0, %v1862
        %1864 = vmatprep.mubr.f32.mxu0 0.0
        %1865 = vmatmul.mubr.f32.gmra.mrb[0].mxu0 %v1771
        %v1866 = vpop.f32.mrb[0].mxu0
        %v1867 = vadd.f32 0.0, %v1866
        %v1868 = vpop.f32.mrb[0].mxu0
        %v1869 = vadd.f32 0.0, %v1868
        %1870 = vmatprep.mubr.f32.mxu0 0.0
        %1871 = vmatmul.mubr.f32.gmra.mrb[0].mxu0 %v1774
        %v1872 = vpop.f32.mrb[0].mxu0
        %v1873 = vadd.f32 0.0, %v1872
        %v1874 = vpop.f32.mrb[0].mxu0
        %v1875 = vadd.f32 0.0, %v1874
        %1876 = vmatprep.mubr.f32.mxu0 0.0
        %1877 = vmatmul.mubr.f32.gmra.mrb[0].mxu0 %v1777
        %v1878 = vpop.f32.mrb[0].mxu0
        %v1879 = vadd.f32 0.0, %v1878
        %v1880 = vpop.f32.mrb[0].mxu0
        %v1881 = vadd.f32 0.0, %v1880
        %1882 = vmatprep.mubr.f32.mxu0 0.0
        %1883 = vmatmul.mubr.f32.gmra.mrb[0].mxu0 %v1780
        %v1884 = vpop.f32.mrb[0].mxu0
        %v1885 = vadd.f32 0.0, %v1884
        %v1886 = vpop.f32.mrb[0].mxu0
        %v1887 = vadd.f32 0.0, %v1886
        %1888 = vmatprep.mubr.f32.mxu0 0.0
        %1889 = vmatmul.mubr.f32.gmra.mrb[0].mxu0 %v1783
        %v1890 = vpop.f32.mrb[0].mxu0
        %v1891 = vadd.f32 0.0, %v1890
        %v1892 = vpop.f32.mrb[0].mxu0
        %v1893 = vadd.f32 0.0, %v1892
        %1894 = vmatprep.mubr.f32.mxu0 0.0
        %1895 = vmatmul.mubr.f32.gmra.mrb[0].mxu0 %v1786
        %v1896 = vpop.f32.mrb[0].mxu0
        %v1897 = vadd.f32 0.0, %v1896
        %v1898 = vpop.f32.mrb[0].mxu0
        %v1899 = vadd.f32 0.0, %v1898
        %1900 = vdwg.mxu0
        %1901 = vmatprep.subr.mxu0 0.0
        %1902 = vmatpush1.msra.mxu0 %v1680
        %1903 = vmatprep.subr.mxu0 0.0
        %1904 = vmatpush1.msra.mxu0 %v1686
        %1905 = vmatprep.subr.mxu0 0.0
        %1906 = vmatpush1.msra.mxu0 %v1692
        %1907 = vmatprep.subr.mxu0 0.0
        %1908 = vmatpush1.msra.mxu0 %v1698
        %1909 = vmatprep.subr.mxu0 0.0
        %1910 = vmatpush1.msra.mxu0 %v1704
        %1911 = vmatprep.subr.mxu0 0.0
        %1912 = vmatpush1.msra.mxu0 %v1710
        %1913 = vmatprep.subr.mxu0 0.0
        %1914 = vmatpush1.msra.mxu0 %v1716
        %1915 = vmatprep.subr.mxu0 0.0
        %1916 = vmatpush1.msra.mxu0 %v1722
        %1917 = vmatprep.subr.mxu0 0.0
        %1918 = vmatpush1.msra.mxu0 0.0
        %1919 = vmatprep.subr.mxu0 0.0
        %1920 = vmatpush1.msra.mxu0 0.0
        %1921 = vmatprep.subr.mxu0 0.0
        %1922 = vmatpush1.msra.mxu0 0.0
        %1923 = vmatprep.subr.mxu0 0.0
        %1924 = vmatpush1.msra.mxu0 0.0
        %1925 = vmatprep.subr.mxu0 0.0
        %1926 = vmatpush1.msra.mxu0 0.0
        %1927 = vmatprep.subr.mxu0 0.0
        %1928 = vmatpush1.msra.mxu0 0.0
        %1929 = vmatprep.subr.mxu0 0.0
        %1930 = vmatpush1.msra.mxu0 0.0
        %1931 = vmatprep.subr.mxu0 0.0
        %1932 = vmatpush1.msra.mxu0 0.0
        %1933 = vmatprep.subr.mxu0 0.0
        %1934 = vmatpush1.msra.mxu0 0.0
        %1935 = vmatprep.subr.mxu0 0.0
        %1936 = vmatpush1.msra.mxu0 0.0
        %1937 = vmatprep.subr.mxu0 0.0
        %1938 = vmatpush1.msra.mxu0 0.0
        %1939 = vmatprep.subr.mxu0 0.0
        %1940 = vmatpush1.msra.mxu0 0.0
        %1941 = vmatprep.subr.mxu0 0.0
        %1942 = vmatpush1.msra.mxu0 0.0
        %1943 = vmatprep.subr.mxu0 0.0
        %1944 = vmatpush1.msra.mxu0 0.0
        %1945 = vmatprep.subr.mxu0 0.0
        %1946 = vmatpush1.msra.mxu0 0.0
        %1947 = vmatprep.subr.mxu0 0.0
        %1948 = vmatpush1.msra.mxu0 0.0
        %1949 = vmatprep.subr.mxu0 0.0
        %1950 = vmatpush1.msra.mxu0 0.0
        %1951 = vmatprep.subr.mxu0 0.0
        %1952 = vmatpush1.msra.mxu0 0.0
        %1953 = vmatprep.subr.mxu0 0.0
        %1954 = vmatpush1.msra.mxu0 0.0
        %1955 = vmatprep.subr.mxu0 0.0
        %1956 = vmatpush1.msra.mxu0 0.0
        %1957 = vmatprep.subr.mxu0 0.0
        %1958 = vmatpush1.msra.mxu0 0.0
        %1959 = vmatprep.subr.mxu0 0.0
        %1960 = vmatpush1.msra.mxu0 0.0
        %1961 = vmatprep.subr.mxu0 0.0
        %1962 = vmatpush1.msra.mxu0 0.0
        %1963 = vmatprep.subr.mxu0 0.0
        %1964 = vmatpush1.msra.mxu0 0.0
        %1965 = vmatprep.mubr.f32.mxu0 0.0
        %1966 = vmatmul.mubr.f32.gmra.mrb[0].mxu0 %v1765
        %v1967 = vpop.f32.mrb[0].mxu0
        %v1968 = vadd.f32 0.0, %v1967
        %v1969 = vpop.f32.mrb[0].mxu0
        %1970 = vmatprep.mubr.f32.mxu0 0.0
        %1971 = vmatmul.mubr.f32.gmra.mrb[0].mxu0 %v1768
        %v1972 = vpop.f32.mrb[0].mxu0
        %v1973 = vadd.f32 0.0, %v1972
        %v1974 = vpop.f32.mrb[0].mxu0
        %1975 = vmatprep.mubr.f32.mxu0 0.0
        %1976 = vmatmul.mubr.f32.gmra.mrb[0].mxu0 %v1771
        %v1977 = vpop.f32.mrb[0].mxu0
        %v1978 = vadd.f32 0.0, %v1977
        %v1979 = vpop.f32.mrb[0].mxu0
        %1980 = vmatprep.mubr.f32.mxu0 0.0
        %1981 = vmatmul.mubr.f32.gmra.mrb[0].mxu0 %v1774
        %v1982 = vpop.f32.mrb[0].mxu0
        %v1983 = vadd.f32 0.0, %v1982
        %v1984 = vpop.f32.mrb[0].mxu0
        %1985 = vmatprep.mubr.f32.mxu0 0.0
        %1986 = vmatmul.mubr.f32.gmra.mrb[0].mxu0 %v1777
        %v1987 = vpop.f32.mrb[0].mxu0
        %v1988 = vadd.f32 0.0, %v1987
        %v1989 = vpop.f32.mrb[0].mxu0
        %1990 = vmatprep.mubr.f32.mxu0 0.0
        %1991 = vmatmul.mubr.f32.gmra.mrb[0].mxu0 %v1780
        %v1992 = vpop.f32.mrb[0].mxu0
        %v1993 = vadd.f32 0.0, %v1992
        %v1994 = vpop.f32.mrb[0].mxu0
        %1995 = vmatprep.mubr.f32.mxu0 0.0
        %1996 = vmatmul.mubr.f32.gmra.mrb[0].mxu0 %v1783
        %v1997 = vpop.f32.mrb[0].mxu0
        %v1998 = vadd.f32 0.0, %v1997
        %v1999 = vpop.f32.mrb[0].mxu0
        %2000 = vmatprep.mubr.f32.mxu0 0.0
        %2001 = vmatmul.mubr.f32.gmra.mrb[0].mxu0 %v1786
        %v2002 = vpop.f32.mrb[0].mxu0
        %v2003 = vadd.f32 0.0, %v2002
        %v2004 = vpop.f32.mrb[0].mxu0
        %2005 = vdwg.mxu0
        %v2006 = vadd.f32 %v1642, %v1855
        %v2007 = vadd.f32 %v1643, %v1857
        %v2008 = vadd.f32 %v1644, %v1968
        %v2009 = vadd.f32 %v1645, %v1861
        %v2010 = vadd.f32 %v1646, %v1863
        %v2011 = vadd.f32 %v1647, %v1973
        %v2012 = vadd.f32 %v1648, %v1867
        %v2013 = vadd.f32 %v1649, %v1869
        %v2014 = vadd.f32 %v1650, %v1978
        %v2015 = vadd.f32 %v1651, %v1873
        %v2016 = vadd.f32 %v1652, %v1875
        %v2017 = vadd.f32 %v1653, %v1983
        %v2018 = vadd.f32 %v1654, %v1879
        %v2019 = vadd.f32 %v1655, %v1881
        %v2020 = vadd.f32 %v1656, %v1988
        %v2021 = vadd.f32 %v1657, %v1885
        %v2022 = vadd.f32 %v1658, %v1887
        %v2023 = vadd.f32 %v1659, %v1993
        %v2024 = vadd.f32 %v1660, %v1891
        %v2025 = vadd.f32 %v1661, %v1893
        %v2026 = vadd.f32 %v1662, %v1998
        %v2027 = vadd.f32 %v1663, %v1897
        %v2028 = vadd.f32 %v1664, %v1899
        %v2029 = vadd.f32 %v1665, %v2003
        %s2030 = scalar_lea.vmem [#allocation6], 320
        %v2031 = vld [vmem:[%s2030] sm:$0xff]
        %v2032 = vld [vmem:[%s2030 + $0x8] sm:$0xff]
        %v2033 = vld [vmem:[%s2030 + $0x10] sm:$0xff]
        %v2034 = vld [vmem:[%s2030 + $0x18] sm:$0xff]
        %v2035 = vld [vmem:[%s2030 + $0x20] sm:$0xff]
        %v2036 = vld [vmem:[%s2030 + $0x28] sm:$0xff]
        %v2037 = vld [vmem:[%s2030 + $0x30] sm:$0xff]
        %v2038 = vld [vmem:[%s2030 + $0x38] sm:$0xff]
        %2039 = vrot.lane.b32.xlu0 %v307, 108
        %v2040 = vpop.permute.xlu0 %2039
        %2041 = vrot.lane.b32.xlu0 %v308, 108
        %v2042 = vpop.permute.xlu0 %2041
        %2043 = vrot.lane.b32.xlu0 %v309, 108
        %v2044 = vpop.permute.xlu0 %2043
        %2045 = vrot.lane.b32.xlu0 %v310, 108
        %v2046 = vpop.permute.xlu0 %2045
        %2047 = vrot.lane.b32.xlu0 %v311, 108
        %v2048 = vpop.permute.xlu0 %2047
        %2049 = vrot.lane.b32.xlu0 %v312, 108
        %v2050 = vpop.permute.xlu0 %2049
        %2051 = vrot.lane.b32.xlu0 %v313, 108
        %v2052 = vpop.permute.xlu0 %2051
        %2053 = vrot.lane.b32.xlu0 %v314, 108
        %v2054 = vpop.permute.xlu0 %2053
        %2055 = vrot.lane.b32.xlu0 %v315, 108
        %v2056 = vpop.permute.xlu0 %2055
        %2057 = vrot.lane.b32.xlu0 %v316, 108
        %v2058 = vpop.permute.xlu0 %2057
        %2059 = vrot.lane.b32.xlu0 %v317, 108
        %v2060 = vpop.permute.xlu0 %2059
        %2061 = vrot.lane.b32.xlu0 %v318, 108
        %v2062 = vpop.permute.xlu0 %2061
        %2063 = vrot.lane.b32.xlu0 %v319, 108
        %v2064 = vpop.permute.xlu0 %2063
        %2065 = vrot.lane.b32.xlu0 %v320, 108
        %v2066 = vpop.permute.xlu0 %2065
        %2067 = vrot.lane.b32.xlu0 %v321, 108
        %v2068 = vpop.permute.xlu0 %2067
        %2069 = vrot.lane.b32.xlu0 %v322, 108
        %v2070 = vpop.permute.xlu0 %2069
        %2071 = vrot.lane.b32.xlu0 %v323, 108
        %v2072 = vpop.permute.xlu0 %2071
        %2073 = vrot.lane.b32.xlu0 %v324, 108
        %v2074 = vpop.permute.xlu0 %2073
        %2075 = vrot.lane.b32.xlu0 %v325, 108
        %v2076 = vpop.permute.xlu0 %2075
        %2077 = vrot.lane.b32.xlu0 %v326, 108
        %v2078 = vpop.permute.xlu0 %2077
        %2079 = vrot.lane.b32.xlu0 %v327, 108
        %v2080 = vpop.permute.xlu0 %2079
        %2081 = vrot.lane.b32.xlu0 %v328, 108
        %v2082 = vpop.permute.xlu0 %2081
        %2083 = vrot.lane.b32.xlu0 %v329, 108
        %v2084 = vpop.permute.xlu0 %2083
        %2085 = vrot.lane.b32.xlu0 %v330, 108
        %v2086 = vpop.permute.xlu0 %2085
        %vm2087 = vcmask 883712
        %v2088 = vsel %vm2087, %v2040, %v2042
        %v2089 = vsel %vm2087, %v2042, %v2044
        %v2090 = vsel %vm2087, %v2046, %v2048
        %v2091 = vsel %vm2087, %v2048, %v2050
        %v2092 = vsel %vm2087, %v2052, %v2054
        %v2093 = vsel %vm2087, %v2054, %v2056
        %v2094 = vsel %vm2087, %v2058, %v2060
        %v2095 = vsel %vm2087, %v2060, %v2062
        %v2096 = vsel %vm2087, %v2064, %v2066
        %v2097 = vsel %vm2087, %v2066, %v2068
        %v2098 = vsel %vm2087, %v2070, %v2072
        %v2099 = vsel %vm2087, %v2072, %v2074
        %v2100 = vsel %vm2087, %v2076, %v2078
        %v2101 = vsel %vm2087, %v2078, %v2080
        %v2102 = vsel %vm2087, %v2082, %v2084
        %v2103 = vsel %vm2087, %v2084, %v2086
        %v2129 = vsel %vm453, %v2031, 0
        %v2132 = vsel %vm453, %v2032, 0
        %v2135 = vsel %vm453, %v2033, 0
        %v2138 = vsel %vm453, %v2034, 0
        %v2141 = vsel %vm453, %v2035, 0
        %v2144 = vsel %vm453, %v2036, 0
        %v2147 = vsel %vm453, %v2037, 0
        %v2150 = vsel %vm453, %v2038, 0
        %2152 = vmatprep.subr.mxu0 %v2089
        %2153 = vmatpush1.msra.mxu0 %v2088
        %2154 = vmatprep.subr.mxu0 %v2091
        %2155 = vmatpush1.msra.mxu0 %v2090
        %2156 = vmatprep.subr.mxu0 %v2093
        %2157 = vmatpush1.msra.mxu0 %v2092
        %2158 = vmatprep.subr.mxu0 %v2095
        %2159 = vmatpush1.msra.mxu0 %v2094
        %2160 = vmatprep.subr.mxu0 %v2097
        %2161 = vmatpush1.msra.mxu0 %v2096
        %2162 = vmatprep.subr.mxu0 %v2099
        %2163 = vmatpush1.msra.mxu0 %v2098
        %2164 = vmatprep.subr.mxu0 %v2101
        %2165 = vmatpush1.msra.mxu0 %v2100
        %2166 = vmatprep.subr.mxu0 %v2103
        %2167 = vmatpush1.msra.mxu0 %v2102
        %2168 = vmatprep.subr.mxu0 0.0
        %2169 = vmatpush1.msra.mxu0 0.0
        %2170 = vmatprep.subr.mxu0 0.0
        %2171 = vmatpush1.msra.mxu0 0.0
        %2172 = vmatprep.subr.mxu0 0.0
        %2173 = vmatpush1.msra.mxu0 0.0
        %2174 = vmatprep.subr.mxu0 0.0
        %2175 = vmatpush1.msra.mxu0 0.0
        %2176 = vmatprep.subr.mxu0 0.0
        %2177 = vmatpush1.msra.mxu0 0.0
        %2178 = vmatprep.subr.mxu0 0.0
        %2179 = vmatpush1.msra.mxu0 0.0
        %2180 = vmatprep.subr.mxu0 0.0
        %2181 = vmatpush1.msra.mxu0 0.0
        %2182 = vmatprep.subr.mxu0 0.0
        %2183 = vmatpush1.msra.mxu0 0.0
        %2184 = vmatprep.subr.mxu0 0.0
        %2185 = vmatpush1.msra.mxu0 0.0
        %2186 = vmatprep.subr.mxu0 0.0
        %2187 = vmatpush1.msra.mxu0 0.0
        %2188 = vmatprep.subr.mxu0 0.0
        %2189 = vmatpush1.msra.mxu0 0.0
        %2190 = vmatprep.subr.mxu0 0.0
        %2191 = vmatpush1.msra.mxu0 0.0
        %2192 = vmatprep.subr.mxu0 0.0
        %2193 = vmatpush1.msra.mxu0 0.0
        %2194 = vmatprep.subr.mxu0 0.0
        %2195 = vmatpush1.msra.mxu0 0.0
        %2196 = vmatprep.subr.mxu0 0.0
        %2197 = vmatpush1.msra.mxu0 0.0
        %2198 = vmatprep.subr.mxu0 0.0
        %2199 = vmatpush1.msra.mxu0 0.0
        %2200 = vmatprep.subr.mxu0 0.0
        %2201 = vmatpush1.msra.mxu0 0.0
        %2202 = vmatprep.subr.mxu0 0.0
        %2203 = vmatpush1.msra.mxu0 0.0
        %2204 = vmatprep.subr.mxu0 0.0
        %2205 = vmatpush1.msra.mxu0 0.0
        %2206 = vmatprep.subr.mxu0 0.0
        %2207 = vmatpush1.msra.mxu0 0.0
        %2208 = vmatprep.subr.mxu0 0.0
        %2209 = vmatpush1.msra.mxu0 0.0
        %2210 = vmatprep.subr.mxu0 0.0
        %2211 = vmatpush1.msra.mxu0 0.0
        %2212 = vmatprep.subr.mxu0 0.0
        %2213 = vmatpush1.msra.mxu0 0.0
        %2214 = vmatprep.subr.mxu0 0.0
        %2215 = vmatpush1.msra.mxu0 0.0
        %2216 = vmatprep.mubr.f32.mxu0 0.0
        %2217 = vmatmul.mubr.f32.gmra.mrb[0].mxu0 %v2129
        %v2218 = vpop.f32.mrb[0].mxu0
        %v2219 = vadd.f32 0.0, %v2218
        %v2220 = vpop.f32.mrb[0].mxu0
        %v2221 = vadd.f32 0.0, %v2220
        %2222 = vmatprep.mubr.f32.mxu0 0.0
        %2223 = vmatmul.mubr.f32.gmra.mrb[0].mxu0 %v2132
        %v2224 = vpop.f32.mrb[0].mxu0
        %v2225 = vadd.f32 0.0, %v2224
        %v2226 = vpop.f32.mrb[0].mxu0
        %v2227 = vadd.f32 0.0, %v2226
        %2228 = vmatprep.mubr.f32.mxu0 0.0
        %2229 = vmatmul.mubr.f32.gmra.mrb[0].mxu0 %v2135
        %v2230 = vpop.f32.mrb[0].mxu0
        %v2231 = vadd.f32 0.0, %v2230
        %v2232 = vpop.f32.mrb[0].mxu0
        %v2233 = vadd.f32 0.0, %v2232
        %2234 = vmatprep.mubr.f32.mxu0 0.0
        %2235 = vmatmul.mubr.f32.gmra.mrb[0].mxu0 %v2138
        %v2236 = vpop.f32.mrb[0].mxu0
        %v2237 = vadd.f32 0.0, %v2236
        %v2238 = vpop.f32.mrb[0].mxu0
        %v2239 = vadd.f32 0.0, %v2238
        %2240 = vmatprep.mubr.f32.mxu0 0.0
        %2241 = vmatmul.mubr.f32.gmra.mrb[0].mxu0 %v2141
        %v2242 = vpop.f32.mrb[0].mxu0
        %v2243 = vadd.f32 0.0, %v2242
        %v2244 = vpop.f32.mrb[0].mxu0
        %v2245 = vadd.f32 0.0, %v2244
        %2246 = vmatprep.mubr.f32.mxu0 0.0
        %2247 = vmatmul.mubr.f32.gmra.mrb[0].mxu0 %v2144
        %v2248 = vpop.f32.mrb[0].mxu0
        %v2249 = vadd.f32 0.0, %v2248
        %v2250 = vpop.f32.mrb[0].mxu0
        %v2251 = vadd.f32 0.0, %v2250
        %2252 = vmatprep.mubr.f32.mxu0 0.0
        %2253 = vmatmul.mubr.f32.gmra.mrb[0].mxu0 %v2147
        %v2254 = vpop.f32.mrb[0].mxu0
        %v2255 = vadd.f32 0.0, %v2254
        %v2256 = vpop.f32.mrb[0].mxu0
        %v2257 = vadd.f32 0.0, %v2256
        %2258 = vmatprep.mubr.f32.mxu0 0.0
        %2259 = vmatmul.mubr.f32.gmra.mrb[0].mxu0 %v2150
        %v2260 = vpop.f32.mrb[0].mxu0
        %v2261 = vadd.f32 0.0, %v2260
        %v2262 = vpop.f32.mrb[0].mxu0
        %v2263 = vadd.f32 0.0, %v2262
        %2264 = vdwg.mxu0
        %2265 = vmatprep.subr.mxu0 0.0
        %2266 = vmatpush1.msra.mxu0 %v2044
        %2267 = vmatprep.subr.mxu0 0.0
        %2268 = vmatpush1.msra.mxu0 %v2050
        %2269 = vmatprep.subr.mxu0 0.0
        %2270 = vmatpush1.msra.mxu0 %v2056
        %2271 = vmatprep.subr.mxu0 0.0
        %2272 = vmatpush1.msra.mxu0 %v2062
        %2273 = vmatprep.subr.mxu0 0.0
        %2274 = vmatpush1.msra.mxu0 %v2068
        %2275 = vmatprep.subr.mxu0 0.0
        %2276 = vmatpush1.msra.mxu0 %v2074
        %2277 = vmatprep.subr.mxu0 0.0
        %2278 = vmatpush1.msra.mxu0 %v2080
        %2279 = vmatprep.subr.mxu0 0.0
        %2280 = vmatpush1.msra.mxu0 %v2086
        %2281 = vmatprep.subr.mxu0 0.0
        %2282 = vmatpush1.msra.mxu0 0.0
        %2283 = vmatprep.subr.mxu0 0.0
        %2284 = vmatpush1.msra.mxu0 0.0
        %2285 = vmatprep.subr.mxu0 0.0
        %2286 = vmatpush1.msra.mxu0 0.0
        %2287 = vmatprep.subr.mxu0 0.0
        %2288 = vmatpush1.msra.mxu0 0.0
        %2289 = vmatprep.subr.mxu0 0.0
        %2290 = vmatpush1.msra.mxu0 0.0
        %2291 = vmatprep.subr.mxu0 0.0
        %2292 = vmatpush1.msra.mxu0 0.0
        %2293 = vmatprep.subr.mxu0 0.0
        %2294 = vmatpush1.msra.mxu0 0.0
        %2295 = vmatprep.subr.mxu0 0.0
        %2296 = vmatpush1.msra.mxu0 0.0
        %2297 = vmatprep.subr.mxu0 0.0
        %2298 = vmatpush1.msra.mxu0 0.0
        %2299 = vmatprep.subr.mxu0 0.0
        %2300 = vmatpush1.msra.mxu0 0.0
        %2301 = vmatprep.subr.mxu0 0.0
        %2302 = vmatpush1.msra.mxu0 0.0
        %2303 = vmatprep.subr.mxu0 0.0
        %2304 = vmatpush1.msra.mxu0 0.0
        %2305 = vmatprep.subr.mxu0 0.0
        %2306 = vmatpush1.msra.mxu0 0.0
        %2307 = vmatprep.subr.mxu0 0.0
        %2308 = vmatpush1.msra.mxu0 0.0
        %2309 = vmatprep.subr.mxu0 0.0
        %2310 = vmatpush1.msra.mxu0 0.0
        %2311 = vmatprep.subr.mxu0 0.0
        %2312 = vmatpush1.msra.mxu0 0.0
        %2313 = vmatprep.subr.mxu0 0.0
        %2314 = vmatpush1.msra.mxu0 0.0
        %2315 = vmatprep.subr.mxu0 0.0
        %2316 = vmatpush1.msra.mxu0 0.0
        %2317 = vmatprep.subr.mxu0 0.0
        %2318 = vmatpush1.msra.mxu0 0.0
        %2319 = vmatprep.subr.mxu0 0.0
        %2320 = vmatpush1.msra.mxu0 0.0
        %2321 = vmatprep.subr.mxu0 0.0
        %2322 = vmatpush1.msra.mxu0 0.0
        %2323 = vmatprep.subr.mxu0 0.0
        %2324 = vmatpush1.msra.mxu0 0.0
        %2325 = vmatprep.subr.mxu0 0.0
        %2326 = vmatpush1.msra.mxu0 0.0
        %2327 = vmatprep.subr.mxu0 0.0
        %2328 = vmatpush1.msra.mxu0 0.0
        %2329 = vmatprep.mubr.f32.mxu0 0.0
        %2330 = vmatmul.mubr.f32.gmra.mrb[0].mxu0 %v2129
        %v2331 = vpop.f32.mrb[0].mxu0
        %v2332 = vadd.f32 0.0, %v2331
        %v2333 = vpop.f32.mrb[0].mxu0
        %2334 = vmatprep.mubr.f32.mxu0 0.0
        %2335 = vmatmul.mubr.f32.gmra.mrb[0].mxu0 %v2132
        %v2336 = vpop.f32.mrb[0].mxu0
        %v2337 = vadd.f32 0.0, %v2336
        %v2338 = vpop.f32.mrb[0].mxu0
        %2339 = vmatprep.mubr.f32.mxu0 0.0
        %2340 = vmatmul.mubr.f32.gmra.mrb[0].mxu0 %v2135
        %v2341 = vpop.f32.mrb[0].mxu0
        %v2342 = vadd.f32 0.0, %v2341
        %v2343 = vpop.f32.mrb[0].mxu0
        %2344 = vmatprep.mubr.f32.mxu0 0.0
        %2345 = vmatmul.mubr.f32.gmra.mrb[0].mxu0 %v2138
        %v2346 = vpop.f32.mrb[0].mxu0
        %v2347 = vadd.f32 0.0, %v2346
        %v2348 = vpop.f32.mrb[0].mxu0
        %2349 = vmatprep.mubr.f32.mxu0 0.0
        %2350 = vmatmul.mubr.f32.gmra.mrb[0].mxu0 %v2141
        %v2351 = vpop.f32.mrb[0].mxu0
        %v2352 = vadd.f32 0.0, %v2351
        %v2353 = vpop.f32.mrb[0].mxu0
        %2354 = vmatprep.mubr.f32.mxu0 0.0
        %2355 = vmatmul.mubr.f32.gmra.mrb[0].mxu0 %v2144
        %v2356 = vpop.f32.mrb[0].mxu0
        %v2357 = vadd.f32 0.0, %v2356
        %v2358 = vpop.f32.mrb[0].mxu0
        %2359 = vmatprep.mubr.f32.mxu0 0.0
        %2360 = vmatmul.mubr.f32.gmra.mrb[0].mxu0 %v2147
        %v2361 = vpop.f32.mrb[0].mxu0
        %v2362 = vadd.f32 0.0, %v2361
        %v2363 = vpop.f32.mrb[0].mxu0
        %2364 = vmatprep.mubr.f32.mxu0 0.0
        %2365 = vmatmul.mubr.f32.gmra.mrb[0].mxu0 %v2150
        %v2366 = vpop.f32.mrb[0].mxu0
        %v2367 = vadd.f32 0.0, %v2366
        %v2368 = vpop.f32.mrb[0].mxu0
        %2369 = vdwg.mxu0
        %v2370 = vadd.f32 %v2006, %v2219
        %v2371 = vadd.f32 %v2007, %v2221
        %v2372 = vadd.f32 %v2008, %v2332
        %v2373 = vadd.f32 %v2009, %v2225
        %v2374 = vadd.f32 %v2010, %v2227
        %v2375 = vadd.f32 %v2011, %v2337
        %v2376 = vadd.f32 %v2012, %v2231
        %v2377 = vadd.f32 %v2013, %v2233
        %v2378 = vadd.f32 %v2014, %v2342
        %v2379 = vadd.f32 %v2015, %v2237
        %v2380 = vadd.f32 %v2016, %v2239
        %v2381 = vadd.f32 %v2017, %v2347
        %v2382 = vadd.f32 %v2018, %v2243
        %v2383 = vadd.f32 %v2019, %v2245
        %v2384 = vadd.f32 %v2020, %v2352
        %v2385 = vadd.f32 %v2021, %v2249
        %v2386 = vadd.f32 %v2022, %v2251
        %v2387 = vadd.f32 %v2023, %v2357
        %v2388 = vadd.f32 %v2024, %v2255
        %v2389 = vadd.f32 %v2025, %v2257
        %v2390 = vadd.f32 %v2026, %v2362
        %v2391 = vadd.f32 %v2027, %v2261
        %v2392 = vadd.f32 %v2028, %v2263
        %v2393 = vadd.f32 %v2029, %v2367
        %s2394 = scalar_lea.vmem [#allocation6], 384
        %v2395 = vld [vmem:[%s2394] sm:$0xff]
        %v2396 = vld [vmem:[%s2394 + $0x8] sm:$0xff]
        %v2397 = vld [vmem:[%s2394 + $0x10] sm:$0xff]
        %v2398 = vld [vmem:[%s2394 + $0x18] sm:$0xff]
        %v2399 = vld [vmem:[%s2394 + $0x20] sm:$0xff]
        %v2400 = vld [vmem:[%s2394 + $0x28] sm:$0xff]
        %v2401 = vld [vmem:[%s2394 + $0x30] sm:$0xff]
        %v2402 = vld [vmem:[%s2394 + $0x38] sm:$0xff]
        %2403 = vrot.lane.b32.xlu0 %v307, 92
        %v2404 = vpop.permute.xlu0 %2403
        %2405 = vrot.lane.b32.xlu0 %v308, 92
        %v2406 = vpop.permute.xlu0 %2405
        %2407 = vrot.lane.b32.xlu0 %v309, 92
        %v2408 = vpop.permute.xlu0 %2407
        %2409 = vrot.lane.b32.xlu0 %v310, 92
        %v2410 = vpop.permute.xlu0 %2409
        %2411 = vrot.lane.b32.xlu0 %v311, 92
        %v2412 = vpop.permute.xlu0 %2411
        %2413 = vrot.lane.b32.xlu0 %v312, 92
        %v2414 = vpop.permute.xlu0 %2413
        %2415 = vrot.lane.b32.xlu0 %v313, 92
        %v2416 = vpop.permute.xlu0 %2415
        %2417 = vrot.lane.b32.xlu0 %v314, 92
        %v2418 = vpop.permute.xlu0 %2417
        %2419 = vrot.lane.b32.xlu0 %v315, 92
        %v2420 = vpop.permute.xlu0 %2419
        %2421 = vrot.lane.b32.xlu0 %v316, 92
        %v2422 = vpop.permute.xlu0 %2421
        %2423 = vrot.lane.b32.xlu0 %v317, 92
        %v2424 = vpop.permute.xlu0 %2423
        %2425 = vrot.lane.b32.xlu0 %v318, 92
        %v2426 = vpop.permute.xlu0 %2425
        %2427 = vrot.lane.b32.xlu0 %v319, 92
        %v2428 = vpop.permute.xlu0 %2427
        %2429 = vrot.lane.b32.xlu0 %v320, 92
        %v2430 = vpop.permute.xlu0 %2429
        %2431 = vrot.lane.b32.xlu0 %v321, 92
        %v2432 = vpop.permute.xlu0 %2431
        %2433 = vrot.lane.b32.xlu0 %v322, 92
        %v2434 = vpop.permute.xlu0 %2433
        %2435 = vrot.lane.b32.xlu0 %v323, 92
        %v2436 = vpop.permute.xlu0 %2435
        %2437 = vrot.lane.b32.xlu0 %v324, 92
        %v2438 = vpop.permute.xlu0 %2437
        %2439 = vrot.lane.b32.xlu0 %v325, 92
        %v2440 = vpop.permute.xlu0 %2439
        %2441 = vrot.lane.b32.xlu0 %v326, 92
        %v2442 = vpop.permute.xlu0 %2441
        %2443 = vrot.lane.b32.xlu0 %v327, 92
        %v2444 = vpop.permute.xlu0 %2443
        %2445 = vrot.lane.b32.xlu0 %v328, 92
        %v2446 = vpop.permute.xlu0 %2445
        %2447 = vrot.lane.b32.xlu0 %v329, 92
        %v2448 = vpop.permute.xlu0 %2447
        %2449 = vrot.lane.b32.xlu0 %v330, 92
        %v2450 = vpop.permute.xlu0 %2449
        %vm2451 = vcmask 752640
        %v2452 = vsel %vm2451, %v2404, %v2406
        %v2453 = vsel %vm2451, %v2406, %v2408
        %v2454 = vsel %vm2451, %v2410, %v2412
        %v2455 = vsel %vm2451, %v2412, %v2414
        %v2456 = vsel %vm2451, %v2416, %v2418
        %v2457 = vsel %vm2451, %v2418, %v2420
        %v2458 = vsel %vm2451, %v2422, %v2424
        %v2459 = vsel %vm2451, %v2424, %v2426
        %v2460 = vsel %vm2451, %v2428, %v2430
        %v2461 = vsel %vm2451, %v2430, %v2432
        %v2462 = vsel %vm2451, %v2434, %v2436
        %v2463 = vsel %vm2451, %v2436, %v2438
        %v2464 = vsel %vm2451, %v2440, %v2442
        %v2465 = vsel %vm2451, %v2442, %v2444
        %v2466 = vsel %vm2451, %v2446, %v2448
        %v2467 = vsel %vm2451, %v2448, %v2450
        %v2493 = vsel %vm453, %v2395, 0
        %v2496 = vsel %vm453, %v2396, 0
        %v2499 = vsel %vm453, %v2397, 0
        %v2502 = vsel %vm453, %v2398, 0
        %v2505 = vsel %vm453, %v2399, 0
        %v2508 = vsel %vm453, %v2400, 0
        %v2511 = vsel %vm453, %v2401, 0
        %v2514 = vsel %vm453, %v2402, 0
        %2516 = vmatprep.subr.mxu0 %v2453
        %2517 = vmatpush1.msra.mxu0 %v2452
        %2518 = vmatprep.subr.mxu0 %v2455
        %2519 = vmatpush1.msra.mxu0 %v2454
        %2520 = vmatprep.subr.mxu0 %v2457
        %2521 = vmatpush1.msra.mxu0 %v2456
        %2522 = vmatprep.subr.mxu0 %v2459
        %2523 = vmatpush1.msra.mxu0 %v2458
        %2524 = vmatprep.subr.mxu0 %v2461
        %2525 = vmatpush1.msra.mxu0 %v2460
        %2526 = vmatprep.subr.mxu0 %v2463
        %2527 = vmatpush1.msra.mxu0 %v2462
        %2528 = vmatprep.subr.mxu0 %v2465
        %2529 = vmatpush1.msra.mxu0 %v2464
        %2530 = vmatprep.subr.mxu0 %v2467
        %2531 = vmatpush1.msra.mxu0 %v2466
        %2532 = vmatprep.subr.mxu0 0.0
        %2533 = vmatpush1.msra.mxu0 0.0
        %2534 = vmatprep.subr.mxu0 0.0
        %2535 = vmatpush1.msra.mxu0 0.0
        %2536 = vmatprep.subr.mxu0 0.0
        %2537 = vmatpush1.msra.mxu0 0.0
        %2538 = vmatprep.subr.mxu0 0.0
        %2539 = vmatpush1.msra.mxu0 0.0
        %2540 = vmatprep.subr.mxu0 0.0
        %2541 = vmatpush1.msra.mxu0 0.0
        %2542 = vmatprep.subr.mxu0 0.0
        %2543 = vmatpush1.msra.mxu0 0.0
        %2544 = vmatprep.subr.mxu0 0.0
        %2545 = vmatpush1.msra.mxu0 0.0
        %2546 = vmatprep.subr.mxu0 0.0
        %2547 = vmatpush1.msra.mxu0 0.0
        %2548 = vmatprep.subr.mxu0 0.0
        %2549 = vmatpush1.msra.mxu0 0.0
        %2550 = vmatprep.subr.mxu0 0.0
        %2551 = vmatpush1.msra.mxu0 0.0
        %2552 = vmatprep.subr.mxu0 0.0
        %2553 = vmatpush1.msra.mxu0 0.0
        %2554 = vmatprep.subr.mxu0 0.0
        %2555 = vmatpush1.msra.mxu0 0.0
        %2556 = vmatprep.subr.mxu0 0.0
        %2557 = vmatpush1.msra.mxu0 0.0
        %2558 = vmatprep.subr.mxu0 0.0
        %2559 = vmatpush1.msra.mxu0 0.0
        %2560 = vmatprep.subr.mxu0 0.0
        %2561 = vmatpush1.msra.mxu0 0.0
        %2562 = vmatprep.subr.mxu0 0.0
        %2563 = vmatpush1.msra.mxu0 0.0
        %2564 = vmatprep.subr.mxu0 0.0
        %2565 = vmatpush1.msra.mxu0 0.0
        %2566 = vmatprep.subr.mxu0 0.0
        %2567 = vmatpush1.msra.mxu0 0.0
        %2568 = vmatprep.subr.mxu0 0.0
        %2569 = vmatpush1.msra.mxu0 0.0
        %2570 = vmatprep.subr.mxu0 0.0
        %2571 = vmatpush1.msra.mxu0 0.0
        %2572 = vmatprep.subr.mxu0 0.0
        %2573 = vmatpush1.msra.mxu0 0.0
        %2574 = vmatprep.subr.mxu0 0.0
        %2575 = vmatpush1.msra.mxu0 0.0
        %2576 = vmatprep.subr.mxu0 0.0
        %2577 = vmatpush1.msra.mxu0 0.0
        %2578 = vmatprep.subr.mxu0 0.0
        %2579 = vmatpush1.msra.mxu0 0.0
        %2580 = vmatprep.mubr.f32.mxu0 0.0
        %2581 = vmatmul.mubr.f32.gmra.mrb[0].mxu0 %v2493
        %v2582 = vpop.f32.mrb[0].mxu0
        %v2583 = vadd.f32 0.0, %v2582
        %v2584 = vpop.f32.mrb[0].mxu0
        %v2585 = vadd.f32 0.0, %v2584
        %2586 = vmatprep.mubr.f32.mxu0 0.0
        %2587 = vmatmul.mubr.f32.gmra.mrb[0].mxu0 %v2496
        %v2588 = vpop.f32.mrb[0].mxu0
        %v2589 = vadd.f32 0.0, %v2588
        %v2590 = vpop.f32.mrb[0].mxu0
        %v2591 = vadd.f32 0.0, %v2590
        %2592 = vmatprep.mubr.f32.mxu0 0.0
        %2593 = vmatmul.mubr.f32.gmra.mrb[0].mxu0 %v2499
        %v2594 = vpop.f32.mrb[0].mxu0
        %v2595 = vadd.f32 0.0, %v2594
        %v2596 = vpop.f32.mrb[0].mxu0
        %v2597 = vadd.f32 0.0, %v2596
        %2598 = vmatprep.mubr.f32.mxu0 0.0
        %2599 = vmatmul.mubr.f32.gmra.mrb[0].mxu0 %v2502
        %v2600 = vpop.f32.mrb[0].mxu0
        %v2601 = vadd.f32 0.0, %v2600
        %v2602 = vpop.f32.mrb[0].mxu0
        %v2603 = vadd.f32 0.0, %v2602
        %2604 = vmatprep.mubr.f32.mxu0 0.0
        %2605 = vmatmul.mubr.f32.gmra.mrb[0].mxu0 %v2505
        %v2606 = vpop.f32.mrb[0].mxu0
        %v2607 = vadd.f32 0.0, %v2606
        %v2608 = vpop.f32.mrb[0].mxu0
        %v2609 = vadd.f32 0.0, %v2608
        %2610 = vmatprep.mubr.f32.mxu0 0.0
        %2611 = vmatmul.mubr.f32.gmra.mrb[0].mxu0 %v2508
        %v2612 = vpop.f32.mrb[0].mxu0
        %v2613 = vadd.f32 0.0, %v2612
        %v2614 = vpop.f32.mrb[0].mxu0
        %v2615 = vadd.f32 0.0, %v2614
        %2616 = vmatprep.mubr.f32.mxu0 0.0
        %2617 = vmatmul.mubr.f32.gmra.mrb[0].mxu0 %v2511
        %v2618 = vpop.f32.mrb[0].mxu0
        %v2619 = vadd.f32 0.0, %v2618
        %v2620 = vpop.f32.mrb[0].mxu0
        %v2621 = vadd.f32 0.0, %v2620
        %2622 = vmatprep.mubr.f32.mxu0 0.0
        %2623 = vmatmul.mubr.f32.gmra.mrb[0].mxu0 %v2514
        %v2624 = vpop.f32.mrb[0].mxu0
        %v2625 = vadd.f32 0.0, %v2624
        %v2626 = vpop.f32.mrb[0].mxu0
        %v2627 = vadd.f32 0.0, %v2626
        %2628 = vdwg.mxu0
        %2629 = vmatprep.subr.mxu0 0.0
        %2630 = vmatpush1.msra.mxu0 %v2408
        %2631 = vmatprep.subr.mxu0 0.0
        %2632 = vmatpush1.msra.mxu0 %v2414
        %2633 = vmatprep.subr.mxu0 0.0
        %2634 = vmatpush1.msra.mxu0 %v2420
        %2635 = vmatprep.subr.mxu0 0.0
        %2636 = vmatpush1.msra.mxu0 %v2426
        %2637 = vmatprep.subr.mxu0 0.0
        %2638 = vmatpush1.msra.mxu0 %v2432
        %2639 = vmatprep.subr.mxu0 0.0
        %2640 = vmatpush1.msra.mxu0 %v2438
        %2641 = vmatprep.subr.mxu0 0.0
        %2642 = vmatpush1.msra.mxu0 %v2444
        %2643 = vmatprep.subr.mxu0 0.0
        %2644 = vmatpush1.msra.mxu0 %v2450
        %2645 = vmatprep.subr.mxu0 0.0
        %2646 = vmatpush1.msra.mxu0 0.0
        %2647 = vmatprep.subr.mxu0 0.0
        %2648 = vmatpush1.msra.mxu0 0.0
        %2649 = vmatprep.subr.mxu0 0.0
        %2650 = vmatpush1.msra.mxu0 0.0
        %2651 = vmatprep.subr.mxu0 0.0
        %2652 = vmatpush1.msra.mxu0 0.0
        %2653 = vmatprep.subr.mxu0 0.0
        %2654 = vmatpush1.msra.mxu0 0.0
        %2655 = vmatprep.subr.mxu0 0.0
        %2656 = vmatpush1.msra.mxu0 0.0
        %2657 = vmatprep.subr.mxu0 0.0
        %2658 = vmatpush1.msra.mxu0 0.0
        %2659 = vmatprep.subr.mxu0 0.0
        %2660 = vmatpush1.msra.mxu0 0.0
        %2661 = vmatprep.subr.mxu0 0.0
        %2662 = vmatpush1.msra.mxu0 0.0
        %2663 = vmatprep.subr.mxu0 0.0
        %2664 = vmatpush1.msra.mxu0 0.0
        %2665 = vmatprep.subr.mxu0 0.0
        %2666 = vmatpush1.msra.mxu0 0.0
        %2667 = vmatprep.subr.mxu0 0.0
        %2668 = vmatpush1.msra.mxu0 0.0
        %2669 = vmatprep.subr.mxu0 0.0
        %2670 = vmatpush1.msra.mxu0 0.0
        %2671 = vmatprep.subr.mxu0 0.0
        %2672 = vmatpush1.msra.mxu0 0.0
        %2673 = vmatprep.subr.mxu0 0.0
        %2674 = vmatpush1.msra.mxu0 0.0
        %2675 = vmatprep.subr.mxu0 0.0
        %2676 = vmatpush1.msra.mxu0 0.0
        %2677 = vmatprep.subr.mxu0 0.0
        %2678 = vmatpush1.msra.mxu0 0.0
        %2679 = vmatprep.subr.mxu0 0.0
        %2680 = vmatpush1.msra.mxu0 0.0
        %2681 = vmatprep.subr.mxu0 0.0
        %2682 = vmatpush1.msra.mxu0 0.0
        %2683 = vmatprep.subr.mxu0 0.0
        %2684 = vmatpush1.msra.mxu0 0.0
        %2685 = vmatprep.subr.mxu0 0.0
        %2686 = vmatpush1.msra.mxu0 0.0
        %2687 = vmatprep.subr.mxu0 0.0
        %2688 = vmatpush1.msra.mxu0 0.0
        %2689 = vmatprep.subr.mxu0 0.0
        %2690 = vmatpush1.msra.mxu0 0.0
        %2691 = vmatprep.subr.mxu0 0.0
        %2692 = vmatpush1.msra.mxu0 0.0
        %2693 = vmatprep.mubr.f32.mxu0 0.0
        %2694 = vmatmul.mubr.f32.gmra.mrb[0].mxu0 %v2493
        %v2695 = vpop.f32.mrb[0].mxu0
        %v2696 = vadd.f32 0.0, %v2695
        %v2697 = vpop.f32.mrb[0].mxu0
        %2698 = vmatprep.mubr.f32.mxu0 0.0
        %2699 = vmatmul.mubr.f32.gmra.mrb[0].mxu0 %v2496
        %v2700 = vpop.f32.mrb[0].mxu0
        %v2701 = vadd.f32 0.0, %v2700
        %v2702 = vpop.f32.mrb[0].mxu0
        %2703 = vmatprep.mubr.f32.mxu0 0.0
        %2704 = vmatmul.mubr.f32.gmra.mrb[0].mxu0 %v2499
        %v2705 = vpop.f32.mrb[0].mxu0
        %v2706 = vadd.f32 0.0, %v2705
        %v2707 = vpop.f32.mrb[0].mxu0
        %2708 = vmatprep.mubr.f32.mxu0 0.0
        %2709 = vmatmul.mubr.f32.gmra.mrb[0].mxu0 %v2502
        %v2710 = vpop.f32.mrb[0].mxu0
        %v2711 = vadd.f32 0.0, %v2710
        %v2712 = vpop.f32.mrb[0].mxu0
        %2713 = vmatprep.mubr.f32.mxu0 0.0
        %2714 = vmatmul.mubr.f32.gmra.mrb[0].mxu0 %v2505
        %v2715 = vpop.f32.mrb[0].mxu0
        %v2716 = vadd.f32 0.0, %v2715
        %v2717 = vpop.f32.mrb[0].mxu0
        %2718 = vmatprep.mubr.f32.mxu0 0.0
        %2719 = vmatmul.mubr.f32.gmra.mrb[0].mxu0 %v2508
        %v2720 = vpop.f32.mrb[0].mxu0
        %v2721 = vadd.f32 0.0, %v2720
        %v2722 = vpop.f32.mrb[0].mxu0
        %2723 = vmatprep.mubr.f32.mxu0 0.0
        %2724 = vmatmul.mubr.f32.gmra.mrb[0].mxu0 %v2511
        %v2725 = vpop.f32.mrb[0].mxu0
        %v2726 = vadd.f32 0.0, %v2725
        %v2727 = vpop.f32.mrb[0].mxu0
        %2728 = vmatprep.mubr.f32.mxu0 0.0
        %2729 = vmatmul.mubr.f32.gmra.mrb[0].mxu0 %v2514
        %v2730 = vpop.f32.mrb[0].mxu0
        %v2731 = vadd.f32 0.0, %v2730
        %v2732 = vpop.f32.mrb[0].mxu0
        %2733 = vdwg.mxu0
        %v2734 = vadd.f32 %v2370, %v2583
        %v2735 = vadd.f32 %v2371, %v2585
        %v2736 = vadd.f32 %v2372, %v2696
        %v2737 = vadd.f32 %v2373, %v2589
        %v2738 = vadd.f32 %v2374, %v2591
        %v2739 = vadd.f32 %v2375, %v2701
        %v2740 = vadd.f32 %v2376, %v2595
        %v2741 = vadd.f32 %v2377, %v2597
        %v2742 = vadd.f32 %v2378, %v2706
        %v2743 = vadd.f32 %v2379, %v2601
        %v2744 = vadd.f32 %v2380, %v2603
        %v2745 = vadd.f32 %v2381, %v2711
        %v2746 = vadd.f32 %v2382, %v2607
        %v2747 = vadd.f32 %v2383, %v2609
        %v2748 = vadd.f32 %v2384, %v2716
        %v2749 = vadd.f32 %v2385, %v2613
        %v2750 = vadd.f32 %v2386, %v2615
        %v2751 = vadd.f32 %v2387, %v2721
        %v2752 = vadd.f32 %v2388, %v2619
        %v2753 = vadd.f32 %v2389, %v2621
        %v2754 = vadd.f32 %v2390, %v2726
        %v2755 = vadd.f32 %v2391, %v2625
        %v2756 = vadd.f32 %v2392, %v2627
        %v2757 = vadd.f32 %v2393, %v2731
        %s2758 = scalar_lea.vmem [#allocation6], 448
        %v2759 = vld [vmem:[%s2758] sm:$0xff]
        %v2760 = vld [vmem:[%s2758 + $0x8] sm:$0xff]
        %v2761 = vld [vmem:[%s2758 + $0x10] sm:$0xff]
        %v2762 = vld [vmem:[%s2758 + $0x18] sm:$0xff]
        %v2763 = vld [vmem:[%s2758 + $0x20] sm:$0xff]
        %v2764 = vld [vmem:[%s2758 + $0x28] sm:$0xff]
        %v2765 = vld [vmem:[%s2758 + $0x30] sm:$0xff]
        %v2766 = vld [vmem:[%s2758 + $0x38] sm:$0xff]
        %2767 = vrot.lane.b32.xlu0 %v307, 91
        %v2768 = vpop.permute.xlu0 %2767
        %2769 = vrot.lane.b32.xlu0 %v308, 91
        %v2770 = vpop.permute.xlu0 %2769
        %2771 = vrot.lane.b32.xlu0 %v309, 91
        %v2772 = vpop.permute.xlu0 %2771
        %2773 = vrot.lane.b32.xlu0 %v310, 91
        %v2774 = vpop.permute.xlu0 %2773
        %2775 = vrot.lane.b32.xlu0 %v311, 91
        %v2776 = vpop.permute.xlu0 %2775
        %2777 = vrot.lane.b32.xlu0 %v312, 91
        %v2778 = vpop.permute.xlu0 %2777
        %2779 = vrot.lane.b32.xlu0 %v313, 91
        %v2780 = vpop.permute.xlu0 %2779
        %2781 = vrot.lane.b32.xlu0 %v314, 91
        %v2782 = vpop.permute.xlu0 %2781
        %2783 = vrot.lane.b32.xlu0 %v315, 91
        %v2784 = vpop.permute.xlu0 %2783
        %2785 = vrot.lane.b32.xlu0 %v316, 91
        %v2786 = vpop.permute.xlu0 %2785
        %2787 = vrot.lane.b32.xlu0 %v317, 91
        %v2788 = vpop.permute.xlu0 %2787
        %2789 = vrot.lane.b32.xlu0 %v318, 91
        %v2790 = vpop.permute.xlu0 %2789
        %2791 = vrot.lane.b32.xlu0 %v319, 91
        %v2792 = vpop.permute.xlu0 %2791
        %2793 = vrot.lane.b32.xlu0 %v320, 91
        %v2794 = vpop.permute.xlu0 %2793
        %2795 = vrot.lane.b32.xlu0 %v321, 91
        %v2796 = vpop.permute.xlu0 %2795
        %2797 = vrot.lane.b32.xlu0 %v322, 91
        %v2798 = vpop.permute.xlu0 %2797
        %2799 = vrot.lane.b32.xlu0 %v323, 91
        %v2800 = vpop.permute.xlu0 %2799
        %2801 = vrot.lane.b32.xlu0 %v324, 91
        %v2802 = vpop.permute.xlu0 %2801
        %2803 = vrot.lane.b32.xlu0 %v325, 91
        %v2804 = vpop.permute.xlu0 %2803
        %2805 = vrot.lane.b32.xlu0 %v326, 91
        %v2806 = vpop.permute.xlu0 %2805
        %2807 = vrot.lane.b32.xlu0 %v327, 91
        %v2808 = vpop.permute.xlu0 %2807
        %2809 = vrot.lane.b32.xlu0 %v328, 91
        %v2810 = vpop.permute.xlu0 %2809
        %2811 = vrot.lane.b32.xlu0 %v329, 91
        %v2812 = vpop.permute.xlu0 %2811
        %2813 = vrot.lane.b32.xlu0 %v330, 91
        %v2814 = vpop.permute.xlu0 %2813
        %vm2815 = vcmask 744448
        %v2816 = vsel %vm2815, %v2768, %v2770
        %v2817 = vsel %vm2815, %v2770, %v2772
        %v2818 = vsel %vm2815, %v2774, %v2776
        %v2819 = vsel %vm2815, %v2776, %v2778
        %v2820 = vsel %vm2815, %v2780, %v2782
        %v2821 = vsel %vm2815, %v2782, %v2784
        %v2822 = vsel %vm2815, %v2786, %v2788
        %v2823 = vsel %vm2815, %v2788, %v2790
        %v2824 = vsel %vm2815, %v2792, %v2794
        %v2825 = vsel %vm2815, %v2794, %v2796
        %v2826 = vsel %vm2815, %v2798, %v2800
        %v2827 = vsel %vm2815, %v2800, %v2802
        %v2828 = vsel %vm2815, %v2804, %v2806
        %v2829 = vsel %vm2815, %v2806, %v2808
        %v2830 = vsel %vm2815, %v2810, %v2812
        %v2831 = vsel %vm2815, %v2812, %v2814
        %v2857 = vsel %vm453, %v2759, 0
        %v2860 = vsel %vm453, %v2760, 0
        %v2863 = vsel %vm453, %v2761, 0
        %v2866 = vsel %vm453, %v2762, 0
        %v2869 = vsel %vm453, %v2763, 0
        %v2872 = vsel %vm453, %v2764, 0
        %v2875 = vsel %vm453, %v2765, 0
        %v2878 = vsel %vm453, %v2766, 0
        %2880 = vmatprep.subr.mxu0 %v2817
        %2881 = vmatpush1.msra.mxu0 %v2816
        %2882 = vmatprep.subr.mxu0 %v2819
        %2883 = vmatpush1.msra.mxu0 %v2818
        %2884 = vmatprep.subr.mxu0 %v2821
        %2885 = vmatpush1.msra.mxu0 %v2820
        %2886 = vmatprep.subr.mxu0 %v2823
        %2887 = vmatpush1.msra.mxu0 %v2822
        %2888 = vmatprep.subr.mxu0 %v2825
        %2889 = vmatpush1.msra.mxu0 %v2824
        %2890 = vmatprep.subr.mxu0 %v2827
        %2891 = vmatpush1.msra.mxu0 %v2826
        %2892 = vmatprep.subr.mxu0 %v2829
        %2893 = vmatpush1.msra.mxu0 %v2828
        %2894 = vmatprep.subr.mxu0 %v2831
        %2895 = vmatpush1.msra.mxu0 %v2830
        %2896 = vmatprep.subr.mxu0 0.0
        %2897 = vmatpush1.msra.mxu0 0.0
        %2898 = vmatprep.subr.mxu0 0.0
        %2899 = vmatpush1.msra.mxu0 0.0
        %2900 = vmatprep.subr.mxu0 0.0
        %2901 = vmatpush1.msra.mxu0 0.0
        %2902 = vmatprep.subr.mxu0 0.0
        %2903 = vmatpush1.msra.mxu0 0.0
        %2904 = vmatprep.subr.mxu0 0.0
        %2905 = vmatpush1.msra.mxu0 0.0
        %2906 = vmatprep.subr.mxu0 0.0
        %2907 = vmatpush1.msra.mxu0 0.0
        %2908 = vmatprep.subr.mxu0 0.0
        %2909 = vmatpush1.msra.mxu0 0.0
        %2910 = vmatprep.subr.mxu0 0.0
        %2911 = vmatpush1.msra.mxu0 0.0
        %2912 = vmatprep.subr.mxu0 0.0
        %2913 = vmatpush1.msra.mxu0 0.0
        %2914 = vmatprep.subr.mxu0 0.0
        %2915 = vmatpush1.msra.mxu0 0.0
        %2916 = vmatprep.subr.mxu0 0.0
        %2917 = vmatpush1.msra.mxu0 0.0
        %2918 = vmatprep.subr.mxu0 0.0
        %2919 = vmatpush1.msra.mxu0 0.0
        %2920 = vmatprep.subr.mxu0 0.0
        %2921 = vmatpush1.msra.mxu0 0.0
        %2922 = vmatprep.subr.mxu0 0.0
        %2923 = vmatpush1.msra.mxu0 0.0
        %2924 = vmatprep.subr.mxu0 0.0
        %2925 = vmatpush1.msra.mxu0 0.0
        %2926 = vmatprep.subr.mxu0 0.0
        %2927 = vmatpush1.msra.mxu0 0.0
        %2928 = vmatprep.subr.mxu0 0.0
        %2929 = vmatpush1.msra.mxu0 0.0
        %2930 = vmatprep.subr.mxu0 0.0
        %2931 = vmatpush1.msra.mxu0 0.0
        %2932 = vmatprep.subr.mxu0 0.0
        %2933 = vmatpush1.msra.mxu0 0.0
        %2934 = vmatprep.subr.mxu0 0.0
        %2935 = vmatpush1.msra.mxu0 0.0
        %2936 = vmatprep.subr.mxu0 0.0
        %2937 = vmatpush1.msra.mxu0 0.0
        %2938 = vmatprep.subr.mxu0 0.0
        %2939 = vmatpush1.msra.mxu0 0.0
        %2940 = vmatprep.subr.mxu0 0.0
        %2941 = vmatpush1.msra.mxu0 0.0
        %2942 = vmatprep.subr.mxu0 0.0
        %2943 = vmatpush1.msra.mxu0 0.0
        %2944 = vmatprep.mubr.f32.mxu0 0.0
        %2945 = vmatmul.mubr.f32.gmra.mrb[0].mxu0 %v2857
        %v2946 = vpop.f32.mrb[0].mxu0
        %v2947 = vadd.f32 0.0, %v2946
        %v2948 = vpop.f32.mrb[0].mxu0
        %v2949 = vadd.f32 0.0, %v2948
        %2950 = vmatprep.mubr.f32.mxu0 0.0
        %2951 = vmatmul.mubr.f32.gmra.mrb[0].mxu0 %v2860
        %v2952 = vpop.f32.mrb[0].mxu0
        %v2953 = vadd.f32 0.0, %v2952
        %v2954 = vpop.f32.mrb[0].mxu0
        %v2955 = vadd.f32 0.0, %v2954
        %2956 = vmatprep.mubr.f32.mxu0 0.0
        %2957 = vmatmul.mubr.f32.gmra.mrb[0].mxu0 %v2863
        %v2958 = vpop.f32.mrb[0].mxu0
        %v2959 = vadd.f32 0.0, %v2958
        %v2960 = vpop.f32.mrb[0].mxu0
        %v2961 = vadd.f32 0.0, %v2960
        %2962 = vmatprep.mubr.f32.mxu0 0.0
        %2963 = vmatmul.mubr.f32.gmra.mrb[0].mxu0 %v2866
        %v2964 = vpop.f32.mrb[0].mxu0
        %v2965 = vadd.f32 0.0, %v2964
        %v2966 = vpop.f32.mrb[0].mxu0
        %v2967 = vadd.f32 0.0, %v2966
        %2968 = vmatprep.mubr.f32.mxu0 0.0
        %2969 = vmatmul.mubr.f32.gmra.mrb[0].mxu0 %v2869
        %v2970 = vpop.f32.mrb[0].mxu0
        %v2971 = vadd.f32 0.0, %v2970
        %v2972 = vpop.f32.mrb[0].mxu0
        %v2973 = vadd.f32 0.0, %v2972
        %2974 = vmatprep.mubr.f32.mxu0 0.0
        %2975 = vmatmul.mubr.f32.gmra.mrb[0].mxu0 %v2872
        %v2976 = vpop.f32.mrb[0].mxu0
        %v2977 = vadd.f32 0.0, %v2976
        %v2978 = vpop.f32.mrb[0].mxu0
        %v2979 = vadd.f32 0.0, %v2978
        %2980 = vmatprep.mubr.f32.mxu0 0.0
        %2981 = vmatmul.mubr.f32.gmra.mrb[0].mxu0 %v2875
        %v2982 = vpop.f32.mrb[0].mxu0
        %v2983 = vadd.f32 0.0, %v2982
        %v2984 = vpop.f32.mrb[0].mxu0
        %v2985 = vadd.f32 0.0, %v2984
        %2986 = vmatprep.mubr.f32.mxu0 0.0
        %2987 = vmatmul.mubr.f32.gmra.mrb[0].mxu0 %v2878
        %v2988 = vpop.f32.mrb[0].mxu0
        %v2989 = vadd.f32 0.0, %v2988
        %v2990 = vpop.f32.mrb[0].mxu0
        %v2991 = vadd.f32 0.0, %v2990
        %2992 = vdwg.mxu0
        %2993 = vmatprep.subr.mxu0 0.0
        %2994 = vmatpush1.msra.mxu0 %v2772
        %2995 = vmatprep.subr.mxu0 0.0
        %2996 = vmatpush1.msra.mxu0 %v2778
        %2997 = vmatprep.subr.mxu0 0.0
        %2998 = vmatpush1.msra.mxu0 %v2784
        %2999 = vmatprep.subr.mxu0 0.0
        %3000 = vmatpush1.msra.mxu0 %v2790
        %3001 = vmatprep.subr.mxu0 0.0
        %3002 = vmatpush1.msra.mxu0 %v2796
        %3003 = vmatprep.subr.mxu0 0.0
        %3004 = vmatpush1.msra.mxu0 %v2802
        %3005 = vmatprep.subr.mxu0 0.0
        %3006 = vmatpush1.msra.mxu0 %v2808
        %3007 = vmatprep.subr.mxu0 0.0
        %3008 = vmatpush1.msra.mxu0 %v2814
        %3009 = vmatprep.subr.mxu0 0.0
        %3010 = vmatpush1.msra.mxu0 0.0
        %3011 = vmatprep.subr.mxu0 0.0
        %3012 = vmatpush1.msra.mxu0 0.0
        %3013 = vmatprep.subr.mxu0 0.0
        %3014 = vmatpush1.msra.mxu0 0.0
        %3015 = vmatprep.subr.mxu0 0.0
        %3016 = vmatpush1.msra.mxu0 0.0
        %3017 = vmatprep.subr.mxu0 0.0
        %3018 = vmatpush1.msra.mxu0 0.0
        %3019 = vmatprep.subr.mxu0 0.0
        %3020 = vmatpush1.msra.mxu0 0.0
        %3021 = vmatprep.subr.mxu0 0.0
        %3022 = vmatpush1.msra.mxu0 0.0
        %3023 = vmatprep.subr.mxu0 0.0
        %3024 = vmatpush1.msra.mxu0 0.0
        %3025 = vmatprep.subr.mxu0 0.0
        %3026 = vmatpush1.msra.mxu0 0.0
        %3027 = vmatprep.subr.mxu0 0.0
        %3028 = vmatpush1.msra.mxu0 0.0
        %3029 = vmatprep.subr.mxu0 0.0
        %3030 = vmatpush1.msra.mxu0 0.0
        %3031 = vmatprep.subr.mxu0 0.0
        %3032 = vmatpush1.msra.mxu0 0.0
        %3033 = vmatprep.subr.mxu0 0.0
        %3034 = vmatpush1.msra.mxu0 0.0
        %3035 = vmatprep.subr.mxu0 0.0
        %3036 = vmatpush1.msra.mxu0 0.0
        %3037 = vmatprep.subr.mxu0 0.0
        %3038 = vmatpush1.msra.mxu0 0.0
        %3039 = vmatprep.subr.mxu0 0.0
        %3040 = vmatpush1.msra.mxu0 0.0
        %3041 = vmatprep.subr.mxu0 0.0
        %3042 = vmatpush1.msra.mxu0 0.0
        %3043 = vmatprep.subr.mxu0 0.0
        %3044 = vmatpush1.msra.mxu0 0.0
        %3045 = vmatprep.subr.mxu0 0.0
        %3046 = vmatpush1.msra.mxu0 0.0
        %3047 = vmatprep.subr.mxu0 0.0
        %3048 = vmatpush1.msra.mxu0 0.0
        %3049 = vmatprep.subr.mxu0 0.0
        %3050 = vmatpush1.msra.mxu0 0.0
        %3051 = vmatprep.subr.mxu0 0.0
        %3052 = vmatpush1.msra.mxu0 0.0
        %3053 = vmatprep.subr.mxu0 0.0
        %3054 = vmatpush1.msra.mxu0 0.0
        %3055 = vmatprep.subr.mxu0 0.0
        %3056 = vmatpush1.msra.mxu0 0.0
        %3057 = vmatprep.mubr.f32.mxu0 0.0
        %3058 = vmatmul.mubr.f32.gmra.mrb[0].mxu0 %v2857
        %v3059 = vpop.f32.mrb[0].mxu0
        %v3060 = vadd.f32 0.0, %v3059
        %v3061 = vpop.f32.mrb[0].mxu0
        %3062 = vmatprep.mubr.f32.mxu0 0.0
        %3063 = vmatmul.mubr.f32.gmra.mrb[0].mxu0 %v2860
        %v3064 = vpop.f32.mrb[0].mxu0
        %v3065 = vadd.f32 0.0, %v3064
        %v3066 = vpop.f32.mrb[0].mxu0
        %3067 = vmatprep.mubr.f32.mxu0 0.0
        %3068 = vmatmul.mubr.f32.gmra.mrb[0].mxu0 %v2863
        %v3069 = vpop.f32.mrb[0].mxu0
        %v3070 = vadd.f32 0.0, %v3069
        %v3071 = vpop.f32.mrb[0].mxu0
        %3072 = vmatprep.mubr.f32.mxu0 0.0
        %3073 = vmatmul.mubr.f32.gmra.mrb[0].mxu0 %v2866
        %v3074 = vpop.f32.mrb[0].mxu0
        %v3075 = vadd.f32 0.0, %v3074
        %v3076 = vpop.f32.mrb[0].mxu0
        %3077 = vmatprep.mubr.f32.mxu0 0.0
        %3078 = vmatmul.mubr.f32.gmra.mrb[0].mxu0 %v2869
        %v3079 = vpop.f32.mrb[0].mxu0
        %v3080 = vadd.f32 0.0, %v3079
        %v3081 = vpop.f32.mrb[0].mxu0
        %3082 = vmatprep.mubr.f32.mxu0 0.0
        %3083 = vmatmul.mubr.f32.gmra.mrb[0].mxu0 %v2872
        %v3084 = vpop.f32.mrb[0].mxu0
        %v3085 = vadd.f32 0.0, %v3084
        %v3086 = vpop.f32.mrb[0].mxu0
        %3087 = vmatprep.mubr.f32.mxu0 0.0
        %3088 = vmatmul.mubr.f32.gmra.mrb[0].mxu0 %v2875
        %v3089 = vpop.f32.mrb[0].mxu0
        %v3090 = vadd.f32 0.0, %v3089
        %v3091 = vpop.f32.mrb[0].mxu0
        %3092 = vmatprep.mubr.f32.mxu0 0.0
        %3093 = vmatmul.mubr.f32.gmra.mrb[0].mxu0 %v2878
        %v3094 = vpop.f32.mrb[0].mxu0
        %v3095 = vadd.f32 0.0, %v3094
        %v3096 = vpop.f32.mrb[0].mxu0
        %3097 = vdwg.mxu0
        %v3098 = vadd.f32 %v2734, %v2947
        %v3099 = vadd.f32 %v2735, %v2949
        %v3100 = vadd.f32 %v2736, %v3060
        %v3101 = vadd.f32 %v2737, %v2953
        %v3102 = vadd.f32 %v2738, %v2955
        %v3103 = vadd.f32 %v2739, %v3065
        %v3104 = vadd.f32 %v2740, %v2959
        %v3105 = vadd.f32 %v2741, %v2961
        %v3106 = vadd.f32 %v2742, %v3070
        %v3107 = vadd.f32 %v2743, %v2965
        %v3108 = vadd.f32 %v2744, %v2967
        %v3109 = vadd.f32 %v2745, %v3075
        %v3110 = vadd.f32 %v2746, %v2971
        %v3111 = vadd.f32 %v2747, %v2973
        %v3112 = vadd.f32 %v2748, %v3080
        %v3113 = vadd.f32 %v2749, %v2977
        %v3114 = vadd.f32 %v2750, %v2979
        %v3115 = vadd.f32 %v2751, %v3085
        %v3116 = vadd.f32 %v2752, %v2983
        %v3117 = vadd.f32 %v2753, %v2985
        %v3118 = vadd.f32 %v2754, %v3090
        %v3119 = vadd.f32 %v2755, %v2989
        %v3120 = vadd.f32 %v2756, %v2991
        %v3121 = vadd.f32 %v2757, %v3095
        %s3122 = scalar_lea.vmem [#allocation6], 512
        %v3123 = vld [vmem:[%s3122] sm:$0xff]
        %v3124 = vld [vmem:[%s3122 + $0x8] sm:$0xff]
        %v3125 = vld [vmem:[%s3122 + $0x10] sm:$0xff]
        %v3126 = vld [vmem:[%s3122 + $0x18] sm:$0xff]
        %v3127 = vld [vmem:[%s3122 + $0x20] sm:$0xff]
        %v3128 = vld [vmem:[%s3122 + $0x28] sm:$0xff]
        %v3129 = vld [vmem:[%s3122 + $0x30] sm:$0xff]
        %v3130 = vld [vmem:[%s3122 + $0x38] sm:$0xff]
        %3131 = vrot.lane.b32.xlu0 %v307, 90
        %v3132 = vpop.permute.xlu0 %3131
        %3133 = vrot.lane.b32.xlu0 %v308, 90
        %v3134 = vpop.permute.xlu0 %3133
        %3135 = vrot.lane.b32.xlu0 %v309, 90
        %v3136 = vpop.permute.xlu0 %3135
        %3137 = vrot.lane.b32.xlu0 %v310, 90
        %v3138 = vpop.permute.xlu0 %3137
        %3139 = vrot.lane.b32.xlu0 %v311, 90
        %v3140 = vpop.permute.xlu0 %3139
        %3141 = vrot.lane.b32.xlu0 %v312, 90
        %v3142 = vpop.permute.xlu0 %3141
        %3143 = vrot.lane.b32.xlu0 %v313, 90
        %v3144 = vpop.permute.xlu0 %3143
        %3145 = vrot.lane.b32.xlu0 %v314, 90
        %v3146 = vpop.permute.xlu0 %3145
        %3147 = vrot.lane.b32.xlu0 %v315, 90
        %v3148 = vpop.permute.xlu0 %3147
        %3149 = vrot.lane.b32.xlu0 %v316, 90
        %v3150 = vpop.permute.xlu0 %3149
        %3151 = vrot.lane.b32.xlu0 %v317, 90
        %v3152 = vpop.permute.xlu0 %3151
        %3153 = vrot.lane.b32.xlu0 %v318, 90
        %v3154 = vpop.permute.xlu0 %3153
        %3155 = vrot.lane.b32.xlu0 %v319, 90
        %v3156 = vpop.permute.xlu0 %3155
        %3157 = vrot.lane.b32.xlu0 %v320, 90
        %v3158 = vpop.permute.xlu0 %3157
        %3159 = vrot.lane.b32.xlu0 %v321, 90
        %v3160 = vpop.permute.xlu0 %3159
        %3161 = vrot.lane.b32.xlu0 %v322, 90
        %v3162 = vpop.permute.xlu0 %3161
        %3163 = vrot.lane.b32.xlu0 %v323, 90
        %v3164 = vpop.permute.xlu0 %3163
        %3165 = vrot.lane.b32.xlu0 %v324, 90
        %v3166 = vpop.permute.xlu0 %3165
        %3167 = vrot.lane.b32.xlu0 %v325, 90
        %v3168 = vpop.permute.xlu0 %3167
        %3169 = vrot.lane.b32.xlu0 %v326, 90
        %v3170 = vpop.permute.xlu0 %3169
        %3171 = vrot.lane.b32.xlu0 %v327, 90
        %v3172 = vpop.permute.xlu0 %3171
        %3173 = vrot.lane.b32.xlu0 %v328, 90
        %v3174 = vpop.permute.xlu0 %3173
        %3175 = vrot.lane.b32.xlu0 %v329, 90
        %v3176 = vpop.permute.xlu0 %3175
        %3177 = vrot.lane.b32.xlu0 %v330, 90
        %v3178 = vpop.permute.xlu0 %3177
        %vm3179 = vcmask 736256
        %v3180 = vsel %vm3179, %v3132, %v3134
        %v3181 = vsel %vm3179, %v3134, %v3136
        %v3182 = vsel %vm3179, %v3138, %v3140
        %v3183 = vsel %vm3179, %v3140, %v3142
        %v3184 = vsel %vm3179, %v3144, %v3146
        %v3185 = vsel %vm3179, %v3146, %v3148
        %v3186 = vsel %vm3179, %v3150, %v3152
        %v3187 = vsel %vm3179, %v3152, %v3154
        %v3188 = vsel %vm3179, %v3156, %v3158
        %v3189 = vsel %vm3179, %v3158, %v3160
        %v3190 = vsel %vm3179, %v3162, %v3164
        %v3191 = vsel %vm3179, %v3164, %v3166
        %v3192 = vsel %vm3179, %v3168, %v3170
        %v3193 = vsel %vm3179, %v3170, %v3172
        %v3194 = vsel %vm3179, %v3174, %v3176
        %v3195 = vsel %vm3179, %v3176, %v3178
        %v3221 = vsel %vm453, %v3123, 0
        %v3224 = vsel %vm453, %v3124, 0
        %v3227 = vsel %vm453, %v3125, 0
        %v3230 = vsel %vm453, %v3126, 0
        %v3233 = vsel %vm453, %v3127, 0
        %v3236 = vsel %vm453, %v3128, 0
        %v3239 = vsel %vm453, %v3129, 0
        %v3242 = vsel %vm453, %v3130, 0
        %3244 = vmatprep.subr.mxu0 %v3181
        %3245 = vmatpush1.msra.mxu0 %v3180
        %3246 = vmatprep.subr.mxu0 %v3183
        %3247 = vmatpush1.msra.mxu0 %v3182
        %3248 = vmatprep.subr.mxu0 %v3185
        %3249 = vmatpush1.msra.mxu0 %v3184
        %3250 = vmatprep.subr.mxu0 %v3187
        %3251 = vmatpush1.msra.mxu0 %v3186
        %3252 = vmatprep.subr.mxu0 %v3189
        %3253 = vmatpush1.msra.mxu0 %v3188
        %3254 = vmatprep.subr.mxu0 %v3191
        %3255 = vmatpush1.msra.mxu0 %v3190
        %3256 = vmatprep.subr.mxu0 %v3193
        %3257 = vmatpush1.msra.mxu0 %v3192
        %3258 = vmatprep.subr.mxu0 %v3195
        %3259 = vmatpush1.msra.mxu0 %v3194
        %3260 = vmatprep.subr.mxu0 0.0
        %3261 = vmatpush1.msra.mxu0 0.0
        %3262 = vmatprep.subr.mxu0 0.0
        %3263 = vmatpush1.msra.mxu0 0.0
        %3264 = vmatprep.subr.mxu0 0.0
        %3265 = vmatpush1.msra.mxu0 0.0
        %3266 = vmatprep.subr.mxu0 0.0
        %3267 = vmatpush1.msra.mxu0 0.0
        %3268 = vmatprep.subr.mxu0 0.0
        %3269 = vmatpush1.msra.mxu0 0.0
        %3270 = vmatprep.subr.mxu0 0.0
        %3271 = vmatpush1.msra.mxu0 0.0
        %3272 = vmatprep.subr.mxu0 0.0
        %3273 = vmatpush1.msra.mxu0 0.0
        %3274 = vmatprep.subr.mxu0 0.0
        %3275 = vmatpush1.msra.mxu0 0.0
        %3276 = vmatprep.subr.mxu0 0.0
        %3277 = vmatpush1.msra.mxu0 0.0
        %3278 = vmatprep.subr.mxu0 0.0
        %3279 = vmatpush1.msra.mxu0 0.0
        %3280 = vmatprep.subr.mxu0 0.0
        %3281 = vmatpush1.msra.mxu0 0.0
        %3282 = vmatprep.subr.mxu0 0.0
        %3283 = vmatpush1.msra.mxu0 0.0
        %3284 = vmatprep.subr.mxu0 0.0
        %3285 = vmatpush1.msra.mxu0 0.0
        %3286 = vmatprep.subr.mxu0 0.0
        %3287 = vmatpush1.msra.mxu0 0.0
        %3288 = vmatprep.subr.mxu0 0.0
        %3289 = vmatpush1.msra.mxu0 0.0
        %3290 = vmatprep.subr.mxu0 0.0
        %3291 = vmatpush1.msra.mxu0 0.0
        %3292 = vmatprep.subr.mxu0 0.0
        %3293 = vmatpush1.msra.mxu0 0.0
        %3294 = vmatprep.subr.mxu0 0.0
        %3295 = vmatpush1.msra.mxu0 0.0
        %3296 = vmatprep.subr.mxu0 0.0
        %3297 = vmatpush1.msra.mxu0 0.0
        %3298 = vmatprep.subr.mxu0 0.0
        %3299 = vmatpush1.msra.mxu0 0.0
        %3300 = vmatprep.subr.mxu0 0.0
        %3301 = vmatpush1.msra.mxu0 0.0
        %3302 = vmatprep.subr.mxu0 0.0
        %3303 = vmatpush1.msra.mxu0 0.0
        %3304 = vmatprep.subr.mxu0 0.0
        %3305 = vmatpush1.msra.mxu0 0.0
        %3306 = vmatprep.subr.mxu0 0.0
        %3307 = vmatpush1.msra.mxu0 0.0
        %3308 = vmatprep.mubr.f32.mxu0 0.0
        %3309 = vmatmul.mubr.f32.gmra.mrb[0].mxu0 %v3221
        %v3310 = vpop.f32.mrb[0].mxu0
        %v3311 = vadd.f32 0.0, %v3310
        %v3312 = vpop.f32.mrb[0].mxu0
        %v3313 = vadd.f32 0.0, %v3312
        %3314 = vmatprep.mubr.f32.mxu0 0.0
        %3315 = vmatmul.mubr.f32.gmra.mrb[0].mxu0 %v3224
        %v3316 = vpop.f32.mrb[0].mxu0
        %v3317 = vadd.f32 0.0, %v3316
        %v3318 = vpop.f32.mrb[0].mxu0
        %v3319 = vadd.f32 0.0, %v3318
        %3320 = vmatprep.mubr.f32.mxu0 0.0
        %3321 = vmatmul.mubr.f32.gmra.mrb[0].mxu0 %v3227
        %v3322 = vpop.f32.mrb[0].mxu0
        %v3323 = vadd.f32 0.0, %v3322
        %v3324 = vpop.f32.mrb[0].mxu0
        %v3325 = vadd.f32 0.0, %v3324
        %3326 = vmatprep.mubr.f32.mxu0 0.0
        %3327 = vmatmul.mubr.f32.gmra.mrb[0].mxu0 %v3230
        %v3328 = vpop.f32.mrb[0].mxu0
        %v3329 = vadd.f32 0.0, %v3328
        %v3330 = vpop.f32.mrb[0].mxu0
        %v3331 = vadd.f32 0.0, %v3330
        %3332 = vmatprep.mubr.f32.mxu0 0.0
        %3333 = vmatmul.mubr.f32.gmra.mrb[0].mxu0 %v3233
        %v3334 = vpop.f32.mrb[0].mxu0
        %v3335 = vadd.f32 0.0, %v3334
        %v3336 = vpop.f32.mrb[0].mxu0
        %v3337 = vadd.f32 0.0, %v3336
        %3338 = vmatprep.mubr.f32.mxu0 0.0
        %3339 = vmatmul.mubr.f32.gmra.mrb[0].mxu0 %v3236
        %v3340 = vpop.f32.mrb[0].mxu0
        %v3341 = vadd.f32 0.0, %v3340
        %v3342 = vpop.f32.mrb[0].mxu0
        %v3343 = vadd.f32 0.0, %v3342
        %3344 = vmatprep.mubr.f32.mxu0 0.0
        %3345 = vmatmul.mubr.f32.gmra.mrb[0].mxu0 %v3239
        %v3346 = vpop.f32.mrb[0].mxu0
        %v3347 = vadd.f32 0.0, %v3346
        %v3348 = vpop.f32.mrb[0].mxu0
        %v3349 = vadd.f32 0.0, %v3348
        %3350 = vmatprep.mubr.f32.mxu0 0.0
        %3351 = vmatmul.mubr.f32.gmra.mrb[0].mxu0 %v3242
        %v3352 = vpop.f32.mrb[0].mxu0
        %v3353 = vadd.f32 0.0, %v3352
        %v3354 = vpop.f32.mrb[0].mxu0
        %v3355 = vadd.f32 0.0, %v3354
        %3356 = vdwg.mxu0
        %3357 = vmatprep.subr.mxu0 0.0
        %3358 = vmatpush1.msra.mxu0 %v3136
        %3359 = vmatprep.subr.mxu0 0.0
        %3360 = vmatpush1.msra.mxu0 %v3142
        %3361 = vmatprep.subr.mxu0 0.0
        %3362 = vmatpush1.msra.mxu0 %v3148
        %3363 = vmatprep.subr.mxu0 0.0
        %3364 = vmatpush1.msra.mxu0 %v3154
        %3365 = vmatprep.subr.mxu0 0.0
        %3366 = vmatpush1.msra.mxu0 %v3160
        %3367 = vmatprep.subr.mxu0 0.0
        %3368 = vmatpush1.msra.mxu0 %v3166
        %3369 = vmatprep.subr.mxu0 0.0
        %3370 = vmatpush1.msra.mxu0 %v3172
        %3371 = vmatprep.subr.mxu0 0.0
        %3372 = vmatpush1.msra.mxu0 %v3178
        %3373 = vmatprep.subr.mxu0 0.0
        %3374 = vmatpush1.msra.mxu0 0.0
        %3375 = vmatprep.subr.mxu0 0.0
        %3376 = vmatpush1.msra.mxu0 0.0
        %3377 = vmatprep.subr.mxu0 0.0
        %3378 = vmatpush1.msra.mxu0 0.0
        %3379 = vmatprep.subr.mxu0 0.0
        %3380 = vmatpush1.msra.mxu0 0.0
        %3381 = vmatprep.subr.mxu0 0.0
        %3382 = vmatpush1.msra.mxu0 0.0
        %3383 = vmatprep.subr.mxu0 0.0
        %3384 = vmatpush1.msra.mxu0 0.0
        %3385 = vmatprep.subr.mxu0 0.0
        %3386 = vmatpush1.msra.mxu0 0.0
        %3387 = vmatprep.subr.mxu0 0.0
        %3388 = vmatpush1.msra.mxu0 0.0
        %3389 = vmatprep.subr.mxu0 0.0
        %3390 = vmatpush1.msra.mxu0 0.0
        %3391 = vmatprep.subr.mxu0 0.0
        %3392 = vmatpush1.msra.mxu0 0.0
        %3393 = vmatprep.subr.mxu0 0.0
        %3394 = vmatpush1.msra.mxu0 0.0
        %3395 = vmatprep.subr.mxu0 0.0
        %3396 = vmatpush1.msra.mxu0 0.0
        %3397 = vmatprep.subr.mxu0 0.0
        %3398 = vmatpush1.msra.mxu0 0.0
        %3399 = vmatprep.subr.mxu0 0.0
        %3400 = vmatpush1.msra.mxu0 0.0
        %3401 = vmatprep.subr.mxu0 0.0
        %3402 = vmatpush1.msra.mxu0 0.0
        %3403 = vmatprep.subr.mxu0 0.0
        %3404 = vmatpush1.msra.mxu0 0.0
        %3405 = vmatprep.subr.mxu0 0.0
        %3406 = vmatpush1.msra.mxu0 0.0
        %3407 = vmatprep.subr.mxu0 0.0
        %3408 = vmatpush1.msra.mxu0 0.0
        %3409 = vmatprep.subr.mxu0 0.0
        %3410 = vmatpush1.msra.mxu0 0.0
        %3411 = vmatprep.subr.mxu0 0.0
        %3412 = vmatpush1.msra.mxu0 0.0
        %3413 = vmatprep.subr.mxu0 0.0
        %3414 = vmatpush1.msra.mxu0 0.0
        %3415 = vmatprep.subr.mxu0 0.0
        %3416 = vmatpush1.msra.mxu0 0.0
        %3417 = vmatprep.subr.mxu0 0.0
        %3418 = vmatpush1.msra.mxu0 0.0
        %3419 = vmatprep.subr.mxu0 0.0
        %3420 = vmatpush1.msra.mxu0 0.0
        %3421 = vmatprep.mubr.f32.mxu0 0.0
        %3422 = vmatmul.mubr.f32.gmra.mrb[0].mxu0 %v3221
        %v3423 = vpop.f32.mrb[0].mxu0
        %v3424 = vadd.f32 0.0, %v3423
        %v3425 = vpop.f32.mrb[0].mxu0
        %3426 = vmatprep.mubr.f32.mxu0 0.0
        %3427 = vmatmul.mubr.f32.gmra.mrb[0].mxu0 %v3224
        %v3428 = vpop.f32.mrb[0].mxu0
        %v3429 = vadd.f32 0.0, %v3428
        %v3430 = vpop.f32.mrb[0].mxu0
        %3431 = vmatprep.mubr.f32.mxu0 0.0
        %3432 = vmatmul.mubr.f32.gmra.mrb[0].mxu0 %v3227
        %v3433 = vpop.f32.mrb[0].mxu0
        %v3434 = vadd.f32 0.0, %v3433
        %v3435 = vpop.f32.mrb[0].mxu0
        %3436 = vmatprep.mubr.f32.mxu0 0.0
        %3437 = vmatmul.mubr.f32.gmra.mrb[0].mxu0 %v3230
        %v3438 = vpop.f32.mrb[0].mxu0
        %v3439 = vadd.f32 0.0, %v3438
        %v3440 = vpop.f32.mrb[0].mxu0
        %3441 = vmatprep.mubr.f32.mxu0 0.0
        %3442 = vmatmul.mubr.f32.gmra.mrb[0].mxu0 %v3233
        %v3443 = vpop.f32.mrb[0].mxu0
        %v3444 = vadd.f32 0.0, %v3443
        %v3445 = vpop.f32.mrb[0].mxu0
        %3446 = vmatprep.mubr.f32.mxu0 0.0
        %3447 = vmatmul.mubr.f32.gmra.mrb[0].mxu0 %v3236
        %v3448 = vpop.f32.mrb[0].mxu0
        %v3449 = vadd.f32 0.0, %v3448
        %v3450 = vpop.f32.mrb[0].mxu0
        %3451 = vmatprep.mubr.f32.mxu0 0.0
        %3452 = vmatmul.mubr.f32.gmra.mrb[0].mxu0 %v3239
        %v3453 = vpop.f32.mrb[0].mxu0
        %v3454 = vadd.f32 0.0, %v3453
        %v3455 = vpop.f32.mrb[0].mxu0
        %3456 = vmatprep.mubr.f32.mxu0 0.0
        %3457 = vmatmul.mubr.f32.gmra.mrb[0].mxu0 %v3242
        %v3458 = vpop.f32.mrb[0].mxu0
        %v3459 = vadd.f32 0.0, %v3458
        %v3460 = vpop.f32.mrb[0].mxu0
        %3461 = vdwg.mxu0
        %v3462 = vadd.f32 %v3098, %v3311
        %v3463 = vadd.f32 %v3099, %v3313
        %v3464 = vadd.f32 %v3100, %v3424
        %v3465 = vadd.f32 %v3101, %v3317
        %v3466 = vadd.f32 %v3102, %v3319
        %v3467 = vadd.f32 %v3103, %v3429
        %v3468 = vadd.f32 %v3104, %v3323
        %v3469 = vadd.f32 %v3105, %v3325
        %v3470 = vadd.f32 %v3106, %v3434
        %v3471 = vadd.f32 %v3107, %v3329
        %v3472 = vadd.f32 %v3108, %v3331
        %v3473 = vadd.f32 %v3109, %v3439
        %v3474 = vadd.f32 %v3110, %v3335
        %v3475 = vadd.f32 %v3111, %v3337
        %v3476 = vadd.f32 %v3112, %v3444
        %v3477 = vadd.f32 %v3113, %v3341
        %v3478 = vadd.f32 %v3114, %v3343
        %v3479 = vadd.f32 %v3115, %v3449
        %v3480 = vadd.f32 %v3116, %v3347
        %v3481 = vadd.f32 %v3117, %v3349
        %v3482 = vadd.f32 %v3118, %v3454
        %v3483 = vadd.f32 %v3119, %v3353
        %v3484 = vadd.f32 %v3120, %v3355
        %v3485 = vadd.f32 %v3121, %v3459
        %v3486 = vld [vmem:[%s2] sm:$0xff]
        %v3487 = vld [vmem:[%s2 + $0x8] sm:$0xff]
        %v3488 = vld [vmem:[%s2 + $0x10] sm:$0xff]
        %v3489 = vld [vmem:[%s2 + $0x18] sm:$0xff]
        %v3490 = vld [vmem:[%s2 + $0x20] sm:$0xff]
        %v3491 = vld [vmem:[%s2 + $0x28] sm:$0xff]
        %v3492 = vld [vmem:[%s2 + $0x30] sm:$0xff]
        %v3493 = vld [vmem:[%s2 + $0x38] sm:$0xff]
        %3495 = vset.pattern.permute.xlu0 0
        %3496 = vperm.xlu0 %3495, %v3486
        %v3497 = vpop.permute.xlu0 %3496
        %3500 = vset.pattern.permute.xlu0 0
        %3501 = vperm.xlu0 %3500, %v3487
        %v3502 = vpop.permute.xlu0 %3501
        %3505 = vset.pattern.permute.xlu0 0
        %3506 = vperm.xlu0 %3505, %v3488
        %v3507 = vpop.permute.xlu0 %3506
        %3510 = vset.pattern.permute.xlu0 0
        %3511 = vperm.xlu0 %3510, %v3489
        %v3512 = vpop.permute.xlu0 %3511
        %3515 = vset.pattern.permute.xlu0 0
        %3516 = vperm.xlu0 %3515, %v3490
        %v3517 = vpop.permute.xlu0 %3516
        %3520 = vset.pattern.permute.xlu0 0
        %3521 = vperm.xlu0 %3520, %v3491
        %v3522 = vpop.permute.xlu0 %3521
        %3525 = vset.pattern.permute.xlu0 0
        %3526 = vperm.xlu0 %3525, %v3492
        %v3527 = vpop.permute.xlu0 %3526
        %3530 = vset.pattern.permute.xlu0 0
        %3531 = vperm.xlu0 %3530, %v3493
        %v3532 = vpop.permute.xlu0 %3531
        %v3534 = vadd.f32 %v3462, %v3497
        %v3535 = vadd.f32 %v3463, %v3497
        %v3536 = vadd.f32 %v3464, %v3497
        %v3537 = vadd.f32 %v3465, %v3502
        %v3538 = vadd.f32 %v3466, %v3502
        %v3539 = vadd.f32 %v3467, %v3502
        %v3540 = vadd.f32 %v3468, %v3507
        %v3541 = vadd.f32 %v3469, %v3507
        %v3542 = vadd.f32 %v3470, %v3507
        %v3543 = vadd.f32 %v3471, %v3512
        %v3544 = vadd.f32 %v3472, %v3512
        %v3545 = vadd.f32 %v3473, %v3512
        %v3546 = vadd.f32 %v3474, %v3517
        %v3547 = vadd.f32 %v3475, %v3517
        %v3548 = vadd.f32 %v3476, %v3517
        %v3549 = vadd.f32 %v3477, %v3522
        %v3550 = vadd.f32 %v3478, %v3522
        %v3551 = vadd.f32 %v3479, %v3522
        %v3552 = vadd.f32 %v3480, %v3527
        %v3553 = vadd.f32 %v3481, %v3527
        %v3554 = vadd.f32 %v3482, %v3527
        %v3555 = vadd.f32 %v3483, %v3532
        %v3556 = vadd.f32 %v3484, %v3532
        %v3557 = vadd.f32 %v3485, %v3532
        %v3558 = vmax.f32 %v3534, 0.0
        %v3559 = vmax.f32 %v3535, 0.0
        %v3560 = vmax.f32 %v3536, 0.0
        %v3561 = vmax.f32 %v3537, 0.0
        %v3562 = vmax.f32 %v3538, 0.0
        %v3563 = vmax.f32 %v3539, 0.0
        %v3564 = vmax.f32 %v3540, 0.0
        %v3565 = vmax.f32 %v3541, 0.0
        %v3566 = vmax.f32 %v3542, 0.0
        %v3567 = vmax.f32 %v3543, 0.0
        %v3568 = vmax.f32 %v3544, 0.0
        %v3569 = vmax.f32 %v3545, 0.0
        %v3570 = vmax.f32 %v3546, 0.0
        %v3571 = vmax.f32 %v3547, 0.0
        %v3572 = vmax.f32 %v3548, 0.0
        %v3573 = vmax.f32 %v3549, 0.0
        %v3574 = vmax.f32 %v3550, 0.0
        %v3575 = vmax.f32 %v3551, 0.0
        %v3576 = vmax.f32 %v3552, 0.0
        %v3577 = vmax.f32 %v3553, 0.0
        %v3578 = vmax.f32 %v3554, 0.0
        %v3579 = vmax.f32 %v3555, 0.0
        %v3580 = vmax.f32 %v3556, 0.0
        %v3581 = vmax.f32 %v3557, 0.0
        %3582 = vst [vmem:[#allocation2] sm:$0xff] 0.0
        %3583 = vst [vmem:[#allocation2 + $0x8] sm:$0xff] 0.0
        %3584 = vst [vmem:[#allocation2 + $0x10] sm:$0xff] 0.0
        %vm3585 = vcmask 400384
        %3586 = vst.msk [vmem:[#allocation2 + $0x18] sm:$0xff] %vm3585, 0.0
        %3587 = vst [vmem:[#allocation2 + $0x20] sm:$0xff] 0.0
        %3588 = vst [vmem:[#allocation2 + $0x28] sm:$0xff] 0.0
        %3589 = vst [vmem:[#allocation2 + $0x30] sm:$0xff] 0.0
        %3590 = vst.msk [vmem:[#allocation2 + $0x38] sm:$0xff] %vm3585, 0.0
        %3591 = vst [vmem:[#allocation2 + $0x40] sm:$0xff] 0.0
        %3592 = vst [vmem:[#allocation2 + $0x48] sm:$0xff] 0.0
        %3593 = vst [vmem:[#allocation2 + $0x50] sm:$0xff] 0.0
        %3594 = vst.msk [vmem:[#allocation2 + $0x58] sm:$0xff] %vm3585, 0.0
        %3595 = vst [vmem:[#allocation2 + $0x60] sm:$0xff] 0.0
        %3596 = vst [vmem:[#allocation2 + $0x68] sm:$0xff] 0.0
        %3597 = vst [vmem:[#allocation2 + $0x70] sm:$0xff] 0.0
        %3598 = vst.msk [vmem:[#allocation2 + $0x78] sm:$0xff] %vm3585, 0.0
        %3599 = vst [vmem:[#allocation2 + $0x80] sm:$0xff] 0.0
        %3600 = vst [vmem:[#allocation2 + $0x88] sm:$0xff] 0.0
        %3601 = vst [vmem:[#allocation2 + $0x90] sm:$0xff] 0.0
        %3602 = vst.msk [vmem:[#allocation2 + $0x98] sm:$0xff] %vm3585, 0.0
        %3603 = vst [vmem:[#allocation2 + $0xa0] sm:$0xff] 0.0
        %3604 = vst [vmem:[#allocation2 + $0xa8] sm:$0xff] 0.0
        %3605 = vst [vmem:[#allocation2 + $0xb0] sm:$0xff] 0.0
        %3606 = vst.msk [vmem:[#allocation2 + $0xb8] sm:$0xff] %vm3585, 0.0
        %3607 = vst [vmem:[#allocation2 + $0xc0] sm:$0xff] 0.0
        %3608 = vst [vmem:[#allocation2 + $0xc8] sm:$0xff] 0.0
        %3609 = vst [vmem:[#allocation2 + $0xd0] sm:$0xff] 0.0
        %3610 = vst.msk [vmem:[#allocation2 + $0xd8] sm:$0xff] %vm3585, 0.0
        %3611 = vst [vmem:[#allocation2 + $0xe0] sm:$0xff] 0.0
        %3612 = vst [vmem:[#allocation2 + $0xe8] sm:$0xff] 0.0
        %3613 = vst [vmem:[#allocation2 + $0xf0] sm:$0xff] 0.0
        %3614 = vst.msk [vmem:[#allocation2 + $0xf8] sm:$0xff] %vm3585, 0.0
        %v3615 = vld [vmem:[%s5] sm:$0x7]
        %v3617 = vlaneseq
        %v3618 = vshrl.u32 %v3617, 7
        %v3619 = vsub.s32 0, %v3618
        %v3620 = vrot.slane %v3615, %v3619
        %v3621 = vlaneseq
        %v3622 = vshrl.u32 %v3621, 7
        %v3623 = vsub.s32 1, %v3622
        %v3624 = vrot.slane %v3615, %v3623
        %v3625 = vlaneseq
        %v3626 = vshrl.u32 %v3625, 7
        %v3627 = vsub.s32 2, %v3626
        %v3628 = vrot.slane %v3615, %v3627
        %v3632 = vmul.f32 %v3558, %v3620
        %v3633 = vmul.f32 %v3559, %v3624
        %v3634 = vmul.f32 %v3560, %v3628
        %v3635 = vmul.f32 %v3561, %v3620
        %v3636 = vmul.f32 %v3562, %v3624
        %v3637 = vmul.f32 %v3563, %v3628
        %v3638 = vmul.f32 %v3564, %v3620
        %v3639 = vmul.f32 %v3565, %v3624
        %v3640 = vmul.f32 %v3566, %v3628
        %v3641 = vmul.f32 %v3567, %v3620
        %v3642 = vmul.f32 %v3568, %v3624
        %v3643 = vmul.f32 %v3569, %v3628
        %v3644 = vmul.f32 %v3570, %v3620
        %v3645 = vmul.f32 %v3571, %v3624
        %v3646 = vmul.f32 %v3572, %v3628
        %v3647 = vmul.f32 %v3573, %v3620
        %v3648 = vmul.f32 %v3574, %v3624
        %v3649 = vmul.f32 %v3575, %v3628
        %v3650 = vmul.f32 %v3576, %v3620
        %v3651 = vmul.f32 %v3577, %v3624
        %v3652 = vmul.f32 %v3578, %v3628
        %v3653 = vmul.f32 %v3579, %v3620
        %v3654 = vmul.f32 %v3580, %v3624
        %v3655 = vmul.f32 %v3581, %v3628
        %3656 = vst [vmem:[#allocation2 + $0x8] sm:$0xff] %v3632
        %3657 = vst [vmem:[#allocation2 + $0x10] sm:$0xff] %v3633
        %vm3658 = vcmask 244736
        %3659 = vst.msk [vmem:[#allocation2 + $0x18] sm:$0xff] %vm3658, %v3634
        %3660 = vst [vmem:[#allocation2 + $0x28] sm:$0xff] %v3635
        %3661 = vst [vmem:[#allocation2 + $0x30] sm:$0xff] %v3636
        %3662 = vst.msk [vmem:[#allocation2 + $0x38] sm:$0xff] %vm3658, %v3637
        %3663 = vst [vmem:[#allocation2 + $0x48] sm:$0xff] %v3638
        %3664 = vst [vmem:[#allocation2 + $0x50] sm:$0xff] %v3639
        %3665 = vst.msk [vmem:[#allocation2 + $0x58] sm:$0xff] %vm3658, %v3640
        %3666 = vst [vmem:[#allocation2 + $0x68] sm:$0xff] %v3641
        %3667 = vst [vmem:[#allocation2 + $0x70] sm:$0xff] %v3642
        %3668 = vst.msk [vmem:[#allocation2 + $0x78] sm:$0xff] %vm3658, %v3643
        %3669 = vst [vmem:[#allocation2 + $0x88] sm:$0xff] %v3644
        %3670 = vst [vmem:[#allocation2 + $0x90] sm:$0xff] %v3645
        %3671 = vst.msk [vmem:[#allocation2 + $0x98] sm:$0xff] %vm3658, %v3646
        %3672 = vst [vmem:[#allocation2 + $0xa8] sm:$0xff] %v3647
        %3673 = vst [vmem:[#allocation2 + $0xb0] sm:$0xff] %v3648
        %3674 = vst.msk [vmem:[#allocation2 + $0xb8] sm:$0xff] %vm3658, %v3649
        %3675 = vst [vmem:[#allocation2 + $0xc8] sm:$0xff] %v3650
        %3676 = vst [vmem:[#allocation2 + $0xd0] sm:$0xff] %v3651
        %3677 = vst.msk [vmem:[#allocation2 + $0xd8] sm:$0xff] %vm3658, %v3652
        %3678 = vst [vmem:[#allocation2 + $0xe8] sm:$0xff] %v3653
        %3679 = vst [vmem:[#allocation2 + $0xf0] sm:$0xff] %v3654
        %3680 = vst.msk [vmem:[#allocation2 + $0xf8] sm:$0xff] %vm3658, %v3655
        %v3681 = vld [vmem:[#allocation8] sm:$0xff]
        %v3682 = vld [vmem:[#allocation8 + $0x8] sm:$0xff]
        %v3683 = vld [vmem:[#allocation8 + $0x10] sm:$0xff]
        %v3684 = vld [vmem:[#allocation8 + $0x18] sm:$0xff]
        %v3685 = vld [vmem:[#allocation8 + $0x20] sm:$0xff]
        %v3686 = vld [vmem:[#allocation8 + $0x28] sm:$0xff]
        %v3687 = vld [vmem:[#allocation8 + $0x30] sm:$0xff]
        %v3688 = vld [vmem:[#allocation8 + $0x38] sm:$0xff]
        %v3689 = vld [vmem:[#allocation2] sm:$0xff]
        %v3690 = vld [vmem:[#allocation2 + $0x8] sm:$0xff]
        %v3691 = vld [vmem:[#allocation2 + $0x10] sm:$0xff]
        %v3692 = vld [vmem:[#allocation2 + $0x18] sm:$0xff]
        %v3693 = vld [vmem:[#allocation2 + $0x20] sm:$0xff]
        %v3694 = vld [vmem:[#allocation2 + $0x28] sm:$0xff]
        %v3695 = vld [vmem:[#allocation2 + $0x30] sm:$0xff]
        %v3696 = vld [vmem:[#allocation2 + $0x38] sm:$0xff]
        %v3697 = vld [vmem:[#allocation2 + $0x40] sm:$0xff]
        %v3698 = vld [vmem:[#allocation2 + $0x48] sm:$0xff]
        %v3699 = vld [vmem:[#allocation2 + $0x50] sm:$0xff]
        %v3700 = vld [vmem:[#allocation2 + $0x58] sm:$0xff]
        %v3701 = vld [vmem:[#allocation2 + $0x60] sm:$0xff]
        %v3702 = vld [vmem:[#allocation2 + $0x68] sm:$0xff]
        %v3703 = vld [vmem:[#allocation2 + $0x70] sm:$0xff]
        %v3704 = vld [vmem:[#allocation2 + $0x78] sm:$0xff]
        %v3705 = vld [vmem:[#allocation2 + $0x80] sm:$0xff]
        %v3706 = vld [vmem:[#allocation2 + $0x88] sm:$0xff]
        %v3707 = vld [vmem:[#allocation2 + $0x90] sm:$0xff]
        %v3708 = vld [vmem:[#allocation2 + $0x98] sm:$0xff]
        %v3709 = vld [vmem:[#allocation2 + $0xa0] sm:$0xff]
        %v3710 = vld [vmem:[#allocation2 + $0xa8] sm:$0xff]
        %v3711 = vld [vmem:[#allocation2 + $0xb0] sm:$0xff]
        %v3712 = vld [vmem:[#allocation2 + $0xb8] sm:$0xff]
        %v3713 = vld [vmem:[#allocation2 + $0xc0] sm:$0xff]
        %v3714 = vld [vmem:[#allocation2 + $0xc8] sm:$0xff]
        %v3715 = vld [vmem:[#allocation2 + $0xd0] sm:$0xff]
        %v3716 = vld [vmem:[#allocation2 + $0xd8] sm:$0xff]
        %v3717 = vld [vmem:[#allocation2 + $0xe0] sm:$0xff]
        %v3718 = vld [vmem:[#allocation2 + $0xe8] sm:$0xff]
        %v3719 = vld [vmem:[#allocation2 + $0xf0] sm:$0xff]
        %v3720 = vld [vmem:[#allocation2 + $0xf8] sm:$0xff]
        %s3721 = scalar_lea.vmem [#allocation8], 64
        %v3722 = vld [vmem:[%s3721] sm:$0xff]
        %v3723 = vld [vmem:[%s3721 + $0x8] sm:$0xff]
        %v3724 = vld [vmem:[%s3721 + $0x10] sm:$0xff]
        %v3725 = vld [vmem:[%s3721 + $0x18] sm:$0xff]
        %v3726 = vld [vmem:[%s3721 + $0x20] sm:$0xff]
        %v3727 = vld [vmem:[%s3721 + $0x28] sm:$0xff]
        %v3728 = vld [vmem:[%s3721 + $0x30] sm:$0xff]
        %v3729 = vld [vmem:[%s3721 + $0x38] sm:$0xff]
        %3762 = vrot.lane.b32.xlu0 %v3689, 18
        %v3763 = vpop.permute.xlu0 %3762
        %3764 = vrot.lane.b32.xlu0 %v3690, 18
        %v3765 = vpop.permute.xlu0 %3764
        %3766 = vrot.lane.b32.xlu0 %v3691, 18
        %v3767 = vpop.permute.xlu0 %3766
        %3768 = vrot.lane.b32.xlu0 %v3692, 18
        %v3769 = vpop.permute.xlu0 %3768
        %3770 = vrot.lane.b32.xlu0 %v3693, 18
        %v3771 = vpop.permute.xlu0 %3770
        %3772 = vrot.lane.b32.xlu0 %v3694, 18
        %v3773 = vpop.permute.xlu0 %3772
        %3774 = vrot.lane.b32.xlu0 %v3695, 18
        %v3775 = vpop.permute.xlu0 %3774
        %3776 = vrot.lane.b32.xlu0 %v3696, 18
        %v3777 = vpop.permute.xlu0 %3776
        %3778 = vrot.lane.b32.xlu0 %v3697, 18
        %v3779 = vpop.permute.xlu0 %3778
        %3780 = vrot.lane.b32.xlu0 %v3698, 18
        %v3781 = vpop.permute.xlu0 %3780
        %3782 = vrot.lane.b32.xlu0 %v3699, 18
        %v3783 = vpop.permute.xlu0 %3782
        %3784 = vrot.lane.b32.xlu0 %v3700, 18
        %v3785 = vpop.permute.xlu0 %3784
        %3786 = vrot.lane.b32.xlu0 %v3701, 18
        %v3787 = vpop.permute.xlu0 %3786
        %3788 = vrot.lane.b32.xlu0 %v3702, 18
        %v3789 = vpop.permute.xlu0 %3788
        %3790 = vrot.lane.b32.xlu0 %v3703, 18
        %v3791 = vpop.permute.xlu0 %3790
        %3792 = vrot.lane.b32.xlu0 %v3704, 18
        %v3793 = vpop.permute.xlu0 %3792
        %3794 = vrot.lane.b32.xlu0 %v3705, 18
        %v3795 = vpop.permute.xlu0 %3794
        %3796 = vrot.lane.b32.xlu0 %v3706, 18
        %v3797 = vpop.permute.xlu0 %3796
        %3798 = vrot.lane.b32.xlu0 %v3707, 18
        %v3799 = vpop.permute.xlu0 %3798
        %3800 = vrot.lane.b32.xlu0 %v3708, 18
        %v3801 = vpop.permute.xlu0 %3800
        %3802 = vrot.lane.b32.xlu0 %v3709, 18
        %v3803 = vpop.permute.xlu0 %3802
        %3804 = vrot.lane.b32.xlu0 %v3710, 18
        %v3805 = vpop.permute.xlu0 %3804
        %3806 = vrot.lane.b32.xlu0 %v3711, 18
        %v3807 = vpop.permute.xlu0 %3806
        %3808 = vrot.lane.b32.xlu0 %v3712, 18
        %v3809 = vpop.permute.xlu0 %3808
        %3810 = vrot.lane.b32.xlu0 %v3713, 18
        %v3811 = vpop.permute.xlu0 %3810
        %3812 = vrot.lane.b32.xlu0 %v3714, 18
        %v3813 = vpop.permute.xlu0 %3812
        %3814 = vrot.lane.b32.xlu0 %v3715, 18
        %v3815 = vpop.permute.xlu0 %3814
        %3816 = vrot.lane.b32.xlu0 %v3716, 18
        %v3817 = vpop.permute.xlu0 %3816
        %3818 = vrot.lane.b32.xlu0 %v3717, 18
        %v3819 = vpop.permute.xlu0 %3818
        %3820 = vrot.lane.b32.xlu0 %v3718, 18
        %v3821 = vpop.permute.xlu0 %3820
        %3822 = vrot.lane.b32.xlu0 %v3719, 18
        %v3823 = vpop.permute.xlu0 %3822
        %3824 = vrot.lane.b32.xlu0 %v3720, 18
        %v3825 = vpop.permute.xlu0 %3824
        %vm3826 = vcmask 146432
        %v3827 = vsel %vm3826, %v3763, %v3765
        %v3828 = vsel %vm3826, %v3765, %v3767
        %v3829 = vsel %vm3826, %v3767, %v3769
        %v3830 = vsel %vm3826, %v3771, %v3773
        %v3831 = vsel %vm3826, %v3773, %v3775
        %v3832 = vsel %vm3826, %v3775, %v3777
        %v3833 = vsel %vm3826, %v3779, %v3781
        %v3834 = vsel %vm3826, %v3781, %v3783
        %v3835 = vsel %vm3826, %v3783, %v3785
        %v3836 = vsel %vm3826, %v3787, %v3789
        %v3837 = vsel %vm3826, %v3789, %v3791
        %v3838 = vsel %vm3826, %v3791, %v3793
        %v3839 = vsel %vm3826, %v3795, %v3797
        %v3840 = vsel %vm3826, %v3797, %v3799
        %v3841 = vsel %vm3826, %v3799, %v3801
        %v3842 = vsel %vm3826, %v3803, %v3805
        %v3843 = vsel %vm3826, %v3805, %v3807
        %v3844 = vsel %vm3826, %v3807, %v3809
        %v3845 = vsel %vm3826, %v3811, %v3813
        %v3846 = vsel %vm3826, %v3813, %v3815
        %v3847 = vsel %vm3826, %v3815, %v3817
        %v3848 = vsel %vm3826, %v3819, %v3821
        %v3849 = vsel %vm3826, %v3821, %v3823
        %v3850 = vsel %vm3826, %v3823, %v3825
        %v3876 = vsel %vm453, %v3722, 0
        %v3879 = vsel %vm453, %v3723, 0
        %v3882 = vsel %vm453, %v3724, 0
        %v3885 = vsel %vm453, %v3725, 0
        %v3888 = vsel %vm453, %v3726, 0
        %v3891 = vsel %vm453, %v3727, 0
        %v3894 = vsel %vm453, %v3728, 0
        %v3897 = vsel %vm453, %v3729, 0
        %3899 = vmatprep.subr.mxu0 %v3828
        %3900 = vmatpush1.msra.mxu0 %v3827
        %3901 = vmatprep.subr.mxu0 %v3831
        %3902 = vmatpush1.msra.mxu0 %v3830
        %3903 = vmatprep.subr.mxu0 %v3834
        %3904 = vmatpush1.msra.mxu0 %v3833
        %3905 = vmatprep.subr.mxu0 %v3837
        %3906 = vmatpush1.msra.mxu0 %v3836
        %3907 = vmatprep.subr.mxu0 %v3840
        %3908 = vmatpush1.msra.mxu0 %v3839
        %3909 = vmatprep.subr.mxu0 %v3843
        %3910 = vmatpush1.msra.mxu0 %v3842
        %3911 = vmatprep.subr.mxu0 %v3846
        %3912 = vmatpush1.msra.mxu0 %v3845
        %3913 = vmatprep.subr.mxu0 %v3849
        %3914 = vmatpush1.msra.mxu0 %v3848
        %3915 = vmatprep.subr.mxu0 0.0
        %3916 = vmatpush1.msra.mxu0 0.0
        %3917 = vmatprep.subr.mxu0 0.0
        %3918 = vmatpush1.msra.mxu0 0.0
        %3919 = vmatprep.subr.mxu0 0.0
        %3920 = vmatpush1.msra.mxu0 0.0
        %3921 = vmatprep.subr.mxu0 0.0
        %3922 = vmatpush1.msra.mxu0 0.0
        %3923 = vmatprep.subr.mxu0 0.0
        %3924 = vmatpush1.msra.mxu0 0.0
        %3925 = vmatprep.subr.mxu0 0.0
        %3926 = vmatpush1.msra.mxu0 0.0
        %3927 = vmatprep.subr.mxu0 0.0
        %3928 = vmatpush1.msra.mxu0 0.0
        %3929 = vmatprep.subr.mxu0 0.0
        %3930 = vmatpush1.msra.mxu0 0.0
        %3931 = vmatprep.subr.mxu0 0.0
        %3932 = vmatpush1.msra.mxu0 0.0
        %3933 = vmatprep.subr.mxu0 0.0
        %3934 = vmatpush1.msra.mxu0 0.0
        %3935 = vmatprep.subr.mxu0 0.0
        %3936 = vmatpush1.msra.mxu0 0.0
        %3937 = vmatprep.subr.mxu0 0.0
        %3938 = vmatpush1.msra.mxu0 0.0
        %3939 = vmatprep.subr.mxu0 0.0
        %3940 = vmatpush1.msra.mxu0 0.0
        %3941 = vmatprep.subr.mxu0 0.0
        %3942 = vmatpush1.msra.mxu0 0.0
        %3943 = vmatprep.subr.mxu0 0.0
        %3944 = vmatpush1.msra.mxu0 0.0
        %3945 = vmatprep.subr.mxu0 0.0
        %3946 = vmatpush1.msra.mxu0 0.0
        %3947 = vmatprep.subr.mxu0 0.0
        %3948 = vmatpush1.msra.mxu0 0.0
        %3949 = vmatprep.subr.mxu0 0.0
        %3950 = vmatpush1.msra.mxu0 0.0
        %3951 = vmatprep.subr.mxu0 0.0
        %3952 = vmatpush1.msra.mxu0 0.0
        %3953 = vmatprep.subr.mxu0 0.0
        %3954 = vmatpush1.msra.mxu0 0.0
        %3955 = vmatprep.subr.mxu0 0.0
        %3956 = vmatpush1.msra.mxu0 0.0
        %3957 = vmatprep.subr.mxu0 0.0
        %3958 = vmatpush1.msra.mxu0 0.0
        %3959 = vmatprep.subr.mxu0 0.0
        %3960 = vmatpush1.msra.mxu0 0.0
        %3961 = vmatprep.subr.mxu0 0.0
        %3962 = vmatpush1.msra.mxu0 0.0
        %3963 = vmatprep.mubr.f32.mxu0 0.0
        %3964 = vmatmul.mubr.f32.gmra.mrb[0].mxu0 %v3876
        %v3965 = vpop.f32.mrb[0].mxu0
        %v3966 = vadd.f32 0.0, %v3965
        %v3967 = vpop.f32.mrb[0].mxu0
        %v3968 = vadd.f32 0.0, %v3967
        %3969 = vmatprep.mubr.f32.mxu0 0.0
        %3970 = vmatmul.mubr.f32.gmra.mrb[0].mxu0 %v3879
        %v3971 = vpop.f32.mrb[0].mxu0
        %v3972 = vadd.f32 0.0, %v3971
        %v3973 = vpop.f32.mrb[0].mxu0
        %v3974 = vadd.f32 0.0, %v3973
        %3975 = vmatprep.mubr.f32.mxu0 0.0
        %3976 = vmatmul.mubr.f32.gmra.mrb[0].mxu0 %v3882
        %v3977 = vpop.f32.mrb[0].mxu0
        %v3978 = vadd.f32 0.0, %v3977
        %v3979 = vpop.f32.mrb[0].mxu0
        %v3980 = vadd.f32 0.0, %v3979
        %3981 = vmatprep.mubr.f32.mxu0 0.0
        %3982 = vmatmul.mubr.f32.gmra.mrb[0].mxu0 %v3885
        %v3983 = vpop.f32.mrb[0].mxu0
        %v3984 = vadd.f32 0.0, %v3983
        %v3985 = vpop.f32.mrb[0].mxu0
        %v3986 = vadd.f32 0.0, %v3985
        %3987 = vmatprep.mubr.f32.mxu0 0.0
        %3988 = vmatmul.mubr.f32.gmra.mrb[0].mxu0 %v3888
        %v3989 = vpop.f32.mrb[0].mxu0
        %v3990 = vadd.f32 0.0, %v3989
        %v3991 = vpop.f32.mrb[0].mxu0
        %v3992 = vadd.f32 0.0, %v3991
        %3993 = vmatprep.mubr.f32.mxu0 0.0
        %3994 = vmatmul.mubr.f32.gmra.mrb[0].mxu0 %v3891
        %v3995 = vpop.f32.mrb[0].mxu0
        %v3996 = vadd.f32 0.0, %v3995
        %v3997 = vpop.f32.mrb[0].mxu0
        %v3998 = vadd.f32 0.0, %v3997
        %3999 = vmatprep.mubr.f32.mxu0 0.0
        %4000 = vmatmul.mubr.f32.gmra.mrb[0].mxu0 %v3894
        %v4001 = vpop.f32.mrb[0].mxu0
        %v4002 = vadd.f32 0.0, %v4001
        %v4003 = vpop.f32.mrb[0].mxu0
        %v4004 = vadd.f32 0.0, %v4003
        %4005 = vmatprep.mubr.f32.mxu0 0.0
        %4006 = vmatmul.mubr.f32.gmra.mrb[0].mxu0 %v3897
        %v4007 = vpop.f32.mrb[0].mxu0
        %v4008 = vadd.f32 0.0, %v4007
        %v4009 = vpop.f32.mrb[0].mxu0
        %v4010 = vadd.f32 0.0, %v4009
        %4011 = vdwg.mxu0
        %4012 = vmatprep.subr.mxu0 0.0
        %4013 = vmatpush1.msra.mxu0 %v3829
        %4014 = vmatprep.subr.mxu0 0.0
        %4015 = vmatpush1.msra.mxu0 %v3832
        %4016 = vmatprep.subr.mxu0 0.0
        %4017 = vmatpush1.msra.mxu0 %v3835
        %4018 = vmatprep.subr.mxu0 0.0
        %4019 = vmatpush1.msra.mxu0 %v3838
        %4020 = vmatprep.subr.mxu0 0.0
        %4021 = vmatpush1.msra.mxu0 %v3841
        %4022 = vmatprep.subr.mxu0 0.0
        %4023 = vmatpush1.msra.mxu0 %v3844
        %4024 = vmatprep.subr.mxu0 0.0
        %4025 = vmatpush1.msra.mxu0 %v3847
        %4026 = vmatprep.subr.mxu0 0.0
        %4027 = vmatpush1.msra.mxu0 %v3850
        %4028 = vmatprep.subr.mxu0 0.0
        %4029 = vmatpush1.msra.mxu0 0.0
        %4030 = vmatprep.subr.mxu0 0.0
        %4031 = vmatpush1.msra.mxu0 0.0
        %4032 = vmatprep.subr.mxu0 0.0
        %4033 = vmatpush1.msra.mxu0 0.0
        %4034 = vmatprep.subr.mxu0 0.0
        %4035 = vmatpush1.msra.mxu0 0.0
        %4036 = vmatprep.subr.mxu0 0.0
        %4037 = vmatpush1.msra.mxu0 0.0
        %4038 = vmatprep.subr.mxu0 0.0
        %4039 = vmatpush1.msra.mxu0 0.0
        %4040 = vmatprep.subr.mxu0 0.0
        %4041 = vmatpush1.msra.mxu0 0.0
        %4042 = vmatprep.subr.mxu0 0.0
        %4043 = vmatpush1.msra.mxu0 0.0
        %4044 = vmatprep.subr.mxu0 0.0
        %4045 = vmatpush1.msra.mxu0 0.0
        %4046 = vmatprep.subr.mxu0 0.0
        %4047 = vmatpush1.msra.mxu0 0.0
        %4048 = vmatprep.subr.mxu0 0.0
        %4049 = vmatpush1.msra.mxu0 0.0
        %4050 = vmatprep.subr.mxu0 0.0
        %4051 = vmatpush1.msra.mxu0 0.0
        %4052 = vmatprep.subr.mxu0 0.0
        %4053 = vmatpush1.msra.mxu0 0.0
        %4054 = vmatprep.subr.mxu0 0.0
        %4055 = vmatpush1.msra.mxu0 0.0
        %4056 = vmatprep.subr.mxu0 0.0
        %4057 = vmatpush1.msra.mxu0 0.0
        %4058 = vmatprep.subr.mxu0 0.0
        %4059 = vmatpush1.msra.mxu0 0.0
        %4060 = vmatprep.subr.mxu0 0.0
        %4061 = vmatpush1.msra.mxu0 0.0
        %4062 = vmatprep.subr.mxu0 0.0
        %4063 = vmatpush1.msra.mxu0 0.0
        %4064 = vmatprep.subr.mxu0 0.0
        %4065 = vmatpush1.msra.mxu0 0.0
        %4066 = vmatprep.subr.mxu0 0.0
        %4067 = vmatpush1.msra.mxu0 0.0
        %4068 = vmatprep.subr.mxu0 0.0
        %4069 = vmatpush1.msra.mxu0 0.0
        %4070 = vmatprep.subr.mxu0 0.0
        %4071 = vmatpush1.msra.mxu0 0.0
        %4072 = vmatprep.subr.mxu0 0.0
        %4073 = vmatpush1.msra.mxu0 0.0
        %4074 = vmatprep.subr.mxu0 0.0
        %4075 = vmatpush1.msra.mxu0 0.0
        %4076 = vmatprep.mubr.f32.mxu0 0.0
        %4077 = vmatmul.mubr.f32.gmra.mrb[0].mxu0 %v3876
        %v4078 = vpop.f32.mrb[0].mxu0
        %v4079 = vadd.f32 0.0, %v4078
        %v4080 = vpop.f32.mrb[0].mxu0
        %4081 = vmatprep.mubr.f32.mxu0 0.0
        %4082 = vmatmul.mubr.f32.gmra.mrb[0].mxu0 %v3879
        %v4083 = vpop.f32.mrb[0].mxu0
        %v4084 = vadd.f32 0.0, %v4083
        %v4085 = vpop.f32.mrb[0].mxu0
        %4086 = vmatprep.mubr.f32.mxu0 0.0
        %4087 = vmatmul.mubr.f32.gmra.mrb[0].mxu0 %v3882
        %v4088 = vpop.f32.mrb[0].mxu0
        %v4089 = vadd.f32 0.0, %v4088
        %v4090 = vpop.f32.mrb[0].mxu0
        %4091 = vmatprep.mubr.f32.mxu0 0.0
        %4092 = vmatmul.mubr.f32.gmra.mrb[0].mxu0 %v3885
        %v4093 = vpop.f32.mrb[0].mxu0
        %v4094 = vadd.f32 0.0, %v4093
        %v4095 = vpop.f32.mrb[0].mxu0
        %4096 = vmatprep.mubr.f32.mxu0 0.0
        %4097 = vmatmul.mubr.f32.gmra.mrb[0].mxu0 %v3888
        %v4098 = vpop.f32.mrb[0].mxu0
        %v4099 = vadd.f32 0.0, %v4098
        %v4100 = vpop.f32.mrb[0].mxu0
        %4101 = vmatprep.mubr.f32.mxu0 0.0
        %4102 = vmatmul.mubr.f32.gmra.mrb[0].mxu0 %v3891
        %v4103 = vpop.f32.mrb[0].mxu0
        %v4104 = vadd.f32 0.0, %v4103
        %v4105 = vpop.f32.mrb[0].mxu0
        %4106 = vmatprep.mubr.f32.mxu0 0.0
        %4107 = vmatmul.mubr.f32.gmra.mrb[0].mxu0 %v3894
        %v4108 = vpop.f32.mrb[0].mxu0
        %v4109 = vadd.f32 0.0, %v4108
        %v4110 = vpop.f32.mrb[0].mxu0
        %4111 = vmatprep.mubr.f32.mxu0 0.0
        %4112 = vmatmul.mubr.f32.gmra.mrb[0].mxu0 %v3897
        %v4113 = vpop.f32.mrb[0].mxu0
        %v4114 = vadd.f32 0.0, %v4113
        %v4115 = vpop.f32.mrb[0].mxu0
        %4116 = vdwg.mxu0
        %4117 = vrot.lane.b32.xlu0 %v3689, 19
        %v4118 = vpop.permute.xlu0 %4117
        %4119 = vrot.lane.b32.xlu0 %v3690, 19
        %v4120 = vpop.permute.xlu0 %4119
        %4121 = vrot.lane.b32.xlu0 %v3691, 19
        %v4122 = vpop.permute.xlu0 %4121
        %4123 = vrot.lane.b32.xlu0 %v3692, 19
        %v4124 = vpop.permute.xlu0 %4123
        %4125 = vrot.lane.b32.xlu0 %v3693, 19
        %v4126 = vpop.permute.xlu0 %4125
        %4127 = vrot.lane.b32.xlu0 %v3694, 19
        %v4128 = vpop.permute.xlu0 %4127
        %4129 = vrot.lane.b32.xlu0 %v3695, 19
        %v4130 = vpop.permute.xlu0 %4129
        %4131 = vrot.lane.b32.xlu0 %v3696, 19
        %v4132 = vpop.permute.xlu0 %4131
        %4133 = vrot.lane.b32.xlu0 %v3697, 19
        %v4134 = vpop.permute.xlu0 %4133
        %4135 = vrot.lane.b32.xlu0 %v3698, 19
        %v4136 = vpop.permute.xlu0 %4135
        %4137 = vrot.lane.b32.xlu0 %v3699, 19
        %v4138 = vpop.permute.xlu0 %4137
        %4139 = vrot.lane.b32.xlu0 %v3700, 19
        %v4140 = vpop.permute.xlu0 %4139
        %4141 = vrot.lane.b32.xlu0 %v3701, 19
        %v4142 = vpop.permute.xlu0 %4141
        %4143 = vrot.lane.b32.xlu0 %v3702, 19
        %v4144 = vpop.permute.xlu0 %4143
        %4145 = vrot.lane.b32.xlu0 %v3703, 19
        %v4146 = vpop.permute.xlu0 %4145
        %4147 = vrot.lane.b32.xlu0 %v3704, 19
        %v4148 = vpop.permute.xlu0 %4147
        %4149 = vrot.lane.b32.xlu0 %v3705, 19
        %v4150 = vpop.permute.xlu0 %4149
        %4151 = vrot.lane.b32.xlu0 %v3706, 19
        %v4152 = vpop.permute.xlu0 %4151
        %4153 = vrot.lane.b32.xlu0 %v3707, 19
        %v4154 = vpop.permute.xlu0 %4153
        %4155 = vrot.lane.b32.xlu0 %v3708, 19
        %v4156 = vpop.permute.xlu0 %4155
        %4157 = vrot.lane.b32.xlu0 %v3709, 19
        %v4158 = vpop.permute.xlu0 %4157
        %4159 = vrot.lane.b32.xlu0 %v3710, 19
        %v4160 = vpop.permute.xlu0 %4159
        %4161 = vrot.lane.b32.xlu0 %v3711, 19
        %v4162 = vpop.permute.xlu0 %4161
        %4163 = vrot.lane.b32.xlu0 %v3712, 19
        %v4164 = vpop.permute.xlu0 %4163
        %4165 = vrot.lane.b32.xlu0 %v3713, 19
        %v4166 = vpop.permute.xlu0 %4165
        %4167 = vrot.lane.b32.xlu0 %v3714, 19
        %v4168 = vpop.permute.xlu0 %4167
        %4169 = vrot.lane.b32.xlu0 %v3715, 19
        %v4170 = vpop.permute.xlu0 %4169
        %4171 = vrot.lane.b32.xlu0 %v3716, 19
        %v4172 = vpop.permute.xlu0 %4171
        %4173 = vrot.lane.b32.xlu0 %v3717, 19
        %v4174 = vpop.permute.xlu0 %4173
        %4175 = vrot.lane.b32.xlu0 %v3718, 19
        %v4176 = vpop.permute.xlu0 %4175
        %4177 = vrot.lane.b32.xlu0 %v3719, 19
        %v4178 = vpop.permute.xlu0 %4177
        %4179 = vrot.lane.b32.xlu0 %v3720, 19
        %v4180 = vpop.permute.xlu0 %4179
        %vm4181 = vcmask 154624
        %v4182 = vsel %vm4181, %v4118, %v4120
        %v4183 = vsel %vm4181, %v4120, %v4122
        %v4184 = vsel %vm4181, %v4122, %v4124
        %v4185 = vsel %vm4181, %v4126, %v4128
        %v4186 = vsel %vm4181, %v4128, %v4130
        %v4187 = vsel %vm4181, %v4130, %v4132
        %v4188 = vsel %vm4181, %v4134, %v4136
        %v4189 = vsel %vm4181, %v4136, %v4138
        %v4190 = vsel %vm4181, %v4138, %v4140
        %v4191 = vsel %vm4181, %v4142, %v4144
        %v4192 = vsel %vm4181, %v4144, %v4146
        %v4193 = vsel %vm4181, %v4146, %v4148
        %v4194 = vsel %vm4181, %v4150, %v4152
        %v4195 = vsel %vm4181, %v4152, %v4154
        %v4196 = vsel %vm4181, %v4154, %v4156
        %v4197 = vsel %vm4181, %v4158, %v4160
        %v4198 = vsel %vm4181, %v4160, %v4162
        %v4199 = vsel %vm4181, %v4162, %v4164
        %v4200 = vsel %vm4181, %v4166, %v4168
        %v4201 = vsel %vm4181, %v4168, %v4170
        %v4202 = vsel %vm4181, %v4170, %v4172
        %v4203 = vsel %vm4181, %v4174, %v4176
        %v4204 = vsel %vm4181, %v4176, %v4178
        %v4205 = vsel %vm4181, %v4178, %v4180
        %v4231 = vsel %vm453, %v3681, 0
        %v4234 = vsel %vm453, %v3682, 0
        %v4237 = vsel %vm453, %v3683, 0
        %v4240 = vsel %vm453, %v3684, 0
        %v4243 = vsel %vm453, %v3685, 0
        %v4246 = vsel %vm453, %v3686, 0
        %v4249 = vsel %vm453, %v3687, 0
        %v4252 = vsel %vm453, %v3688, 0
        %4254 = vmatprep.subr.mxu0 %v4183
        %4255 = vmatpush1.msra.mxu0 %v4182
        %4256 = vmatprep.subr.mxu0 %v4186
        %4257 = vmatpush1.msra.mxu0 %v4185
        %4258 = vmatprep.subr.mxu0 %v4189
        %4259 = vmatpush1.msra.mxu0 %v4188
        %4260 = vmatprep.subr.mxu0 %v4192
        %4261 = vmatpush1.msra.mxu0 %v4191
        %4262 = vmatprep.subr.mxu0 %v4195
        %4263 = vmatpush1.msra.mxu0 %v4194
        %4264 = vmatprep.subr.mxu0 %v4198
        %4265 = vmatpush1.msra.mxu0 %v4197
        %4266 = vmatprep.subr.mxu0 %v4201
        %4267 = vmatpush1.msra.mxu0 %v4200
        %4268 = vmatprep.subr.mxu0 %v4204
        %4269 = vmatpush1.msra.mxu0 %v4203
        %4270 = vmatprep.subr.mxu0 0.0
        %4271 = vmatpush1.msra.mxu0 0.0
        %4272 = vmatprep.subr.mxu0 0.0
        %4273 = vmatpush1.msra.mxu0 0.0
        %4274 = vmatprep.subr.mxu0 0.0
        %4275 = vmatpush1.msra.mxu0 0.0
        %4276 = vmatprep.subr.mxu0 0.0
        %4277 = vmatpush1.msra.mxu0 0.0
        %4278 = vmatprep.subr.mxu0 0.0
        %4279 = vmatpush1.msra.mxu0 0.0
        %4280 = vmatprep.subr.mxu0 0.0
        %4281 = vmatpush1.msra.mxu0 0.0
        %4282 = vmatprep.subr.mxu0 0.0
        %4283 = vmatpush1.msra.mxu0 0.0
        %4284 = vmatprep.subr.mxu0 0.0
        %4285 = vmatpush1.msra.mxu0 0.0
        %4286 = vmatprep.subr.mxu0 0.0
        %4287 = vmatpush1.msra.mxu0 0.0
        %4288 = vmatprep.subr.mxu0 0.0
        %4289 = vmatpush1.msra.mxu0 0.0
        %4290 = vmatprep.subr.mxu0 0.0
        %4291 = vmatpush1.msra.mxu0 0.0
        %4292 = vmatprep.subr.mxu0 0.0
        %4293 = vmatpush1.msra.mxu0 0.0
        %4294 = vmatprep.subr.mxu0 0.0
        %4295 = vmatpush1.msra.mxu0 0.0
        %4296 = vmatprep.subr.mxu0 0.0
        %4297 = vmatpush1.msra.mxu0 0.0
        %4298 = vmatprep.subr.mxu0 0.0
        %4299 = vmatpush1.msra.mxu0 0.0
        %4300 = vmatprep.subr.mxu0 0.0
        %4301 = vmatpush1.msra.mxu0 0.0
        %4302 = vmatprep.subr.mxu0 0.0
        %4303 = vmatpush1.msra.mxu0 0.0
        %4304 = vmatprep.subr.mxu0 0.0
        %4305 = vmatpush1.msra.mxu0 0.0
        %4306 = vmatprep.subr.mxu0 0.0
        %4307 = vmatpush1.msra.mxu0 0.0
        %4308 = vmatprep.subr.mxu0 0.0
        %4309 = vmatpush1.msra.mxu0 0.0
        %4310 = vmatprep.subr.mxu0 0.0
        %4311 = vmatpush1.msra.mxu0 0.0
        %4312 = vmatprep.subr.mxu0 0.0
        %4313 = vmatpush1.msra.mxu0 0.0
        %4314 = vmatprep.subr.mxu0 0.0
        %4315 = vmatpush1.msra.mxu0 0.0
        %4316 = vmatprep.subr.mxu0 0.0
        %4317 = vmatpush1.msra.mxu0 0.0
        %4318 = vmatprep.mubr.f32.mxu0 0.0
        %4319 = vmatmul.mubr.f32.gmra.mrb[0].mxu0 %v4231
        %v4320 = vpop.f32.mrb[0].mxu0
        %v4321 = vadd.f32 %v3966, %v4320
        %v4322 = vpop.f32.mrb[0].mxu0
        %v4323 = vadd.f32 %v3968, %v4322
        %4324 = vmatprep.mubr.f32.mxu0 0.0
        %4325 = vmatmul.mubr.f32.gmra.mrb[0].mxu0 %v4234
        %v4326 = vpop.f32.mrb[0].mxu0
        %v4327 = vadd.f32 %v3972, %v4326
        %v4328 = vpop.f32.mrb[0].mxu0
        %v4329 = vadd.f32 %v3974, %v4328
        %4330 = vmatprep.mubr.f32.mxu0 0.0
        %4331 = vmatmul.mubr.f32.gmra.mrb[0].mxu0 %v4237
        %v4332 = vpop.f32.mrb[0].mxu0
        %v4333 = vadd.f32 %v3978, %v4332
        %v4334 = vpop.f32.mrb[0].mxu0
        %v4335 = vadd.f32 %v3980, %v4334
        %4336 = vmatprep.mubr.f32.mxu0 0.0
        %4337 = vmatmul.mubr.f32.gmra.mrb[0].mxu0 %v4240
        %v4338 = vpop.f32.mrb[0].mxu0
        %v4339 = vadd.f32 %v3984, %v4338
        %v4340 = vpop.f32.mrb[0].mxu0
        %v4341 = vadd.f32 %v3986, %v4340
        %4342 = vmatprep.mubr.f32.mxu0 0.0
        %4343 = vmatmul.mubr.f32.gmra.mrb[0].mxu0 %v4243
        %v4344 = vpop.f32.mrb[0].mxu0
        %v4345 = vadd.f32 %v3990, %v4344
        %v4346 = vpop.f32.mrb[0].mxu0
        %v4347 = vadd.f32 %v3992, %v4346
        %4348 = vmatprep.mubr.f32.mxu0 0.0
        %4349 = vmatmul.mubr.f32.gmra.mrb[0].mxu0 %v4246
        %v4350 = vpop.f32.mrb[0].mxu0
        %v4351 = vadd.f32 %v3996, %v4350
        %v4352 = vpop.f32.mrb[0].mxu0
        %v4353 = vadd.f32 %v3998, %v4352
        %4354 = vmatprep.mubr.f32.mxu0 0.0
        %4355 = vmatmul.mubr.f32.gmra.mrb[0].mxu0 %v4249
        %v4356 = vpop.f32.mrb[0].mxu0
        %v4357 = vadd.f32 %v4002, %v4356
        %v4358 = vpop.f32.mrb[0].mxu0
        %v4359 = vadd.f32 %v4004, %v4358
        %4360 = vmatprep.mubr.f32.mxu0 0.0
        %4361 = vmatmul.mubr.f32.gmra.mrb[0].mxu0 %v4252
        %v4362 = vpop.f32.mrb[0].mxu0
        %v4363 = vadd.f32 %v4008, %v4362
        %v4364 = vpop.f32.mrb[0].mxu0
        %v4365 = vadd.f32 %v4010, %v4364
        %4366 = vdwg.mxu0
        %4367 = vmatprep.subr.mxu0 0.0
        %4368 = vmatpush1.msra.mxu0 %v4184
        %4369 = vmatprep.subr.mxu0 0.0
        %4370 = vmatpush1.msra.mxu0 %v4187
        %4371 = vmatprep.subr.mxu0 0.0
        %4372 = vmatpush1.msra.mxu0 %v4190
        %4373 = vmatprep.subr.mxu0 0.0
        %4374 = vmatpush1.msra.mxu0 %v4193
        %4375 = vmatprep.subr.mxu0 0.0
        %4376 = vmatpush1.msra.mxu0 %v4196
        %4377 = vmatprep.subr.mxu0 0.0
        %4378 = vmatpush1.msra.mxu0 %v4199
        %4379 = vmatprep.subr.mxu0 0.0
        %4380 = vmatpush1.msra.mxu0 %v4202
        %4381 = vmatprep.subr.mxu0 0.0
        %4382 = vmatpush1.msra.mxu0 %v4205
        %4383 = vmatprep.subr.mxu0 0.0
        %4384 = vmatpush1.msra.mxu0 0.0
        %4385 = vmatprep.subr.mxu0 0.0
        %4386 = vmatpush1.msra.mxu0 0.0
        %4387 = vmatprep.subr.mxu0 0.0
        %4388 = vmatpush1.msra.mxu0 0.0
        %4389 = vmatprep.subr.mxu0 0.0
        %4390 = vmatpush1.msra.mxu0 0.0
        %4391 = vmatprep.subr.mxu0 0.0
        %4392 = vmatpush1.msra.mxu0 0.0
        %4393 = vmatprep.subr.mxu0 0.0
        %4394 = vmatpush1.msra.mxu0 0.0
        %4395 = vmatprep.subr.mxu0 0.0
        %4396 = vmatpush1.msra.mxu0 0.0
        %4397 = vmatprep.subr.mxu0 0.0
        %4398 = vmatpush1.msra.mxu0 0.0
        %4399 = vmatprep.subr.mxu0 0.0
        %4400 = vmatpush1.msra.mxu0 0.0
        %4401 = vmatprep.subr.mxu0 0.0
        %4402 = vmatpush1.msra.mxu0 0.0
        %4403 = vmatprep.subr.mxu0 0.0
        %4404 = vmatpush1.msra.mxu0 0.0
        %4405 = vmatprep.subr.mxu0 0.0
        %4406 = vmatpush1.msra.mxu0 0.0
        %4407 = vmatprep.subr.mxu0 0.0
        %4408 = vmatpush1.msra.mxu0 0.0
        %4409 = vmatprep.subr.mxu0 0.0
        %4410 = vmatpush1.msra.mxu0 0.0
        %4411 = vmatprep.subr.mxu0 0.0
        %4412 = vmatpush1.msra.mxu0 0.0
        %4413 = vmatprep.subr.mxu0 0.0
        %4414 = vmatpush1.msra.mxu0 0.0
        %4415 = vmatprep.subr.mxu0 0.0
        %4416 = vmatpush1.msra.mxu0 0.0
        %4417 = vmatprep.subr.mxu0 0.0
        %4418 = vmatpush1.msra.mxu0 0.0
        %4419 = vmatprep.subr.mxu0 0.0
        %4420 = vmatpush1.msra.mxu0 0.0
        %4421 = vmatprep.subr.mxu0 0.0
        %4422 = vmatpush1.msra.mxu0 0.0
        %4423 = vmatprep.subr.mxu0 0.0
        %4424 = vmatpush1.msra.mxu0 0.0
        %4425 = vmatprep.subr.mxu0 0.0
        %4426 = vmatpush1.msra.mxu0 0.0
        %4427 = vmatprep.subr.mxu0 0.0
        %4428 = vmatpush1.msra.mxu0 0.0
        %4429 = vmatprep.subr.mxu0 0.0
        %4430 = vmatpush1.msra.mxu0 0.0
        %4431 = vmatprep.mubr.f32.mxu0 0.0
        %4432 = vmatmul.mubr.f32.gmra.mrb[0].mxu0 %v4231
        %v4433 = vpop.f32.mrb[0].mxu0
        %v4434 = vadd.f32 %v4079, %v4433
        %v4435 = vpop.f32.mrb[0].mxu0
        %4436 = vmatprep.mubr.f32.mxu0 0.0
        %4437 = vmatmul.mubr.f32.gmra.mrb[0].mxu0 %v4234
        %v4438 = vpop.f32.mrb[0].mxu0
        %v4439 = vadd.f32 %v4084, %v4438
        %v4440 = vpop.f32.mrb[0].mxu0
        %4441 = vmatprep.mubr.f32.mxu0 0.0
        %4442 = vmatmul.mubr.f32.gmra.mrb[0].mxu0 %v4237
        %v4443 = vpop.f32.mrb[0].mxu0
        %v4444 = vadd.f32 %v4089, %v4443
        %v4445 = vpop.f32.mrb[0].mxu0
        %4446 = vmatprep.mubr.f32.mxu0 0.0
        %4447 = vmatmul.mubr.f32.gmra.mrb[0].mxu0 %v4240
        %v4448 = vpop.f32.mrb[0].mxu0
        %v4449 = vadd.f32 %v4094, %v4448
        %v4450 = vpop.f32.mrb[0].mxu0
        %4451 = vmatprep.mubr.f32.mxu0 0.0
        %4452 = vmatmul.mubr.f32.gmra.mrb[0].mxu0 %v4243
        %v4453 = vpop.f32.mrb[0].mxu0
        %v4454 = vadd.f32 %v4099, %v4453
        %v4455 = vpop.f32.mrb[0].mxu0
        %4456 = vmatprep.mubr.f32.mxu0 0.0
        %4457 = vmatmul.mubr.f32.gmra.mrb[0].mxu0 %v4246
        %v4458 = vpop.f32.mrb[0].mxu0
        %v4459 = vadd.f32 %v4104, %v4458
        %v4460 = vpop.f32.mrb[0].mxu0
        %4461 = vmatprep.mubr.f32.mxu0 0.0
        %4462 = vmatmul.mubr.f32.gmra.mrb[0].mxu0 %v4249
        %v4463 = vpop.f32.mrb[0].mxu0
        %v4464 = vadd.f32 %v4109, %v4463
        %v4465 = vpop.f32.mrb[0].mxu0
        %4466 = vmatprep.mubr.f32.mxu0 0.0
        %4467 = vmatmul.mubr.f32.gmra.mrb[0].mxu0 %v4252
        %v4468 = vpop.f32.mrb[0].mxu0
        %v4469 = vadd.f32 %v4114, %v4468
        %v4470 = vpop.f32.mrb[0].mxu0
        %4471 = vdwg.mxu0
        %s4472 = scalar_lea.vmem [#allocation8], 128
        %v4473 = vld [vmem:[%s4472] sm:$0xff]
        %v4474 = vld [vmem:[%s4472 + $0x8] sm:$0xff]
        %v4475 = vld [vmem:[%s4472 + $0x10] sm:$0xff]
        %v4476 = vld [vmem:[%s4472 + $0x18] sm:$0xff]
        %v4477 = vld [vmem:[%s4472 + $0x20] sm:$0xff]
        %v4478 = vld [vmem:[%s4472 + $0x28] sm:$0xff]
        %v4479 = vld [vmem:[%s4472 + $0x30] sm:$0xff]
        %v4480 = vld [vmem:[%s4472 + $0x38] sm:$0xff]
        %4481 = vrot.lane.b32.xlu0 %v3689, 17
        %v4482 = vpop.permute.xlu0 %4481
        %4483 = vrot.lane.b32.xlu0 %v3690, 17
        %v4484 = vpop.permute.xlu0 %4483
        %4485 = vrot.lane.b32.xlu0 %v3691, 17
        %v4486 = vpop.permute.xlu0 %4485
        %4487 = vrot.lane.b32.xlu0 %v3692, 17
        %v4488 = vpop.permute.xlu0 %4487
        %4489 = vrot.lane.b32.xlu0 %v3693, 17
        %v4490 = vpop.permute.xlu0 %4489
        %4491 = vrot.lane.b32.xlu0 %v3694, 17
        %v4492 = vpop.permute.xlu0 %4491
        %4493 = vrot.lane.b32.xlu0 %v3695, 17
        %v4494 = vpop.permute.xlu0 %4493
        %4495 = vrot.lane.b32.xlu0 %v3696, 17
        %v4496 = vpop.permute.xlu0 %4495
        %4497 = vrot.lane.b32.xlu0 %v3697, 17
        %v4498 = vpop.permute.xlu0 %4497
        %4499 = vrot.lane.b32.xlu0 %v3698, 17
        %v4500 = vpop.permute.xlu0 %4499
        %4501 = vrot.lane.b32.xlu0 %v3699, 17
        %v4502 = vpop.permute.xlu0 %4501
        %4503 = vrot.lane.b32.xlu0 %v3700, 17
        %v4504 = vpop.permute.xlu0 %4503
        %4505 = vrot.lane.b32.xlu0 %v3701, 17
        %v4506 = vpop.permute.xlu0 %4505
        %4507 = vrot.lane.b32.xlu0 %v3702, 17
        %v4508 = vpop.permute.xlu0 %4507
        %4509 = vrot.lane.b32.xlu0 %v3703, 17
        %v4510 = vpop.permute.xlu0 %4509
        %4511 = vrot.lane.b32.xlu0 %v3704, 17
        %v4512 = vpop.permute.xlu0 %4511
        %4513 = vrot.lane.b32.xlu0 %v3705, 17
        %v4514 = vpop.permute.xlu0 %4513
        %4515 = vrot.lane.b32.xlu0 %v3706, 17
        %v4516 = vpop.permute.xlu0 %4515
        %4517 = vrot.lane.b32.xlu0 %v3707, 17
        %v4518 = vpop.permute.xlu0 %4517
        %4519 = vrot.lane.b32.xlu0 %v3708, 17
        %v4520 = vpop.permute.xlu0 %4519
        %4521 = vrot.lane.b32.xlu0 %v3709, 17
        %v4522 = vpop.permute.xlu0 %4521
        %4523 = vrot.lane.b32.xlu0 %v3710, 17
        %v4524 = vpop.permute.xlu0 %4523
        %4525 = vrot.lane.b32.xlu0 %v3711, 17
        %v4526 = vpop.permute.xlu0 %4525
        %4527 = vrot.lane.b32.xlu0 %v3712, 17
        %v4528 = vpop.permute.xlu0 %4527
        %4529 = vrot.lane.b32.xlu0 %v3713, 17
        %v4530 = vpop.permute.xlu0 %4529
        %4531 = vrot.lane.b32.xlu0 %v3714, 17
        %v4532 = vpop.permute.xlu0 %4531
        %4533 = vrot.lane.b32.xlu0 %v3715, 17
        %v4534 = vpop.permute.xlu0 %4533
        %4535 = vrot.lane.b32.xlu0 %v3716, 17
        %v4536 = vpop.permute.xlu0 %4535
        %4537 = vrot.lane.b32.xlu0 %v3717, 17
        %v4538 = vpop.permute.xlu0 %4537
        %4539 = vrot.lane.b32.xlu0 %v3718, 17
        %v4540 = vpop.permute.xlu0 %4539
        %4541 = vrot.lane.b32.xlu0 %v3719, 17
        %v4542 = vpop.permute.xlu0 %4541
        %4543 = vrot.lane.b32.xlu0 %v3720, 17
        %v4544 = vpop.permute.xlu0 %4543
        %vm4545 = vcmask 138240
        %v4546 = vsel %vm4545, %v4482, %v4484
        %v4547 = vsel %vm4545, %v4484, %v4486
        %v4548 = vsel %vm4545, %v4486, %v4488
        %v4549 = vsel %vm4545, %v4490, %v4492
        %v4550 = vsel %vm4545, %v4492, %v4494
        %v4551 = vsel %vm4545, %v4494, %v4496
        %v4552 = vsel %vm4545, %v4498, %v4500
        %v4553 = vsel %vm4545, %v4500, %v4502
        %v4554 = vsel %vm4545, %v4502, %v4504
        %v4555 = vsel %vm4545, %v4506, %v4508
        %v4556 = vsel %vm4545, %v4508, %v4510
        %v4557 = vsel %vm4545, %v4510, %v4512
        %v4558 = vsel %vm4545, %v4514, %v4516
        %v4559 = vsel %vm4545, %v4516, %v4518
        %v4560 = vsel %vm4545, %v4518, %v4520
        %v4561 = vsel %vm4545, %v4522, %v4524
        %v4562 = vsel %vm4545, %v4524, %v4526
        %v4563 = vsel %vm4545, %v4526, %v4528
        %v4564 = vsel %vm4545, %v4530, %v4532
        %v4565 = vsel %vm4545, %v4532, %v4534
        %v4566 = vsel %vm4545, %v4534, %v4536
        %v4567 = vsel %vm4545, %v4538, %v4540
        %v4568 = vsel %vm4545, %v4540, %v4542
        %v4569 = vsel %vm4545, %v4542, %v4544
        %v4595 = vsel %vm453, %v4473, 0
        %v4598 = vsel %vm453, %v4474, 0
        %v4601 = vsel %vm453, %v4475, 0
        %v4604 = vsel %vm453, %v4476, 0
        %v4607 = vsel %vm453, %v4477, 0
        %v4610 = vsel %vm453, %v4478, 0
        %v4613 = vsel %vm453, %v4479, 0
        %v4616 = vsel %vm453, %v4480, 0
        %4618 = vmatprep.subr.mxu0 %v4547
        %4619 = vmatpush1.msra.mxu0 %v4546
        %4620 = vmatprep.subr.mxu0 %v4550
        %4621 = vmatpush1.msra.mxu0 %v4549
        %4622 = vmatprep.subr.mxu0 %v4553
        %4623 = vmatpush1.msra.mxu0 %v4552
        %4624 = vmatprep.subr.mxu0 %v4556
        %4625 = vmatpush1.msra.mxu0 %v4555
        %4626 = vmatprep.subr.mxu0 %v4559
        %4627 = vmatpush1.msra.mxu0 %v4558
        %4628 = vmatprep.subr.mxu0 %v4562
        %4629 = vmatpush1.msra.mxu0 %v4561
        %4630 = vmatprep.subr.mxu0 %v4565
        %4631 = vmatpush1.msra.mxu0 %v4564
        %4632 = vmatprep.subr.mxu0 %v4568
        %4633 = vmatpush1.msra.mxu0 %v4567
        %4634 = vmatprep.subr.mxu0 0.0
        %4635 = vmatpush1.msra.mxu0 0.0
        %4636 = vmatprep.subr.mxu0 0.0
        %4637 = vmatpush1.msra.mxu0 0.0
        %4638 = vmatprep.subr.mxu0 0.0
        %4639 = vmatpush1.msra.mxu0 0.0
        %4640 = vmatprep.subr.mxu0 0.0
        %4641 = vmatpush1.msra.mxu0 0.0
        %4642 = vmatprep.subr.mxu0 0.0
        %4643 = vmatpush1.msra.mxu0 0.0
        %4644 = vmatprep.subr.mxu0 0.0
        %4645 = vmatpush1.msra.mxu0 0.0
        %4646 = vmatprep.subr.mxu0 0.0
        %4647 = vmatpush1.msra.mxu0 0.0
        %4648 = vmatprep.subr.mxu0 0.0
        %4649 = vmatpush1.msra.mxu0 0.0
        %4650 = vmatprep.subr.mxu0 0.0
        %4651 = vmatpush1.msra.mxu0 0.0
        %4652 = vmatprep.subr.mxu0 0.0
        %4653 = vmatpush1.msra.mxu0 0.0
        %4654 = vmatprep.subr.mxu0 0.0
        %4655 = vmatpush1.msra.mxu0 0.0
        %4656 = vmatprep.subr.mxu0 0.0
        %4657 = vmatpush1.msra.mxu0 0.0
        %4658 = vmatprep.subr.mxu0 0.0
        %4659 = vmatpush1.msra.mxu0 0.0
        %4660 = vmatprep.subr.mxu0 0.0
        %4661 = vmatpush1.msra.mxu0 0.0
        %4662 = vmatprep.subr.mxu0 0.0
        %4663 = vmatpush1.msra.mxu0 0.0
        %4664 = vmatprep.subr.mxu0 0.0
        %4665 = vmatpush1.msra.mxu0 0.0
        %4666 = vmatprep.subr.mxu0 0.0
        %4667 = vmatpush1.msra.mxu0 0.0
        %4668 = vmatprep.subr.mxu0 0.0
        %4669 = vmatpush1.msra.mxu0 0.0
        %4670 = vmatprep.subr.mxu0 0.0
        %4671 = vmatpush1.msra.mxu0 0.0
        %4672 = vmatprep.subr.mxu0 0.0
        %4673 = vmatpush1.msra.mxu0 0.0
        %4674 = vmatprep.subr.mxu0 0.0
        %4675 = vmatpush1.msra.mxu0 0.0
        %4676 = vmatprep.subr.mxu0 0.0
        %4677 = vmatpush1.msra.mxu0 0.0
        %4678 = vmatprep.subr.mxu0 0.0
        %4679 = vmatpush1.msra.mxu0 0.0
        %4680 = vmatprep.subr.mxu0 0.0
        %4681 = vmatpush1.msra.mxu0 0.0
        %4682 = vmatprep.mubr.f32.mxu0 0.0
        %4683 = vmatmul.mubr.f32.gmra.mrb[0].mxu0 %v4595
        %v4684 = vpop.f32.mrb[0].mxu0
        %v4685 = vadd.f32 0.0, %v4684
        %v4686 = vpop.f32.mrb[0].mxu0
        %v4687 = vadd.f32 0.0, %v4686
        %4688 = vmatprep.mubr.f32.mxu0 0.0
        %4689 = vmatmul.mubr.f32.gmra.mrb[0].mxu0 %v4598
        %v4690 = vpop.f32.mrb[0].mxu0
        %v4691 = vadd.f32 0.0, %v4690
        %v4692 = vpop.f32.mrb[0].mxu0
        %v4693 = vadd.f32 0.0, %v4692
        %4694 = vmatprep.mubr.f32.mxu0 0.0
        %4695 = vmatmul.mubr.f32.gmra.mrb[0].mxu0 %v4601
        %v4696 = vpop.f32.mrb[0].mxu0
        %v4697 = vadd.f32 0.0, %v4696
        %v4698 = vpop.f32.mrb[0].mxu0
        %v4699 = vadd.f32 0.0, %v4698
        %4700 = vmatprep.mubr.f32.mxu0 0.0
        %4701 = vmatmul.mubr.f32.gmra.mrb[0].mxu0 %v4604
        %v4702 = vpop.f32.mrb[0].mxu0
        %v4703 = vadd.f32 0.0, %v4702
        %v4704 = vpop.f32.mrb[0].mxu0
        %v4705 = vadd.f32 0.0, %v4704
        %4706 = vmatprep.mubr.f32.mxu0 0.0
        %4707 = vmatmul.mubr.f32.gmra.mrb[0].mxu0 %v4607
        %v4708 = vpop.f32.mrb[0].mxu0
        %v4709 = vadd.f32 0.0, %v4708
        %v4710 = vpop.f32.mrb[0].mxu0
        %v4711 = vadd.f32 0.0, %v4710
        %4712 = vmatprep.mubr.f32.mxu0 0.0
        %4713 = vmatmul.mubr.f32.gmra.mrb[0].mxu0 %v4610
        %v4714 = vpop.f32.mrb[0].mxu0
        %v4715 = vadd.f32 0.0, %v4714
        %v4716 = vpop.f32.mrb[0].mxu0
        %v4717 = vadd.f32 0.0, %v4716
        %4718 = vmatprep.mubr.f32.mxu0 0.0
        %4719 = vmatmul.mubr.f32.gmra.mrb[0].mxu0 %v4613
        %v4720 = vpop.f32.mrb[0].mxu0
        %v4721 = vadd.f32 0.0, %v4720
        %v4722 = vpop.f32.mrb[0].mxu0
        %v4723 = vadd.f32 0.0, %v4722
        %4724 = vmatprep.mubr.f32.mxu0 0.0
        %4725 = vmatmul.mubr.f32.gmra.mrb[0].mxu0 %v4616
        %v4726 = vpop.f32.mrb[0].mxu0
        %v4727 = vadd.f32 0.0, %v4726
        %v4728 = vpop.f32.mrb[0].mxu0
        %v4729 = vadd.f32 0.0, %v4728
        %4730 = vdwg.mxu0
        %4731 = vmatprep.subr.mxu0 0.0
        %4732 = vmatpush1.msra.mxu0 %v4548
        %4733 = vmatprep.subr.mxu0 0.0
        %4734 = vmatpush1.msra.mxu0 %v4551
        %4735 = vmatprep.subr.mxu0 0.0
        %4736 = vmatpush1.msra.mxu0 %v4554
        %4737 = vmatprep.subr.mxu0 0.0
        %4738 = vmatpush1.msra.mxu0 %v4557
        %4739 = vmatprep.subr.mxu0 0.0
        %4740 = vmatpush1.msra.mxu0 %v4560
        %4741 = vmatprep.subr.mxu0 0.0
        %4742 = vmatpush1.msra.mxu0 %v4563
        %4743 = vmatprep.subr.mxu0 0.0
        %4744 = vmatpush1.msra.mxu0 %v4566
        %4745 = vmatprep.subr.mxu0 0.0
        %4746 = vmatpush1.msra.mxu0 %v4569
        %4747 = vmatprep.subr.mxu0 0.0
        %4748 = vmatpush1.msra.mxu0 0.0
        %4749 = vmatprep.subr.mxu0 0.0
        %4750 = vmatpush1.msra.mxu0 0.0
        %4751 = vmatprep.subr.mxu0 0.0
        %4752 = vmatpush1.msra.mxu0 0.0
        %4753 = vmatprep.subr.mxu0 0.0
        %4754 = vmatpush1.msra.mxu0 0.0
        %4755 = vmatprep.subr.mxu0 0.0
        %4756 = vmatpush1.msra.mxu0 0.0
        %4757 = vmatprep.subr.mxu0 0.0
        %4758 = vmatpush1.msra.mxu0 0.0
        %4759 = vmatprep.subr.mxu0 0.0
        %4760 = vmatpush1.msra.mxu0 0.0
        %4761 = vmatprep.subr.mxu0 0.0
        %4762 = vmatpush1.msra.mxu0 0.0
        %4763 = vmatprep.subr.mxu0 0.0
        %4764 = vmatpush1.msra.mxu0 0.0
        %4765 = vmatprep.subr.mxu0 0.0
        %4766 = vmatpush1.msra.mxu0 0.0
        %4767 = vmatprep.subr.mxu0 0.0
        %4768 = vmatpush1.msra.mxu0 0.0
        %4769 = vmatprep.subr.mxu0 0.0
        %4770 = vmatpush1.msra.mxu0 0.0
        %4771 = vmatprep.subr.mxu0 0.0
        %4772 = vmatpush1.msra.mxu0 0.0
        %4773 = vmatprep.subr.mxu0 0.0
        %4774 = vmatpush1.msra.mxu0 0.0
        %4775 = vmatprep.subr.mxu0 0.0
        %4776 = vmatpush1.msra.mxu0 0.0
        %4777 = vmatprep.subr.mxu0 0.0
        %4778 = vmatpush1.msra.mxu0 0.0
        %4779 = vmatprep.subr.mxu0 0.0
        %4780 = vmatpush1.msra.mxu0 0.0
        %4781 = vmatprep.subr.mxu0 0.0
        %4782 = vmatpush1.msra.mxu0 0.0
        %4783 = vmatprep.subr.mxu0 0.0
        %4784 = vmatpush1.msra.mxu0 0.0
        %4785 = vmatprep.subr.mxu0 0.0
        %4786 = vmatpush1.msra.mxu0 0.0
        %4787 = vmatprep.subr.mxu0 0.0
        %4788 = vmatpush1.msra.mxu0 0.0
        %4789 = vmatprep.subr.mxu0 0.0
        %4790 = vmatpush1.msra.mxu0 0.0
        %4791 = vmatprep.subr.mxu0 0.0
        %4792 = vmatpush1.msra.mxu0 0.0
        %4793 = vmatprep.subr.mxu0 0.0
        %4794 = vmatpush1.msra.mxu0 0.0
        %4795 = vmatprep.mubr.f32.mxu0 0.0
        %4796 = vmatmul.mubr.f32.gmra.mrb[0].mxu0 %v4595
        %v4797 = vpop.f32.mrb[0].mxu0
        %v4798 = vadd.f32 0.0, %v4797
        %v4799 = vpop.f32.mrb[0].mxu0
        %4800 = vmatprep.mubr.f32.mxu0 0.0
        %4801 = vmatmul.mubr.f32.gmra.mrb[0].mxu0 %v4598
        %v4802 = vpop.f32.mrb[0].mxu0
        %v4803 = vadd.f32 0.0, %v4802
        %v4804 = vpop.f32.mrb[0].mxu0
        %4805 = vmatprep.mubr.f32.mxu0 0.0
        %4806 = vmatmul.mubr.f32.gmra.mrb[0].mxu0 %v4601
        %v4807 = vpop.f32.mrb[0].mxu0
        %v4808 = vadd.f32 0.0, %v4807
        %v4809 = vpop.f32.mrb[0].mxu0
        %4810 = vmatprep.mubr.f32.mxu0 0.0
        %4811 = vmatmul.mubr.f32.gmra.mrb[0].mxu0 %v4604
        %v4812 = vpop.f32.mrb[0].mxu0
        %v4813 = vadd.f32 0.0, %v4812
        %v4814 = vpop.f32.mrb[0].mxu0
        %4815 = vmatprep.mubr.f32.mxu0 0.0
        %4816 = vmatmul.mubr.f32.gmra.mrb[0].mxu0 %v4607
        %v4817 = vpop.f32.mrb[0].mxu0
        %v4818 = vadd.f32 0.0, %v4817
        %v4819 = vpop.f32.mrb[0].mxu0
        %4820 = vmatprep.mubr.f32.mxu0 0.0
        %4821 = vmatmul.mubr.f32.gmra.mrb[0].mxu0 %v4610
        %v4822 = vpop.f32.mrb[0].mxu0
        %v4823 = vadd.f32 0.0, %v4822
        %v4824 = vpop.f32.mrb[0].mxu0
        %4825 = vmatprep.mubr.f32.mxu0 0.0
        %4826 = vmatmul.mubr.f32.gmra.mrb[0].mxu0 %v4613
        %v4827 = vpop.f32.mrb[0].mxu0
        %v4828 = vadd.f32 0.0, %v4827
        %v4829 = vpop.f32.mrb[0].mxu0
        %4830 = vmatprep.mubr.f32.mxu0 0.0
        %4831 = vmatmul.mubr.f32.gmra.mrb[0].mxu0 %v4616
        %v4832 = vpop.f32.mrb[0].mxu0
        %v4833 = vadd.f32 0.0, %v4832
        %v4834 = vpop.f32.mrb[0].mxu0
        %4835 = vdwg.mxu0
        %v4836 = vadd.f32 %v4321, %v4685
        %v4837 = vadd.f32 %v4323, %v4687
        %v4838 = vadd.f32 %v4434, %v4798
        %v4839 = vadd.f32 %v4327, %v4691
        %v4840 = vadd.f32 %v4329, %v4693
        %v4841 = vadd.f32 %v4439, %v4803
        %v4842 = vadd.f32 %v4333, %v4697
        %v4843 = vadd.f32 %v4335, %v4699
        %v4844 = vadd.f32 %v4444, %v4808
        %v4845 = vadd.f32 %v4339, %v4703
        %v4846 = vadd.f32 %v4341, %v4705
        %v4847 = vadd.f32 %v4449, %v4813
        %v4848 = vadd.f32 %v4345, %v4709
        %v4849 = vadd.f32 %v4347, %v4711
        %v4850 = vadd.f32 %v4454, %v4818
        %v4851 = vadd.f32 %v4351, %v4715
        %v4852 = vadd.f32 %v4353, %v4717
        %v4853 = vadd.f32 %v4459, %v4823
        %v4854 = vadd.f32 %v4357, %v4721
        %v4855 = vadd.f32 %v4359, %v4723
        %v4856 = vadd.f32 %v4464, %v4828
        %v4857 = vadd.f32 %v4363, %v4727
        %v4858 = vadd.f32 %v4365, %v4729
        %v4859 = vadd.f32 %v4469, %v4833
        %s4860 = scalar_lea.vmem [#allocation8], 192
        %v4861 = vld [vmem:[%s4860] sm:$0xff]
        %v4862 = vld [vmem:[%s4860 + $0x8] sm:$0xff]
        %v4863 = vld [vmem:[%s4860 + $0x10] sm:$0xff]
        %v4864 = vld [vmem:[%s4860 + $0x18] sm:$0xff]
        %v4865 = vld [vmem:[%s4860 + $0x20] sm:$0xff]
        %v4866 = vld [vmem:[%s4860 + $0x28] sm:$0xff]
        %v4867 = vld [vmem:[%s4860 + $0x30] sm:$0xff]
        %v4868 = vld [vmem:[%s4860 + $0x38] sm:$0xff]
        %4869 = vrot.lane.b32.xlu0 %v3689, 1
        %v4870 = vpop.permute.xlu0 %4869
        %4871 = vrot.lane.b32.xlu0 %v3690, 1
        %v4872 = vpop.permute.xlu0 %4871
        %4873 = vrot.lane.b32.xlu0 %v3691, 1
        %v4874 = vpop.permute.xlu0 %4873
        %4875 = vrot.lane.b32.xlu0 %v3692, 1
        %v4876 = vpop.permute.xlu0 %4875
        %4877 = vrot.lane.b32.xlu0 %v3693, 1
        %v4878 = vpop.permute.xlu0 %4877
        %4879 = vrot.lane.b32.xlu0 %v3694, 1
        %v4880 = vpop.permute.xlu0 %4879
        %4881 = vrot.lane.b32.xlu0 %v3695, 1
        %v4882 = vpop.permute.xlu0 %4881
        %4883 = vrot.lane.b32.xlu0 %v3696, 1
        %v4884 = vpop.permute.xlu0 %4883
        %4885 = vrot.lane.b32.xlu0 %v3697, 1
        %v4886 = vpop.permute.xlu0 %4885
        %4887 = vrot.lane.b32.xlu0 %v3698, 1
        %v4888 = vpop.permute.xlu0 %4887
        %4889 = vrot.lane.b32.xlu0 %v3699, 1
        %v4890 = vpop.permute.xlu0 %4889
        %4891 = vrot.lane.b32.xlu0 %v3700, 1
        %v4892 = vpop.permute.xlu0 %4891
        %4893 = vrot.lane.b32.xlu0 %v3701, 1
        %v4894 = vpop.permute.xlu0 %4893
        %4895 = vrot.lane.b32.xlu0 %v3702, 1
        %v4896 = vpop.permute.xlu0 %4895
        %4897 = vrot.lane.b32.xlu0 %v3703, 1
        %v4898 = vpop.permute.xlu0 %4897
        %4899 = vrot.lane.b32.xlu0 %v3704, 1
        %v4900 = vpop.permute.xlu0 %4899
        %4901 = vrot.lane.b32.xlu0 %v3705, 1
        %v4902 = vpop.permute.xlu0 %4901
        %4903 = vrot.lane.b32.xlu0 %v3706, 1
        %v4904 = vpop.permute.xlu0 %4903
        %4905 = vrot.lane.b32.xlu0 %v3707, 1
        %v4906 = vpop.permute.xlu0 %4905
        %4907 = vrot.lane.b32.xlu0 %v3708, 1
        %v4908 = vpop.permute.xlu0 %4907
        %4909 = vrot.lane.b32.xlu0 %v3709, 1
        %v4910 = vpop.permute.xlu0 %4909
        %4911 = vrot.lane.b32.xlu0 %v3710, 1
        %v4912 = vpop.permute.xlu0 %4911
        %4913 = vrot.lane.b32.xlu0 %v3711, 1
        %v4914 = vpop.permute.xlu0 %4913
        %4915 = vrot.lane.b32.xlu0 %v3712, 1
        %v4916 = vpop.permute.xlu0 %4915
        %4917 = vrot.lane.b32.xlu0 %v3713, 1
        %v4918 = vpop.permute.xlu0 %4917
        %4919 = vrot.lane.b32.xlu0 %v3714, 1
        %v4920 = vpop.permute.xlu0 %4919
        %4921 = vrot.lane.b32.xlu0 %v3715, 1
        %v4922 = vpop.permute.xlu0 %4921
        %4923 = vrot.lane.b32.xlu0 %v3716, 1
        %v4924 = vpop.permute.xlu0 %4923
        %4925 = vrot.lane.b32.xlu0 %v3717, 1
        %v4926 = vpop.permute.xlu0 %4925
        %4927 = vrot.lane.b32.xlu0 %v3718, 1
        %v4928 = vpop.permute.xlu0 %4927
        %4929 = vrot.lane.b32.xlu0 %v3719, 1
        %v4930 = vpop.permute.xlu0 %4929
        %4931 = vrot.lane.b32.xlu0 %v3720, 1
        %v4932 = vpop.permute.xlu0 %4931
        %vm4933 = vcmask 7168
        %v4934 = vsel %vm4933, %v4870, %v4872
        %v4935 = vsel %vm4933, %v4872, %v4874
        %v4936 = vsel %vm4933, %v4874, %v4876
        %v4937 = vsel %vm4933, %v4878, %v4880
        %v4938 = vsel %vm4933, %v4880, %v4882
        %v4939 = vsel %vm4933, %v4882, %v4884
        %v4940 = vsel %vm4933, %v4886, %v4888
        %v4941 = vsel %vm4933, %v4888, %v4890
        %v4942 = vsel %vm4933, %v4890, %v4892
        %v4943 = vsel %vm4933, %v4894, %v4896
        %v4944 = vsel %vm4933, %v4896, %v4898
        %v4945 = vsel %vm4933, %v4898, %v4900
        %v4946 = vsel %vm4933, %v4902, %v4904
        %v4947 = vsel %vm4933, %v4904, %v4906
        %v4948 = vsel %vm4933, %v4906, %v4908
        %v4949 = vsel %vm4933, %v4910, %v4912
        %v4950 = vsel %vm4933, %v4912, %v4914
        %v4951 = vsel %vm4933, %v4914, %v4916
        %v4952 = vsel %vm4933, %v4918, %v4920
        %v4953 = vsel %vm4933, %v4920, %v4922
        %v4954 = vsel %vm4933, %v4922, %v4924
        %v4955 = vsel %vm4933, %v4926, %v4928
        %v4956 = vsel %vm4933, %v4928, %v4930
        %v4957 = vsel %vm4933, %v4930, %v4932
        %v4983 = vsel %vm453, %v4861, 0
        %v4986 = vsel %vm453, %v4862, 0
        %v4989 = vsel %vm453, %v4863, 0
        %v4992 = vsel %vm453, %v4864, 0
        %v4995 = vsel %vm453, %v4865, 0
        %v4998 = vsel %vm453, %v4866, 0
        %v5001 = vsel %vm453, %v4867, 0
        %v5004 = vsel %vm453, %v4868, 0
        %5006 = vmatprep.subr.mxu0 %v4935
        %5007 = vmatpush1.msra.mxu0 %v4934
        %5008 = vmatprep.subr.mxu0 %v4938
        %5009 = vmatpush1.msra.mxu0 %v4937
        %5010 = vmatprep.subr.mxu0 %v4941
        %5011 = vmatpush1.msra.mxu0 %v4940
        %5012 = vmatprep.subr.mxu0 %v4944
        %5013 = vmatpush1.msra.mxu0 %v4943
        %5014 = vmatprep.subr.mxu0 %v4947
        %5015 = vmatpush1.msra.mxu0 %v4946
        %5016 = vmatprep.subr.mxu0 %v4950
        %5017 = vmatpush1.msra.mxu0 %v4949
        %5018 = vmatprep.subr.mxu0 %v4953
        %5019 = vmatpush1.msra.mxu0 %v4952
        %5020 = vmatprep.subr.mxu0 %v4956
        %5021 = vmatpush1.msra.mxu0 %v4955
        %5022 = vmatprep.subr.mxu0 0.0
        %5023 = vmatpush1.msra.mxu0 0.0
        %5024 = vmatprep.subr.mxu0 0.0
        %5025 = vmatpush1.msra.mxu0 0.0
        %5026 = vmatprep.subr.mxu0 0.0
        %5027 = vmatpush1.msra.mxu0 0.0
        %5028 = vmatprep.subr.mxu0 0.0
        %5029 = vmatpush1.msra.mxu0 0.0
        %5030 = vmatprep.subr.mxu0 0.0
        %5031 = vmatpush1.msra.mxu0 0.0
        %5032 = vmatprep.subr.mxu0 0.0
        %5033 = vmatpush1.msra.mxu0 0.0
        %5034 = vmatprep.subr.mxu0 0.0
        %5035 = vmatpush1.msra.mxu0 0.0
        %5036 = vmatprep.subr.mxu0 0.0
        %5037 = vmatpush1.msra.mxu0 0.0
        %5038 = vmatprep.subr.mxu0 0.0
        %5039 = vmatpush1.msra.mxu0 0.0
        %5040 = vmatprep.subr.mxu0 0.0
        %5041 = vmatpush1.msra.mxu0 0.0
        %5042 = vmatprep.subr.mxu0 0.0
        %5043 = vmatpush1.msra.mxu0 0.0
        %5044 = vmatprep.subr.mxu0 0.0
        %5045 = vmatpush1.msra.mxu0 0.0
        %5046 = vmatprep.subr.mxu0 0.0
        %5047 = vmatpush1.msra.mxu0 0.0
        %5048 = vmatprep.subr.mxu0 0.0
        %5049 = vmatpush1.msra.mxu0 0.0
        %5050 = vmatprep.subr.mxu0 0.0
        %5051 = vmatpush1.msra.mxu0 0.0
        %5052 = vmatprep.subr.mxu0 0.0
        %5053 = vmatpush1.msra.mxu0 0.0
        %5054 = vmatprep.subr.mxu0 0.0
        %5055 = vmatpush1.msra.mxu0 0.0
        %5056 = vmatprep.subr.mxu0 0.0
        %5057 = vmatpush1.msra.mxu0 0.0
        %5058 = vmatprep.subr.mxu0 0.0
        %5059 = vmatpush1.msra.mxu0 0.0
        %5060 = vmatprep.subr.mxu0 0.0
        %5061 = vmatpush1.msra.mxu0 0.0
        %5062 = vmatprep.subr.mxu0 0.0
        %5063 = vmatpush1.msra.mxu0 0.0
        %5064 = vmatprep.subr.mxu0 0.0
        %5065 = vmatpush1.msra.mxu0 0.0
        %5066 = vmatprep.subr.mxu0 0.0
        %5067 = vmatpush1.msra.mxu0 0.0
        %5068 = vmatprep.subr.mxu0 0.0
        %5069 = vmatpush1.msra.mxu0 0.0
        %5070 = vmatprep.mubr.f32.mxu0 0.0
        %5071 = vmatmul.mubr.f32.gmra.mrb[0].mxu0 %v4983
        %v5072 = vpop.f32.mrb[0].mxu0
        %v5073 = vadd.f32 0.0, %v5072
        %v5074 = vpop.f32.mrb[0].mxu0
        %v5075 = vadd.f32 0.0, %v5074
        %5076 = vmatprep.mubr.f32.mxu0 0.0
        %5077 = vmatmul.mubr.f32.gmra.mrb[0].mxu0 %v4986
        %v5078 = vpop.f32.mrb[0].mxu0
        %v5079 = vadd.f32 0.0, %v5078
        %v5080 = vpop.f32.mrb[0].mxu0
        %v5081 = vadd.f32 0.0, %v5080
        %5082 = vmatprep.mubr.f32.mxu0 0.0
        %5083 = vmatmul.mubr.f32.gmra.mrb[0].mxu0 %v4989
        %v5084 = vpop.f32.mrb[0].mxu0
        %v5085 = vadd.f32 0.0, %v5084
        %v5086 = vpop.f32.mrb[0].mxu0
        %v5087 = vadd.f32 0.0, %v5086
        %5088 = vmatprep.mubr.f32.mxu0 0.0
        %5089 = vmatmul.mubr.f32.gmra.mrb[0].mxu0 %v4992
        %v5090 = vpop.f32.mrb[0].mxu0
        %v5091 = vadd.f32 0.0, %v5090
        %v5092 = vpop.f32.mrb[0].mxu0
        %v5093 = vadd.f32 0.0, %v5092
        %5094 = vmatprep.mubr.f32.mxu0 0.0
        %5095 = vmatmul.mubr.f32.gmra.mrb[0].mxu0 %v4995
        %v5096 = vpop.f32.mrb[0].mxu0
        %v5097 = vadd.f32 0.0, %v5096
        %v5098 = vpop.f32.mrb[0].mxu0
        %v5099 = vadd.f32 0.0, %v5098
        %5100 = vmatprep.mubr.f32.mxu0 0.0
        %5101 = vmatmul.mubr.f32.gmra.mrb[0].mxu0 %v4998
        %v5102 = vpop.f32.mrb[0].mxu0
        %v5103 = vadd.f32 0.0, %v5102
        %v5104 = vpop.f32.mrb[0].mxu0
        %v5105 = vadd.f32 0.0, %v5104
        %5106 = vmatprep.mubr.f32.mxu0 0.0
        %5107 = vmatmul.mubr.f32.gmra.mrb[0].mxu0 %v5001
        %v5108 = vpop.f32.mrb[0].mxu0
        %v5109 = vadd.f32 0.0, %v5108
        %v5110 = vpop.f32.mrb[0].mxu0
        %v5111 = vadd.f32 0.0, %v5110
        %5112 = vmatprep.mubr.f32.mxu0 0.0
        %5113 = vmatmul.mubr.f32.gmra.mrb[0].mxu0 %v5004
        %v5114 = vpop.f32.mrb[0].mxu0
        %v5115 = vadd.f32 0.0, %v5114
        %v5116 = vpop.f32.mrb[0].mxu0
        %v5117 = vadd.f32 0.0, %v5116
        %5118 = vdwg.mxu0
        %5119 = vmatprep.subr.mxu0 0.0
        %5120 = vmatpush1.msra.mxu0 %v4936
        %5121 = vmatprep.subr.mxu0 0.0
        %5122 = vmatpush1.msra.mxu0 %v4939
        %5123 = vmatprep.subr.mxu0 0.0
        %5124 = vmatpush1.msra.mxu0 %v4942
        %5125 = vmatprep.subr.mxu0 0.0
        %5126 = vmatpush1.msra.mxu0 %v4945
        %5127 = vmatprep.subr.mxu0 0.0
        %5128 = vmatpush1.msra.mxu0 %v4948
        %5129 = vmatprep.subr.mxu0 0.0
        %5130 = vmatpush1.msra.mxu0 %v4951
        %5131 = vmatprep.subr.mxu0 0.0
        %5132 = vmatpush1.msra.mxu0 %v4954
        %5133 = vmatprep.subr.mxu0 0.0
        %5134 = vmatpush1.msra.mxu0 %v4957
        %5135 = vmatprep.subr.mxu0 0.0
        %5136 = vmatpush1.msra.mxu0 0.0
        %5137 = vmatprep.subr.mxu0 0.0
        %5138 = vmatpush1.msra.mxu0 0.0
        %5139 = vmatprep.subr.mxu0 0.0
        %5140 = vmatpush1.msra.mxu0 0.0
        %5141 = vmatprep.subr.mxu0 0.0
        %5142 = vmatpush1.msra.mxu0 0.0
        %5143 = vmatprep.subr.mxu0 0.0
        %5144 = vmatpush1.msra.mxu0 0.0
        %5145 = vmatprep.subr.mxu0 0.0
        %5146 = vmatpush1.msra.mxu0 0.0
        %5147 = vmatprep.subr.mxu0 0.0
        %5148 = vmatpush1.msra.mxu0 0.0
        %5149 = vmatprep.subr.mxu0 0.0
        %5150 = vmatpush1.msra.mxu0 0.0
        %5151 = vmatprep.subr.mxu0 0.0
        %5152 = vmatpush1.msra.mxu0 0.0
        %5153 = vmatprep.subr.mxu0 0.0
        %5154 = vmatpush1.msra.mxu0 0.0
        %5155 = vmatprep.subr.mxu0 0.0
        %5156 = vmatpush1.msra.mxu0 0.0
        %5157 = vmatprep.subr.mxu0 0.0
        %5158 = vmatpush1.msra.mxu0 0.0
        %5159 = vmatprep.subr.mxu0 0.0
        %5160 = vmatpush1.msra.mxu0 0.0
        %5161 = vmatprep.subr.mxu0 0.0
        %5162 = vmatpush1.msra.mxu0 0.0
        %5163 = vmatprep.subr.mxu0 0.0
        %5164 = vmatpush1.msra.mxu0 0.0
        %5165 = vmatprep.subr.mxu0 0.0
        %5166 = vmatpush1.msra.mxu0 0.0
        %5167 = vmatprep.subr.mxu0 0.0
        %5168 = vmatpush1.msra.mxu0 0.0
        %5169 = vmatprep.subr.mxu0 0.0
        %5170 = vmatpush1.msra.mxu0 0.0
        %5171 = vmatprep.subr.mxu0 0.0
        %5172 = vmatpush1.msra.mxu0 0.0
        %5173 = vmatprep.subr.mxu0 0.0
        %5174 = vmatpush1.msra.mxu0 0.0
        %5175 = vmatprep.subr.mxu0 0.0
        %5176 = vmatpush1.msra.mxu0 0.0
        %5177 = vmatprep.subr.mxu0 0.0
        %5178 = vmatpush1.msra.mxu0 0.0
        %5179 = vmatprep.subr.mxu0 0.0
        %5180 = vmatpush1.msra.mxu0 0.0
        %5181 = vmatprep.subr.mxu0 0.0
        %5182 = vmatpush1.msra.mxu0 0.0
        %5183 = vmatprep.mubr.f32.mxu0 0.0
        %5184 = vmatmul.mubr.f32.gmra.mrb[0].mxu0 %v4983
        %v5185 = vpop.f32.mrb[0].mxu0
        %v5186 = vadd.f32 0.0, %v5185
        %v5187 = vpop.f32.mrb[0].mxu0
        %5188 = vmatprep.mubr.f32.mxu0 0.0
        %5189 = vmatmul.mubr.f32.gmra.mrb[0].mxu0 %v4986
        %v5190 = vpop.f32.mrb[0].mxu0
        %v5191 = vadd.f32 0.0, %v5190
        %v5192 = vpop.f32.mrb[0].mxu0
        %5193 = vmatprep.mubr.f32.mxu0 0.0
        %5194 = vmatmul.mubr.f32.gmra.mrb[0].mxu0 %v4989
        %v5195 = vpop.f32.mrb[0].mxu0
        %v5196 = vadd.f32 0.0, %v5195
        %v5197 = vpop.f32.mrb[0].mxu0
        %5198 = vmatprep.mubr.f32.mxu0 0.0
        %5199 = vmatmul.mubr.f32.gmra.mrb[0].mxu0 %v4992
        %v5200 = vpop.f32.mrb[0].mxu0
        %v5201 = vadd.f32 0.0, %v5200
        %v5202 = vpop.f32.mrb[0].mxu0
        %5203 = vmatprep.mubr.f32.mxu0 0.0
        %5204 = vmatmul.mubr.f32.gmra.mrb[0].mxu0 %v4995
        %v5205 = vpop.f32.mrb[0].mxu0
        %v5206 = vadd.f32 0.0, %v5205
        %v5207 = vpop.f32.mrb[0].mxu0
        %5208 = vmatprep.mubr.f32.mxu0 0.0
        %5209 = vmatmul.mubr.f32.gmra.mrb[0].mxu0 %v4998
        %v5210 = vpop.f32.mrb[0].mxu0
        %v5211 = vadd.f32 0.0, %v5210
        %v5212 = vpop.f32.mrb[0].mxu0
        %5213 = vmatprep.mubr.f32.mxu0 0.0
        %5214 = vmatmul.mubr.f32.gmra.mrb[0].mxu0 %v5001
        %v5215 = vpop.f32.mrb[0].mxu0
        %v5216 = vadd.f32 0.0, %v5215
        %v5217 = vpop.f32.mrb[0].mxu0
        %5218 = vmatprep.mubr.f32.mxu0 0.0
        %5219 = vmatmul.mubr.f32.gmra.mrb[0].mxu0 %v5004
        %v5220 = vpop.f32.mrb[0].mxu0
        %v5221 = vadd.f32 0.0, %v5220
        %v5222 = vpop.f32.mrb[0].mxu0
        %5223 = vdwg.mxu0
        %v5224 = vadd.f32 %v4836, %v5073
        %v5225 = vadd.f32 %v4837, %v5075
        %v5226 = vadd.f32 %v4838, %v5186
        %v5227 = vadd.f32 %v4839, %v5079
        %v5228 = vadd.f32 %v4840, %v5081
        %v5229 = vadd.f32 %v4841, %v5191
        %v5230 = vadd.f32 %v4842, %v5085
        %v5231 = vadd.f32 %v4843, %v5087
        %v5232 = vadd.f32 %v4844, %v5196
        %v5233 = vadd.f32 %v4845, %v5091
        %v5234 = vadd.f32 %v4846, %v5093
        %v5235 = vadd.f32 %v4847, %v5201
        %v5236 = vadd.f32 %v4848, %v5097
        %v5237 = vadd.f32 %v4849, %v5099
        %v5238 = vadd.f32 %v4850, %v5206
        %v5239 = vadd.f32 %v4851, %v5103
        %v5240 = vadd.f32 %v4852, %v5105
        %v5241 = vadd.f32 %v4853, %v5211
        %v5242 = vadd.f32 %v4854, %v5109
        %v5243 = vadd.f32 %v4855, %v5111
        %v5244 = vadd.f32 %v4856, %v5216
        %v5245 = vadd.f32 %v4857, %v5115
        %v5246 = vadd.f32 %v4858, %v5117
        %v5247 = vadd.f32 %v4859, %v5221
        %s5248 = scalar_lea.vmem [#allocation8], 256
        %v5249 = vld [vmem:[%s5248] sm:$0xff]
        %v5250 = vld [vmem:[%s5248 + $0x8] sm:$0xff]
        %v5251 = vld [vmem:[%s5248 + $0x10] sm:$0xff]
        %v5252 = vld [vmem:[%s5248 + $0x18] sm:$0xff]
        %v5253 = vld [vmem:[%s5248 + $0x20] sm:$0xff]
        %v5254 = vld [vmem:[%s5248 + $0x28] sm:$0xff]
        %v5255 = vld [vmem:[%s5248 + $0x30] sm:$0xff]
        %v5256 = vld [vmem:[%s5248 + $0x38] sm:$0xff]
        %v5258 = vsel %vm453, %v5249, 0
        %v5261 = vsel %vm453, %v5250, 0
        %v5264 = vsel %vm453, %v5251, 0
        %v5267 = vsel %vm453, %v5252, 0
        %v5270 = vsel %vm453, %v5253, 0
        %v5273 = vsel %vm453, %v5254, 0
        %v5276 = vsel %vm453, %v5255, 0
        %v5279 = vsel %vm453, %v5256, 0
        %5281 = vmatprep.subr.mxu0 %v3691
        %5282 = vmatpush1.msra.mxu0 %v3690
        %5283 = vmatprep.subr.mxu0 %v3695
        %5284 = vmatpush1.msra.mxu0 %v3694
        %5285 = vmatprep.subr.mxu0 %v3699
        %5286 = vmatpush1.msra.mxu0 %v3698
        %5287 = vmatprep.subr.mxu0 %v3703
        %5288 = vmatpush1.msra.mxu0 %v3702
        %5289 = vmatprep.subr.mxu0 %v3707
        %5290 = vmatpush1.msra.mxu0 %v3706
        %5291 = vmatprep.subr.mxu0 %v3711
        %5292 = vmatpush1.msra.mxu0 %v3710
        %5293 = vmatprep.subr.mxu0 %v3715
        %5294 = vmatpush1.msra.mxu0 %v3714
        %5295 = vmatprep.subr.mxu0 %v3719
        %5296 = vmatpush1.msra.mxu0 %v3718
        %5297 = vmatprep.subr.mxu0 0.0
        %5298 = vmatpush1.msra.mxu0 0.0
        %5299 = vmatprep.subr.mxu0 0.0
        %5300 = vmatpush1.msra.mxu0 0.0
        %5301 = vmatprep.subr.mxu0 0.0
        %5302 = vmatpush1.msra.mxu0 0.0
        %5303 = vmatprep.subr.mxu0 0.0
        %5304 = vmatpush1.msra.mxu0 0.0
        %5305 = vmatprep.subr.mxu0 0.0
        %5306 = vmatpush1.msra.mxu0 0.0
        %5307 = vmatprep.subr.mxu0 0.0
        %5308 = vmatpush1.msra.mxu0 0.0
        %5309 = vmatprep.subr.mxu0 0.0
        %5310 = vmatpush1.msra.mxu0 0.0
        %5311 = vmatprep.subr.mxu0 0.0
        %5312 = vmatpush1.msra.mxu0 0.0
        %5313 = vmatprep.subr.mxu0 0.0
        %5314 = vmatpush1.msra.mxu0 0.0
        %5315 = vmatprep.subr.mxu0 0.0
        %5316 = vmatpush1.msra.mxu0 0.0
        %5317 = vmatprep.subr.mxu0 0.0
        %5318 = vmatpush1.msra.mxu0 0.0
        %5319 = vmatprep.subr.mxu0 0.0
        %5320 = vmatpush1.msra.mxu0 0.0
        %5321 = vmatprep.subr.mxu0 0.0
        %5322 = vmatpush1.msra.mxu0 0.0
        %5323 = vmatprep.subr.mxu0 0.0
        %5324 = vmatpush1.msra.mxu0 0.0
        %5325 = vmatprep.subr.mxu0 0.0
        %5326 = vmatpush1.msra.mxu0 0.0
        %5327 = vmatprep.subr.mxu0 0.0
        %5328 = vmatpush1.msra.mxu0 0.0
        %5329 = vmatprep.subr.mxu0 0.0
        %5330 = vmatpush1.msra.mxu0 0.0
        %5331 = vmatprep.subr.mxu0 0.0
        %5332 = vmatpush1.msra.mxu0 0.0
        %5333 = vmatprep.subr.mxu0 0.0
        %5334 = vmatpush1.msra.mxu0 0.0
        %5335 = vmatprep.subr.mxu0 0.0
        %5336 = vmatpush1.msra.mxu0 0.0
        %5337 = vmatprep.subr.mxu0 0.0
        %5338 = vmatpush1.msra.mxu0 0.0
        %5339 = vmatprep.subr.mxu0 0.0
        %5340 = vmatpush1.msra.mxu0 0.0
        %5341 = vmatprep.subr.mxu0 0.0
        %5342 = vmatpush1.msra.mxu0 0.0
        %5343 = vmatprep.subr.mxu0 0.0
        %5344 = vmatpush1.msra.mxu0 0.0
        %5345 = vmatprep.mubr.f32.mxu0 0.0
        %5346 = vmatmul.mubr.f32.gmra.mrb[0].mxu0 %v5258
        %v5347 = vpop.f32.mrb[0].mxu0
        %v5348 = vadd.f32 0.0, %v5347
        %v5349 = vpop.f32.mrb[0].mxu0
        %v5350 = vadd.f32 0.0, %v5349
        %5351 = vmatprep.mubr.f32.mxu0 0.0
        %5352 = vmatmul.mubr.f32.gmra.mrb[0].mxu0 %v5261
        %v5353 = vpop.f32.mrb[0].mxu0
        %v5354 = vadd.f32 0.0, %v5353
        %v5355 = vpop.f32.mrb[0].mxu0
        %v5356 = vadd.f32 0.0, %v5355
        %5357 = vmatprep.mubr.f32.mxu0 0.0
        %5358 = vmatmul.mubr.f32.gmra.mrb[0].mxu0 %v5264
        %v5359 = vpop.f32.mrb[0].mxu0
        %v5360 = vadd.f32 0.0, %v5359
        %v5361 = vpop.f32.mrb[0].mxu0
        %v5362 = vadd.f32 0.0, %v5361
        %5363 = vmatprep.mubr.f32.mxu0 0.0
        %5364 = vmatmul.mubr.f32.gmra.mrb[0].mxu0 %v5267
        %v5365 = vpop.f32.mrb[0].mxu0
        %v5366 = vadd.f32 0.0, %v5365
        %v5367 = vpop.f32.mrb[0].mxu0
        %v5368 = vadd.f32 0.0, %v5367
        %5369 = vmatprep.mubr.f32.mxu0 0.0
        %5370 = vmatmul.mubr.f32.gmra.mrb[0].mxu0 %v5270
        %v5371 = vpop.f32.mrb[0].mxu0
        %v5372 = vadd.f32 0.0, %v5371
        %v5373 = vpop.f32.mrb[0].mxu0
        %v5374 = vadd.f32 0.0, %v5373
        %5375 = vmatprep.mubr.f32.mxu0 0.0
        %5376 = vmatmul.mubr.f32.gmra.mrb[0].mxu0 %v5273
        %v5377 = vpop.f32.mrb[0].mxu0
        %v5378 = vadd.f32 0.0, %v5377
        %v5379 = vpop.f32.mrb[0].mxu0
        %v5380 = vadd.f32 0.0, %v5379
        %5381 = vmatprep.mubr.f32.mxu0 0.0
        %5382 = vmatmul.mubr.f32.gmra.mrb[0].mxu0 %v5276
        %v5383 = vpop.f32.mrb[0].mxu0
        %v5384 = vadd.f32 0.0, %v5383
        %v5385 = vpop.f32.mrb[0].mxu0
        %v5386 = vadd.f32 0.0, %v5385
        %5387 = vmatprep.mubr.f32.mxu0 0.0
        %5388 = vmatmul.mubr.f32.gmra.mrb[0].mxu0 %v5279
        %v5389 = vpop.f32.mrb[0].mxu0
        %v5390 = vadd.f32 0.0, %v5389
        %v5391 = vpop.f32.mrb[0].mxu0
        %v5392 = vadd.f32 0.0, %v5391
        %5393 = vdwg.mxu0
        %5394 = vmatprep.subr.mxu0 0.0
        %5395 = vmatpush1.msra.mxu0 %v3692
        %5396 = vmatprep.subr.mxu0 0.0
        %5397 = vmatpush1.msra.mxu0 %v3696
        %5398 = vmatprep.subr.mxu0 0.0
        %5399 = vmatpush1.msra.mxu0 %v3700
        %5400 = vmatprep.subr.mxu0 0.0
        %5401 = vmatpush1.msra.mxu0 %v3704
        %5402 = vmatprep.subr.mxu0 0.0
        %5403 = vmatpush1.msra.mxu0 %v3708
        %5404 = vmatprep.subr.mxu0 0.0
        %5405 = vmatpush1.msra.mxu0 %v3712
        %5406 = vmatprep.subr.mxu0 0.0
        %5407 = vmatpush1.msra.mxu0 %v3716
        %5408 = vmatprep.subr.mxu0 0.0
        %5409 = vmatpush1.msra.mxu0 %v3720
        %5410 = vmatprep.subr.mxu0 0.0
        %5411 = vmatpush1.msra.mxu0 0.0
        %5412 = vmatprep.subr.mxu0 0.0
        %5413 = vmatpush1.msra.mxu0 0.0
        %5414 = vmatprep.subr.mxu0 0.0
        %5415 = vmatpush1.msra.mxu0 0.0
        %5416 = vmatprep.subr.mxu0 0.0
        %5417 = vmatpush1.msra.mxu0 0.0
        %5418 = vmatprep.subr.mxu0 0.0
        %5419 = vmatpush1.msra.mxu0 0.0
        %5420 = vmatprep.subr.mxu0 0.0
        %5421 = vmatpush1.msra.mxu0 0.0
        %5422 = vmatprep.subr.mxu0 0.0
        %5423 = vmatpush1.msra.mxu0 0.0
        %5424 = vmatprep.subr.mxu0 0.0
        %5425 = vmatpush1.msra.mxu0 0.0
        %5426 = vmatprep.subr.mxu0 0.0
        %5427 = vmatpush1.msra.mxu0 0.0
        %5428 = vmatprep.subr.mxu0 0.0
        %5429 = vmatpush1.msra.mxu0 0.0
        %5430 = vmatprep.subr.mxu0 0.0
        %5431 = vmatpush1.msra.mxu0 0.0
        %5432 = vmatprep.subr.mxu0 0.0
        %5433 = vmatpush1.msra.mxu0 0.0
        %5434 = vmatprep.subr.mxu0 0.0
        %5435 = vmatpush1.msra.mxu0 0.0
        %5436 = vmatprep.subr.mxu0 0.0
        %5437 = vmatpush1.msra.mxu0 0.0
        %5438 = vmatprep.subr.mxu0 0.0
        %5439 = vmatpush1.msra.mxu0 0.0
        %5440 = vmatprep.subr.mxu0 0.0
        %5441 = vmatpush1.msra.mxu0 0.0
        %5442 = vmatprep.subr.mxu0 0.0
        %5443 = vmatpush1.msra.mxu0 0.0
        %5444 = vmatprep.subr.mxu0 0.0
        %5445 = vmatpush1.msra.mxu0 0.0
        %5446 = vmatprep.subr.mxu0 0.0
        %5447 = vmatpush1.msra.mxu0 0.0
        %5448 = vmatprep.subr.mxu0 0.0
        %5449 = vmatpush1.msra.mxu0 0.0
        %5450 = vmatprep.subr.mxu0 0.0
        %5451 = vmatpush1.msra.mxu0 0.0
        %5452 = vmatprep.subr.mxu0 0.0
        %5453 = vmatpush1.msra.mxu0 0.0
        %5454 = vmatprep.subr.mxu0 0.0
        %5455 = vmatpush1.msra.mxu0 0.0
        %5456 = vmatprep.subr.mxu0 0.0
        %5457 = vmatpush1.msra.mxu0 0.0
        %5458 = vmatprep.mubr.f32.mxu0 0.0
        %5459 = vmatmul.mubr.f32.gmra.mrb[0].mxu0 %v5258
        %v5460 = vpop.f32.mrb[0].mxu0
        %v5461 = vadd.f32 0.0, %v5460
        %v5462 = vpop.f32.mrb[0].mxu0
        %5463 = vmatprep.mubr.f32.mxu0 0.0
        %5464 = vmatmul.mubr.f32.gmra.mrb[0].mxu0 %v5261
        %v5465 = vpop.f32.mrb[0].mxu0
        %v5466 = vadd.f32 0.0, %v5465
        %v5467 = vpop.f32.mrb[0].mxu0
        %5468 = vmatprep.mubr.f32.mxu0 0.0
        %5469 = vmatmul.mubr.f32.gmra.mrb[0].mxu0 %v5264
        %v5470 = vpop.f32.mrb[0].mxu0
        %v5471 = vadd.f32 0.0, %v5470
        %v5472 = vpop.f32.mrb[0].mxu0
        %5473 = vmatprep.mubr.f32.mxu0 0.0
        %5474 = vmatmul.mubr.f32.gmra.mrb[0].mxu0 %v5267
        %v5475 = vpop.f32.mrb[0].mxu0
        %v5476 = vadd.f32 0.0, %v5475
        %v5477 = vpop.f32.mrb[0].mxu0
        %5478 = vmatprep.mubr.f32.mxu0 0.0
        %5479 = vmatmul.mubr.f32.gmra.mrb[0].mxu0 %v5270
        %v5480 = vpop.f32.mrb[0].mxu0
        %v5481 = vadd.f32 0.0, %v5480
        %v5482 = vpop.f32.mrb[0].mxu0
        %5483 = vmatprep.mubr.f32.mxu0 0.0
        %5484 = vmatmul.mubr.f32.gmra.mrb[0].mxu0 %v5273
        %v5485 = vpop.f32.mrb[0].mxu0
        %v5486 = vadd.f32 0.0, %v5485
        %v5487 = vpop.f32.mrb[0].mxu0
        %5488 = vmatprep.mubr.f32.mxu0 0.0
        %5489 = vmatmul.mubr.f32.gmra.mrb[0].mxu0 %v5276
        %v5490 = vpop.f32.mrb[0].mxu0
        %v5491 = vadd.f32 0.0, %v5490
        %v5492 = vpop.f32.mrb[0].mxu0
        %5493 = vmatprep.mubr.f32.mxu0 0.0
        %5494 = vmatmul.mubr.f32.gmra.mrb[0].mxu0 %v5279
        %v5495 = vpop.f32.mrb[0].mxu0
        %v5496 = vadd.f32 0.0, %v5495
        %v5497 = vpop.f32.mrb[0].mxu0
        %5498 = vdwg.mxu0
        %v5499 = vadd.f32 %v5224, %v5348
        %v5500 = vadd.f32 %v5225, %v5350
        %v5501 = vadd.f32 %v5226, %v5461
        %v5502 = vadd.f32 %v5227, %v5354
        %v5503 = vadd.f32 %v5228, %v5356
        %v5504 = vadd.f32 %v5229, %v5466
        %v5505 = vadd.f32 %v5230, %v5360
        %v5506 = vadd.f32 %v5231, %v5362
        %v5507 = vadd.f32 %v5232, %v5471
        %v5508 = vadd.f32 %v5233, %v5366
        %v5509 = vadd.f32 %v5234, %v5368
        %v5510 = vadd.f32 %v5235, %v5476
        %v5511 = vadd.f32 %v5236, %v5372
        %v5512 = vadd.f32 %v5237, %v5374
        %v5513 = vadd.f32 %v5238, %v5481
        %v5514 = vadd.f32 %v5239, %v5378
        %v5515 = vadd.f32 %v5240, %v5380
        %v5516 = vadd.f32 %v5241, %v5486
        %v5517 = vadd.f32 %v5242, %v5384
        %v5518 = vadd.f32 %v5243, %v5386
        %v5519 = vadd.f32 %v5244, %v5491
        %v5520 = vadd.f32 %v5245, %v5390
        %v5521 = vadd.f32 %v5246, %v5392
        %v5522 = vadd.f32 %v5247, %v5496
        %s5523 = scalar_lea.vmem [#allocation8], 320
        %v5524 = vld [vmem:[%s5523] sm:$0xff]
        %v5525 = vld [vmem:[%s5523 + $0x8] sm:$0xff]
        %v5526 = vld [vmem:[%s5523 + $0x10] sm:$0xff]
        %v5527 = vld [vmem:[%s5523 + $0x18] sm:$0xff]
        %v5528 = vld [vmem:[%s5523 + $0x20] sm:$0xff]
        %v5529 = vld [vmem:[%s5523 + $0x28] sm:$0xff]
        %v5530 = vld [vmem:[%s5523 + $0x30] sm:$0xff]
        %v5531 = vld [vmem:[%s5523 + $0x38] sm:$0xff]
        %5532 = vrot.lane.b32.xlu0 %v3690, 127
        %v5533 = vpop.permute.xlu0 %5532
        %5534 = vrot.lane.b32.xlu0 %v3691, 127
        %v5535 = vpop.permute.xlu0 %5534
        %5536 = vrot.lane.b32.xlu0 %v3692, 127
        %v5537 = vpop.permute.xlu0 %5536
        %5538 = vrot.lane.b32.xlu0 %v3694, 127
        %v5539 = vpop.permute.xlu0 %5538
        %5540 = vrot.lane.b32.xlu0 %v3695, 127
        %v5541 = vpop.permute.xlu0 %5540
        %5542 = vrot.lane.b32.xlu0 %v3696, 127
        %v5543 = vpop.permute.xlu0 %5542
        %5544 = vrot.lane.b32.xlu0 %v3698, 127
        %v5545 = vpop.permute.xlu0 %5544
        %5546 = vrot.lane.b32.xlu0 %v3699, 127
        %v5547 = vpop.permute.xlu0 %5546
        %5548 = vrot.lane.b32.xlu0 %v3700, 127
        %v5549 = vpop.permute.xlu0 %5548
        %5550 = vrot.lane.b32.xlu0 %v3702, 127
        %v5551 = vpop.permute.xlu0 %5550
        %5552 = vrot.lane.b32.xlu0 %v3703, 127
        %v5553 = vpop.permute.xlu0 %5552
        %5554 = vrot.lane.b32.xlu0 %v3704, 127
        %v5555 = vpop.permute.xlu0 %5554
        %5556 = vrot.lane.b32.xlu0 %v3706, 127
        %v5557 = vpop.permute.xlu0 %5556
        %5558 = vrot.lane.b32.xlu0 %v3707, 127
        %v5559 = vpop.permute.xlu0 %5558
        %5560 = vrot.lane.b32.xlu0 %v3708, 127
        %v5561 = vpop.permute.xlu0 %5560
        %5562 = vrot.lane.b32.xlu0 %v3710, 127
        %v5563 = vpop.permute.xlu0 %5562
        %5564 = vrot.lane.b32.xlu0 %v3711, 127
        %v5565 = vpop.permute.xlu0 %5564
        %5566 = vrot.lane.b32.xlu0 %v3712, 127
        %v5567 = vpop.permute.xlu0 %5566
        %5568 = vrot.lane.b32.xlu0 %v3714, 127
        %v5569 = vpop.permute.xlu0 %5568
        %5570 = vrot.lane.b32.xlu0 %v3715, 127
        %v5571 = vpop.permute.xlu0 %5570
        %5572 = vrot.lane.b32.xlu0 %v3716, 127
        %v5573 = vpop.permute.xlu0 %5572
        %5574 = vrot.lane.b32.xlu0 %v3718, 127
        %v5575 = vpop.permute.xlu0 %5574
        %5576 = vrot.lane.b32.xlu0 %v3719, 127
        %v5577 = vpop.permute.xlu0 %5576
        %5578 = vrot.lane.b32.xlu0 %v3720, 127
        %v5579 = vpop.permute.xlu0 %5578
        %v5580 = vsel %vm412, %v5533, %v5535
        %v5581 = vsel %vm412, %v5535, %v5537
        %v5582 = vsel %vm412, %v5539, %v5541
        %v5583 = vsel %vm412, %v5541, %v5543
        %v5584 = vsel %vm412, %v5545, %v5547
        %v5585 = vsel %vm412, %v5547, %v5549
        %v5586 = vsel %vm412, %v5551, %v5553
        %v5587 = vsel %vm412, %v5553, %v5555
        %v5588 = vsel %vm412, %v5557, %v5559
        %v5589 = vsel %vm412, %v5559, %v5561
        %v5590 = vsel %vm412, %v5563, %v5565
        %v5591 = vsel %vm412, %v5565, %v5567
        %v5592 = vsel %vm412, %v5569, %v5571
        %v5593 = vsel %vm412, %v5571, %v5573
        %v5594 = vsel %vm412, %v5575, %v5577
        %v5595 = vsel %vm412, %v5577, %v5579
        %v5621 = vsel %vm453, %v5524, 0
        %v5624 = vsel %vm453, %v5525, 0
        %v5627 = vsel %vm453, %v5526, 0
        %v5630 = vsel %vm453, %v5527, 0
        %v5633 = vsel %vm453, %v5528, 0
        %v5636 = vsel %vm453, %v5529, 0
        %v5639 = vsel %vm453, %v5530, 0
        %v5642 = vsel %vm453, %v5531, 0
        %5644 = vmatprep.subr.mxu0 %v5581
        %5645 = vmatpush1.msra.mxu0 %v5580
        %5646 = vmatprep.subr.mxu0 %v5583
        %5647 = vmatpush1.msra.mxu0 %v5582
        %5648 = vmatprep.subr.mxu0 %v5585
        %5649 = vmatpush1.msra.mxu0 %v5584
        %5650 = vmatprep.subr.mxu0 %v5587
        %5651 = vmatpush1.msra.mxu0 %v5586
        %5652 = vmatprep.subr.mxu0 %v5589
        %5653 = vmatpush1.msra.mxu0 %v5588
        %5654 = vmatprep.subr.mxu0 %v5591
        %5655 = vmatpush1.msra.mxu0 %v5590
        %5656 = vmatprep.subr.mxu0 %v5593
        %5657 = vmatpush1.msra.mxu0 %v5592
        %5658 = vmatprep.subr.mxu0 %v5595
        %5659 = vmatpush1.msra.mxu0 %v5594
        %5660 = vmatprep.subr.mxu0 0.0
        %5661 = vmatpush1.msra.mxu0 0.0
        %5662 = vmatprep.subr.mxu0 0.0
        %5663 = vmatpush1.msra.mxu0 0.0
        %5664 = vmatprep.subr.mxu0 0.0
        %5665 = vmatpush1.msra.mxu0 0.0
        %5666 = vmatprep.subr.mxu0 0.0
        %5667 = vmatpush1.msra.mxu0 0.0
        %5668 = vmatprep.subr.mxu0 0.0
        %5669 = vmatpush1.msra.mxu0 0.0
        %5670 = vmatprep.subr.mxu0 0.0
        %5671 = vmatpush1.msra.mxu0 0.0
        %5672 = vmatprep.subr.mxu0 0.0
        %5673 = vmatpush1.msra.mxu0 0.0
        %5674 = vmatprep.subr.mxu0 0.0
        %5675 = vmatpush1.msra.mxu0 0.0
        %5676 = vmatprep.subr.mxu0 0.0
        %5677 = vmatpush1.msra.mxu0 0.0
        %5678 = vmatprep.subr.mxu0 0.0
        %5679 = vmatpush1.msra.mxu0 0.0
        %5680 = vmatprep.subr.mxu0 0.0
        %5681 = vmatpush1.msra.mxu0 0.0
        %5682 = vmatprep.subr.mxu0 0.0
        %5683 = vmatpush1.msra.mxu0 0.0
        %5684 = vmatprep.subr.mxu0 0.0
        %5685 = vmatpush1.msra.mxu0 0.0
        %5686 = vmatprep.subr.mxu0 0.0
        %5687 = vmatpush1.msra.mxu0 0.0
        %5688 = vmatprep.subr.mxu0 0.0
        %5689 = vmatpush1.msra.mxu0 0.0
        %5690 = vmatprep.subr.mxu0 0.0
        %5691 = vmatpush1.msra.mxu0 0.0
        %5692 = vmatprep.subr.mxu0 0.0
        %5693 = vmatpush1.msra.mxu0 0.0
        %5694 = vmatprep.subr.mxu0 0.0
        %5695 = vmatpush1.msra.mxu0 0.0
        %5696 = vmatprep.subr.mxu0 0.0
        %5697 = vmatpush1.msra.mxu0 0.0
        %5698 = vmatprep.subr.mxu0 0.0
        %5699 = vmatpush1.msra.mxu0 0.0
        %5700 = vmatprep.subr.mxu0 0.0
        %5701 = vmatpush1.msra.mxu0 0.0
        %5702 = vmatprep.subr.mxu0 0.0
        %5703 = vmatpush1.msra.mxu0 0.0
        %5704 = vmatprep.subr.mxu0 0.0
        %5705 = vmatpush1.msra.mxu0 0.0
        %5706 = vmatprep.subr.mxu0 0.0
        %5707 = vmatpush1.msra.mxu0 0.0
        %5708 = vmatprep.mubr.f32.mxu0 0.0
        %5709 = vmatmul.mubr.f32.gmra.mrb[0].mxu0 %v5621
        %v5710 = vpop.f32.mrb[0].mxu0
        %v5711 = vadd.f32 0.0, %v5710
        %v5712 = vpop.f32.mrb[0].mxu0
        %v5713 = vadd.f32 0.0, %v5712
        %5714 = vmatprep.mubr.f32.mxu0 0.0
        %5715 = vmatmul.mubr.f32.gmra.mrb[0].mxu0 %v5624
        %v5716 = vpop.f32.mrb[0].mxu0
        %v5717 = vadd.f32 0.0, %v5716
        %v5718 = vpop.f32.mrb[0].mxu0
        %v5719 = vadd.f32 0.0, %v5718
        %5720 = vmatprep.mubr.f32.mxu0 0.0
        %5721 = vmatmul.mubr.f32.gmra.mrb[0].mxu0 %v5627
        %v5722 = vpop.f32.mrb[0].mxu0
        %v5723 = vadd.f32 0.0, %v5722
        %v5724 = vpop.f32.mrb[0].mxu0
        %v5725 = vadd.f32 0.0, %v5724
        %5726 = vmatprep.mubr.f32.mxu0 0.0
        %5727 = vmatmul.mubr.f32.gmra.mrb[0].mxu0 %v5630
        %v5728 = vpop.f32.mrb[0].mxu0
        %v5729 = vadd.f32 0.0, %v5728
        %v5730 = vpop.f32.mrb[0].mxu0
        %v5731 = vadd.f32 0.0, %v5730
        %5732 = vmatprep.mubr.f32.mxu0 0.0
        %5733 = vmatmul.mubr.f32.gmra.mrb[0].mxu0 %v5633
        %v5734 = vpop.f32.mrb[0].mxu0
        %v5735 = vadd.f32 0.0, %v5734
        %v5736 = vpop.f32.mrb[0].mxu0
        %v5737 = vadd.f32 0.0, %v5736
        %5738 = vmatprep.mubr.f32.mxu0 0.0
        %5739 = vmatmul.mubr.f32.gmra.mrb[0].mxu0 %v5636
        %v5740 = vpop.f32.mrb[0].mxu0
        %v5741 = vadd.f32 0.0, %v5740
        %v5742 = vpop.f32.mrb[0].mxu0
        %v5743 = vadd.f32 0.0, %v5742
        %5744 = vmatprep.mubr.f32.mxu0 0.0
        %5745 = vmatmul.mubr.f32.gmra.mrb[0].mxu0 %v5639
        %v5746 = vpop.f32.mrb[0].mxu0
        %v5747 = vadd.f32 0.0, %v5746
        %v5748 = vpop.f32.mrb[0].mxu0
        %v5749 = vadd.f32 0.0, %v5748
        %5750 = vmatprep.mubr.f32.mxu0 0.0
        %5751 = vmatmul.mubr.f32.gmra.mrb[0].mxu0 %v5642
        %v5752 = vpop.f32.mrb[0].mxu0
        %v5753 = vadd.f32 0.0, %v5752
        %v5754 = vpop.f32.mrb[0].mxu0
        %v5755 = vadd.f32 0.0, %v5754
        %5756 = vdwg.mxu0
        %5757 = vmatprep.subr.mxu0 0.0
        %5758 = vmatpush1.msra.mxu0 %v5537
        %5759 = vmatprep.subr.mxu0 0.0
        %5760 = vmatpush1.msra.mxu0 %v5543
        %5761 = vmatprep.subr.mxu0 0.0
        %5762 = vmatpush1.msra.mxu0 %v5549
        %5763 = vmatprep.subr.mxu0 0.0
        %5764 = vmatpush1.msra.mxu0 %v5555
        %5765 = vmatprep.subr.mxu0 0.0
        %5766 = vmatpush1.msra.mxu0 %v5561
        %5767 = vmatprep.subr.mxu0 0.0
        %5768 = vmatpush1.msra.mxu0 %v5567
        %5769 = vmatprep.subr.mxu0 0.0
        %5770 = vmatpush1.msra.mxu0 %v5573
        %5771 = vmatprep.subr.mxu0 0.0
        %5772 = vmatpush1.msra.mxu0 %v5579
        %5773 = vmatprep.subr.mxu0 0.0
        %5774 = vmatpush1.msra.mxu0 0.0
        %5775 = vmatprep.subr.mxu0 0.0
        %5776 = vmatpush1.msra.mxu0 0.0
        %5777 = vmatprep.subr.mxu0 0.0
        %5778 = vmatpush1.msra.mxu0 0.0
        %5779 = vmatprep.subr.mxu0 0.0
        %5780 = vmatpush1.msra.mxu0 0.0
        %5781 = vmatprep.subr.mxu0 0.0
        %5782 = vmatpush1.msra.mxu0 0.0
        %5783 = vmatprep.subr.mxu0 0.0
        %5784 = vmatpush1.msra.mxu0 0.0
        %5785 = vmatprep.subr.mxu0 0.0
        %5786 = vmatpush1.msra.mxu0 0.0
        %5787 = vmatprep.subr.mxu0 0.0
        %5788 = vmatpush1.msra.mxu0 0.0
        %5789 = vmatprep.subr.mxu0 0.0
        %5790 = vmatpush1.msra.mxu0 0.0
        %5791 = vmatprep.subr.mxu0 0.0
        %5792 = vmatpush1.msra.mxu0 0.0
        %5793 = vmatprep.subr.mxu0 0.0
        %5794 = vmatpush1.msra.mxu0 0.0
        %5795 = vmatprep.subr.mxu0 0.0
        %5796 = vmatpush1.msra.mxu0 0.0
        %5797 = vmatprep.subr.mxu0 0.0
        %5798 = vmatpush1.msra.mxu0 0.0
        %5799 = vmatprep.subr.mxu0 0.0
        %5800 = vmatpush1.msra.mxu0 0.0
        %5801 = vmatprep.subr.mxu0 0.0
        %5802 = vmatpush1.msra.mxu0 0.0
        %5803 = vmatprep.subr.mxu0 0.0
        %5804 = vmatpush1.msra.mxu0 0.0
        %5805 = vmatprep.subr.mxu0 0.0
        %5806 = vmatpush1.msra.mxu0 0.0
        %5807 = vmatprep.subr.mxu0 0.0
        %5808 = vmatpush1.msra.mxu0 0.0
        %5809 = vmatprep.subr.mxu0 0.0
        %5810 = vmatpush1.msra.mxu0 0.0
        %5811 = vmatprep.subr.mxu0 0.0
        %5812 = vmatpush1.msra.mxu0 0.0
        %5813 = vmatprep.subr.mxu0 0.0
        %5814 = vmatpush1.msra.mxu0 0.0
        %5815 = vmatprep.subr.mxu0 0.0
        %5816 = vmatpush1.msra.mxu0 0.0
        %5817 = vmatprep.subr.mxu0 0.0
        %5818 = vmatpush1.msra.mxu0 0.0
        %5819 = vmatprep.subr.mxu0 0.0
        %5820 = vmatpush1.msra.mxu0 0.0
        %5821 = vmatprep.mubr.f32.mxu0 0.0
        %5822 = vmatmul.mubr.f32.gmra.mrb[0].mxu0 %v5621
        %v5823 = vpop.f32.mrb[0].mxu0
        %v5824 = vadd.f32 0.0, %v5823
        %v5825 = vpop.f32.mrb[0].mxu0
        %5826 = vmatprep.mubr.f32.mxu0 0.0
        %5827 = vmatmul.mubr.f32.gmra.mrb[0].mxu0 %v5624
        %v5828 = vpop.f32.mrb[0].mxu0
        %v5829 = vadd.f32 0.0, %v5828
        %v5830 = vpop.f32.mrb[0].mxu0
        %5831 = vmatprep.mubr.f32.mxu0 0.0
        %5832 = vmatmul.mubr.f32.gmra.mrb[0].mxu0 %v5627
        %v5833 = vpop.f32.mrb[0].mxu0
        %v5834 = vadd.f32 0.0, %v5833
        %v5835 = vpop.f32.mrb[0].mxu0
        %5836 = vmatprep.mubr.f32.mxu0 0.0
        %5837 = vmatmul.mubr.f32.gmra.mrb[0].mxu0 %v5630
        %v5838 = vpop.f32.mrb[0].mxu0
        %v5839 = vadd.f32 0.0, %v5838
        %v5840 = vpop.f32.mrb[0].mxu0
        %5841 = vmatprep.mubr.f32.mxu0 0.0
        %5842 = vmatmul.mubr.f32.gmra.mrb[0].mxu0 %v5633
        %v5843 = vpop.f32.mrb[0].mxu0
        %v5844 = vadd.f32 0.0, %v5843
        %v5845 = vpop.f32.mrb[0].mxu0
        %5846 = vmatprep.mubr.f32.mxu0 0.0
        %5847 = vmatmul.mubr.f32.gmra.mrb[0].mxu0 %v5636
        %v5848 = vpop.f32.mrb[0].mxu0
        %v5849 = vadd.f32 0.0, %v5848
        %v5850 = vpop.f32.mrb[0].mxu0
        %5851 = vmatprep.mubr.f32.mxu0 0.0
        %5852 = vmatmul.mubr.f32.gmra.mrb[0].mxu0 %v5639
        %v5853 = vpop.f32.mrb[0].mxu0
        %v5854 = vadd.f32 0.0, %v5853
        %v5855 = vpop.f32.mrb[0].mxu0
        %5856 = vmatprep.mubr.f32.mxu0 0.0
        %5857 = vmatmul.mubr.f32.gmra.mrb[0].mxu0 %v5642
        %v5858 = vpop.f32.mrb[0].mxu0
        %v5859 = vadd.f32 0.0, %v5858
        %v5860 = vpop.f32.mrb[0].mxu0
        %5861 = vdwg.mxu0
        %v5862 = vadd.f32 %v5499, %v5711
        %v5863 = vadd.f32 %v5500, %v5713
        %v5864 = vadd.f32 %v5501, %v5824
        %v5865 = vadd.f32 %v5502, %v5717
        %v5866 = vadd.f32 %v5503, %v5719
        %v5867 = vadd.f32 %v5504, %v5829
        %v5868 = vadd.f32 %v5505, %v5723
        %v5869 = vadd.f32 %v5506, %v5725
        %v5870 = vadd.f32 %v5507, %v5834
        %v5871 = vadd.f32 %v5508, %v5729
        %v5872 = vadd.f32 %v5509, %v5731
        %v5873 = vadd.f32 %v5510, %v5839
        %v5874 = vadd.f32 %v5511, %v5735
        %v5875 = vadd.f32 %v5512, %v5737
        %v5876 = vadd.f32 %v5513, %v5844
        %v5877 = vadd.f32 %v5514, %v5741
        %v5878 = vadd.f32 %v5515, %v5743
        %v5879 = vadd.f32 %v5516, %v5849
        %v5880 = vadd.f32 %v5517, %v5747
        %v5881 = vadd.f32 %v5518, %v5749
        %v5882 = vadd.f32 %v5519, %v5854
        %v5883 = vadd.f32 %v5520, %v5753
        %v5884 = vadd.f32 %v5521, %v5755
        %v5885 = vadd.f32 %v5522, %v5859
        %s5886 = scalar_lea.vmem [#allocation8], 384
        %v5887 = vld [vmem:[%s5886] sm:$0xff]
        %v5888 = vld [vmem:[%s5886 + $0x8] sm:$0xff]
        %v5889 = vld [vmem:[%s5886 + $0x10] sm:$0xff]
        %v5890 = vld [vmem:[%s5886 + $0x18] sm:$0xff]
        %v5891 = vld [vmem:[%s5886 + $0x20] sm:$0xff]
        %v5892 = vld [vmem:[%s5886 + $0x28] sm:$0xff]
        %v5893 = vld [vmem:[%s5886 + $0x30] sm:$0xff]
        %v5894 = vld [vmem:[%s5886 + $0x38] sm:$0xff]
        %5895 = vrot.lane.b32.xlu0 %v3690, 111
        %v5896 = vpop.permute.xlu0 %5895
        %5897 = vrot.lane.b32.xlu0 %v3691, 111
        %v5898 = vpop.permute.xlu0 %5897
        %5899 = vrot.lane.b32.xlu0 %v3692, 111
        %v5900 = vpop.permute.xlu0 %5899
        %5901 = vrot.lane.b32.xlu0 %v3694, 111
        %v5902 = vpop.permute.xlu0 %5901
        %5903 = vrot.lane.b32.xlu0 %v3695, 111
        %v5904 = vpop.permute.xlu0 %5903
        %5905 = vrot.lane.b32.xlu0 %v3696, 111
        %v5906 = vpop.permute.xlu0 %5905
        %5907 = vrot.lane.b32.xlu0 %v3698, 111
        %v5908 = vpop.permute.xlu0 %5907
        %5909 = vrot.lane.b32.xlu0 %v3699, 111
        %v5910 = vpop.permute.xlu0 %5909
        %5911 = vrot.lane.b32.xlu0 %v3700, 111
        %v5912 = vpop.permute.xlu0 %5911
        %5913 = vrot.lane.b32.xlu0 %v3702, 111
        %v5914 = vpop.permute.xlu0 %5913
        %5915 = vrot.lane.b32.xlu0 %v3703, 111
        %v5916 = vpop.permute.xlu0 %5915
        %5917 = vrot.lane.b32.xlu0 %v3704, 111
        %v5918 = vpop.permute.xlu0 %5917
        %5919 = vrot.lane.b32.xlu0 %v3706, 111
        %v5920 = vpop.permute.xlu0 %5919
        %5921 = vrot.lane.b32.xlu0 %v3707, 111
        %v5922 = vpop.permute.xlu0 %5921
        %5923 = vrot.lane.b32.xlu0 %v3708, 111
        %v5924 = vpop.permute.xlu0 %5923
        %5925 = vrot.lane.b32.xlu0 %v3710, 111
        %v5926 = vpop.permute.xlu0 %5925
        %5927 = vrot.lane.b32.xlu0 %v3711, 111
        %v5928 = vpop.permute.xlu0 %5927
        %5929 = vrot.lane.b32.xlu0 %v3712, 111
        %v5930 = vpop.permute.xlu0 %5929
        %5931 = vrot.lane.b32.xlu0 %v3714, 111
        %v5932 = vpop.permute.xlu0 %5931
        %5933 = vrot.lane.b32.xlu0 %v3715, 111
        %v5934 = vpop.permute.xlu0 %5933
        %5935 = vrot.lane.b32.xlu0 %v3716, 111
        %v5936 = vpop.permute.xlu0 %5935
        %5937 = vrot.lane.b32.xlu0 %v3718, 111
        %v5938 = vpop.permute.xlu0 %5937
        %5939 = vrot.lane.b32.xlu0 %v3719, 111
        %v5940 = vpop.permute.xlu0 %5939
        %5941 = vrot.lane.b32.xlu0 %v3720, 111
        %v5942 = vpop.permute.xlu0 %5941
        %vm5943 = vcmask 908288
        %v5944 = vsel %vm5943, %v5896, %v5898
        %v5945 = vsel %vm5943, %v5898, %v5900
        %v5946 = vsel %vm5943, %v5902, %v5904
        %v5947 = vsel %vm5943, %v5904, %v5906
        %v5948 = vsel %vm5943, %v5908, %v5910
        %v5949 = vsel %vm5943, %v5910, %v5912
        %v5950 = vsel %vm5943, %v5914, %v5916
        %v5951 = vsel %vm5943, %v5916, %v5918
        %v5952 = vsel %vm5943, %v5920, %v5922
        %v5953 = vsel %vm5943, %v5922, %v5924
        %v5954 = vsel %vm5943, %v5926, %v5928
        %v5955 = vsel %vm5943, %v5928, %v5930
        %v5956 = vsel %vm5943, %v5932, %v5934
        %v5957 = vsel %vm5943, %v5934, %v5936
        %v5958 = vsel %vm5943, %v5938, %v5940
        %v5959 = vsel %vm5943, %v5940, %v5942
        %v5985 = vsel %vm453, %v5887, 0
        %v5988 = vsel %vm453, %v5888, 0
        %v5991 = vsel %vm453, %v5889, 0
        %v5994 = vsel %vm453, %v5890, 0
        %v5997 = vsel %vm453, %v5891, 0
        %v6000 = vsel %vm453, %v5892, 0
        %v6003 = vsel %vm453, %v5893, 0
        %v6006 = vsel %vm453, %v5894, 0
        %6008 = vmatprep.subr.mxu0 %v5945
        %6009 = vmatpush1.msra.mxu0 %v5944
        %6010 = vmatprep.subr.mxu0 %v5947
        %6011 = vmatpush1.msra.mxu0 %v5946
        %6012 = vmatprep.subr.mxu0 %v5949
        %6013 = vmatpush1.msra.mxu0 %v5948
        %6014 = vmatprep.subr.mxu0 %v5951
        %6015 = vmatpush1.msra.mxu0 %v5950
        %6016 = vmatprep.subr.mxu0 %v5953
        %6017 = vmatpush1.msra.mxu0 %v5952
        %6018 = vmatprep.subr.mxu0 %v5955
        %6019 = vmatpush1.msra.mxu0 %v5954
        %6020 = vmatprep.subr.mxu0 %v5957
        %6021 = vmatpush1.msra.mxu0 %v5956
        %6022 = vmatprep.subr.mxu0 %v5959
        %6023 = vmatpush1.msra.mxu0 %v5958
        %6024 = vmatprep.subr.mxu0 0.0
        %6025 = vmatpush1.msra.mxu0 0.0
        %6026 = vmatprep.subr.mxu0 0.0
        %6027 = vmatpush1.msra.mxu0 0.0
        %6028 = vmatprep.subr.mxu0 0.0
        %6029 = vmatpush1.msra.mxu0 0.0
        %6030 = vmatprep.subr.mxu0 0.0
        %6031 = vmatpush1.msra.mxu0 0.0
        %6032 = vmatprep.subr.mxu0 0.0
        %6033 = vmatpush1.msra.mxu0 0.0
        %6034 = vmatprep.subr.mxu0 0.0
        %6035 = vmatpush1.msra.mxu0 0.0
        %6036 = vmatprep.subr.mxu0 0.0
        %6037 = vmatpush1.msra.mxu0 0.0
        %6038 = vmatprep.subr.mxu0 0.0
        %6039 = vmatpush1.msra.mxu0 0.0
        %6040 = vmatprep.subr.mxu0 0.0
        %6041 = vmatpush1.msra.mxu0 0.0
        %6042 = vmatprep.subr.mxu0 0.0
        %6043 = vmatpush1.msra.mxu0 0.0
        %6044 = vmatprep.subr.mxu0 0.0
        %6045 = vmatpush1.msra.mxu0 0.0
        %6046 = vmatprep.subr.mxu0 0.0
        %6047 = vmatpush1.msra.mxu0 0.0
        %6048 = vmatprep.subr.mxu0 0.0
        %6049 = vmatpush1.msra.mxu0 0.0
        %6050 = vmatprep.subr.mxu0 0.0
        %6051 = vmatpush1.msra.mxu0 0.0
        %6052 = vmatprep.subr.mxu0 0.0
        %6053 = vmatpush1.msra.mxu0 0.0
        %6054 = vmatprep.subr.mxu0 0.0
        %6055 = vmatpush1.msra.mxu0 0.0
        %6056 = vmatprep.subr.mxu0 0.0
        %6057 = vmatpush1.msra.mxu0 0.0
        %6058 = vmatprep.subr.mxu0 0.0
        %6059 = vmatpush1.msra.mxu0 0.0
        %6060 = vmatprep.subr.mxu0 0.0
        %6061 = vmatpush1.msra.mxu0 0.0
        %6062 = vmatprep.subr.mxu0 0.0
        %6063 = vmatpush1.msra.mxu0 0.0
        %6064 = vmatprep.subr.mxu0 0.0
        %6065 = vmatpush1.msra.mxu0 0.0
        %6066 = vmatprep.subr.mxu0 0.0
        %6067 = vmatpush1.msra.mxu0 0.0
        %6068 = vmatprep.subr.mxu0 0.0
        %6069 = vmatpush1.msra.mxu0 0.0
        %6070 = vmatprep.subr.mxu0 0.0
        %6071 = vmatpush1.msra.mxu0 0.0
        %6072 = vmatprep.mubr.f32.mxu0 0.0
        %6073 = vmatmul.mubr.f32.gmra.mrb[0].mxu0 %v5985
        %v6074 = vpop.f32.mrb[0].mxu0
        %v6075 = vadd.f32 0.0, %v6074
        %v6076 = vpop.f32.mrb[0].mxu0
        %v6077 = vadd.f32 0.0, %v6076
        %6078 = vmatprep.mubr.f32.mxu0 0.0
        %6079 = vmatmul.mubr.f32.gmra.mrb[0].mxu0 %v5988
        %v6080 = vpop.f32.mrb[0].mxu0
        %v6081 = vadd.f32 0.0, %v6080
        %v6082 = vpop.f32.mrb[0].mxu0
        %v6083 = vadd.f32 0.0, %v6082
        %6084 = vmatprep.mubr.f32.mxu0 0.0
        %6085 = vmatmul.mubr.f32.gmra.mrb[0].mxu0 %v5991
        %v6086 = vpop.f32.mrb[0].mxu0
        %v6087 = vadd.f32 0.0, %v6086
        %v6088 = vpop.f32.mrb[0].mxu0
        %v6089 = vadd.f32 0.0, %v6088
        %6090 = vmatprep.mubr.f32.mxu0 0.0
        %6091 = vmatmul.mubr.f32.gmra.mrb[0].mxu0 %v5994
        %v6092 = vpop.f32.mrb[0].mxu0
        %v6093 = vadd.f32 0.0, %v6092
        %v6094 = vpop.f32.mrb[0].mxu0
        %v6095 = vadd.f32 0.0, %v6094
        %6096 = vmatprep.mubr.f32.mxu0 0.0
        %6097 = vmatmul.mubr.f32.gmra.mrb[0].mxu0 %v5997
        %v6098 = vpop.f32.mrb[0].mxu0
        %v6099 = vadd.f32 0.0, %v6098
        %v6100 = vpop.f32.mrb[0].mxu0
        %v6101 = vadd.f32 0.0, %v6100
        %6102 = vmatprep.mubr.f32.mxu0 0.0
        %6103 = vmatmul.mubr.f32.gmra.mrb[0].mxu0 %v6000
        %v6104 = vpop.f32.mrb[0].mxu0
        %v6105 = vadd.f32 0.0, %v6104
        %v6106 = vpop.f32.mrb[0].mxu0
        %v6107 = vadd.f32 0.0, %v6106
        %6108 = vmatprep.mubr.f32.mxu0 0.0
        %6109 = vmatmul.mubr.f32.gmra.mrb[0].mxu0 %v6003
        %v6110 = vpop.f32.mrb[0].mxu0
        %v6111 = vadd.f32 0.0, %v6110
        %v6112 = vpop.f32.mrb[0].mxu0
        %v6113 = vadd.f32 0.0, %v6112
        %6114 = vmatprep.mubr.f32.mxu0 0.0
        %6115 = vmatmul.mubr.f32.gmra.mrb[0].mxu0 %v6006
        %v6116 = vpop.f32.mrb[0].mxu0
        %v6117 = vadd.f32 0.0, %v6116
        %v6118 = vpop.f32.mrb[0].mxu0
        %v6119 = vadd.f32 0.0, %v6118
        %6120 = vdwg.mxu0
        %6121 = vmatprep.subr.mxu0 0.0
        %6122 = vmatpush1.msra.mxu0 %v5900
        %6123 = vmatprep.subr.mxu0 0.0
        %6124 = vmatpush1.msra.mxu0 %v5906
        %6125 = vmatprep.subr.mxu0 0.0
        %6126 = vmatpush1.msra.mxu0 %v5912
        %6127 = vmatprep.subr.mxu0 0.0
        %6128 = vmatpush1.msra.mxu0 %v5918
        %6129 = vmatprep.subr.mxu0 0.0
        %6130 = vmatpush1.msra.mxu0 %v5924
        %6131 = vmatprep.subr.mxu0 0.0
        %6132 = vmatpush1.msra.mxu0 %v5930
        %6133 = vmatprep.subr.mxu0 0.0
        %6134 = vmatpush1.msra.mxu0 %v5936
        %6135 = vmatprep.subr.mxu0 0.0
        %6136 = vmatpush1.msra.mxu0 %v5942
        %6137 = vmatprep.subr.mxu0 0.0
        %6138 = vmatpush1.msra.mxu0 0.0
        %6139 = vmatprep.subr.mxu0 0.0
        %6140 = vmatpush1.msra.mxu0 0.0
        %6141 = vmatprep.subr.mxu0 0.0
        %6142 = vmatpush1.msra.mxu0 0.0
        %6143 = vmatprep.subr.mxu0 0.0
        %6144 = vmatpush1.msra.mxu0 0.0
        %6145 = vmatprep.subr.mxu0 0.0
        %6146 = vmatpush1.msra.mxu0 0.0
        %6147 = vmatprep.subr.mxu0 0.0
        %6148 = vmatpush1.msra.mxu0 0.0
        %6149 = vmatprep.subr.mxu0 0.0
        %6150 = vmatpush1.msra.mxu0 0.0
        %6151 = vmatprep.subr.mxu0 0.0
        %6152 = vmatpush1.msra.mxu0 0.0
        %6153 = vmatprep.subr.mxu0 0.0
        %6154 = vmatpush1.msra.mxu0 0.0
        %6155 = vmatprep.subr.mxu0 0.0
        %6156 = vmatpush1.msra.mxu0 0.0
        %6157 = vmatprep.subr.mxu0 0.0
        %6158 = vmatpush1.msra.mxu0 0.0
        %6159 = vmatprep.subr.mxu0 0.0
        %6160 = vmatpush1.msra.mxu0 0.0
        %6161 = vmatprep.subr.mxu0 0.0
        %6162 = vmatpush1.msra.mxu0 0.0
        %6163 = vmatprep.subr.mxu0 0.0
        %6164 = vmatpush1.msra.mxu0 0.0
        %6165 = vmatprep.subr.mxu0 0.0
        %6166 = vmatpush1.msra.mxu0 0.0
        %6167 = vmatprep.subr.mxu0 0.0
        %6168 = vmatpush1.msra.mxu0 0.0
        %6169 = vmatprep.subr.mxu0 0.0
        %6170 = vmatpush1.msra.mxu0 0.0
        %6171 = vmatprep.subr.mxu0 0.0
        %6172 = vmatpush1.msra.mxu0 0.0
        %6173 = vmatprep.subr.mxu0 0.0
        %6174 = vmatpush1.msra.mxu0 0.0
        %6175 = vmatprep.subr.mxu0 0.0
        %6176 = vmatpush1.msra.mxu0 0.0
        %6177 = vmatprep.subr.mxu0 0.0
        %6178 = vmatpush1.msra.mxu0 0.0
        %6179 = vmatprep.subr.mxu0 0.0
        %6180 = vmatpush1.msra.mxu0 0.0
        %6181 = vmatprep.subr.mxu0 0.0
        %6182 = vmatpush1.msra.mxu0 0.0
        %6183 = vmatprep.subr.mxu0 0.0
        %6184 = vmatpush1.msra.mxu0 0.0
        %6185 = vmatprep.mubr.f32.mxu0 0.0
        %6186 = vmatmul.mubr.f32.gmra.mrb[0].mxu0 %v5985
        %v6187 = vpop.f32.mrb[0].mxu0
        %v6188 = vadd.f32 0.0, %v6187
        %v6189 = vpop.f32.mrb[0].mxu0
        %6190 = vmatprep.mubr.f32.mxu0 0.0
        %6191 = vmatmul.mubr.f32.gmra.mrb[0].mxu0 %v5988
        %v6192 = vpop.f32.mrb[0].mxu0
        %v6193 = vadd.f32 0.0, %v6192
        %v6194 = vpop.f32.mrb[0].mxu0
        %6195 = vmatprep.mubr.f32.mxu0 0.0
        %6196 = vmatmul.mubr.f32.gmra.mrb[0].mxu0 %v5991
        %v6197 = vpop.f32.mrb[0].mxu0
        %v6198 = vadd.f32 0.0, %v6197
        %v6199 = vpop.f32.mrb[0].mxu0
        %6200 = vmatprep.mubr.f32.mxu0 0.0
        %6201 = vmatmul.mubr.f32.gmra.mrb[0].mxu0 %v5994
        %v6202 = vpop.f32.mrb[0].mxu0
        %v6203 = vadd.f32 0.0, %v6202
        %v6204 = vpop.f32.mrb[0].mxu0
        %6205 = vmatprep.mubr.f32.mxu0 0.0
        %6206 = vmatmul.mubr.f32.gmra.mrb[0].mxu0 %v5997
        %v6207 = vpop.f32.mrb[0].mxu0
        %v6208 = vadd.f32 0.0, %v6207
        %v6209 = vpop.f32.mrb[0].mxu0
        %6210 = vmatprep.mubr.f32.mxu0 0.0
        %6211 = vmatmul.mubr.f32.gmra.mrb[0].mxu0 %v6000
        %v6212 = vpop.f32.mrb[0].mxu0
        %v6213 = vadd.f32 0.0, %v6212
        %v6214 = vpop.f32.mrb[0].mxu0
        %6215 = vmatprep.mubr.f32.mxu0 0.0
        %6216 = vmatmul.mubr.f32.gmra.mrb[0].mxu0 %v6003
        %v6217 = vpop.f32.mrb[0].mxu0
        %v6218 = vadd.f32 0.0, %v6217
        %v6219 = vpop.f32.mrb[0].mxu0
        %6220 = vmatprep.mubr.f32.mxu0 0.0
        %6221 = vmatmul.mubr.f32.gmra.mrb[0].mxu0 %v6006
        %v6222 = vpop.f32.mrb[0].mxu0
        %v6223 = vadd.f32 0.0, %v6222
        %v6224 = vpop.f32.mrb[0].mxu0
        %6225 = vdwg.mxu0
        %v6226 = vadd.f32 %v5862, %v6075
        %v6227 = vadd.f32 %v5863, %v6077
        %v6228 = vadd.f32 %v5864, %v6188
        %v6229 = vadd.f32 %v5865, %v6081
        %v6230 = vadd.f32 %v5866, %v6083
        %v6231 = vadd.f32 %v5867, %v6193
        %v6232 = vadd.f32 %v5868, %v6087
        %v6233 = vadd.f32 %v5869, %v6089
        %v6234 = vadd.f32 %v5870, %v6198
        %v6235 = vadd.f32 %v5871, %v6093
        %v6236 = vadd.f32 %v5872, %v6095
        %v6237 = vadd.f32 %v5873, %v6203
        %v6238 = vadd.f32 %v5874, %v6099
        %v6239 = vadd.f32 %v5875, %v6101
        %v6240 = vadd.f32 %v5876, %v6208
        %v6241 = vadd.f32 %v5877, %v6105
        %v6242 = vadd.f32 %v5878, %v6107
        %v6243 = vadd.f32 %v5879, %v6213
        %v6244 = vadd.f32 %v5880, %v6111
        %v6245 = vadd.f32 %v5881, %v6113
        %v6246 = vadd.f32 %v5882, %v6218
        %v6247 = vadd.f32 %v5883, %v6117
        %v6248 = vadd.f32 %v5884, %v6119
        %v6249 = vadd.f32 %v5885, %v6223
        %s6250 = scalar_lea.vmem [#allocation8], 448
        %v6251 = vld [vmem:[%s6250] sm:$0xff]
        %v6252 = vld [vmem:[%s6250 + $0x8] sm:$0xff]
        %v6253 = vld [vmem:[%s6250 + $0x10] sm:$0xff]
        %v6254 = vld [vmem:[%s6250 + $0x18] sm:$0xff]
        %v6255 = vld [vmem:[%s6250 + $0x20] sm:$0xff]
        %v6256 = vld [vmem:[%s6250 + $0x28] sm:$0xff]
        %v6257 = vld [vmem:[%s6250 + $0x30] sm:$0xff]
        %v6258 = vld [vmem:[%s6250 + $0x38] sm:$0xff]
        %6259 = vrot.lane.b32.xlu0 %v3690, 110
        %v6260 = vpop.permute.xlu0 %6259
        %6261 = vrot.lane.b32.xlu0 %v3691, 110
        %v6262 = vpop.permute.xlu0 %6261
        %6263 = vrot.lane.b32.xlu0 %v3692, 110
        %v6264 = vpop.permute.xlu0 %6263
        %6265 = vrot.lane.b32.xlu0 %v3694, 110
        %v6266 = vpop.permute.xlu0 %6265
        %6267 = vrot.lane.b32.xlu0 %v3695, 110
        %v6268 = vpop.permute.xlu0 %6267
        %6269 = vrot.lane.b32.xlu0 %v3696, 110
        %v6270 = vpop.permute.xlu0 %6269
        %6271 = vrot.lane.b32.xlu0 %v3698, 110
        %v6272 = vpop.permute.xlu0 %6271
        %6273 = vrot.lane.b32.xlu0 %v3699, 110
        %v6274 = vpop.permute.xlu0 %6273
        %6275 = vrot.lane.b32.xlu0 %v3700, 110
        %v6276 = vpop.permute.xlu0 %6275
        %6277 = vrot.lane.b32.xlu0 %v3702, 110
        %v6278 = vpop.permute.xlu0 %6277
        %6279 = vrot.lane.b32.xlu0 %v3703, 110
        %v6280 = vpop.permute.xlu0 %6279
        %6281 = vrot.lane.b32.xlu0 %v3704, 110
        %v6282 = vpop.permute.xlu0 %6281
        %6283 = vrot.lane.b32.xlu0 %v3706, 110
        %v6284 = vpop.permute.xlu0 %6283
        %6285 = vrot.lane.b32.xlu0 %v3707, 110
        %v6286 = vpop.permute.xlu0 %6285
        %6287 = vrot.lane.b32.xlu0 %v3708, 110
        %v6288 = vpop.permute.xlu0 %6287
        %6289 = vrot.lane.b32.xlu0 %v3710, 110
        %v6290 = vpop.permute.xlu0 %6289
        %6291 = vrot.lane.b32.xlu0 %v3711, 110
        %v6292 = vpop.permute.xlu0 %6291
        %6293 = vrot.lane.b32.xlu0 %v3712, 110
        %v6294 = vpop.permute.xlu0 %6293
        %6295 = vrot.lane.b32.xlu0 %v3714, 110
        %v6296 = vpop.permute.xlu0 %6295
        %6297 = vrot.lane.b32.xlu0 %v3715, 110
        %v6298 = vpop.permute.xlu0 %6297
        %6299 = vrot.lane.b32.xlu0 %v3716, 110
        %v6300 = vpop.permute.xlu0 %6299
        %6301 = vrot.lane.b32.xlu0 %v3718, 110
        %v6302 = vpop.permute.xlu0 %6301
        %6303 = vrot.lane.b32.xlu0 %v3719, 110
        %v6304 = vpop.permute.xlu0 %6303
        %6305 = vrot.lane.b32.xlu0 %v3720, 110
        %v6306 = vpop.permute.xlu0 %6305
        %v6307 = vsel %vm1359, %v6260, %v6262
        %v6308 = vsel %vm1359, %v6262, %v6264
        %v6309 = vsel %vm1359, %v6266, %v6268
        %v6310 = vsel %vm1359, %v6268, %v6270
        %v6311 = vsel %vm1359, %v6272, %v6274
        %v6312 = vsel %vm1359, %v6274, %v6276
        %v6313 = vsel %vm1359, %v6278, %v6280
        %v6314 = vsel %vm1359, %v6280, %v6282
        %v6315 = vsel %vm1359, %v6284, %v6286
        %v6316 = vsel %vm1359, %v6286, %v6288
        %v6317 = vsel %vm1359, %v6290, %v6292
        %v6318 = vsel %vm1359, %v6292, %v6294
        %v6319 = vsel %vm1359, %v6296, %v6298
        %v6320 = vsel %vm1359, %v6298, %v6300
        %v6321 = vsel %vm1359, %v6302, %v6304
        %v6322 = vsel %vm1359, %v6304, %v6306
        %v6348 = vsel %vm453, %v6251, 0
        %v6351 = vsel %vm453, %v6252, 0
        %v6354 = vsel %vm453, %v6253, 0
        %v6357 = vsel %vm453, %v6254, 0
        %v6360 = vsel %vm453, %v6255, 0
        %v6363 = vsel %vm453, %v6256, 0
        %v6366 = vsel %vm453, %v6257, 0
        %v6369 = vsel %vm453, %v6258, 0
        %6371 = vmatprep.subr.mxu0 %v6308
        %6372 = vmatpush1.msra.mxu0 %v6307
        %6373 = vmatprep.subr.mxu0 %v6310
        %6374 = vmatpush1.msra.mxu0 %v6309
        %6375 = vmatprep.subr.mxu0 %v6312
        %6376 = vmatpush1.msra.mxu0 %v6311
        %6377 = vmatprep.subr.mxu0 %v6314
        %6378 = vmatpush1.msra.mxu0 %v6313
        %6379 = vmatprep.subr.mxu0 %v6316
        %6380 = vmatpush1.msra.mxu0 %v6315
        %6381 = vmatprep.subr.mxu0 %v6318
        %6382 = vmatpush1.msra.mxu0 %v6317
        %6383 = vmatprep.subr.mxu0 %v6320
        %6384 = vmatpush1.msra.mxu0 %v6319
        %6385 = vmatprep.subr.mxu0 %v6322
        %6386 = vmatpush1.msra.mxu0 %v6321
        %6387 = vmatprep.subr.mxu0 0.0
        %6388 = vmatpush1.msra.mxu0 0.0
        %6389 = vmatprep.subr.mxu0 0.0
        %6390 = vmatpush1.msra.mxu0 0.0
        %6391 = vmatprep.subr.mxu0 0.0
        %6392 = vmatpush1.msra.mxu0 0.0
        %6393 = vmatprep.subr.mxu0 0.0
        %6394 = vmatpush1.msra.mxu0 0.0
        %6395 = vmatprep.subr.mxu0 0.0
        %6396 = vmatpush1.msra.mxu0 0.0
        %6397 = vmatprep.subr.mxu0 0.0
        %6398 = vmatpush1.msra.mxu0 0.0
        %6399 = vmatprep.subr.mxu0 0.0
        %6400 = vmatpush1.msra.mxu0 0.0
        %6401 = vmatprep.subr.mxu0 0.0
        %6402 = vmatpush1.msra.mxu0 0.0
        %6403 = vmatprep.subr.mxu0 0.0
        %6404 = vmatpush1.msra.mxu0 0.0
        %6405 = vmatprep.subr.mxu0 0.0
        %6406 = vmatpush1.msra.mxu0 0.0
        %6407 = vmatprep.subr.mxu0 0.0
        %6408 = vmatpush1.msra.mxu0 0.0
        %6409 = vmatprep.subr.mxu0 0.0
        %6410 = vmatpush1.msra.mxu0 0.0
        %6411 = vmatprep.subr.mxu0 0.0
        %6412 = vmatpush1.msra.mxu0 0.0
        %6413 = vmatprep.subr.mxu0 0.0
        %6414 = vmatpush1.msra.mxu0 0.0
        %6415 = vmatprep.subr.mxu0 0.0
        %6416 = vmatpush1.msra.mxu0 0.0
        %6417 = vmatprep.subr.mxu0 0.0
        %6418 = vmatpush1.msra.mxu0 0.0
        %6419 = vmatprep.subr.mxu0 0.0
        %6420 = vmatpush1.msra.mxu0 0.0
        %6421 = vmatprep.subr.mxu0 0.0
        %6422 = vmatpush1.msra.mxu0 0.0
        %6423 = vmatprep.subr.mxu0 0.0
        %6424 = vmatpush1.msra.mxu0 0.0
        %6425 = vmatprep.subr.mxu0 0.0
        %6426 = vmatpush1.msra.mxu0 0.0
        %6427 = vmatprep.subr.mxu0 0.0
        %6428 = vmatpush1.msra.mxu0 0.0
        %6429 = vmatprep.subr.mxu0 0.0
        %6430 = vmatpush1.msra.mxu0 0.0
        %6431 = vmatprep.subr.mxu0 0.0
        %6432 = vmatpush1.msra.mxu0 0.0
        %6433 = vmatprep.subr.mxu0 0.0
        %6434 = vmatpush1.msra.mxu0 0.0
        %6435 = vmatprep.mubr.f32.mxu0 0.0
        %6436 = vmatmul.mubr.f32.gmra.mrb[0].mxu0 %v6348
        %v6437 = vpop.f32.mrb[0].mxu0
        %v6438 = vadd.f32 0.0, %v6437
        %v6439 = vpop.f32.mrb[0].mxu0
        %v6440 = vadd.f32 0.0, %v6439
        %6441 = vmatprep.mubr.f32.mxu0 0.0
        %6442 = vmatmul.mubr.f32.gmra.mrb[0].mxu0 %v6351
        %v6443 = vpop.f32.mrb[0].mxu0
        %v6444 = vadd.f32 0.0, %v6443
        %v6445 = vpop.f32.mrb[0].mxu0
        %v6446 = vadd.f32 0.0, %v6445
        %6447 = vmatprep.mubr.f32.mxu0 0.0
        %6448 = vmatmul.mubr.f32.gmra.mrb[0].mxu0 %v6354
        %v6449 = vpop.f32.mrb[0].mxu0
        %v6450 = vadd.f32 0.0, %v6449
        %v6451 = vpop.f32.mrb[0].mxu0
        %v6452 = vadd.f32 0.0, %v6451
        %6453 = vmatprep.mubr.f32.mxu0 0.0
        %6454 = vmatmul.mubr.f32.gmra.mrb[0].mxu0 %v6357
        %v6455 = vpop.f32.mrb[0].mxu0
        %v6456 = vadd.f32 0.0, %v6455
        %v6457 = vpop.f32.mrb[0].mxu0
        %v6458 = vadd.f32 0.0, %v6457
        %6459 = vmatprep.mubr.f32.mxu0 0.0
        %6460 = vmatmul.mubr.f32.gmra.mrb[0].mxu0 %v6360
        %v6461 = vpop.f32.mrb[0].mxu0
        %v6462 = vadd.f32 0.0, %v6461
        %v6463 = vpop.f32.mrb[0].mxu0
        %v6464 = vadd.f32 0.0, %v6463
        %6465 = vmatprep.mubr.f32.mxu0 0.0
        %6466 = vmatmul.mubr.f32.gmra.mrb[0].mxu0 %v6363
        %v6467 = vpop.f32.mrb[0].mxu0
        %v6468 = vadd.f32 0.0, %v6467
        %v6469 = vpop.f32.mrb[0].mxu0
        %v6470 = vadd.f32 0.0, %v6469
        %6471 = vmatprep.mubr.f32.mxu0 0.0
        %6472 = vmatmul.mubr.f32.gmra.mrb[0].mxu0 %v6366
        %v6473 = vpop.f32.mrb[0].mxu0
        %v6474 = vadd.f32 0.0, %v6473
        %v6475 = vpop.f32.mrb[0].mxu0
        %v6476 = vadd.f32 0.0, %v6475
        %6477 = vmatprep.mubr.f32.mxu0 0.0
        %6478 = vmatmul.mubr.f32.gmra.mrb[0].mxu0 %v6369
        %v6479 = vpop.f32.mrb[0].mxu0
        %v6480 = vadd.f32 0.0, %v6479
        %v6481 = vpop.f32.mrb[0].mxu0
        %v6482 = vadd.f32 0.0, %v6481
        %6483 = vdwg.mxu0
        %6484 = vmatprep.subr.mxu0 0.0
        %6485 = vmatpush1.msra.mxu0 %v6264
        %6486 = vmatprep.subr.mxu0 0.0
        %6487 = vmatpush1.msra.mxu0 %v6270
        %6488 = vmatprep.subr.mxu0 0.0
        %6489 = vmatpush1.msra.mxu0 %v6276
        %6490 = vmatprep.subr.mxu0 0.0
        %6491 = vmatpush1.msra.mxu0 %v6282
        %6492 = vmatprep.subr.mxu0 0.0
        %6493 = vmatpush1.msra.mxu0 %v6288
        %6494 = vmatprep.subr.mxu0 0.0
        %6495 = vmatpush1.msra.mxu0 %v6294
        %6496 = vmatprep.subr.mxu0 0.0
        %6497 = vmatpush1.msra.mxu0 %v6300
        %6498 = vmatprep.subr.mxu0 0.0
        %6499 = vmatpush1.msra.mxu0 %v6306
        %6500 = vmatprep.subr.mxu0 0.0
        %6501 = vmatpush1.msra.mxu0 0.0
        %6502 = vmatprep.subr.mxu0 0.0
        %6503 = vmatpush1.msra.mxu0 0.0
        %6504 = vmatprep.subr.mxu0 0.0
        %6505 = vmatpush1.msra.mxu0 0.0
        %6506 = vmatprep.subr.mxu0 0.0
        %6507 = vmatpush1.msra.mxu0 0.0
        %6508 = vmatprep.subr.mxu0 0.0
        %6509 = vmatpush1.msra.mxu0 0.0
        %6510 = vmatprep.subr.mxu0 0.0
        %6511 = vmatpush1.msra.mxu0 0.0
        %6512 = vmatprep.subr.mxu0 0.0
        %6513 = vmatpush1.msra.mxu0 0.0
        %6514 = vmatprep.subr.mxu0 0.0
        %6515 = vmatpush1.msra.mxu0 0.0
        %6516 = vmatprep.subr.mxu0 0.0
        %6517 = vmatpush1.msra.mxu0 0.0
        %6518 = vmatprep.subr.mxu0 0.0
        %6519 = vmatpush1.msra.mxu0 0.0
        %6520 = vmatprep.subr.mxu0 0.0
        %6521 = vmatpush1.msra.mxu0 0.0
        %6522 = vmatprep.subr.mxu0 0.0
        %6523 = vmatpush1.msra.mxu0 0.0
        %6524 = vmatprep.subr.mxu0 0.0
        %6525 = vmatpush1.msra.mxu0 0.0
        %6526 = vmatprep.subr.mxu0 0.0
        %6527 = vmatpush1.msra.mxu0 0.0
        %6528 = vmatprep.subr.mxu0 0.0
        %6529 = vmatpush1.msra.mxu0 0.0
        %6530 = vmatprep.subr.mxu0 0.0
        %6531 = vmatpush1.msra.mxu0 0.0
        %6532 = vmatprep.subr.mxu0 0.0
        %6533 = vmatpush1.msra.mxu0 0.0
        %6534 = vmatprep.subr.mxu0 0.0
        %6535 = vmatpush1.msra.mxu0 0.0
        %6536 = vmatprep.subr.mxu0 0.0
        %6537 = vmatpush1.msra.mxu0 0.0
        %6538 = vmatprep.subr.mxu0 0.0
        %6539 = vmatpush1.msra.mxu0 0.0
        %6540 = vmatprep.subr.mxu0 0.0
        %6541 = vmatpush1.msra.mxu0 0.0
        %6542 = vmatprep.subr.mxu0 0.0
        %6543 = vmatpush1.msra.mxu0 0.0
        %6544 = vmatprep.subr.mxu0 0.0
        %6545 = vmatpush1.msra.mxu0 0.0
        %6546 = vmatprep.subr.mxu0 0.0
        %6547 = vmatpush1.msra.mxu0 0.0
        %6548 = vmatprep.mubr.f32.mxu0 0.0
        %6549 = vmatmul.mubr.f32.gmra.mrb[0].mxu0 %v6348
        %v6550 = vpop.f32.mrb[0].mxu0
        %v6551 = vadd.f32 0.0, %v6550
        %v6552 = vpop.f32.mrb[0].mxu0
        %6553 = vmatprep.mubr.f32.mxu0 0.0
        %6554 = vmatmul.mubr.f32.gmra.mrb[0].mxu0 %v6351
        %v6555 = vpop.f32.mrb[0].mxu0
        %v6556 = vadd.f32 0.0, %v6555
        %v6557 = vpop.f32.mrb[0].mxu0
        %6558 = vmatprep.mubr.f32.mxu0 0.0
        %6559 = vmatmul.mubr.f32.gmra.mrb[0].mxu0 %v6354
        %v6560 = vpop.f32.mrb[0].mxu0
        %v6561 = vadd.f32 0.0, %v6560
        %v6562 = vpop.f32.mrb[0].mxu0
        %6563 = vmatprep.mubr.f32.mxu0 0.0
        %6564 = vmatmul.mubr.f32.gmra.mrb[0].mxu0 %v6357
        %v6565 = vpop.f32.mrb[0].mxu0
        %v6566 = vadd.f32 0.0, %v6565
        %v6567 = vpop.f32.mrb[0].mxu0
        %6568 = vmatprep.mubr.f32.mxu0 0.0
        %6569 = vmatmul.mubr.f32.gmra.mrb[0].mxu0 %v6360
        %v6570 = vpop.f32.mrb[0].mxu0
        %v6571 = vadd.f32 0.0, %v6570
        %v6572 = vpop.f32.mrb[0].mxu0
        %6573 = vmatprep.mubr.f32.mxu0 0.0
        %6574 = vmatmul.mubr.f32.gmra.mrb[0].mxu0 %v6363
        %v6575 = vpop.f32.mrb[0].mxu0
        %v6576 = vadd.f32 0.0, %v6575
        %v6577 = vpop.f32.mrb[0].mxu0
        %6578 = vmatprep.mubr.f32.mxu0 0.0
        %6579 = vmatmul.mubr.f32.gmra.mrb[0].mxu0 %v6366
        %v6580 = vpop.f32.mrb[0].mxu0
        %v6581 = vadd.f32 0.0, %v6580
        %v6582 = vpop.f32.mrb[0].mxu0
        %6583 = vmatprep.mubr.f32.mxu0 0.0
        %6584 = vmatmul.mubr.f32.gmra.mrb[0].mxu0 %v6369
        %v6585 = vpop.f32.mrb[0].mxu0
        %v6586 = vadd.f32 0.0, %v6585
        %v6587 = vpop.f32.mrb[0].mxu0
        %6588 = vdwg.mxu0
        %v6589 = vadd.f32 %v6226, %v6438
        %v6590 = vadd.f32 %v6227, %v6440
        %v6591 = vadd.f32 %v6228, %v6551
        %v6592 = vadd.f32 %v6229, %v6444
        %v6593 = vadd.f32 %v6230, %v6446
        %v6594 = vadd.f32 %v6231, %v6556
        %v6595 = vadd.f32 %v6232, %v6450
        %v6596 = vadd.f32 %v6233, %v6452
        %v6597 = vadd.f32 %v6234, %v6561
        %v6598 = vadd.f32 %v6235, %v6456
        %v6599 = vadd.f32 %v6236, %v6458
        %v6600 = vadd.f32 %v6237, %v6566
        %v6601 = vadd.f32 %v6238, %v6462
        %v6602 = vadd.f32 %v6239, %v6464
        %v6603 = vadd.f32 %v6240, %v6571
        %v6604 = vadd.f32 %v6241, %v6468
        %v6605 = vadd.f32 %v6242, %v6470
        %v6606 = vadd.f32 %v6243, %v6576
        %v6607 = vadd.f32 %v6244, %v6474
        %v6608 = vadd.f32 %v6245, %v6476
        %v6609 = vadd.f32 %v6246, %v6581
        %v6610 = vadd.f32 %v6247, %v6480
        %v6611 = vadd.f32 %v6248, %v6482
        %v6612 = vadd.f32 %v6249, %v6586
        %s6613 = scalar_lea.vmem [#allocation8], 512
        %v6614 = vld [vmem:[%s6613] sm:$0xff]
        %v6615 = vld [vmem:[%s6613 + $0x8] sm:$0xff]
        %v6616 = vld [vmem:[%s6613 + $0x10] sm:$0xff]
        %v6617 = vld [vmem:[%s6613 + $0x18] sm:$0xff]
        %v6618 = vld [vmem:[%s6613 + $0x20] sm:$0xff]
        %v6619 = vld [vmem:[%s6613 + $0x28] sm:$0xff]
        %v6620 = vld [vmem:[%s6613 + $0x30] sm:$0xff]
        %v6621 = vld [vmem:[%s6613 + $0x38] sm:$0xff]
        %6622 = vrot.lane.b32.xlu0 %v3690, 109
        %v6623 = vpop.permute.xlu0 %6622
        %6624 = vrot.lane.b32.xlu0 %v3691, 109
        %v6625 = vpop.permute.xlu0 %6624
        %6626 = vrot.lane.b32.xlu0 %v3692, 109
        %v6627 = vpop.permute.xlu0 %6626
        %6628 = vrot.lane.b32.xlu0 %v3694, 109
        %v6629 = vpop.permute.xlu0 %6628
        %6630 = vrot.lane.b32.xlu0 %v3695, 109
        %v6631 = vpop.permute.xlu0 %6630
        %6632 = vrot.lane.b32.xlu0 %v3696, 109
        %v6633 = vpop.permute.xlu0 %6632
        %6634 = vrot.lane.b32.xlu0 %v3698, 109
        %v6635 = vpop.permute.xlu0 %6634
        %6636 = vrot.lane.b32.xlu0 %v3699, 109
        %v6637 = vpop.permute.xlu0 %6636
        %6638 = vrot.lane.b32.xlu0 %v3700, 109
        %v6639 = vpop.permute.xlu0 %6638
        %6640 = vrot.lane.b32.xlu0 %v3702, 109
        %v6641 = vpop.permute.xlu0 %6640
        %6642 = vrot.lane.b32.xlu0 %v3703, 109
        %v6643 = vpop.permute.xlu0 %6642
        %6644 = vrot.lane.b32.xlu0 %v3704, 109
        %v6645 = vpop.permute.xlu0 %6644
        %6646 = vrot.lane.b32.xlu0 %v3706, 109
        %v6647 = vpop.permute.xlu0 %6646
        %6648 = vrot.lane.b32.xlu0 %v3707, 109
        %v6649 = vpop.permute.xlu0 %6648
        %6650 = vrot.lane.b32.xlu0 %v3708, 109
        %v6651 = vpop.permute.xlu0 %6650
        %6652 = vrot.lane.b32.xlu0 %v3710, 109
        %v6653 = vpop.permute.xlu0 %6652
        %6654 = vrot.lane.b32.xlu0 %v3711, 109
        %v6655 = vpop.permute.xlu0 %6654
        %6656 = vrot.lane.b32.xlu0 %v3712, 109
        %v6657 = vpop.permute.xlu0 %6656
        %6658 = vrot.lane.b32.xlu0 %v3714, 109
        %v6659 = vpop.permute.xlu0 %6658
        %6660 = vrot.lane.b32.xlu0 %v3715, 109
        %v6661 = vpop.permute.xlu0 %6660
        %6662 = vrot.lane.b32.xlu0 %v3716, 109
        %v6663 = vpop.permute.xlu0 %6662
        %6664 = vrot.lane.b32.xlu0 %v3718, 109
        %v6665 = vpop.permute.xlu0 %6664
        %6666 = vrot.lane.b32.xlu0 %v3719, 109
        %v6667 = vpop.permute.xlu0 %6666
        %6668 = vrot.lane.b32.xlu0 %v3720, 109
        %v6669 = vpop.permute.xlu0 %6668
        %v6670 = vsel %vm1723, %v6623, %v6625
        %v6671 = vsel %vm1723, %v6625, %v6627
        %v6672 = vsel %vm1723, %v6629, %v6631
        %v6673 = vsel %vm1723, %v6631, %v6633
        %v6674 = vsel %vm1723, %v6635, %v6637
        %v6675 = vsel %vm1723, %v6637, %v6639
        %v6676 = vsel %vm1723, %v6641, %v6643
        %v6677 = vsel %vm1723, %v6643, %v6645
        %v6678 = vsel %vm1723, %v6647, %v6649
        %v6679 = vsel %vm1723, %v6649, %v6651
        %v6680 = vsel %vm1723, %v6653, %v6655
        %v6681 = vsel %vm1723, %v6655, %v6657
        %v6682 = vsel %vm1723, %v6659, %v6661
        %v6683 = vsel %vm1723, %v6661, %v6663
        %v6684 = vsel %vm1723, %v6665, %v6667
        %v6685 = vsel %vm1723, %v6667, %v6669
        %v6711 = vsel %vm453, %v6614, 0
        %v6714 = vsel %vm453, %v6615, 0
        %v6717 = vsel %vm453, %v6616, 0
        %v6720 = vsel %vm453, %v6617, 0
        %v6723 = vsel %vm453, %v6618, 0
        %v6726 = vsel %vm453, %v6619, 0
        %v6729 = vsel %vm453, %v6620, 0
        %v6732 = vsel %vm453, %v6621, 0
        %6734 = vmatprep.subr.mxu0 %v6671
        %6735 = vmatpush1.msra.mxu0 %v6670
        %6736 = vmatprep.subr.mxu0 %v6673
        %6737 = vmatpush1.msra.mxu0 %v6672
        %6738 = vmatprep.subr.mxu0 %v6675
        %6739 = vmatpush1.msra.mxu0 %v6674
        %6740 = vmatprep.subr.mxu0 %v6677
        %6741 = vmatpush1.msra.mxu0 %v6676
        %6742 = vmatprep.subr.mxu0 %v6679
        %6743 = vmatpush1.msra.mxu0 %v6678
        %6744 = vmatprep.subr.mxu0 %v6681
        %6745 = vmatpush1.msra.mxu0 %v6680
        %6746 = vmatprep.subr.mxu0 %v6683
        %6747 = vmatpush1.msra.mxu0 %v6682
        %6748 = vmatprep.subr.mxu0 %v6685
        %6749 = vmatpush1.msra.mxu0 %v6684
        %6750 = vmatprep.subr.mxu0 0.0
        %6751 = vmatpush1.msra.mxu0 0.0
        %6752 = vmatprep.subr.mxu0 0.0
        %6753 = vmatpush1.msra.mxu0 0.0
        %6754 = vmatprep.subr.mxu0 0.0
        %6755 = vmatpush1.msra.mxu0 0.0
        %6756 = vmatprep.subr.mxu0 0.0
        %6757 = vmatpush1.msra.mxu0 0.0
        %6758 = vmatprep.subr.mxu0 0.0
        %6759 = vmatpush1.msra.mxu0 0.0
        %6760 = vmatprep.subr.mxu0 0.0
        %6761 = vmatpush1.msra.mxu0 0.0
        %6762 = vmatprep.subr.mxu0 0.0
        %6763 = vmatpush1.msra.mxu0 0.0
        %6764 = vmatprep.subr.mxu0 0.0
        %6765 = vmatpush1.msra.mxu0 0.0
        %6766 = vmatprep.subr.mxu0 0.0
        %6767 = vmatpush1.msra.mxu0 0.0
        %6768 = vmatprep.subr.mxu0 0.0
        %6769 = vmatpush1.msra.mxu0 0.0
        %6770 = vmatprep.subr.mxu0 0.0
        %6771 = vmatpush1.msra.mxu0 0.0
        %6772 = vmatprep.subr.mxu0 0.0
        %6773 = vmatpush1.msra.mxu0 0.0
        %6774 = vmatprep.subr.mxu0 0.0
        %6775 = vmatpush1.msra.mxu0 0.0
        %6776 = vmatprep.subr.mxu0 0.0
        %6777 = vmatpush1.msra.mxu0 0.0
        %6778 = vmatprep.subr.mxu0 0.0
        %6779 = vmatpush1.msra.mxu0 0.0
        %6780 = vmatprep.subr.mxu0 0.0
        %6781 = vmatpush1.msra.mxu0 0.0
        %6782 = vmatprep.subr.mxu0 0.0
        %6783 = vmatpush1.msra.mxu0 0.0
        %6784 = vmatprep.subr.mxu0 0.0
        %6785 = vmatpush1.msra.mxu0 0.0
        %6786 = vmatprep.subr.mxu0 0.0
        %6787 = vmatpush1.msra.mxu0 0.0
        %6788 = vmatprep.subr.mxu0 0.0
        %6789 = vmatpush1.msra.mxu0 0.0
        %6790 = vmatprep.subr.mxu0 0.0
        %6791 = vmatpush1.msra.mxu0 0.0
        %6792 = vmatprep.subr.mxu0 0.0
        %6793 = vmatpush1.msra.mxu0 0.0
        %6794 = vmatprep.subr.mxu0 0.0
        %6795 = vmatpush1.msra.mxu0 0.0
        %6796 = vmatprep.subr.mxu0 0.0
        %6797 = vmatpush1.msra.mxu0 0.0
        %6798 = vmatprep.mubr.f32.mxu0 0.0
        %6799 = vmatmul.mubr.f32.gmra.mrb[0].mxu0 %v6711
        %v6800 = vpop.f32.mrb[0].mxu0
        %v6801 = vadd.f32 0.0, %v6800
        %v6802 = vpop.f32.mrb[0].mxu0
        %v6803 = vadd.f32 0.0, %v6802
        %6804 = vmatprep.mubr.f32.mxu0 0.0
        %6805 = vmatmul.mubr.f32.gmra.mrb[0].mxu0 %v6714
        %v6806 = vpop.f32.mrb[0].mxu0
        %v6807 = vadd.f32 0.0, %v6806
        %v6808 = vpop.f32.mrb[0].mxu0
        %v6809 = vadd.f32 0.0, %v6808
        %6810 = vmatprep.mubr.f32.mxu0 0.0
        %6811 = vmatmul.mubr.f32.gmra.mrb[0].mxu0 %v6717
        %v6812 = vpop.f32.mrb[0].mxu0
        %v6813 = vadd.f32 0.0, %v6812
        %v6814 = vpop.f32.mrb[0].mxu0
        %v6815 = vadd.f32 0.0, %v6814
        %6816 = vmatprep.mubr.f32.mxu0 0.0
        %6817 = vmatmul.mubr.f32.gmra.mrb[0].mxu0 %v6720
        %v6818 = vpop.f32.mrb[0].mxu0
        %v6819 = vadd.f32 0.0, %v6818
        %v6820 = vpop.f32.mrb[0].mxu0
        %v6821 = vadd.f32 0.0, %v6820
        %6822 = vmatprep.mubr.f32.mxu0 0.0
        %6823 = vmatmul.mubr.f32.gmra.mrb[0].mxu0 %v6723
        %v6824 = vpop.f32.mrb[0].mxu0
        %v6825 = vadd.f32 0.0, %v6824
        %v6826 = vpop.f32.mrb[0].mxu0
        %v6827 = vadd.f32 0.0, %v6826
        %6828 = vmatprep.mubr.f32.mxu0 0.0
        %6829 = vmatmul.mubr.f32.gmra.mrb[0].mxu0 %v6726
        %v6830 = vpop.f32.mrb[0].mxu0
        %v6831 = vadd.f32 0.0, %v6830
        %v6832 = vpop.f32.mrb[0].mxu0
        %v6833 = vadd.f32 0.0, %v6832
        %6834 = vmatprep.mubr.f32.mxu0 0.0
        %6835 = vmatmul.mubr.f32.gmra.mrb[0].mxu0 %v6729
        %v6836 = vpop.f32.mrb[0].mxu0
        %v6837 = vadd.f32 0.0, %v6836
        %v6838 = vpop.f32.mrb[0].mxu0
        %v6839 = vadd.f32 0.0, %v6838
        %6840 = vmatprep.mubr.f32.mxu0 0.0
        %6841 = vmatmul.mubr.f32.gmra.mrb[0].mxu0 %v6732
        %v6842 = vpop.f32.mrb[0].mxu0
        %v6843 = vadd.f32 0.0, %v6842
        %v6844 = vpop.f32.mrb[0].mxu0
        %v6845 = vadd.f32 0.0, %v6844
        %6846 = vdwg.mxu0
        %6847 = vmatprep.subr.mxu0 0.0
        %6848 = vmatpush1.msra.mxu0 %v6627
        %6849 = vmatprep.subr.mxu0 0.0
        %6850 = vmatpush1.msra.mxu0 %v6633
        %6851 = vmatprep.subr.mxu0 0.0
        %6852 = vmatpush1.msra.mxu0 %v6639
        %6853 = vmatprep.subr.mxu0 0.0
        %6854 = vmatpush1.msra.mxu0 %v6645
        %6855 = vmatprep.subr.mxu0 0.0
        %6856 = vmatpush1.msra.mxu0 %v6651
        %6857 = vmatprep.subr.mxu0 0.0
        %6858 = vmatpush1.msra.mxu0 %v6657
        %6859 = vmatprep.subr.mxu0 0.0
        %6860 = vmatpush1.msra.mxu0 %v6663
        %6861 = vmatprep.subr.mxu0 0.0
        %6862 = vmatpush1.msra.mxu0 %v6669
        %6863 = vmatprep.subr.mxu0 0.0
        %6864 = vmatpush1.msra.mxu0 0.0
        %6865 = vmatprep.subr.mxu0 0.0
        %6866 = vmatpush1.msra.mxu0 0.0
        %6867 = vmatprep.subr.mxu0 0.0
        %6868 = vmatpush1.msra.mxu0 0.0
        %6869 = vmatprep.subr.mxu0 0.0
        %6870 = vmatpush1.msra.mxu0 0.0
        %6871 = vmatprep.subr.mxu0 0.0
        %6872 = vmatpush1.msra.mxu0 0.0
        %6873 = vmatprep.subr.mxu0 0.0
        %6874 = vmatpush1.msra.mxu0 0.0
        %6875 = vmatprep.subr.mxu0 0.0
        %6876 = vmatpush1.msra.mxu0 0.0
        %6877 = vmatprep.subr.mxu0 0.0
        %6878 = vmatpush1.msra.mxu0 0.0
        %6879 = vmatprep.subr.mxu0 0.0
        %6880 = vmatpush1.msra.mxu0 0.0
        %6881 = vmatprep.subr.mxu0 0.0
        %6882 = vmatpush1.msra.mxu0 0.0
        %6883 = vmatprep.subr.mxu0 0.0
        %6884 = vmatpush1.msra.mxu0 0.0
        %6885 = vmatprep.subr.mxu0 0.0
        %6886 = vmatpush1.msra.mxu0 0.0
        %6887 = vmatprep.subr.mxu0 0.0
        %6888 = vmatpush1.msra.mxu0 0.0
        %6889 = vmatprep.subr.mxu0 0.0
        %6890 = vmatpush1.msra.mxu0 0.0
        %6891 = vmatprep.subr.mxu0 0.0
        %6892 = vmatpush1.msra.mxu0 0.0
        %6893 = vmatprep.subr.mxu0 0.0
        %6894 = vmatpush1.msra.mxu0 0.0
        %6895 = vmatprep.subr.mxu0 0.0
        %6896 = vmatpush1.msra.mxu0 0.0
        %6897 = vmatprep.subr.mxu0 0.0
        %6898 = vmatpush1.msra.mxu0 0.0
        %6899 = vmatprep.subr.mxu0 0.0
        %6900 = vmatpush1.msra.mxu0 0.0
        %6901 = vmatprep.subr.mxu0 0.0
        %6902 = vmatpush1.msra.mxu0 0.0
        %6903 = vmatprep.subr.mxu0 0.0
        %6904 = vmatpush1.msra.mxu0 0.0
        %6905 = vmatprep.subr.mxu0 0.0
        %6906 = vmatpush1.msra.mxu0 0.0
        %6907 = vmatprep.subr.mxu0 0.0
        %6908 = vmatpush1.msra.mxu0 0.0
        %6909 = vmatprep.subr.mxu0 0.0
        %6910 = vmatpush1.msra.mxu0 0.0
        %6911 = vmatprep.mubr.f32.mxu0 0.0
        %6912 = vmatmul.mubr.f32.gmra.mrb[0].mxu0 %v6711
        %v6913 = vpop.f32.mrb[0].mxu0
        %v6914 = vadd.f32 0.0, %v6913
        %v6915 = vpop.f32.mrb[0].mxu0
        %6916 = vmatprep.mubr.f32.mxu0 0.0
        %6917 = vmatmul.mubr.f32.gmra.mrb[0].mxu0 %v6714
        %v6918 = vpop.f32.mrb[0].mxu0
        %v6919 = vadd.f32 0.0, %v6918
        %v6920 = vpop.f32.mrb[0].mxu0
        %6921 = vmatprep.mubr.f32.mxu0 0.0
        %6922 = vmatmul.mubr.f32.gmra.mrb[0].mxu0 %v6717
        %v6923 = vpop.f32.mrb[0].mxu0
        %v6924 = vadd.f32 0.0, %v6923
        %v6925 = vpop.f32.mrb[0].mxu0
        %6926 = vmatprep.mubr.f32.mxu0 0.0
        %6927 = vmatmul.mubr.f32.gmra.mrb[0].mxu0 %v6720
        %v6928 = vpop.f32.mrb[0].mxu0
        %v6929 = vadd.f32 0.0, %v6928
        %v6930 = vpop.f32.mrb[0].mxu0
        %6931 = vmatprep.mubr.f32.mxu0 0.0
        %6932 = vmatmul.mubr.f32.gmra.mrb[0].mxu0 %v6723
        %v6933 = vpop.f32.mrb[0].mxu0
        %v6934 = vadd.f32 0.0, %v6933
        %v6935 = vpop.f32.mrb[0].mxu0
        %6936 = vmatprep.mubr.f32.mxu0 0.0
        %6937 = vmatmul.mubr.f32.gmra.mrb[0].mxu0 %v6726
        %v6938 = vpop.f32.mrb[0].mxu0
        %v6939 = vadd.f32 0.0, %v6938
        %v6940 = vpop.f32.mrb[0].mxu0
        %6941 = vmatprep.mubr.f32.mxu0 0.0
        %6942 = vmatmul.mubr.f32.gmra.mrb[0].mxu0 %v6729
        %v6943 = vpop.f32.mrb[0].mxu0
        %v6944 = vadd.f32 0.0, %v6943
        %v6945 = vpop.f32.mrb[0].mxu0
        %6946 = vmatprep.mubr.f32.mxu0 0.0
        %6947 = vmatmul.mubr.f32.gmra.mrb[0].mxu0 %v6732
        %v6948 = vpop.f32.mrb[0].mxu0
        %v6949 = vadd.f32 0.0, %v6948
        %v6950 = vpop.f32.mrb[0].mxu0
        %6951 = vdwg.mxu0
        %v6952 = vadd.f32 %v6589, %v6801
        %v6953 = vadd.f32 %v6590, %v6803
        %v6954 = vadd.f32 %v6591, %v6914
        %v6955 = vadd.f32 %v6592, %v6807
        %v6956 = vadd.f32 %v6593, %v6809
        %v6957 = vadd.f32 %v6594, %v6919
        %v6958 = vadd.f32 %v6595, %v6813
        %v6959 = vadd.f32 %v6596, %v6815
        %v6960 = vadd.f32 %v6597, %v6924
        %v6961 = vadd.f32 %v6598, %v6819
        %v6962 = vadd.f32 %v6599, %v6821
        %v6963 = vadd.f32 %v6600, %v6929
        %v6964 = vadd.f32 %v6601, %v6825
        %v6965 = vadd.f32 %v6602, %v6827
        %v6966 = vadd.f32 %v6603, %v6934
        %v6967 = vadd.f32 %v6604, %v6831
        %v6968 = vadd.f32 %v6605, %v6833
        %v6969 = vadd.f32 %v6606, %v6939
        %v6970 = vadd.f32 %v6607, %v6837
        %v6971 = vadd.f32 %v6608, %v6839
        %v6972 = vadd.f32 %v6609, %v6944
        %v6973 = vadd.f32 %v6610, %v6843
        %v6974 = vadd.f32 %v6611, %v6845
        %v6975 = vadd.f32 %v6612, %v6949
        %v6976 = vld [vmem:[%s4] sm:$0xff]
        %v6977 = vld [vmem:[%s4 + $0x8] sm:$0xff]
        %v6978 = vld [vmem:[%s4 + $0x10] sm:$0xff]
        %v6979 = vld [vmem:[%s4 + $0x18] sm:$0xff]
        %v6980 = vld [vmem:[%s4 + $0x20] sm:$0xff]
        %v6981 = vld [vmem:[%s4 + $0x28] sm:$0xff]
        %v6982 = vld [vmem:[%s4 + $0x30] sm:$0xff]
        %v6983 = vld [vmem:[%s4 + $0x38] sm:$0xff]
        %6985 = vset.pattern.permute.xlu0 0
        %6986 = vperm.xlu0 %6985, %v6976
        %v6987 = vpop.permute.xlu0 %6986
        %6990 = vset.pattern.permute.xlu0 0
        %6991 = vperm.xlu0 %6990, %v6977
        %v6992 = vpop.permute.xlu0 %6991
        %6995 = vset.pattern.permute.xlu0 0
        %6996 = vperm.xlu0 %6995, %v6978
        %v6997 = vpop.permute.xlu0 %6996
        %7000 = vset.pattern.permute.xlu0 0
        %7001 = vperm.xlu0 %7000, %v6979
        %v7002 = vpop.permute.xlu0 %7001
        %7005 = vset.pattern.permute.xlu0 0
        %7006 = vperm.xlu0 %7005, %v6980
        %v7007 = vpop.permute.xlu0 %7006
        %7010 = vset.pattern.permute.xlu0 0
        %7011 = vperm.xlu0 %7010, %v6981
        %v7012 = vpop.permute.xlu0 %7011
        %7015 = vset.pattern.permute.xlu0 0
        %7016 = vperm.xlu0 %7015, %v6982
        %v7017 = vpop.permute.xlu0 %7016
        %7020 = vset.pattern.permute.xlu0 0
        %7021 = vperm.xlu0 %7020, %v6983
        %v7022 = vpop.permute.xlu0 %7021
        %v7024 = vadd.f32 %v6952, %v6987
        %v7025 = vadd.f32 %v6953, %v6987
        %v7026 = vadd.f32 %v6954, %v6987
        %v7027 = vadd.f32 %v6955, %v6992
        %v7028 = vadd.f32 %v6956, %v6992
        %v7029 = vadd.f32 %v6957, %v6992
        %v7030 = vadd.f32 %v6958, %v6997
        %v7031 = vadd.f32 %v6959, %v6997
        %v7032 = vadd.f32 %v6960, %v6997
        %v7033 = vadd.f32 %v6961, %v7002
        %v7034 = vadd.f32 %v6962, %v7002
        %v7035 = vadd.f32 %v6963, %v7002
        %v7036 = vadd.f32 %v6964, %v7007
        %v7037 = vadd.f32 %v6965, %v7007
        %v7038 = vadd.f32 %v6966, %v7007
        %v7039 = vadd.f32 %v6967, %v7012
        %v7040 = vadd.f32 %v6968, %v7012
        %v7041 = vadd.f32 %v6969, %v7012
        %v7042 = vadd.f32 %v6970, %v7017
        %v7043 = vadd.f32 %v6971, %v7017
        %v7044 = vadd.f32 %v6972, %v7017
        %v7045 = vadd.f32 %v6973, %v7022
        %v7046 = vadd.f32 %v6974, %v7022
        %v7047 = vadd.f32 %v6975, %v7022
        %v7048 = vld [vmem:[%s262] sm:$0xff]
        %v7049 = vld [vmem:[%s262 + $0x8] sm:$0xff]
        %v7050 = vld [vmem:[%s262 + $0x10] sm:$0xff]
        %v7051 = vld [vmem:[%s262 + $0x18] sm:$0xff]
        %v7052 = vld [vmem:[%s262 + $0x20] sm:$0xff]
        %v7053 = vld [vmem:[%s262 + $0x28] sm:$0xff]
        %v7054 = vld [vmem:[%s262 + $0x30] sm:$0xff]
        %v7055 = vld [vmem:[%s262 + $0x38] sm:$0xff]
        %v7056 = vld [vmem:[%s262 + $0x40] sm:$0xff]
        %v7057 = vld [vmem:[%s262 + $0x48] sm:$0xff]
        %v7058 = vld [vmem:[%s262 + $0x50] sm:$0xff]
        %v7059 = vld [vmem:[%s262 + $0x58] sm:$0xff]
        %v7060 = vld [vmem:[%s262 + $0x60] sm:$0xff]
        %v7061 = vld [vmem:[%s262 + $0x68] sm:$0xff]
        %v7062 = vld [vmem:[%s262 + $0x70] sm:$0xff]
        %v7063 = vld [vmem:[%s262 + $0x78] sm:$0xff]
        %v7064 = vld [vmem:[%s262 + $0x80] sm:$0xff]
        %v7065 = vld [vmem:[%s262 + $0x88] sm:$0xff]
        %v7066 = vld [vmem:[%s262 + $0x90] sm:$0xff]
        %v7067 = vld [vmem:[%s262 + $0x98] sm:$0xff]
        %v7068 = vld [vmem:[%s262 + $0xa0] sm:$0xff]
        %v7069 = vld [vmem:[%s262 + $0xa8] sm:$0xff]
        %v7070 = vld [vmem:[%s262 + $0xb0] sm:$0xff]
        %v7071 = vld [vmem:[%s262 + $0xb8] sm:$0xff]
        %7096 = vrot.lane.b32.xlu0 %v7024, 19
        %v7097 = vpop.permute.xlu0 %7096
        %7098 = vrot.lane.b32.xlu0 %v7025, 19
        %v7099 = vpop.permute.xlu0 %7098
        %7100 = vrot.lane.b32.xlu0 %v7026, 19
        %v7101 = vpop.permute.xlu0 %7100
        %7102 = vrot.lane.b32.xlu0 %v7027, 19
        %v7103 = vpop.permute.xlu0 %7102
        %7104 = vrot.lane.b32.xlu0 %v7028, 19
        %v7105 = vpop.permute.xlu0 %7104
        %7106 = vrot.lane.b32.xlu0 %v7029, 19
        %v7107 = vpop.permute.xlu0 %7106
        %7108 = vrot.lane.b32.xlu0 %v7030, 19
        %v7109 = vpop.permute.xlu0 %7108
        %7110 = vrot.lane.b32.xlu0 %v7031, 19
        %v7111 = vpop.permute.xlu0 %7110
        %7112 = vrot.lane.b32.xlu0 %v7032, 19
        %v7113 = vpop.permute.xlu0 %7112
        %7114 = vrot.lane.b32.xlu0 %v7033, 19
        %v7115 = vpop.permute.xlu0 %7114
        %7116 = vrot.lane.b32.xlu0 %v7034, 19
        %v7117 = vpop.permute.xlu0 %7116
        %7118 = vrot.lane.b32.xlu0 %v7035, 19
        %v7119 = vpop.permute.xlu0 %7118
        %7120 = vrot.lane.b32.xlu0 %v7036, 19
        %v7121 = vpop.permute.xlu0 %7120
        %7122 = vrot.lane.b32.xlu0 %v7037, 19
        %v7123 = vpop.permute.xlu0 %7122
        %7124 = vrot.lane.b32.xlu0 %v7038, 19
        %v7125 = vpop.permute.xlu0 %7124
        %7126 = vrot.lane.b32.xlu0 %v7039, 19
        %v7127 = vpop.permute.xlu0 %7126
        %7128 = vrot.lane.b32.xlu0 %v7040, 19
        %v7129 = vpop.permute.xlu0 %7128
        %7130 = vrot.lane.b32.xlu0 %v7041, 19
        %v7131 = vpop.permute.xlu0 %7130
        %7132 = vrot.lane.b32.xlu0 %v7042, 19
        %v7133 = vpop.permute.xlu0 %7132
        %7134 = vrot.lane.b32.xlu0 %v7043, 19
        %v7135 = vpop.permute.xlu0 %7134
        %7136 = vrot.lane.b32.xlu0 %v7044, 19
        %v7137 = vpop.permute.xlu0 %7136
        %7138 = vrot.lane.b32.xlu0 %v7045, 19
        %v7139 = vpop.permute.xlu0 %7138
        %7140 = vrot.lane.b32.xlu0 %v7046, 19
        %v7141 = vpop.permute.xlu0 %7140
        %7142 = vrot.lane.b32.xlu0 %v7047, 19
        %v7143 = vpop.permute.xlu0 %7142
        %v7144 = vsel %vm4181, %v7097, %v7099
        %v7145 = vsel %vm4181, %v7099, %v7101
        %v7146 = vsel %vm4181, %v7103, %v7105
        %v7147 = vsel %vm4181, %v7105, %v7107
        %v7148 = vsel %vm4181, %v7109, %v7111
        %v7149 = vsel %vm4181, %v7111, %v7113
        %v7150 = vsel %vm4181, %v7115, %v7117
        %v7151 = vsel %vm4181, %v7117, %v7119
        %v7152 = vsel %vm4181, %v7121, %v7123
        %v7153 = vsel %vm4181, %v7123, %v7125
        %v7154 = vsel %vm4181, %v7127, %v7129
        %v7155 = vsel %vm4181, %v7129, %v7131
        %v7156 = vsel %vm4181, %v7133, %v7135
        %v7157 = vsel %vm4181, %v7135, %v7137
        %v7158 = vsel %vm4181, %v7139, %v7141
        %v7159 = vsel %vm4181, %v7141, %v7143
        %v7184 = vadd.f32 %v7048, %v7097
        %v7185 = vadd.f32 %v7049, %v7144
        %v7186 = vadd.f32 %v7050, %v7145
        %v7187 = vadd.f32 %v7051, %v7103
        %v7188 = vadd.f32 %v7052, %v7146
        %v7189 = vadd.f32 %v7053, %v7147
        %v7190 = vadd.f32 %v7054, %v7109
        %v7191 = vadd.f32 %v7055, %v7148
        %v7192 = vadd.f32 %v7056, %v7149
        %v7193 = vadd.f32 %v7057, %v7115
        %v7194 = vadd.f32 %v7058, %v7150
        %v7195 = vadd.f32 %v7059, %v7151
        %v7196 = vadd.f32 %v7060, %v7121
        %v7197 = vadd.f32 %v7061, %v7152
        %v7198 = vadd.f32 %v7062, %v7153
        %v7199 = vadd.f32 %v7063, %v7127
        %v7200 = vadd.f32 %v7064, %v7154
        %v7201 = vadd.f32 %v7065, %v7155
        %v7202 = vadd.f32 %v7066, %v7133
        %v7203 = vadd.f32 %v7067, %v7156
        %v7204 = vadd.f32 %v7068, %v7157
        %v7205 = vadd.f32 %v7069, %v7139
        %v7206 = vadd.f32 %v7070, %v7158
        %v7207 = vadd.f32 %v7071, %v7159
        %7232 = vrot.lane.b32.xlu0 %v7184, 109
        %v7233 = vpop.permute.xlu0 %7232
        %7234 = vrot.lane.b32.xlu0 %v7185, 109
        %v7235 = vpop.permute.xlu0 %7234
        %7236 = vrot.lane.b32.xlu0 %v7186, 109
        %v7237 = vpop.permute.xlu0 %7236
        %7238 = vrot.lane.b32.xlu0 %v7187, 109
        %v7239 = vpop.permute.xlu0 %7238
        %7240 = vrot.lane.b32.xlu0 %v7188, 109
        %v7241 = vpop.permute.xlu0 %7240
        %7242 = vrot.lane.b32.xlu0 %v7189, 109
        %v7243 = vpop.permute.xlu0 %7242
        %7244 = vrot.lane.b32.xlu0 %v7190, 109
        %v7245 = vpop.permute.xlu0 %7244
        %7246 = vrot.lane.b32.xlu0 %v7191, 109
        %v7247 = vpop.permute.xlu0 %7246
        %7248 = vrot.lane.b32.xlu0 %v7192, 109
        %v7249 = vpop.permute.xlu0 %7248
        %7250 = vrot.lane.b32.xlu0 %v7193, 109
        %v7251 = vpop.permute.xlu0 %7250
        %7252 = vrot.lane.b32.xlu0 %v7194, 109
        %v7253 = vpop.permute.xlu0 %7252
        %7254 = vrot.lane.b32.xlu0 %v7195, 109
        %v7255 = vpop.permute.xlu0 %7254
        %7256 = vrot.lane.b32.xlu0 %v7196, 109
        %v7257 = vpop.permute.xlu0 %7256
        %7258 = vrot.lane.b32.xlu0 %v7197, 109
        %v7259 = vpop.permute.xlu0 %7258
        %7260 = vrot.lane.b32.xlu0 %v7198, 109
        %v7261 = vpop.permute.xlu0 %7260
        %7262 = vrot.lane.b32.xlu0 %v7199, 109
        %v7263 = vpop.permute.xlu0 %7262
        %7264 = vrot.lane.b32.xlu0 %v7200, 109
        %v7265 = vpop.permute.xlu0 %7264
        %7266 = vrot.lane.b32.xlu0 %v7201, 109
        %v7267 = vpop.permute.xlu0 %7266
        %7268 = vrot.lane.b32.xlu0 %v7202, 109
        %v7269 = vpop.permute.xlu0 %7268
        %7270 = vrot.lane.b32.xlu0 %v7203, 109
        %v7271 = vpop.permute.xlu0 %7270
        %7272 = vrot.lane.b32.xlu0 %v7204, 109
        %v7273 = vpop.permute.xlu0 %7272
        %7274 = vrot.lane.b32.xlu0 %v7205, 109
        %v7275 = vpop.permute.xlu0 %7274
        %7276 = vrot.lane.b32.xlu0 %v7206, 109
        %v7277 = vpop.permute.xlu0 %7276
        %7278 = vrot.lane.b32.xlu0 %v7207, 109
        %v7279 = vpop.permute.xlu0 %7278
        %v7280 = vsel %vm1723, %v7233, %v7235
        %v7281 = vsel %vm1723, %v7235, %v7237
        %v7282 = vsel %vm1723, %v7239, %v7241
        %v7283 = vsel %vm1723, %v7241, %v7243
        %v7284 = vsel %vm1723, %v7245, %v7247
        %v7285 = vsel %vm1723, %v7247, %v7249
        %v7286 = vsel %vm1723, %v7251, %v7253
        %v7287 = vsel %vm1723, %v7253, %v7255
        %v7288 = vsel %vm1723, %v7257, %v7259
        %v7289 = vsel %vm1723, %v7259, %v7261
        %v7290 = vsel %vm1723, %v7263, %v7265
        %v7291 = vsel %vm1723, %v7265, %v7267
        %v7292 = vsel %vm1723, %v7269, %v7271
        %v7293 = vsel %vm1723, %v7271, %v7273
        %v7294 = vsel %vm1723, %v7275, %v7277
        %v7295 = vsel %vm1723, %v7277, %v7279
        %7320 = vst [vmem:[%s298] sm:$0xff] %v7280
        %7321 = vst [vmem:[%s298 + $0x8] sm:$0xff] %v7281
        %7322 = vst.msk [vmem:[%s298 + $0x10] sm:$0xff] %vm3658, %v7237
        %7323 = vst [vmem:[%s298 + $0x18] sm:$0xff] %v7282
        %7324 = vst [vmem:[%s298 + $0x20] sm:$0xff] %v7283
        %7325 = vst.msk [vmem:[%s298 + $0x28] sm:$0xff] %vm3658, %v7243
        %7326 = vst [vmem:[%s298 + $0x30] sm:$0xff] %v7284
        %7327 = vst [vmem:[%s298 + $0x38] sm:$0xff] %v7285
        %7328 = vst.msk [vmem:[%s298 + $0x40] sm:$0xff] %vm3658, %v7249
        %7329 = vst [vmem:[%s298 + $0x48] sm:$0xff] %v7286
        %7330 = vst [vmem:[%s298 + $0x50] sm:$0xff] %v7287
        %7331 = vst.msk [vmem:[%s298 + $0x58] sm:$0xff] %vm3658, %v7255
        %7332 = vst [vmem:[%s298 + $0x60] sm:$0xff] %v7288
        %7333 = vst [vmem:[%s298 + $0x68] sm:$0xff] %v7289
        %7334 = vst.msk [vmem:[%s298 + $0x70] sm:$0xff] %vm3658, %v7261
        %7335 = vst [vmem:[%s298 + $0x78] sm:$0xff] %v7290
        %7336 = vst [vmem:[%s298 + $0x80] sm:$0xff] %v7291
        %7337 = vst.msk [vmem:[%s298 + $0x88] sm:$0xff] %vm3658, %v7267
        %7338 = vst [vmem:[%s298 + $0x90] sm:$0xff] %v7292
        %7339 = vst [vmem:[%s298 + $0x98] sm:$0xff] %v7293
        %7340 = vst.msk [vmem:[%s298 + $0xa0] sm:$0xff] %vm3658, %v7273
        %7341 = vst [vmem:[%s298 + $0xa8] sm:$0xff] %v7294
        %7342 = vst [vmem:[%s298 + $0xb0] sm:$0xff] %v7295
        %7343 = vst.msk [vmem:[%s298 + $0xb8] sm:$0xff] %vm3658, %v7279
        %s7344 = sand.u32 %s163, 1
        %s7345 = scalar_lea.sflag [#allocation5], %s7344
        %s7346 = sand.u32 %s163, 1
        %s7347 = smul.addr %s7346, 192
        %s7348 = scalar_lea.vmem [#allocation9], %s7347
        // Predicated region
        $region57: #{tpu_custom_call.1} parent=43 // pred_check
          %p7349 = pneg %p173
        $region58: #{tpu_custom_call.1} parent=43 // pred_check_branch
          %7351 = sbr.rel (%p7349) target = $region60
        $region59: #{tpu_custom_call.1} parent=43 // pred_region
          %s7353 = ssub.s32 3072, 3072
          %7354 = vsyncadd %s7345, %s7353
          %s7355 = smul.addr %s24, 24
          %s7356 = smul.addr %s7355, 128
          %s7357 = scalar_lea.hbm %s6, %s7356
          %s7358 = sshll.u32 %s7348, 4
          %s7359 = int_to_ptr.vmem [resolvable:$true] %s7358
          %7364 = dma.vmem_to_hbm [thread:$0]  %s7359, 3072, %s7357, %s7345, 384, 384, 24
        $region60: #{tpu_custom_call.1} parent=43 // pred_fallthru
          _
      $region44: #{tpu_custom_call.1} parent=5 // pred_fallthru
        _
      %p7365 = scmp.le.s32.totalorder 2, %s19
      // Predicated region
      $region61: #{tpu_custom_call.1} parent=5 // pred_check
        %p7366 = pneg %p7365
      $region62: #{tpu_custom_call.1} parent=5 // pred_check_branch
        %7368 = sbr.rel (%p7366) target = $region64
      $region63: #{tpu_custom_call.1} parent=5 // pred_region
        %s7369 = ssub.s32 %s19, 2
        // Predicated region
        $region65: #{tpu_custom_call.1} parent=63 // pred_check
          %p7370 = pneg %p179
        $region66: #{tpu_custom_call.1} parent=63 // pred_check_branch
          %7372 = sbr.rel (%p7370) target = $region68
        $region67: #{tpu_custom_call.1} parent=63 // pred_region
          %s7373 = sand.u32 %s164, 1
          %s7374 = scalar_lea.sflag [#allocation5], %s7373
          %s7375 = sand.u32 %s164, 1
          %s7376 = smul.addr %s7375, 192
          %s7377 = scalar_lea.vmem [#allocation9], %s7376
          %7378 = dma.done %s7374, 3072
        $region68: #{tpu_custom_call.1} parent=63 // pred_fallthru
          _
      $region64: #{tpu_custom_call.1} parent=5 // pred_fallthru
        _
    $region6: #{tpu_custom_call.1} parent=1 // loop_footer
      %s23 = sadd.s32 1, %s19
    $region7: #{tpu_custom_call.1} parent=1 // loop_footer_branch
      %18 = sbr.rel target = $region3
    $region8: #{tpu_custom_call.1} parent=1 // loop_exit
      _
    %7379 = vsyncpa [#allocation4], 1
    %s7380 = scalar_lea.sflag [#allocation4], 1
    %7381 = vsyncpa %s7380, 1
    %7382 = vsyncpa [#allocation7], 1
    %7383 = vsyncpa [#allocation5], 1
    %s7384 = scalar_lea.sflag [#allocation5], 1
    %7385 = vsyncpa %s7384, 1

</llo_original>
